<compile_context>
chip_gen: v5e
topology: v5e:2x2
jax: 0.10.0
libtpu: 0.0.40
codegen_flags: <defaults>
</compile_context>

<pallas_src>
import math

import numpy as np
import jax
import jax.numpy as jnp
from jax.experimental import pallas as pl
from jax.experimental.pallas import tpu as pltpu


# ----------------------------------------------------------------------------
# helpers (match the PyTorch module exactly)
# ----------------------------------------------------------------------------
def kernel_size(in_channel):
    k = int((math.log2(in_channel) + 1) // 2)
    return k + 1 if k % 2 == 0 else k


# ----------------------------------------------------------------------------
# host-side weight packing (numpy, done once per call outside the kernel)
# ----------------------------------------------------------------------------
def _pack_conv_weights(w3, b3, w5, b5, w7, b7, C):
    """All three MSFE convs as one (3C, 49*C) matrix acting on a 7x7 im2col."""
    Wc = np.zeros((3 * C, 49 * C), np.float32)
    for blk, (w, K) in enumerate(((w3, 3), (w5, 5), (w7, 7))):
        off = 3 - K // 2                    # embed the KxK taps in the 7x7 grid
        w = np.asarray(w)                   # HWIO: (K, K, Cin, Cout)
        for kh in range(K):
            for kw in range(K):
                t = (kh + off) * 7 + (kw + off)
                Wc[blk * C:(blk + 1) * C, t * C:(t + 1) * C] = w[kh, kw].T
    bc = np.concatenate([np.asarray(b3), np.asarray(b5), np.asarray(b7)])
    return jnp.asarray(Wc), jnp.asarray(bc.astype(np.float32).reshape(3 * C, 1))


def _pack_spatial_weights(ws1, bs1, ws2, bs2):
    """Both Conv2d(4->1, k=7) as one (2, 4*50) matrix (49 taps + 1 zero tap).

    [R7] only the 4 real pooled channels per tap are kept (no zero padding to
    8); one extra all-zero tap keeps the contraction dim a multiple of 8.
    """
    NTAP = 50
    Wsp = np.zeros((2, 4 * NTAP), np.float32)
    for s, ws in enumerate((np.asarray(ws1), np.asarray(ws2))):  # HWIO (7,7,4,1)
        for kh in range(7):
            for kw in range(7):
                t = kh * 7 + kw
                for j in range(4):
                    Wsp[s, 4 * t + j] = ws[kh, kw, j, 0]
    bsp = np.array([[float(bs1)], [float(bs2)]], np.float32)
    return jnp.asarray(Wsp), jnp.asarray(bsp)


def _pack_channel_weights(wc1, bc1, wc2, bc2, C):
    """Both Conv1d(4->1, k, pad=k//2) folded into a TRANSPOSED Toeplitz
    (2C, 4C) matrix so catt = At @ pool_column comes out as a column.  [R10]
    """
    wc1 = np.asarray(wc1)
    wc2 = np.asarray(wc2)
    k = wc1.shape[1]
    pad = k // 2
    At = np.zeros((2 * C, 4 * C), np.float32)
    for s, wc in enumerate((wc1, wc2)):
        for co in range(C):
            for j in range(4):
                for p in range(k):
                    m = co + p - pad
                    if 0 <= m < C:
                        At[s * C + co, j * C + m] = wc[j, p]
    b = np.concatenate([np.full(C, float(bc1), np.float32),
                        np.full(C, float(bc2), np.float32)]).reshape(2 * C, 1)
    return jnp.asarray(At), jnp.asarray(b)


# ----------------------------------------------------------------------------
# fused BFM kernel
#   p0-layout: every output pixel (r, c) lives at lane p0 = r*Wp + c where
#   Wp >= W+6 is chosen so L_OUT = H*Wp is a multiple of 128 [R2]; lanes with
#   (p0 % Wp) >= W are garbage and masked to zero.  Input images are embedded
#   into a (H+6, Wp) zero-padded grid flattened to L_Q lanes, so every 7x7
#   conv tap is a static lane-shifted slice.
# ----------------------------------------------------------------------------
def _make_bfm_kernel(C, H, W):
    Wp = W + 6
    for cand in range(W + 6, W + 6 + 129):      # [R2] lane-dense row pitch
        if (H * cand) % 128 == 0:
            Wp = cand
            break
    L_OUT = H * Wp                              # e.g. 384 for 16x16
    L2 = 2 * L_OUT                              # both images side by side [R3]
    Q_OFF = 3 * Wp + 3                          # p0 -> q shift of valid region
    HPWP = (H + 6) * Wp                         # flattened padded-image length
    max_end = 6 * Wp + 6 + L_OUT                # largest im2col slice end
    L_Q = ((max(max_end, HPWP, Q_OFF + L_OUT) + 127) // 128) * 128
    NTAP_SP = 50                                # 49 real spatial taps + 1 zero
    inv_hw = 1.0 / float(H * W)

    def kernel(x1_ref, x2_ref, wconv_ref, bconv_ref, wsp_ref, bsp_ref,
               achT_ref, bch_ref, mask_ref, o_ref, xcol_ref, scol_ref):
        mask = mask_ref[...]                    # (1, 2*L_OUT): 1 on valid lanes

        # ---------------- fused MSFE: both images, one matmul [R1,R3,R9] ----
        for t in range(49):
            off = (t // 7) * Wp + (t % 7)
            xcol_ref[t * C:(t + 1) * C, 0:L_OUT] = x1_ref[0, :, off:off + L_OUT]
            xcol_ref[t * C:(t + 1) * C, L_OUT:L2] = x2_ref[0, :, off:off + L_OUT]
        conv = jnp.dot(wconv_ref[...], xcol_ref[...],
                       preferred_element_type=jnp.float32) + bconv_ref[...]
        ms = (jnp.maximum(conv[0:C, :], 0.0) +
              jnp.maximum(conv[C:2 * C, :], 0.0) +
              jnp.maximum(conv[2 * C:3 * C, :], 0.0)) * mask  # (C, 2*L_OUT)
        ms1 = ms[:, 0:L_OUT]
        ms2 = ms[:, L_OUT:L2]

        # ---------------- channel attention (column output, no eye) [R10] ---
        a1 = jnp.sum(ms1, axis=1, keepdims=True) * inv_hw     # (C, 1)
        m1 = jnp.max(ms1, axis=1, keepdims=True)               # valid: ms >= 0
        a2 = jnp.sum(ms2, axis=1, keepdims=True) * inv_hw
        m2 = jnp.max(ms2, axis=1, keepdims=True)
        poolc = jnp.concatenate([a1, m1, a2, m2], axis=0)       # (4C, 1)
        catt = jnp.dot(achT_ref[...], poolc,
                       preferred_element_type=jnp.float32) + bch_ref[...]
        c1 = catt[0:C, :]
        c2 = catt[C:2 * C, :]
        cm = jnp.maximum(c1, c2)
        ce1 = jnp.exp(c1 - cm)
        ce2 = jnp.exp(c2 - cm)
        cinv = pl.reciprocal(ce1 + ce2, approx=True)
        ca1 = ce1 * cinv                                        # (C, 1)
        ca2 = ce2 * cinv

        # ---------------- spatial attention [R7,R9] --------------------------
        avg = jnp.mean(ms, axis=0, keepdims=True)               # (1, 2*L_OUT)
        mx = jnp.max(ms, axis=0, keepdims=True)
        pool4 = jnp.concatenate([avg[:, 0:L_OUT], mx[:, 0:L_OUT],
                                 avg[:, L_OUT:L2], mx[:, L_OUT:L2]],
                                axis=0)                          # (4, L_OUT)
        pool_q = jnp.concatenate([
            jnp.zeros((4, Q_OFF), jnp.float32),
            pool4,
            jnp.zeros((4, L_Q - Q_OFF - L_OUT), jnp.float32)], axis=1)
        for t in range(49):
            off = (t // 7) * Wp + (t % 7)
            scol_ref[4 * t:4 * (t + 1), :] = pool_q[:, off:off + L_OUT]
        scol_ref[4 * 49:4 * NTAP_SP, :] = jnp.zeros(
            (4 * (NTAP_SP - 49), L_OUT), jnp.float32)
        sconv = jnp.dot(wsp_ref[...], scol_ref[...],
                        preferred_element_type=jnp.float32) + bsp_ref[...]
        s1 = sconv[0:1, :]
        s2 = sconv[1:2, :]
        sm = jnp.maximum(s1, s2)
        se1 = jnp.exp(s1 - sm)
        se2 = jnp.exp(s2 - sm)
        sinv = pl.reciprocal(se1 + se2, approx=True)
        sa1 = se1 * sinv                                         # (1, L_OUT)
        sa2 = se2 * sinv

        # ---------------- fuse ----------------
        att1 = ca1 + sa1 + 1.0                                   # (C, L_OUT)
        att2 = ca2 + sa2 + 1.0
        o_ref[0] = att1 * ms1 + att2 * ms2

    return kernel, L_OUT, L_Q, Wp, HPWP, NTAP_SP


# ----------------------------------------------------------------------------
# full BFM forward (NCHW in / NCHW out, matching the PyTorch module)
# ----------------------------------------------------------------------------
def bfm_forward_pallas(t1_nchw, t2_nchw, p):
    B, C, H, W = t1_nchw.shape
    kernel, L_OUT, L_Q, Wp, HPWP, NTAP_SP = _make_bfm_kernel(C, H, W)

    wconv, bconv = _pack_conv_weights(p['w3'], p['b3'], p['w5'], p['b5'],
                                      p['w7'], p['b7'], C)
    wsp, bsp = _pack_spatial_weights(p['ws1'], p['bs1'], p['ws2'], p['bs2'])
    achT, bch = _pack_channel_weights(p['wc1'], p['bc1'], p['wc2'], p['bc2'], C)

    # valid-lane mask on the H x Wp grid, tiled for the two fused images [R3]
    col = np.arange(L_OUT) % Wp
    m_half = (col < W).astype(np.float32).reshape(1, L_OUT)
    mask = jnp.asarray(np.concatenate([m_half, m_half], axis=1))  # (1, 2*L_OUT)

    def embed(x):   # NCHW -> zero-padded, flattened, lane-dense (B, C, L_Q)
        xp = jnp.pad(x, ((0, 0), (0, 0), (3, 3), (3, Wp - W - 3)))
        xf = xp.reshape(B, C, HPWP)
        return jnp.pad(xf, ((0, 0), (0, 0), (0, L_Q - HPWP)))

    x1q = embed(t1_nchw.astype(jnp.float32))
    x2q = embed(t2_nchw.astype(jnp.float32))

    out_p0 = pl.pallas_call(
        kernel,
        out_shape=jax.ShapeDtypeStruct((B, C, L_OUT), jnp.float32),
        grid=(B,),
        in_specs=[
            pl.BlockSpec((1, C, L_Q), lambda b: (b, 0, 0)),       # x1
            pl.BlockSpec((1, C, L_Q), lambda b: (b, 0, 0)),       # x2
            pl.BlockSpec((3 * C, 49 * C), lambda b: (0, 0)),      # Wconv
            pl.BlockSpec((3 * C, 1), lambda b: (0, 0)),           # bconv
            pl.BlockSpec((2, 4 * NTAP_SP), lambda b: (0, 0)),     # Wsp
            pl.BlockSpec((2, 1), lambda b: (0, 0)),               # bsp
            pl.BlockSpec((2 * C, 4 * C), lambda b: (0, 0)),       # A^T channel
            pl.BlockSpec((2 * C, 1), lambda b: (0, 0)),           # b channel
            pl.BlockSpec((1, 2 * L_OUT), lambda b: (0, 0)),       # valid mask
        ],
        out_specs=pl.BlockSpec((1, C, L_OUT), lambda b: (b, 0, 0)),
        scratch_shapes=[
            pltpu.VMEM((49 * C, 2 * L_OUT), jnp.float32),         # MSFE im2col
            pltpu.VMEM((4 * NTAP_SP, L_OUT), jnp.float32),        # spatial col
        ],
        compiler_params=pltpu.CompilerParams(
            dimension_semantics=("parallel",)),                   # [R4] v7x
    )(x1q, x2q, wconv, bconv, wsp, bsp, achT, bch, mask)

    # [R11] p0 grid -> NCHW: one cheap reshape + slice of the garbage columns
    out = out_p0.reshape(B, C, H, Wp)[:, :, :, :W]
    return out


# ----------------------------------------------------------------------------
# pure-JAX reference (NHWC internally) for verification
# ----------------------------------------------------------------------------
def _conv2d_ref(x, w, b, pad):
    y = jax.lax.conv_general_dilated(
        x, w, (1, 1), [(pad, pad), (pad, pad)],
        dimension_numbers=('NHWC', 'HWIO', 'NHWC'),
        precision=jax.lax.Precision.HIGHEST)
    return y + b.reshape(1, 1, 1, -1)


def _msfe_ref(x, p):
    o = jax.nn.relu(_conv2d_ref(x, p['w3'], p['b3'], 1))
    o = o + jax.nn.relu(_conv2d_ref(x, p['w5'], p['b5'], 2))
    o = o + jax.nn.relu(_conv2d_ref(x, p['w7'], p['b7'], 3))
    return o


def _tfam_ref(t1, t2, p):
    B, H, W, C = t1.shape
    avg1, mx1 = t1.mean(axis=(1, 2)), t1.max(axis=(1, 2))
    avg2, mx2 = t2.mean(axis=(1, 2)), t2.max(axis=(1, 2))
    pool = jnp.stack([avg1, mx1, avg2, mx2], axis=1)  # (B, 4, C)
    k = p['wc1'].shape[1]
    pad = k // 2
    pool_p = jnp.pad(pool, ((0, 0), (0, 0), (pad, pad)))

    def conv1d(wc, bc):
        out = jnp.zeros((B, C), jnp.float32)
        for j in range(4):
            for q in range(k):
                out = out + wc[j, q] * pool_p[:, j, q:q + C]
        return out + bc

    a1 = conv1d(p['wc1'], p['bc1'])
    a2 = conv1d(p['wc2'], p['bc2'])
    e = jax.nn.softmax(jnp.stack([a1, a2], axis=0), axis=0)
    ca1, ca2 = e[0], e[1]

    sp = jnp.concatenate([t1.mean(axis=3, keepdims=True),
                          t1.max(axis=3, keepdims=True),
                          t2.mean(axis=3, keepdims=True),
                          t2.max(axis=3, keepdims=True)], axis=3)  # (B,H,W,4)
    s1 = _conv2d_ref(sp, p['ws1'], p['bs1'].reshape(1), 3)
    s2 = _conv2d_ref(sp, p['ws2'], p['bs2'].reshape(1), 3)
    ss = jax.nn.softmax(jnp.stack([s1, s2], axis=0), axis=0)
    sa1, sa2 = ss[0], ss[1]

    att1 = ca1[:, None, None, :] + sa1 + 1.0
    att2 = ca2[:, None, None, :] + sa2 + 1.0
    return att1 * t1 + att2 * t2


def bfm_forward_ref(t1_nchw, t2_nchw, p):
    t1 = jnp.transpose(t1_nchw, (0, 2, 3, 1))
    t2 = jnp.transpose(t2_nchw, (0, 2, 3, 1))
    t1_ms = _msfe_ref(t1, p)
    t2_ms = _msfe_ref(t2, p)
    out = _tfam_ref(t1_ms, t2_ms, p)
    return jnp.transpose(out, (0, 3, 1, 2))


# ----------------------------------------------------------------------------
# main
# ----------------------------------------------------------------------------
if __name__ == "__main__":
    B, C, H, W = 2, 8, 16, 16
    k = kernel_size(C)  # = 3 for C=8

    key = jax.random.PRNGKey(0)
    ks = jax.random.split(key, 16)
    f32 = jnp.float32

    # Inputs/weights are snapped to the bf16 grid so the single-pass bf16 MXU
    # kernel (DEFAULT precision, [R1]) and the f32 HIGHEST reference see
    # identical operands; this isolates layout/algorithm correctness from
    # dtype rounding.
    def _r(x):
        return jnp.asarray(x, f32).astype(jnp.bfloat16).astype(f32)

    params = {
        # MultiScaleFeatureExtractor (weights in HWIO layout)
        'w3': _r(jax.random.normal(ks[0], (3, 3, C, C), f32) * 0.1),
        'b3': _r(jax.random.normal(ks[1], (C,), f32) * 0.1),
        'w5': _r(jax.random.normal(ks[2], (5, 5, C, C), f32) * 0.1),
        'b5': _r(jax.random.normal(ks[3], (C,), f32) * 0.1),
        'w7': _r(jax.random.normal(ks[4], (7, 7, C, C), f32) * 0.1),
        'b7': _r(jax.random.normal(ks[5], (C,), f32) * 0.1),
        # SpatialAttention: Conv2d(4 -> 1, k=7) in HWIO layout
        'ws1': _r(jax.random.normal(ks[6], (7, 7, 4, 1), f32) * 0.1),
        'bs1': _r(jax.random.normal(ks[7], (), f32) * 0.1),
        'ws2': _r(jax.random.normal(ks[8], (7, 7, 4, 1), f32) * 0.1),
        'bs2': _r(jax.random.normal(ks[9], (), f32) * 0.1),
        # ChannelAttention: Conv1d(4 -> 1, kernel=k) weights (4, k)
        'wc1': _r(jax.random.normal(ks[10], (4, k), f32) * 0.1),
        'bc1': _r(jax.random.normal(ks[11], (), f32) * 0.1),
        'wc2': _r(jax.random.normal(ks[12], (4, k), f32) * 0.1),
        'bc2': _r(jax.random.normal(ks[13], (), f32) * 0.1),
    }

    t1 = _r(jax.random.normal(ks[14], (B, C, H, W), f32))  # NCHW like PyTorch
    t2 = _r(jax.random.normal(ks[15], (B, C, H, W), f32))

    out = jax.block_until_ready(bfm_forward_pallas(t1, t2, params))
    ref = jax.block_until_ready(bfm_forward_ref(t1, t2, params))
    np.testing.assert_allclose(np.asarray(out), np.asarray(ref),
                               rtol=3e-2, atol=3e-2)

    print("KERNEL_OK")
</pallas_src>

<mosaic_0001>
module attributes {stable_mosaic.version = 11 : i64} {
  func.func @kernel(%arg0: i32, %arg1: memref<1x8x640xf32, #tpu.memory_space<vmem>>, %arg2: memref<1x8x640xf32, #tpu.memory_space<vmem>>, %arg3: memref<24x392xf32, #tpu.memory_space<vmem>>, %arg4: memref<24x1xf32, #tpu.memory_space<vmem>>, %arg5: memref<2x200xf32, #tpu.memory_space<vmem>>, %arg6: memref<2x1xf32, #tpu.memory_space<vmem>>, %arg7: memref<16x32xf32, #tpu.memory_space<vmem>>, %arg8: memref<16x1xf32, #tpu.memory_space<vmem>>, %arg9: memref<1x768xf32, #tpu.memory_space<vmem>>, %arg10: memref<1x8x384xf32, #tpu.memory_space<vmem>>, %arg11: memref<392x768xf32, #tpu.memory_space<vmem>>, %arg12: memref<200x384xf32, #tpu.memory_space<vmem>>) attributes {dimension_semantics = [#tpu.dimension_semantics<parallel>], iteration_bounds = array<i64: 2>, scalar_prefetch = 0 : i64, scratch_operands = 2 : i64, tpu.core_type = #tpu.core_type<tc>, window_params = [{transform_indices = @transform_0, window_bounds = array<i64: 1, 8, 640>}, {transform_indices = @transform_1, window_bounds = array<i64: 1, 8, 640>}, {pipeline_mode = #tpu.pipeline_mode<synchronous>, transform_indices = @transform_2, window_bounds = array<i64: 24, 392>}, {pipeline_mode = #tpu.pipeline_mode<synchronous>, transform_indices = @transform_3, window_bounds = array<i64: 24, 1>}, {pipeline_mode = #tpu.pipeline_mode<synchronous>, transform_indices = @transform_4, window_bounds = array<i64: 2, 200>}, {pipeline_mode = #tpu.pipeline_mode<synchronous>, transform_indices = @transform_5, window_bounds = array<i64: 2, 1>}, {pipeline_mode = #tpu.pipeline_mode<synchronous>, transform_indices = @transform_6, window_bounds = array<i64: 16, 32>}, {pipeline_mode = #tpu.pipeline_mode<synchronous>, transform_indices = @transform_7, window_bounds = array<i64: 16, 1>}, {pipeline_mode = #tpu.pipeline_mode<synchronous>, transform_indices = @transform_8, window_bounds = array<i64: 1, 768>}, {transform_indices = @transform_9, window_bounds = array<i64: 1, 8, 384>}]} {
    %c0 = arith.constant 0 : index
    %c0_0 = arith.constant 0 : index
    %0 = vector.load %arg9[%c0, %c0_0] : memref<1x768xf32, #tpu.memory_space<vmem>>, vector<1x768xf32>
    %c0_1 = arith.constant 0 : index
    %c0_2 = arith.constant 0 : index
    %c0_3 = arith.constant 0 : index
    %1 = vector.load %arg1[%c0_1, %c0_2, %c0_3] : memref<1x8x640xf32, #tpu.memory_space<vmem>>, vector<1x8x384xf32>
    %2 = vector.shape_cast %1 : vector<1x8x384xf32> to vector<8x384xf32>
    %c0_4 = arith.constant 0 : index
    %c0_5 = arith.constant 0 : index
    %3 = vector.load %arg11[%c0_4, %c0_5] : memref<392x768xf32, #tpu.memory_space<vmem>>, vector<8x384xf32>
    tpu.vector_store %arg11[%c0_4, %c0_5], %2 {strides = array<i32>} : memref<392x768xf32, #tpu.memory_space<vmem>>, vector<8x384xf32>,
    %c0_6 = arith.constant 0 : index
    %c0_7 = arith.constant 0 : index
    %c0_8 = arith.constant 0 : index
    %4 = vector.load %arg2[%c0_6, %c0_7, %c0_8] : memref<1x8x640xf32, #tpu.memory_space<vmem>>, vector<1x8x384xf32>
    %5 = vector.shape_cast %4 : vector<1x8x384xf32> to vector<8x384xf32>
    %c0_9 = arith.constant 0 : index
    %c384 = arith.constant 384 : index
    %6 = vector.load %arg11[%c0_9, %c384] : memref<392x768xf32, #tpu.memory_space<vmem>>, vector<8x384xf32>
    tpu.vector_store %arg11[%c0_9, %c384], %5 {strides = array<i32>} : memref<392x768xf32, #tpu.memory_space<vmem>>, vector<8x384xf32>,
    %c0_10 = arith.constant 0 : index
    %c0_11 = arith.constant 0 : index
    %c1 = arith.constant 1 : index
    %7 = vector.load %arg1[%c0_10, %c0_11, %c1] : memref<1x8x640xf32, #tpu.memory_space<vmem>>, vector<1x8x384xf32>
    %8 = vector.shape_cast %7 : vector<1x8x384xf32> to vector<8x384xf32>
    %c8 = arith.constant 8 : index
    %c0_12 = arith.constant 0 : index
    %9 = vector.load %arg11[%c8, %c0_12] : memref<392x768xf32, #tpu.memory_space<vmem>>, vector<8x384xf32>
    tpu.vector_store %arg11[%c8, %c0_12], %8 {strides = array<i32>} : memref<392x768xf32, #tpu.memory_space<vmem>>, vector<8x384xf32>,
    %c0_13 = arith.constant 0 : index
    %c0_14 = arith.constant 0 : index
    %c1_15 = arith.constant 1 : index
    %10 = vector.load %arg2[%c0_13, %c0_14, %c1_15] : memref<1x8x640xf32, #tpu.memory_space<vmem>>, vector<1x8x384xf32>
    %11 = vector.shape_cast %10 : vector<1x8x384xf32> to vector<8x384xf32>
    %c8_16 = arith.constant 8 : index
    %c384_17 = arith.constant 384 : index
    %12 = vector.load %arg11[%c8_16, %c384_17] : memref<392x768xf32, #tpu.memory_space<vmem>>, vector<8x384xf32>
    tpu.vector_store %arg11[%c8_16, %c384_17], %11 {strides = array<i32>} : memref<392x768xf32, #tpu.memory_space<vmem>>, vector<8x384xf32>,
    %c0_18 = arith.constant 0 : index
    %c0_19 = arith.constant 0 : index
    %c2 = arith.constant 2 : index
    %13 = vector.load %arg1[%c0_18, %c0_19, %c2] : memref<1x8x640xf32, #tpu.memory_space<vmem>>, vector<1x8x384xf32>
    %14 = vector.shape_cast %13 : vector<1x8x384xf32> to vector<8x384xf32>
    %c16 = arith.constant 16 : index
    %c0_20 = arith.constant 0 : index
    %15 = vector.load %arg11[%c16, %c0_20] : memref<392x768xf32, #tpu.memory_space<vmem>>, vector<8x384xf32>
    tpu.vector_store %arg11[%c16, %c0_20], %14 {strides = array<i32>} : memref<392x768xf32, #tpu.memory_space<vmem>>, vector<8x384xf32>,
    %c0_21 = arith.constant 0 : index
    %c0_22 = arith.constant 0 : index
    %c2_23 = arith.constant 2 : index
    %16 = vector.load %arg2[%c0_21, %c0_22, %c2_23] : memref<1x8x640xf32, #tpu.memory_space<vmem>>, vector<1x8x384xf32>
    %17 = vector.shape_cast %16 : vector<1x8x384xf32> to vector<8x384xf32>
    %c16_24 = arith.constant 16 : index
    %c384_25 = arith.constant 384 : index
    %18 = vector.load %arg11[%c16_24, %c384_25] : memref<392x768xf32, #tpu.memory_space<vmem>>, vector<8x384xf32>
    tpu.vector_store %arg11[%c16_24, %c384_25], %17 {strides = array<i32>} : memref<392x768xf32, #tpu.memory_space<vmem>>, vector<8x384xf32>,
    %c0_26 = arith.constant 0 : index
    %c0_27 = arith.constant 0 : index
    %c3 = arith.constant 3 : index
    %19 = vector.load %arg1[%c0_26, %c0_27, %c3] : memref<1x8x640xf32, #tpu.memory_space<vmem>>, vector<1x8x384xf32>
    %20 = vector.shape_cast %19 : vector<1x8x384xf32> to vector<8x384xf32>
    %c24 = arith.constant 24 : index
    %c0_28 = arith.constant 0 : index
    %21 = vector.load %arg11[%c24, %c0_28] : memref<392x768xf32, #tpu.memory_space<vmem>>, vector<8x384xf32>
    tpu.vector_store %arg11[%c24, %c0_28], %20 {strides = array<i32>} : memref<392x768xf32, #tpu.memory_space<vmem>>, vector<8x384xf32>,
    %c0_29 = arith.constant 0 : index
    %c0_30 = arith.constant 0 : index
    %c3_31 = arith.constant 3 : index
    %22 = vector.load %arg2[%c0_29, %c0_30, %c3_31] : memref<1x8x640xf32, #tpu.memory_space<vmem>>, vector<1x8x384xf32>
    %23 = vector.shape_cast %22 : vector<1x8x384xf32> to vector<8x384xf32>
    %c24_32 = arith.constant 24 : index
    %c384_33 = arith.constant 384 : index
    %24 = vector.load %arg11[%c24_32, %c384_33] : memref<392x768xf32, #tpu.memory_space<vmem>>, vector<8x384xf32>
    tpu.vector_store %arg11[%c24_32, %c384_33], %23 {strides = array<i32>} : memref<392x768xf32, #tpu.memory_space<vmem>>, vector<8x384xf32>,
    %c0_34 = arith.constant 0 : index
    %c0_35 = arith.constant 0 : index
    %c4 = arith.constant 4 : index
    %25 = vector.load %arg1[%c0_34, %c0_35, %c4] : memref<1x8x640xf32, #tpu.memory_space<vmem>>, vector<1x8x384xf32>
    %26 = vector.shape_cast %25 : vector<1x8x384xf32> to vector<8x384xf32>
    %c32 = arith.constant 32 : index
    %c0_36 = arith.constant 0 : index
    %27 = vector.load %arg11[%c32, %c0_36] : memref<392x768xf32, #tpu.memory_space<vmem>>, vector<8x384xf32>
    tpu.vector_store %arg11[%c32, %c0_36], %26 {strides = array<i32>} : memref<392x768xf32, #tpu.memory_space<vmem>>, vector<8x384xf32>,
    %c0_37 = arith.constant 0 : index
    %c0_38 = arith.constant 0 : index
    %c4_39 = arith.constant 4 : index
    %28 = vector.load %arg2[%c0_37, %c0_38, %c4_39] : memref<1x8x640xf32, #tpu.memory_space<vmem>>, vector<1x8x384xf32>
    %29 = vector.shape_cast %28 : vector<1x8x384xf32> to vector<8x384xf32>
    %c32_40 = arith.constant 32 : index
    %c384_41 = arith.constant 384 : index
    %30 = vector.load %arg11[%c32_40, %c384_41] : memref<392x768xf32, #tpu.memory_space<vmem>>, vector<8x384xf32>
    tpu.vector_store %arg11[%c32_40, %c384_41], %29 {strides = array<i32>} : memref<392x768xf32, #tpu.memory_space<vmem>>, vector<8x384xf32>,
    %c0_42 = arith.constant 0 : index
    %c0_43 = arith.constant 0 : index
    %c5 = arith.constant 5 : index
    %31 = vector.load %arg1[%c0_42, %c0_43, %c5] : memref<1x8x640xf32, #tpu.memory_space<vmem>>, vector<1x8x384xf32>
    %32 = vector.shape_cast %31 : vector<1x8x384xf32> to vector<8x384xf32>
    %c40 = arith.constant 40 : index
    %c0_44 = arith.constant 0 : index
    %33 = vector.load %arg11[%c40, %c0_44] : memref<392x768xf32, #tpu.memory_space<vmem>>, vector<8x384xf32>
    tpu.vector_store %arg11[%c40, %c0_44], %32 {strides = array<i32>} : memref<392x768xf32, #tpu.memory_space<vmem>>, vector<8x384xf32>,
    %c0_45 = arith.constant 0 : index
    %c0_46 = arith.constant 0 : index
    %c5_47 = arith.constant 5 : index
    %34 = vector.load %arg2[%c0_45, %c0_46, %c5_47] : memref<1x8x640xf32, #tpu.memory_space<vmem>>, vector<1x8x384xf32>
    %35 = vector.shape_cast %34 : vector<1x8x384xf32> to vector<8x384xf32>
    %c40_48 = arith.constant 40 : index
    %c384_49 = arith.constant 384 : index
    %36 = vector.load %arg11[%c40_48, %c384_49] : memref<392x768xf32, #tpu.memory_space<vmem>>, vector<8x384xf32>
    tpu.vector_store %arg11[%c40_48, %c384_49], %35 {strides = array<i32>} : memref<392x768xf32, #tpu.memory_space<vmem>>, vector<8x384xf32>,
    %c0_50 = arith.constant 0 : index
    %c0_51 = arith.constant 0 : index
    %c6 = arith.constant 6 : index
    %37 = vector.load %arg1[%c0_50, %c0_51, %c6] : memref<1x8x640xf32, #tpu.memory_space<vmem>>, vector<1x8x384xf32>
    %38 = vector.shape_cast %37 : vector<1x8x384xf32> to vector<8x384xf32>
    %c48 = arith.constant 48 : index
    %c0_52 = arith.constant 0 : index
    %39 = vector.load %arg11[%c48, %c0_52] : memref<392x768xf32, #tpu.memory_space<vmem>>, vector<8x384xf32>
    tpu.vector_store %arg11[%c48, %c0_52], %38 {strides = array<i32>} : memref<392x768xf32, #tpu.memory_space<vmem>>, vector<8x384xf32>,
    %c0_53 = arith.constant 0 : index
    %c0_54 = arith.constant 0 : index
    %c6_55 = arith.constant 6 : index
    %40 = vector.load %arg2[%c0_53, %c0_54, %c6_55] : memref<1x8x640xf32, #tpu.memory_space<vmem>>, vector<1x8x384xf32>
    %41 = vector.shape_cast %40 : vector<1x8x384xf32> to vector<8x384xf32>
    %c48_56 = arith.constant 48 : index
    %c384_57 = arith.constant 384 : index
    %42 = vector.load %arg11[%c48_56, %c384_57] : memref<392x768xf32, #tpu.memory_space<vmem>>, vector<8x384xf32>
    tpu.vector_store %arg11[%c48_56, %c384_57], %41 {strides = array<i32>} : memref<392x768xf32, #tpu.memory_space<vmem>>, vector<8x384xf32>,
    %c0_58 = arith.constant 0 : index
    %c0_59 = arith.constant 0 : index
    %c24_60 = arith.constant 24 : index
    %43 = vector.load %arg1[%c0_58, %c0_59, %c24_60] : memref<1x8x640xf32, #tpu.memory_space<vmem>>, vector<1x8x384xf32>
    %44 = vector.shape_cast %43 : vector<1x8x384xf32> to vector<8x384xf32>
    %c56 = arith.constant 56 : index
    %c0_61 = arith.constant 0 : index
    %45 = vector.load %arg11[%c56, %c0_61] : memref<392x768xf32, #tpu.memory_space<vmem>>, vector<8x384xf32>
    tpu.vector_store %arg11[%c56, %c0_61], %44 {strides = array<i32>} : memref<392x768xf32, #tpu.memory_space<vmem>>, vector<8x384xf32>,
    %c0_62 = arith.constant 0 : index
    %c0_63 = arith.constant 0 : index
    %c24_64 = arith.constant 24 : index
    %46 = vector.load %arg2[%c0_62, %c0_63, %c24_64] : memref<1x8x640xf32, #tpu.memory_space<vmem>>, vector<1x8x384xf32>
    %47 = vector.shape_cast %46 : vector<1x8x384xf32> to vector<8x384xf32>
    %c56_65 = arith.constant 56 : index
    %c384_66 = arith.constant 384 : index
    %48 = vector.load %arg11[%c56_65, %c384_66] : memref<392x768xf32, #tpu.memory_space<vmem>>, vector<8x384xf32>
    tpu.vector_store %arg11[%c56_65, %c384_66], %47 {strides = array<i32>} : memref<392x768xf32, #tpu.memory_space<vmem>>, vector<8x384xf32>,
    %c0_67 = arith.constant 0 : index
    %c0_68 = arith.constant 0 : index
    %c25 = arith.constant 25 : index
    %49 = vector.load %arg1[%c0_67, %c0_68, %c25] : memref<1x8x640xf32, #tpu.memory_space<vmem>>, vector<1x8x384xf32>
    %50 = vector.shape_cast %49 : vector<1x8x384xf32> to vector<8x384xf32>
    %c64 = arith.constant 64 : index
    %c0_69 = arith.constant 0 : index
    %51 = vector.load %arg11[%c64, %c0_69] : memref<392x768xf32, #tpu.memory_space<vmem>>, vector<8x384xf32>
    tpu.vector_store %arg11[%c64, %c0_69], %50 {strides = array<i32>} : memref<392x768xf32, #tpu.memory_space<vmem>>, vector<8x384xf32>,
    %c0_70 = arith.constant 0 : index
    %c0_71 = arith.constant 0 : index
    %c25_72 = arith.constant 25 : index
    %52 = vector.load %arg2[%c0_70, %c0_71, %c25_72] : memref<1x8x640xf32, #tpu.memory_space<vmem>>, vector<1x8x384xf32>
    %53 = vector.shape_cast %52 : vector<1x8x384xf32> to vector<8x384xf32>
    %c64_73 = arith.constant 64 : index
    %c384_74 = arith.constant 384 : index
    %54 = vector.load %arg11[%c64_73, %c384_74] : memref<392x768xf32, #tpu.memory_space<vmem>>, vector<8x384xf32>
    tpu.vector_store %arg11[%c64_73, %c384_74], %53 {strides = array<i32>} : memref<392x768xf32, #tpu.memory_space<vmem>>, vector<8x384xf32>,
    %c0_75 = arith.constant 0 : index
    %c0_76 = arith.constant 0 : index
    %c26 = arith.constant 26 : index
    %55 = vector.load %arg1[%c0_75, %c0_76, %c26] : memref<1x8x640xf32, #tpu.memory_space<vmem>>, vector<1x8x384xf32>
    %56 = vector.shape_cast %55 : vector<1x8x384xf32> to vector<8x384xf32>
    %c72 = arith.constant 72 : index
    %c0_77 = arith.constant 0 : index
    %57 = vector.load %arg11[%c72, %c0_77] : memref<392x768xf32, #tpu.memory_space<vmem>>, vector<8x384xf32>
    tpu.vector_store %arg11[%c72, %c0_77], %56 {strides = array<i32>} : memref<392x768xf32, #tpu.memory_space<vmem>>, vector<8x384xf32>,
    %c0_78 = arith.constant 0 : index
    %c0_79 = arith.constant 0 : index
    %c26_80 = arith.constant 26 : index
    %58 = vector.load %arg2[%c0_78, %c0_79, %c26_80] : memref<1x8x640xf32, #tpu.memory_space<vmem>>, vector<1x8x384xf32>
    %59 = vector.shape_cast %58 : vector<1x8x384xf32> to vector<8x384xf32>
    %c72_81 = arith.constant 72 : index
    %c384_82 = arith.constant 384 : index
    %60 = vector.load %arg11[%c72_81, %c384_82] : memref<392x768xf32, #tpu.memory_space<vmem>>, vector<8x384xf32>
    tpu.vector_store %arg11[%c72_81, %c384_82], %59 {strides = array<i32>} : memref<392x768xf32, #tpu.memory_space<vmem>>, vector<8x384xf32>,
    %c0_83 = arith.constant 0 : index
    %c0_84 = arith.constant 0 : index
    %c27 = arith.constant 27 : index
    %61 = vector.load %arg1[%c0_83, %c0_84, %c27] : memref<1x8x640xf32, #tpu.memory_space<vmem>>, vector<1x8x384xf32>
    %62 = vector.shape_cast %61 : vector<1x8x384xf32> to vector<8x384xf32>
    %c80 = arith.constant 80 : index
    %c0_85 = arith.constant 0 : index
    %63 = vector.load %arg11[%c80, %c0_85] : memref<392x768xf32, #tpu.memory_space<vmem>>, vector<8x384xf32>
    tpu.vector_store %arg11[%c80, %c0_85], %62 {strides = array<i32>} : memref<392x768xf32, #tpu.memory_space<vmem>>, vector<8x384xf32>,
    %c0_86 = arith.constant 0 : index
    %c0_87 = arith.constant 0 : index
    %c27_88 = arith.constant 27 : index
    %64 = vector.load %arg2[%c0_86, %c0_87, %c27_88] : memref<1x8x640xf32, #tpu.memory_space<vmem>>, vector<1x8x384xf32>
    %65 = vector.shape_cast %64 : vector<1x8x384xf32> to vector<8x384xf32>
    %c80_89 = arith.constant 80 : index
    %c384_90 = arith.constant 384 : index
    %66 = vector.load %arg11[%c80_89, %c384_90] : memref<392x768xf32, #tpu.memory_space<vmem>>, vector<8x384xf32>
    tpu.vector_store %arg11[%c80_89, %c384_90], %65 {strides = array<i32>} : memref<392x768xf32, #tpu.memory_space<vmem>>, vector<8x384xf32>,
    %c0_91 = arith.constant 0 : index
    %c0_92 = arith.constant 0 : index
    %c28 = arith.constant 28 : index
    %67 = vector.load %arg1[%c0_91, %c0_92, %c28] : memref<1x8x640xf32, #tpu.memory_space<vmem>>, vector<1x8x384xf32>
    %68 = vector.shape_cast %67 : vector<1x8x384xf32> to vector<8x384xf32>
    %c88 = arith.constant 88 : index
    %c0_93 = arith.constant 0 : index
    %69 = vector.load %arg11[%c88, %c0_93] : memref<392x768xf32, #tpu.memory_space<vmem>>, vector<8x384xf32>
    tpu.vector_store %arg11[%c88, %c0_93], %68 {strides = array<i32>} : memref<392x768xf32, #tpu.memory_space<vmem>>, vector<8x384xf32>,
    %c0_94 = arith.constant 0 : index
    %c0_95 = arith.constant 0 : index
    %c28_96 = arith.constant 28 : index
    %70 = vector.load %arg2[%c0_94, %c0_95, %c28_96] : memref<1x8x640xf32, #tpu.memory_space<vmem>>, vector<1x8x384xf32>
    %71 = vector.shape_cast %70 : vector<1x8x384xf32> to vector<8x384xf32>
    %c88_97 = arith.constant 88 : index
    %c384_98 = arith.constant 384 : index
    %72 = vector.load %arg11[%c88_97, %c384_98] : memref<392x768xf32, #tpu.memory_space<vmem>>, vector<8x384xf32>
    tpu.vector_store %arg11[%c88_97, %c384_98], %71 {strides = array<i32>} : memref<392x768xf32, #tpu.memory_space<vmem>>, vector<8x384xf32>,
    %c0_99 = arith.constant 0 : index
    %c0_100 = arith.constant 0 : index
    %c29 = arith.constant 29 : index
    %73 = vector.load %arg1[%c0_99, %c0_100, %c29] : memref<1x8x640xf32, #tpu.memory_space<vmem>>, vector<1x8x384xf32>
    %74 = vector.shape_cast %73 : vector<1x8x384xf32> to vector<8x384xf32>
    %c96 = arith.constant 96 : index
    %c0_101 = arith.constant 0 : index
    %75 = vector.load %arg11[%c96, %c0_101] : memref<392x768xf32, #tpu.memory_space<vmem>>, vector<8x384xf32>
    tpu.vector_store %arg11[%c96, %c0_101], %74 {strides = array<i32>} : memref<392x768xf32, #tpu.memory_space<vmem>>, vector<8x384xf32>,
    %c0_102 = arith.constant 0 : index
    %c0_103 = arith.constant 0 : index
    %c29_104 = arith.constant 29 : index
    %76 = vector.load %arg2[%c0_102, %c0_103, %c29_104] : memref<1x8x640xf32, #tpu.memory_space<vmem>>, vector<1x8x384xf32>
    %77 = vector.shape_cast %76 : vector<1x8x384xf32> to vector<8x384xf32>
    %c96_105 = arith.constant 96 : index
    %c384_106 = arith.constant 384 : index
    %78 = vector.load %arg11[%c96_105, %c384_106] : memref<392x768xf32, #tpu.memory_space<vmem>>, vector<8x384xf32>
    tpu.vector_store %arg11[%c96_105, %c384_106], %77 {strides = array<i32>} : memref<392x768xf32, #tpu.memory_space<vmem>>, vector<8x384xf32>,
    %c0_107 = arith.constant 0 : index
    %c0_108 = arith.constant 0 : index
    %c30 = arith.constant 30 : index
    %79 = vector.load %arg1[%c0_107, %c0_108, %c30] : memref<1x8x640xf32, #tpu.memory_space<vmem>>, vector<1x8x384xf32>
    %80 = vector.shape_cast %79 : vector<1x8x384xf32> to vector<8x384xf32>
    %c104 = arith.constant 104 : index
    %c0_109 = arith.constant 0 : index
    %81 = vector.load %arg11[%c104, %c0_109] : memref<392x768xf32, #tpu.memory_space<vmem>>, vector<8x384xf32>
    tpu.vector_store %arg11[%c104, %c0_109], %80 {strides = array<i32>} : memref<392x768xf32, #tpu.memory_space<vmem>>, vector<8x384xf32>,
    %c0_110 = arith.constant 0 : index
    %c0_111 = arith.constant 0 : index
    %c30_112 = arith.constant 30 : index
    %82 = vector.load %arg2[%c0_110, %c0_111, %c30_112] : memref<1x8x640xf32, #tpu.memory_space<vmem>>, vector<1x8x384xf32>
    %83 = vector.shape_cast %82 : vector<1x8x384xf32> to vector<8x384xf32>
    %c104_113 = arith.constant 104 : index
    %c384_114 = arith.constant 384 : index
    %84 = vector.load %arg11[%c104_113, %c384_114] : memref<392x768xf32, #tpu.memory_space<vmem>>, vector<8x384xf32>
    tpu.vector_store %arg11[%c104_113, %c384_114], %83 {strides = array<i32>} : memref<392x768xf32, #tpu.memory_space<vmem>>, vector<8x384xf32>,
    %c0_115 = arith.constant 0 : index
    %c0_116 = arith.constant 0 : index
    %c48_117 = arith.constant 48 : index
    %85 = vector.load %arg1[%c0_115, %c0_116, %c48_117] : memref<1x8x640xf32, #tpu.memory_space<vmem>>, vector<1x8x384xf32>
    %86 = vector.shape_cast %85 : vector<1x8x384xf32> to vector<8x384xf32>
    %c112 = arith.constant 112 : index
    %c0_118 = arith.constant 0 : index
    %87 = vector.load %arg11[%c112, %c0_118] : memref<392x768xf32, #tpu.memory_space<vmem>>, vector<8x384xf32>
    tpu.vector_store %arg11[%c112, %c0_118], %86 {strides = array<i32>} : memref<392x768xf32, #tpu.memory_space<vmem>>, vector<8x384xf32>,
    %c0_119 = arith.constant 0 : index
    %c0_120 = arith.constant 0 : index
    %c48_121 = arith.constant 48 : index
    %88 = vector.load %arg2[%c0_119, %c0_120, %c48_121] : memref<1x8x640xf32, #tpu.memory_space<vmem>>, vector<1x8x384xf32>
    %89 = vector.shape_cast %88 : vector<1x8x384xf32> to vector<8x384xf32>
    %c112_122 = arith.constant 112 : index
    %c384_123 = arith.constant 384 : index
    %90 = vector.load %arg11[%c112_122, %c384_123] : memref<392x768xf32, #tpu.memory_space<vmem>>, vector<8x384xf32>
    tpu.vector_store %arg11[%c112_122, %c384_123], %89 {strides = array<i32>} : memref<392x768xf32, #tpu.memory_space<vmem>>, vector<8x384xf32>,
    %c0_124 = arith.constant 0 : index
    %c0_125 = arith.constant 0 : index
    %c49 = arith.constant 49 : index
    %91 = vector.load %arg1[%c0_124, %c0_125, %c49] : memref<1x8x640xf32, #tpu.memory_space<vmem>>, vector<1x8x384xf32>
    %92 = vector.shape_cast %91 : vector<1x8x384xf32> to vector<8x384xf32>
    %c120 = arith.constant 120 : index
    %c0_126 = arith.constant 0 : index
    %93 = vector.load %arg11[%c120, %c0_126] : memref<392x768xf32, #tpu.memory_space<vmem>>, vector<8x384xf32>
    tpu.vector_store %arg11[%c120, %c0_126], %92 {strides = array<i32>} : memref<392x768xf32, #tpu.memory_space<vmem>>, vector<8x384xf32>,
    %c0_127 = arith.constant 0 : index
    %c0_128 = arith.constant 0 : index
    %c49_129 = arith.constant 49 : index
    %94 = vector.load %arg2[%c0_127, %c0_128, %c49_129] : memref<1x8x640xf32, #tpu.memory_space<vmem>>, vector<1x8x384xf32>
    %95 = vector.shape_cast %94 : vector<1x8x384xf32> to vector<8x384xf32>
    %c120_130 = arith.constant 120 : index
    %c384_131 = arith.constant 384 : index
    %96 = vector.load %arg11[%c120_130, %c384_131] : memref<392x768xf32, #tpu.memory_space<vmem>>, vector<8x384xf32>
    tpu.vector_store %arg11[%c120_130, %c384_131], %95 {strides = array<i32>} : memref<392x768xf32, #tpu.memory_space<vmem>>, vector<8x384xf32>,
    %c0_132 = arith.constant 0 : index
    %c0_133 = arith.constant 0 : index
    %c50 = arith.constant 50 : index
    %97 = vector.load %arg1[%c0_132, %c0_133, %c50] : memref<1x8x640xf32, #tpu.memory_space<vmem>>, vector<1x8x384xf32>
    %98 = vector.shape_cast %97 : vector<1x8x384xf32> to vector<8x384xf32>
    %c128 = arith.constant 128 : index
    %c0_134 = arith.constant 0 : index
    %99 = vector.load %arg11[%c128, %c0_134] : memref<392x768xf32, #tpu.memory_space<vmem>>, vector<8x384xf32>
    tpu.vector_store %arg11[%c128, %c0_134], %98 {strides = array<i32>} : memref<392x768xf32, #tpu.memory_space<vmem>>, vector<8x384xf32>,
    %c0_135 = arith.constant 0 : index
    %c0_136 = arith.constant 0 : index
    %c50_137 = arith.constant 50 : index
    %100 = vector.load %arg2[%c0_135, %c0_136, %c50_137] : memref<1x8x640xf32, #tpu.memory_space<vmem>>, vector<1x8x384xf32>
    %101 = vector.shape_cast %100 : vector<1x8x384xf32> to vector<8x384xf32>
    %c128_138 = arith.constant 128 : index
    %c384_139 = arith.constant 384 : index
    %102 = vector.load %arg11[%c128_138, %c384_139] : memref<392x768xf32, #tpu.memory_space<vmem>>, vector<8x384xf32>
    tpu.vector_store %arg11[%c128_138, %c384_139], %101 {strides = array<i32>} : memref<392x768xf32, #tpu.memory_space<vmem>>, vector<8x384xf32>,
    %c0_140 = arith.constant 0 : index
    %c0_141 = arith.constant 0 : index
    %c51 = arith.constant 51 : index
    %103 = vector.load %arg1[%c0_140, %c0_141, %c51] : memref<1x8x640xf32, #tpu.memory_space<vmem>>, vector<1x8x384xf32>
    %104 = vector.shape_cast %103 : vector<1x8x384xf32> to vector<8x384xf32>
    %c136 = arith.constant 136 : index
    %c0_142 = arith.constant 0 : index
    %105 = vector.load %arg11[%c136, %c0_142] : memref<392x768xf32, #tpu.memory_space<vmem>>, vector<8x384xf32>
    tpu.vector_store %arg11[%c136, %c0_142], %104 {strides = array<i32>} : memref<392x768xf32, #tpu.memory_space<vmem>>, vector<8x384xf32>,
    %c0_143 = arith.constant 0 : index
    %c0_144 = arith.constant 0 : index
    %c51_145 = arith.constant 51 : index
    %106 = vector.load %arg2[%c0_143, %c0_144, %c51_145] : memref<1x8x640xf32, #tpu.memory_space<vmem>>, vector<1x8x384xf32>
    %107 = vector.shape_cast %106 : vector<1x8x384xf32> to vector<8x384xf32>
    %c136_146 = arith.constant 136 : index
    %c384_147 = arith.constant 384 : index
    %108 = vector.load %arg11[%c136_146, %c384_147] : memref<392x768xf32, #tpu.memory_space<vmem>>, vector<8x384xf32>
    tpu.vector_store %arg11[%c136_146, %c384_147], %107 {strides = array<i32>} : memref<392x768xf32, #tpu.memory_space<vmem>>, vector<8x384xf32>,
    %c0_148 = arith.constant 0 : index
    %c0_149 = arith.constant 0 : index
    %c52 = arith.constant 52 : index
    %109 = vector.load %arg1[%c0_148, %c0_149, %c52] : memref<1x8x640xf32, #tpu.memory_space<vmem>>, vector<1x8x384xf32>
    %110 = vector.shape_cast %109 : vector<1x8x384xf32> to vector<8x384xf32>
    %c144 = arith.constant 144 : index
    %c0_150 = arith.constant 0 : index
    %111 = vector.load %arg11[%c144, %c0_150] : memref<392x768xf32, #tpu.memory_space<vmem>>, vector<8x384xf32>
    tpu.vector_store %arg11[%c144, %c0_150], %110 {strides = array<i32>} : memref<392x768xf32, #tpu.memory_space<vmem>>, vector<8x384xf32>,
    %c0_151 = arith.constant 0 : index
    %c0_152 = arith.constant 0 : index
    %c52_153 = arith.constant 52 : index
    %112 = vector.load %arg2[%c0_151, %c0_152, %c52_153] : memref<1x8x640xf32, #tpu.memory_space<vmem>>, vector<1x8x384xf32>
    %113 = vector.shape_cast %112 : vector<1x8x384xf32> to vector<8x384xf32>
    %c144_154 = arith.constant 144 : index
    %c384_155 = arith.constant 384 : index
    %114 = vector.load %arg11[%c144_154, %c384_155] : memref<392x768xf32, #tpu.memory_space<vmem>>, vector<8x384xf32>
    tpu.vector_store %arg11[%c144_154, %c384_155], %113 {strides = array<i32>} : memref<392x768xf32, #tpu.memory_space<vmem>>, vector<8x384xf32>,
    %c0_156 = arith.constant 0 : index
    %c0_157 = arith.constant 0 : index
    %c53 = arith.constant 53 : index
    %115 = vector.load %arg1[%c0_156, %c0_157, %c53] : memref<1x8x640xf32, #tpu.memory_space<vmem>>, vector<1x8x384xf32>
    %116 = vector.shape_cast %115 : vector<1x8x384xf32> to vector<8x384xf32>
    %c152 = arith.constant 152 : index
    %c0_158 = arith.constant 0 : index
    %117 = vector.load %arg11[%c152, %c0_158] : memref<392x768xf32, #tpu.memory_space<vmem>>, vector<8x384xf32>
    tpu.vector_store %arg11[%c152, %c0_158], %116 {strides = array<i32>} : memref<392x768xf32, #tpu.memory_space<vmem>>, vector<8x384xf32>,
    %c0_159 = arith.constant 0 : index
    %c0_160 = arith.constant 0 : index
    %c53_161 = arith.constant 53 : index
    %118 = vector.load %arg2[%c0_159, %c0_160, %c53_161] : memref<1x8x640xf32, #tpu.memory_space<vmem>>, vector<1x8x384xf32>
    %119 = vector.shape_cast %118 : vector<1x8x384xf32> to vector<8x384xf32>
    %c152_162 = arith.constant 152 : index
    %c384_163 = arith.constant 384 : index
    %120 = vector.load %arg11[%c152_162, %c384_163] : memref<392x768xf32, #tpu.memory_space<vmem>>, vector<8x384xf32>
    tpu.vector_store %arg11[%c152_162, %c384_163], %119 {strides = array<i32>} : memref<392x768xf32, #tpu.memory_space<vmem>>, vector<8x384xf32>,
    %c0_164 = arith.constant 0 : index
    %c0_165 = arith.constant 0 : index
    %c54 = arith.constant 54 : index
    %121 = vector.load %arg1[%c0_164, %c0_165, %c54] : memref<1x8x640xf32, #tpu.memory_space<vmem>>, vector<1x8x384xf32>
    %122 = vector.shape_cast %121 : vector<1x8x384xf32> to vector<8x384xf32>
    %c160 = arith.constant 160 : index
    %c0_166 = arith.constant 0 : index
    %123 = vector.load %arg11[%c160, %c0_166] : memref<392x768xf32, #tpu.memory_space<vmem>>, vector<8x384xf32>
    tpu.vector_store %arg11[%c160, %c0_166], %122 {strides = array<i32>} : memref<392x768xf32, #tpu.memory_space<vmem>>, vector<8x384xf32>,
    %c0_167 = arith.constant 0 : index
    %c0_168 = arith.constant 0 : index
    %c54_169 = arith.constant 54 : index
    %124 = vector.load %arg2[%c0_167, %c0_168, %c54_169] : memref<1x8x640xf32, #tpu.memory_space<vmem>>, vector<1x8x384xf32>
    %125 = vector.shape_cast %124 : vector<1x8x384xf32> to vector<8x384xf32>
    %c160_170 = arith.constant 160 : index
    %c384_171 = arith.constant 384 : index
    %126 = vector.load %arg11[%c160_170, %c384_171] : memref<392x768xf32, #tpu.memory_space<vmem>>, vector<8x384xf32>
    tpu.vector_store %arg11[%c160_170, %c384_171], %125 {strides = array<i32>} : memref<392x768xf32, #tpu.memory_space<vmem>>, vector<8x384xf32>,
    %c0_172 = arith.constant 0 : index
    %c0_173 = arith.constant 0 : index
    %c72_174 = arith.constant 72 : index
    %127 = vector.load %arg1[%c0_172, %c0_173, %c72_174] : memref<1x8x640xf32, #tpu.memory_space<vmem>>, vector<1x8x384xf32>
    %128 = vector.shape_cast %127 : vector<1x8x384xf32> to vector<8x384xf32>
    %c168 = arith.constant 168 : index
    %c0_175 = arith.constant 0 : index
    %129 = vector.load %arg11[%c168, %c0_175] : memref<392x768xf32, #tpu.memory_space<vmem>>, vector<8x384xf32>
    tpu.vector_store %arg11[%c168, %c0_175], %128 {strides = array<i32>} : memref<392x768xf32, #tpu.memory_space<vmem>>, vector<8x384xf32>,
    %c0_176 = arith.constant 0 : index
    %c0_177 = arith.constant 0 : index
    %c72_178 = arith.constant 72 : index
    %130 = vector.load %arg2[%c0_176, %c0_177, %c72_178] : memref<1x8x640xf32, #tpu.memory_space<vmem>>, vector<1x8x384xf32>
    %131 = vector.shape_cast %130 : vector<1x8x384xf32> to vector<8x384xf32>
    %c168_179 = arith.constant 168 : index
    %c384_180 = arith.constant 384 : index
    %132 = vector.load %arg11[%c168_179, %c384_180] : memref<392x768xf32, #tpu.memory_space<vmem>>, vector<8x384xf32>
    tpu.vector_store %arg11[%c168_179, %c384_180], %131 {strides = array<i32>} : memref<392x768xf32, #tpu.memory_space<vmem>>, vector<8x384xf32>,
    %c0_181 = arith.constant 0 : index
    %c0_182 = arith.constant 0 : index
    %c73 = arith.constant 73 : index
    %133 = vector.load %arg1[%c0_181, %c0_182, %c73] : memref<1x8x640xf32, #tpu.memory_space<vmem>>, vector<1x8x384xf32>
    %134 = vector.shape_cast %133 : vector<1x8x384xf32> to vector<8x384xf32>
    %c176 = arith.constant 176 : index
    %c0_183 = arith.constant 0 : index
    %135 = vector.load %arg11[%c176, %c0_183] : memref<392x768xf32, #tpu.memory_space<vmem>>, vector<8x384xf32>
    tpu.vector_store %arg11[%c176, %c0_183], %134 {strides = array<i32>} : memref<392x768xf32, #tpu.memory_space<vmem>>, vector<8x384xf32>,
    %c0_184 = arith.constant 0 : index
    %c0_185 = arith.constant 0 : index
    %c73_186 = arith.constant 73 : index
    %136 = vector.load %arg2[%c0_184, %c0_185, %c73_186] : memref<1x8x640xf32, #tpu.memory_space<vmem>>, vector<1x8x384xf32>
    %137 = vector.shape_cast %136 : vector<1x8x384xf32> to vector<8x384xf32>
    %c176_187 = arith.constant 176 : index
    %c384_188 = arith.constant 384 : index
    %138 = vector.load %arg11[%c176_187, %c384_188] : memref<392x768xf32, #tpu.memory_space<vmem>>, vector<8x384xf32>
    tpu.vector_store %arg11[%c176_187, %c384_188], %137 {strides = array<i32>} : memref<392x768xf32, #tpu.memory_space<vmem>>, vector<8x384xf32>,
    %c0_189 = arith.constant 0 : index
    %c0_190 = arith.constant 0 : index
    %c74 = arith.constant 74 : index
    %139 = vector.load %arg1[%c0_189, %c0_190, %c74] : memref<1x8x640xf32, #tpu.memory_space<vmem>>, vector<1x8x384xf32>
    %140 = vector.shape_cast %139 : vector<1x8x384xf32> to vector<8x384xf32>
    %c184 = arith.constant 184 : index
    %c0_191 = arith.constant 0 : index
    %141 = vector.load %arg11[%c184, %c0_191] : memref<392x768xf32, #tpu.memory_space<vmem>>, vector<8x384xf32>
    tpu.vector_store %arg11[%c184, %c0_191], %140 {strides = array<i32>} : memref<392x768xf32, #tpu.memory_space<vmem>>, vector<8x384xf32>,
    %c0_192 = arith.constant 0 : index
    %c0_193 = arith.constant 0 : index
    %c74_194 = arith.constant 74 : index
    %142 = vector.load %arg2[%c0_192, %c0_193, %c74_194] : memref<1x8x640xf32, #tpu.memory_space<vmem>>, vector<1x8x384xf32>
    %143 = vector.shape_cast %142 : vector<1x8x384xf32> to vector<8x384xf32>
    %c184_195 = arith.constant 184 : index
    %c384_196 = arith.constant 384 : index
    %144 = vector.load %arg11[%c184_195, %c384_196] : memref<392x768xf32, #tpu.memory_space<vmem>>, vector<8x384xf32>
    tpu.vector_store %arg11[%c184_195, %c384_196], %143 {strides = array<i32>} : memref<392x768xf32, #tpu.memory_space<vmem>>, vector<8x384xf32>,
    %c0_197 = arith.constant 0 : index
    %c0_198 = arith.constant 0 : index
    %c75 = arith.constant 75 : index
    %145 = vector.load %arg1[%c0_197, %c0_198, %c75] : memref<1x8x640xf32, #tpu.memory_space<vmem>>, vector<1x8x384xf32>
    %146 = vector.shape_cast %145 : vector<1x8x384xf32> to vector<8x384xf32>
    %c192 = arith.constant 192 : index
    %c0_199 = arith.constant 0 : index
    %147 = vector.load %arg11[%c192, %c0_199] : memref<392x768xf32, #tpu.memory_space<vmem>>, vector<8x384xf32>
    tpu.vector_store %arg11[%c192, %c0_199], %146 {strides = array<i32>} : memref<392x768xf32, #tpu.memory_space<vmem>>, vector<8x384xf32>,
    %c0_200 = arith.constant 0 : index
    %c0_201 = arith.constant 0 : index
    %c75_202 = arith.constant 75 : index
    %148 = vector.load %arg2[%c0_200, %c0_201, %c75_202] : memref<1x8x640xf32, #tpu.memory_space<vmem>>, vector<1x8x384xf32>
    %149 = vector.shape_cast %148 : vector<1x8x384xf32> to vector<8x384xf32>
    %c192_203 = arith.constant 192 : index
    %c384_204 = arith.constant 384 : index
    %150 = vector.load %arg11[%c192_203, %c384_204] : memref<392x768xf32, #tpu.memory_space<vmem>>, vector<8x384xf32>
    tpu.vector_store %arg11[%c192_203, %c384_204], %149 {strides = array<i32>} : memref<392x768xf32, #tpu.memory_space<vmem>>, vector<8x384xf32>,
    %c0_205 = arith.constant 0 : index
    %c0_206 = arith.constant 0 : index
    %c76 = arith.constant 76 : index
    %151 = vector.load %arg1[%c0_205, %c0_206, %c76] : memref<1x8x640xf32, #tpu.memory_space<vmem>>, vector<1x8x384xf32>
    %152 = vector.shape_cast %151 : vector<1x8x384xf32> to vector<8x384xf32>
    %c200 = arith.constant 200 : index
    %c0_207 = arith.constant 0 : index
    %153 = vector.load %arg11[%c200, %c0_207] : memref<392x768xf32, #tpu.memory_space<vmem>>, vector<8x384xf32>
    tpu.vector_store %arg11[%c200, %c0_207], %152 {strides = array<i32>} : memref<392x768xf32, #tpu.memory_space<vmem>>, vector<8x384xf32>,
    %c0_208 = arith.constant 0 : index
    %c0_209 = arith.constant 0 : index
    %c76_210 = arith.constant 76 : index
    %154 = vector.load %arg2[%c0_208, %c0_209, %c76_210] : memref<1x8x640xf32, #tpu.memory_space<vmem>>, vector<1x8x384xf32>
    %155 = vector.shape_cast %154 : vector<1x8x384xf32> to vector<8x384xf32>
    %c200_211 = arith.constant 200 : index
    %c384_212 = arith.constant 384 : index
    %156 = vector.load %arg11[%c200_211, %c384_212] : memref<392x768xf32, #tpu.memory_space<vmem>>, vector<8x384xf32>
    tpu.vector_store %arg11[%c200_211, %c384_212], %155 {strides = array<i32>} : memref<392x768xf32, #tpu.memory_space<vmem>>, vector<8x384xf32>,
    %c0_213 = arith.constant 0 : index
    %c0_214 = arith.constant 0 : index
    %c77 = arith.constant 77 : index
    %157 = vector.load %arg1[%c0_213, %c0_214, %c77] : memref<1x8x640xf32, #tpu.memory_space<vmem>>, vector<1x8x384xf32>
    %158 = vector.shape_cast %157 : vector<1x8x384xf32> to vector<8x384xf32>
    %c208 = arith.constant 208 : index
    %c0_215 = arith.constant 0 : index
    %159 = vector.load %arg11[%c208, %c0_215] : memref<392x768xf32, #tpu.memory_space<vmem>>, vector<8x384xf32>
    tpu.vector_store %arg11[%c208, %c0_215], %158 {strides = array<i32>} : memref<392x768xf32, #tpu.memory_space<vmem>>, vector<8x384xf32>,
    %c0_216 = arith.constant 0 : index
    %c0_217 = arith.constant 0 : index
    %c77_218 = arith.constant 77 : index
    %160 = vector.load %arg2[%c0_216, %c0_217, %c77_218] : memref<1x8x640xf32, #tpu.memory_space<vmem>>, vector<1x8x384xf32>
    %161 = vector.shape_cast %160 : vector<1x8x384xf32> to vector<8x384xf32>
    %c208_219 = arith.constant 208 : index
    %c384_220 = arith.constant 384 : index
    %162 = vector.load %arg11[%c208_219, %c384_220] : memref<392x768xf32, #tpu.memory_space<vmem>>, vector<8x384xf32>
    tpu.vector_store %arg11[%c208_219, %c384_220], %161 {strides = array<i32>} : memref<392x768xf32, #tpu.memory_space<vmem>>, vector<8x384xf32>,
    %c0_221 = arith.constant 0 : index
    %c0_222 = arith.constant 0 : index
    %c78 = arith.constant 78 : index
    %163 = vector.load %arg1[%c0_221, %c0_222, %c78] : memref<1x8x640xf32, #tpu.memory_space<vmem>>, vector<1x8x384xf32>
    %164 = vector.shape_cast %163 : vector<1x8x384xf32> to vector<8x384xf32>
    %c216 = arith.constant 216 : index
    %c0_223 = arith.constant 0 : index
    %165 = vector.load %arg11[%c216, %c0_223] : memref<392x768xf32, #tpu.memory_space<vmem>>, vector<8x384xf32>
    tpu.vector_store %arg11[%c216, %c0_223], %164 {strides = array<i32>} : memref<392x768xf32, #tpu.memory_space<vmem>>, vector<8x384xf32>,
    %c0_224 = arith.constant 0 : index
    %c0_225 = arith.constant 0 : index
    %c78_226 = arith.constant 78 : index
    %166 = vector.load %arg2[%c0_224, %c0_225, %c78_226] : memref<1x8x640xf32, #tpu.memory_space<vmem>>, vector<1x8x384xf32>
    %167 = vector.shape_cast %166 : vector<1x8x384xf32> to vector<8x384xf32>
    %c216_227 = arith.constant 216 : index
    %c384_228 = arith.constant 384 : index
    %168 = vector.load %arg11[%c216_227, %c384_228] : memref<392x768xf32, #tpu.memory_space<vmem>>, vector<8x384xf32>
    tpu.vector_store %arg11[%c216_227, %c384_228], %167 {strides = array<i32>} : memref<392x768xf32, #tpu.memory_space<vmem>>, vector<8x384xf32>,
    %c0_229 = arith.constant 0 : index
    %c0_230 = arith.constant 0 : index
    %c96_231 = arith.constant 96 : index
    %169 = vector.load %arg1[%c0_229, %c0_230, %c96_231] : memref<1x8x640xf32, #tpu.memory_space<vmem>>, vector<1x8x384xf32>
    %170 = vector.shape_cast %169 : vector<1x8x384xf32> to vector<8x384xf32>
    %c224 = arith.constant 224 : index
    %c0_232 = arith.constant 0 : index
    %171 = vector.load %arg11[%c224, %c0_232] : memref<392x768xf32, #tpu.memory_space<vmem>>, vector<8x384xf32>
    tpu.vector_store %arg11[%c224, %c0_232], %170 {strides = array<i32>} : memref<392x768xf32, #tpu.memory_space<vmem>>, vector<8x384xf32>,
    %c0_233 = arith.constant 0 : index
    %c0_234 = arith.constant 0 : index
    %c96_235 = arith.constant 96 : index
    %172 = vector.load %arg2[%c0_233, %c0_234, %c96_235] : memref<1x8x640xf32, #tpu.memory_space<vmem>>, vector<1x8x384xf32>
    %173 = vector.shape_cast %172 : vector<1x8x384xf32> to vector<8x384xf32>
    %c224_236 = arith.constant 224 : index
    %c384_237 = arith.constant 384 : index
    %174 = vector.load %arg11[%c224_236, %c384_237] : memref<392x768xf32, #tpu.memory_space<vmem>>, vector<8x384xf32>
    tpu.vector_store %arg11[%c224_236, %c384_237], %173 {strides = array<i32>} : memref<392x768xf32, #tpu.memory_space<vmem>>, vector<8x384xf32>,
    %c0_238 = arith.constant 0 : index
    %c0_239 = arith.constant 0 : index
    %c97 = arith.constant 97 : index
    %175 = vector.load %arg1[%c0_238, %c0_239, %c97] : memref<1x8x640xf32, #tpu.memory_space<vmem>>, vector<1x8x384xf32>
    %176 = vector.shape_cast %175 : vector<1x8x384xf32> to vector<8x384xf32>
    %c232 = arith.constant 232 : index
    %c0_240 = arith.constant 0 : index
    %177 = vector.load %arg11[%c232, %c0_240] : memref<392x768xf32, #tpu.memory_space<vmem>>, vector<8x384xf32>
    tpu.vector_store %arg11[%c232, %c0_240], %176 {strides = array<i32>} : memref<392x768xf32, #tpu.memory_space<vmem>>, vector<8x384xf32>,
    %c0_241 = arith.constant 0 : index
    %c0_242 = arith.constant 0 : index
    %c97_243 = arith.constant 97 : index
    %178 = vector.load %arg2[%c0_241, %c0_242, %c97_243] : memref<1x8x640xf32, #tpu.memory_space<vmem>>, vector<1x8x384xf32>
    %179 = vector.shape_cast %178 : vector<1x8x384xf32> to vector<8x384xf32>
    %c232_244 = arith.constant 232 : index
    %c384_245 = arith.constant 384 : index
    %180 = vector.load %arg11[%c232_244, %c384_245] : memref<392x768xf32, #tpu.memory_space<vmem>>, vector<8x384xf32>
    tpu.vector_store %arg11[%c232_244, %c384_245], %179 {strides = array<i32>} : memref<392x768xf32, #tpu.memory_space<vmem>>, vector<8x384xf32>,
    %c0_246 = arith.constant 0 : index
    %c0_247 = arith.constant 0 : index
    %c98 = arith.constant 98 : index
    %181 = vector.load %arg1[%c0_246, %c0_247, %c98] : memref<1x8x640xf32, #tpu.memory_space<vmem>>, vector<1x8x384xf32>
    %182 = vector.shape_cast %181 : vector<1x8x384xf32> to vector<8x384xf32>
    %c240 = arith.constant 240 : index
    %c0_248 = arith.constant 0 : index
    %183 = vector.load %arg11[%c240, %c0_248] : memref<392x768xf32, #tpu.memory_space<vmem>>, vector<8x384xf32>
    tpu.vector_store %arg11[%c240, %c0_248], %182 {strides = array<i32>} : memref<392x768xf32, #tpu.memory_space<vmem>>, vector<8x384xf32>,
    %c0_249 = arith.constant 0 : index
    %c0_250 = arith.constant 0 : index
    %c98_251 = arith.constant 98 : index
    %184 = vector.load %arg2[%c0_249, %c0_250, %c98_251] : memref<1x8x640xf32, #tpu.memory_space<vmem>>, vector<1x8x384xf32>
    %185 = vector.shape_cast %184 : vector<1x8x384xf32> to vector<8x384xf32>
    %c240_252 = arith.constant 240 : index
    %c384_253 = arith.constant 384 : index
    %186 = vector.load %arg11[%c240_252, %c384_253] : memref<392x768xf32, #tpu.memory_space<vmem>>, vector<8x384xf32>
    tpu.vector_store %arg11[%c240_252, %c384_253], %185 {strides = array<i32>} : memref<392x768xf32, #tpu.memory_space<vmem>>, vector<8x384xf32>,
    %c0_254 = arith.constant 0 : index
    %c0_255 = arith.constant 0 : index
    %c99 = arith.constant 99 : index
    %187 = vector.load %arg1[%c0_254, %c0_255, %c99] : memref<1x8x640xf32, #tpu.memory_space<vmem>>, vector<1x8x384xf32>
    %188 = vector.shape_cast %187 : vector<1x8x384xf32> to vector<8x384xf32>
    %c248 = arith.constant 248 : index
    %c0_256 = arith.constant 0 : index
    %189 = vector.load %arg11[%c248, %c0_256] : memref<392x768xf32, #tpu.memory_space<vmem>>, vector<8x384xf32>
    tpu.vector_store %arg11[%c248, %c0_256], %188 {strides = array<i32>} : memref<392x768xf32, #tpu.memory_space<vmem>>, vector<8x384xf32>,
    %c0_257 = arith.constant 0 : index
    %c0_258 = arith.constant 0 : index
    %c99_259 = arith.constant 99 : index
    %190 = vector.load %arg2[%c0_257, %c0_258, %c99_259] : memref<1x8x640xf32, #tpu.memory_space<vmem>>, vector<1x8x384xf32>
    %191 = vector.shape_cast %190 : vector<1x8x384xf32> to vector<8x384xf32>
    %c248_260 = arith.constant 248 : index
    %c384_261 = arith.constant 384 : index
    %192 = vector.load %arg11[%c248_260, %c384_261] : memref<392x768xf32, #tpu.memory_space<vmem>>, vector<8x384xf32>
    tpu.vector_store %arg11[%c248_260, %c384_261], %191 {strides = array<i32>} : memref<392x768xf32, #tpu.memory_space<vmem>>, vector<8x384xf32>,
    %c0_262 = arith.constant 0 : index
    %c0_263 = arith.constant 0 : index
    %c100 = arith.constant 100 : index
    %193 = vector.load %arg1[%c0_262, %c0_263, %c100] : memref<1x8x640xf32, #tpu.memory_space<vmem>>, vector<1x8x384xf32>
    %194 = vector.shape_cast %193 : vector<1x8x384xf32> to vector<8x384xf32>
    %c256 = arith.constant 256 : index
    %c0_264 = arith.constant 0 : index
    %195 = vector.load %arg11[%c256, %c0_264] : memref<392x768xf32, #tpu.memory_space<vmem>>, vector<8x384xf32>
    tpu.vector_store %arg11[%c256, %c0_264], %194 {strides = array<i32>} : memref<392x768xf32, #tpu.memory_space<vmem>>, vector<8x384xf32>,
    %c0_265 = arith.constant 0 : index
    %c0_266 = arith.constant 0 : index
    %c100_267 = arith.constant 100 : index
    %196 = vector.load %arg2[%c0_265, %c0_266, %c100_267] : memref<1x8x640xf32, #tpu.memory_space<vmem>>, vector<1x8x384xf32>
    %197 = vector.shape_cast %196 : vector<1x8x384xf32> to vector<8x384xf32>
    %c256_268 = arith.constant 256 : index
    %c384_269 = arith.constant 384 : index
    %198 = vector.load %arg11[%c256_268, %c384_269] : memref<392x768xf32, #tpu.memory_space<vmem>>, vector<8x384xf32>
    tpu.vector_store %arg11[%c256_268, %c384_269], %197 {strides = array<i32>} : memref<392x768xf32, #tpu.memory_space<vmem>>, vector<8x384xf32>,
    %c0_270 = arith.constant 0 : index
    %c0_271 = arith.constant 0 : index
    %c101 = arith.constant 101 : index
    %199 = vector.load %arg1[%c0_270, %c0_271, %c101] : memref<1x8x640xf32, #tpu.memory_space<vmem>>, vector<1x8x384xf32>
    %200 = vector.shape_cast %199 : vector<1x8x384xf32> to vector<8x384xf32>
    %c264 = arith.constant 264 : index
    %c0_272 = arith.constant 0 : index
    %201 = vector.load %arg11[%c264, %c0_272] : memref<392x768xf32, #tpu.memory_space<vmem>>, vector<8x384xf32>
    tpu.vector_store %arg11[%c264, %c0_272], %200 {strides = array<i32>} : memref<392x768xf32, #tpu.memory_space<vmem>>, vector<8x384xf32>,
    %c0_273 = arith.constant 0 : index
    %c0_274 = arith.constant 0 : index
    %c101_275 = arith.constant 101 : index
    %202 = vector.load %arg2[%c0_273, %c0_274, %c101_275] : memref<1x8x640xf32, #tpu.memory_space<vmem>>, vector<1x8x384xf32>
    %203 = vector.shape_cast %202 : vector<1x8x384xf32> to vector<8x384xf32>
    %c264_276 = arith.constant 264 : index
    %c384_277 = arith.constant 384 : index
    %204 = vector.load %arg11[%c264_276, %c384_277] : memref<392x768xf32, #tpu.memory_space<vmem>>, vector<8x384xf32>
    tpu.vector_store %arg11[%c264_276, %c384_277], %203 {strides = array<i32>} : memref<392x768xf32, #tpu.memory_space<vmem>>, vector<8x384xf32>,
    %c0_278 = arith.constant 0 : index
    %c0_279 = arith.constant 0 : index
    %c102 = arith.constant 102 : index
    %205 = vector.load %arg1[%c0_278, %c0_279, %c102] : memref<1x8x640xf32, #tpu.memory_space<vmem>>, vector<1x8x384xf32>
    %206 = vector.shape_cast %205 : vector<1x8x384xf32> to vector<8x384xf32>
    %c272 = arith.constant 272 : index
    %c0_280 = arith.constant 0 : index
    %207 = vector.load %arg11[%c272, %c0_280] : memref<392x768xf32, #tpu.memory_space<vmem>>, vector<8x384xf32>
    tpu.vector_store %arg11[%c272, %c0_280], %206 {strides = array<i32>} : memref<392x768xf32, #tpu.memory_space<vmem>>, vector<8x384xf32>,
    %c0_281 = arith.constant 0 : index
    %c0_282 = arith.constant 0 : index
    %c102_283 = arith.constant 102 : index
    %208 = vector.load %arg2[%c0_281, %c0_282, %c102_283] : memref<1x8x640xf32, #tpu.memory_space<vmem>>, vector<1x8x384xf32>
    %209 = vector.shape_cast %208 : vector<1x8x384xf32> to vector<8x384xf32>
    %c272_284 = arith.constant 272 : index
    %c384_285 = arith.constant 384 : index
    %210 = vector.load %arg11[%c272_284, %c384_285] : memref<392x768xf32, #tpu.memory_space<vmem>>, vector<8x384xf32>
    tpu.vector_store %arg11[%c272_284, %c384_285], %209 {strides = array<i32>} : memref<392x768xf32, #tpu.memory_space<vmem>>, vector<8x384xf32>,
    %c0_286 = arith.constant 0 : index
    %c0_287 = arith.constant 0 : index
    %c120_288 = arith.constant 120 : index
    %211 = vector.load %arg1[%c0_286, %c0_287, %c120_288] : memref<1x8x640xf32, #tpu.memory_space<vmem>>, vector<1x8x384xf32>
    %212 = vector.shape_cast %211 : vector<1x8x384xf32> to vector<8x384xf32>
    %c280 = arith.constant 280 : index
    %c0_289 = arith.constant 0 : index
    %213 = vector.load %arg11[%c280, %c0_289] : memref<392x768xf32, #tpu.memory_space<vmem>>, vector<8x384xf32>
    tpu.vector_store %arg11[%c280, %c0_289], %212 {strides = array<i32>} : memref<392x768xf32, #tpu.memory_space<vmem>>, vector<8x384xf32>,
    %c0_290 = arith.constant 0 : index
    %c0_291 = arith.constant 0 : index
    %c120_292 = arith.constant 120 : index
    %214 = vector.load %arg2[%c0_290, %c0_291, %c120_292] : memref<1x8x640xf32, #tpu.memory_space<vmem>>, vector<1x8x384xf32>
    %215 = vector.shape_cast %214 : vector<1x8x384xf32> to vector<8x384xf32>
    %c280_293 = arith.constant 280 : index
    %c384_294 = arith.constant 384 : index
    %216 = vector.load %arg11[%c280_293, %c384_294] : memref<392x768xf32, #tpu.memory_space<vmem>>, vector<8x384xf32>
    tpu.vector_store %arg11[%c280_293, %c384_294], %215 {strides = array<i32>} : memref<392x768xf32, #tpu.memory_space<vmem>>, vector<8x384xf32>,
    %c0_295 = arith.constant 0 : index
    %c0_296 = arith.constant 0 : index
    %c121 = arith.constant 121 : index
    %217 = vector.load %arg1[%c0_295, %c0_296, %c121] : memref<1x8x640xf32, #tpu.memory_space<vmem>>, vector<1x8x384xf32>
    %218 = vector.shape_cast %217 : vector<1x8x384xf32> to vector<8x384xf32>
    %c288 = arith.constant 288 : index
    %c0_297 = arith.constant 0 : index
    %219 = vector.load %arg11[%c288, %c0_297] : memref<392x768xf32, #tpu.memory_space<vmem>>, vector<8x384xf32>
    tpu.vector_store %arg11[%c288, %c0_297], %218 {strides = array<i32>} : memref<392x768xf32, #tpu.memory_space<vmem>>, vector<8x384xf32>,
    %c0_298 = arith.constant 0 : index
    %c0_299 = arith.constant 0 : index
    %c121_300 = arith.constant 121 : index
    %220 = vector.load %arg2[%c0_298, %c0_299, %c121_300] : memref<1x8x640xf32, #tpu.memory_space<vmem>>, vector<1x8x384xf32>
    %221 = vector.shape_cast %220 : vector<1x8x384xf32> to vector<8x384xf32>
    %c288_301 = arith.constant 288 : index
    %c384_302 = arith.constant 384 : index
    %222 = vector.load %arg11[%c288_301, %c384_302] : memref<392x768xf32, #tpu.memory_space<vmem>>, vector<8x384xf32>
    tpu.vector_store %arg11[%c288_301, %c384_302], %221 {strides = array<i32>} : memref<392x768xf32, #tpu.memory_space<vmem>>, vector<8x384xf32>,
    %c0_303 = arith.constant 0 : index
    %c0_304 = arith.constant 0 : index
    %c122 = arith.constant 122 : index
    %223 = vector.load %arg1[%c0_303, %c0_304, %c122] : memref<1x8x640xf32, #tpu.memory_space<vmem>>, vector<1x8x384xf32>
    %224 = vector.shape_cast %223 : vector<1x8x384xf32> to vector<8x384xf32>
    %c296 = arith.constant 296 : index
    %c0_305 = arith.constant 0 : index
    %225 = vector.load %arg11[%c296, %c0_305] : memref<392x768xf32, #tpu.memory_space<vmem>>, vector<8x384xf32>
    tpu.vector_store %arg11[%c296, %c0_305], %224 {strides = array<i32>} : memref<392x768xf32, #tpu.memory_space<vmem>>, vector<8x384xf32>,
    %c0_306 = arith.constant 0 : index
    %c0_307 = arith.constant 0 : index
    %c122_308 = arith.constant 122 : index
    %226 = vector.load %arg2[%c0_306, %c0_307, %c122_308] : memref<1x8x640xf32, #tpu.memory_space<vmem>>, vector<1x8x384xf32>
    %227 = vector.shape_cast %226 : vector<1x8x384xf32> to vector<8x384xf32>
    %c296_309 = arith.constant 296 : index
    %c384_310 = arith.constant 384 : index
    %228 = vector.load %arg11[%c296_309, %c384_310] : memref<392x768xf32, #tpu.memory_space<vmem>>, vector<8x384xf32>
    tpu.vector_store %arg11[%c296_309, %c384_310], %227 {strides = array<i32>} : memref<392x768xf32, #tpu.memory_space<vmem>>, vector<8x384xf32>,
    %c0_311 = arith.constant 0 : index
    %c0_312 = arith.constant 0 : index
    %c123 = arith.constant 123 : index
    %229 = vector.load %arg1[%c0_311, %c0_312, %c123] : memref<1x8x640xf32, #tpu.memory_space<vmem>>, vector<1x8x384xf32>
    %230 = vector.shape_cast %229 : vector<1x8x384xf32> to vector<8x384xf32>
    %c304 = arith.constant 304 : index
    %c0_313 = arith.constant 0 : index
    %231 = vector.load %arg11[%c304, %c0_313] : memref<392x768xf32, #tpu.memory_space<vmem>>, vector<8x384xf32>
    tpu.vector_store %arg11[%c304, %c0_313], %230 {strides = array<i32>} : memref<392x768xf32, #tpu.memory_space<vmem>>, vector<8x384xf32>,
    %c0_314 = arith.constant 0 : index
    %c0_315 = arith.constant 0 : index
    %c123_316 = arith.constant 123 : index
    %232 = vector.load %arg2[%c0_314, %c0_315, %c123_316] : memref<1x8x640xf32, #tpu.memory_space<vmem>>, vector<1x8x384xf32>
    %233 = vector.shape_cast %232 : vector<1x8x384xf32> to vector<8x384xf32>
    %c304_317 = arith.constant 304 : index
    %c384_318 = arith.constant 384 : index
    %234 = vector.load %arg11[%c304_317, %c384_318] : memref<392x768xf32, #tpu.memory_space<vmem>>, vector<8x384xf32>
    tpu.vector_store %arg11[%c304_317, %c384_318], %233 {strides = array<i32>} : memref<392x768xf32, #tpu.memory_space<vmem>>, vector<8x384xf32>,
    %c0_319 = arith.constant 0 : index
    %c0_320 = arith.constant 0 : index
    %c124 = arith.constant 124 : index
    %235 = vector.load %arg1[%c0_319, %c0_320, %c124] : memref<1x8x640xf32, #tpu.memory_space<vmem>>, vector<1x8x384xf32>
    %236 = vector.shape_cast %235 : vector<1x8x384xf32> to vector<8x384xf32>
    %c312 = arith.constant 312 : index
    %c0_321 = arith.constant 0 : index
    %237 = vector.load %arg11[%c312, %c0_321] : memref<392x768xf32, #tpu.memory_space<vmem>>, vector<8x384xf32>
    tpu.vector_store %arg11[%c312, %c0_321], %236 {strides = array<i32>} : memref<392x768xf32, #tpu.memory_space<vmem>>, vector<8x384xf32>,
    %c0_322 = arith.constant 0 : index
    %c0_323 = arith.constant 0 : index
    %c124_324 = arith.constant 124 : index
    %238 = vector.load %arg2[%c0_322, %c0_323, %c124_324] : memref<1x8x640xf32, #tpu.memory_space<vmem>>, vector<1x8x384xf32>
    %239 = vector.shape_cast %238 : vector<1x8x384xf32> to vector<8x384xf32>
    %c312_325 = arith.constant 312 : index
    %c384_326 = arith.constant 384 : index
    %240 = vector.load %arg11[%c312_325, %c384_326] : memref<392x768xf32, #tpu.memory_space<vmem>>, vector<8x384xf32>
    tpu.vector_store %arg11[%c312_325, %c384_326], %239 {strides = array<i32>} : memref<392x768xf32, #tpu.memory_space<vmem>>, vector<8x384xf32>,
    %c0_327 = arith.constant 0 : index
    %c0_328 = arith.constant 0 : index
    %c125 = arith.constant 125 : index
    %241 = vector.load %arg1[%c0_327, %c0_328, %c125] : memref<1x8x640xf32, #tpu.memory_space<vmem>>, vector<1x8x384xf32>
    %242 = vector.shape_cast %241 : vector<1x8x384xf32> to vector<8x384xf32>
    %c320 = arith.constant 320 : index
    %c0_329 = arith.constant 0 : index
    %243 = vector.load %arg11[%c320, %c0_329] : memref<392x768xf32, #tpu.memory_space<vmem>>, vector<8x384xf32>
    tpu.vector_store %arg11[%c320, %c0_329], %242 {strides = array<i32>} : memref<392x768xf32, #tpu.memory_space<vmem>>, vector<8x384xf32>,
    %c0_330 = arith.constant 0 : index
    %c0_331 = arith.constant 0 : index
    %c125_332 = arith.constant 125 : index
    %244 = vector.load %arg2[%c0_330, %c0_331, %c125_332] : memref<1x8x640xf32, #tpu.memory_space<vmem>>, vector<1x8x384xf32>
    %245 = vector.shape_cast %244 : vector<1x8x384xf32> to vector<8x384xf32>
    %c320_333 = arith.constant 320 : index
    %c384_334 = arith.constant 384 : index
    %246 = vector.load %arg11[%c320_333, %c384_334] : memref<392x768xf32, #tpu.memory_space<vmem>>, vector<8x384xf32>
    tpu.vector_store %arg11[%c320_333, %c384_334], %245 {strides = array<i32>} : memref<392x768xf32, #tpu.memory_space<vmem>>, vector<8x384xf32>,
    %c0_335 = arith.constant 0 : index
    %c0_336 = arith.constant 0 : index
    %c126 = arith.constant 126 : index
    %247 = vector.load %arg1[%c0_335, %c0_336, %c126] : memref<1x8x640xf32, #tpu.memory_space<vmem>>, vector<1x8x384xf32>
    %248 = vector.shape_cast %247 : vector<1x8x384xf32> to vector<8x384xf32>
    %c328 = arith.constant 328 : index
    %c0_337 = arith.constant 0 : index
    %249 = vector.load %arg11[%c328, %c0_337] : memref<392x768xf32, #tpu.memory_space<vmem>>, vector<8x384xf32>
    tpu.vector_store %arg11[%c328, %c0_337], %248 {strides = array<i32>} : memref<392x768xf32, #tpu.memory_space<vmem>>, vector<8x384xf32>,
    %c0_338 = arith.constant 0 : index
    %c0_339 = arith.constant 0 : index
    %c126_340 = arith.constant 126 : index
    %250 = vector.load %arg2[%c0_338, %c0_339, %c126_340] : memref<1x8x640xf32, #tpu.memory_space<vmem>>, vector<1x8x384xf32>
    %251 = vector.shape_cast %250 : vector<1x8x384xf32> to vector<8x384xf32>
    %c328_341 = arith.constant 328 : index
    %c384_342 = arith.constant 384 : index
    %252 = vector.load %arg11[%c328_341, %c384_342] : memref<392x768xf32, #tpu.memory_space<vmem>>, vector<8x384xf32>
    tpu.vector_store %arg11[%c328_341, %c384_342], %251 {strides = array<i32>} : memref<392x768xf32, #tpu.memory_space<vmem>>, vector<8x384xf32>,
    %c0_343 = arith.constant 0 : index
    %c0_344 = arith.constant 0 : index
    %c144_345 = arith.constant 144 : index
    %253 = vector.load %arg1[%c0_343, %c0_344, %c144_345] : memref<1x8x640xf32, #tpu.memory_space<vmem>>, vector<1x8x384xf32>
    %254 = vector.shape_cast %253 : vector<1x8x384xf32> to vector<8x384xf32>
    %c336 = arith.constant 336 : index
    %c0_346 = arith.constant 0 : index
    %255 = vector.load %arg11[%c336, %c0_346] : memref<392x768xf32, #tpu.memory_space<vmem>>, vector<8x384xf32>
    tpu.vector_store %arg11[%c336, %c0_346], %254 {strides = array<i32>} : memref<392x768xf32, #tpu.memory_space<vmem>>, vector<8x384xf32>,
    %c0_347 = arith.constant 0 : index
    %c0_348 = arith.constant 0 : index
    %c144_349 = arith.constant 144 : index
    %256 = vector.load %arg2[%c0_347, %c0_348, %c144_349] : memref<1x8x640xf32, #tpu.memory_space<vmem>>, vector<1x8x384xf32>
    %257 = vector.shape_cast %256 : vector<1x8x384xf32> to vector<8x384xf32>
    %c336_350 = arith.constant 336 : index
    %c384_351 = arith.constant 384 : index
    %258 = vector.load %arg11[%c336_350, %c384_351] : memref<392x768xf32, #tpu.memory_space<vmem>>, vector<8x384xf32>
    tpu.vector_store %arg11[%c336_350, %c384_351], %257 {strides = array<i32>} : memref<392x768xf32, #tpu.memory_space<vmem>>, vector<8x384xf32>,
    %c0_352 = arith.constant 0 : index
    %c0_353 = arith.constant 0 : index
    %c145 = arith.constant 145 : index
    %259 = vector.load %arg1[%c0_352, %c0_353, %c145] : memref<1x8x640xf32, #tpu.memory_space<vmem>>, vector<1x8x384xf32>
    %260 = vector.shape_cast %259 : vector<1x8x384xf32> to vector<8x384xf32>
    %c344 = arith.constant 344 : index
    %c0_354 = arith.constant 0 : index
    %261 = vector.load %arg11[%c344, %c0_354] : memref<392x768xf32, #tpu.memory_space<vmem>>, vector<8x384xf32>
    tpu.vector_store %arg11[%c344, %c0_354], %260 {strides = array<i32>} : memref<392x768xf32, #tpu.memory_space<vmem>>, vector<8x384xf32>,
    %c0_355 = arith.constant 0 : index
    %c0_356 = arith.constant 0 : index
    %c145_357 = arith.constant 145 : index
    %262 = vector.load %arg2[%c0_355, %c0_356, %c145_357] : memref<1x8x640xf32, #tpu.memory_space<vmem>>, vector<1x8x384xf32>
    %263 = vector.shape_cast %262 : vector<1x8x384xf32> to vector<8x384xf32>
    %c344_358 = arith.constant 344 : index
    %c384_359 = arith.constant 384 : index
    %264 = vector.load %arg11[%c344_358, %c384_359] : memref<392x768xf32, #tpu.memory_space<vmem>>, vector<8x384xf32>
    tpu.vector_store %arg11[%c344_358, %c384_359], %263 {strides = array<i32>} : memref<392x768xf32, #tpu.memory_space<vmem>>, vector<8x384xf32>,
    %c0_360 = arith.constant 0 : index
    %c0_361 = arith.constant 0 : index
    %c146 = arith.constant 146 : index
    %265 = vector.load %arg1[%c0_360, %c0_361, %c146] : memref<1x8x640xf32, #tpu.memory_space<vmem>>, vector<1x8x384xf32>
    %266 = vector.shape_cast %265 : vector<1x8x384xf32> to vector<8x384xf32>
    %c352 = arith.constant 352 : index
    %c0_362 = arith.constant 0 : index
    %267 = vector.load %arg11[%c352, %c0_362] : memref<392x768xf32, #tpu.memory_space<vmem>>, vector<8x384xf32>
    tpu.vector_store %arg11[%c352, %c0_362], %266 {strides = array<i32>} : memref<392x768xf32, #tpu.memory_space<vmem>>, vector<8x384xf32>,
    %c0_363 = arith.constant 0 : index
    %c0_364 = arith.constant 0 : index
    %c146_365 = arith.constant 146 : index
    %268 = vector.load %arg2[%c0_363, %c0_364, %c146_365] : memref<1x8x640xf32, #tpu.memory_space<vmem>>, vector<1x8x384xf32>
    %269 = vector.shape_cast %268 : vector<1x8x384xf32> to vector<8x384xf32>
    %c352_366 = arith.constant 352 : index
    %c384_367 = arith.constant 384 : index
    %270 = vector.load %arg11[%c352_366, %c384_367] : memref<392x768xf32, #tpu.memory_space<vmem>>, vector<8x384xf32>
    tpu.vector_store %arg11[%c352_366, %c384_367], %269 {strides = array<i32>} : memref<392x768xf32, #tpu.memory_space<vmem>>, vector<8x384xf32>,
    %c0_368 = arith.constant 0 : index
    %c0_369 = arith.constant 0 : index
    %c147 = arith.constant 147 : index
    %271 = vector.load %arg1[%c0_368, %c0_369, %c147] : memref<1x8x640xf32, #tpu.memory_space<vmem>>, vector<1x8x384xf32>
    %272 = vector.shape_cast %271 : vector<1x8x384xf32> to vector<8x384xf32>
    %c360 = arith.constant 360 : index
    %c0_370 = arith.constant 0 : index
    %273 = vector.load %arg11[%c360, %c0_370] : memref<392x768xf32, #tpu.memory_space<vmem>>, vector<8x384xf32>
    tpu.vector_store %arg11[%c360, %c0_370], %272 {strides = array<i32>} : memref<392x768xf32, #tpu.memory_space<vmem>>, vector<8x384xf32>,
    %c0_371 = arith.constant 0 : index
    %c0_372 = arith.constant 0 : index
    %c147_373 = arith.constant 147 : index
    %274 = vector.load %arg2[%c0_371, %c0_372, %c147_373] : memref<1x8x640xf32, #tpu.memory_space<vmem>>, vector<1x8x384xf32>
    %275 = vector.shape_cast %274 : vector<1x8x384xf32> to vector<8x384xf32>
    %c360_374 = arith.constant 360 : index
    %c384_375 = arith.constant 384 : index
    %276 = vector.load %arg11[%c360_374, %c384_375] : memref<392x768xf32, #tpu.memory_space<vmem>>, vector<8x384xf32>
    tpu.vector_store %arg11[%c360_374, %c384_375], %275 {strides = array<i32>} : memref<392x768xf32, #tpu.memory_space<vmem>>, vector<8x384xf32>,
    %c0_376 = arith.constant 0 : index
    %c0_377 = arith.constant 0 : index
    %c148 = arith.constant 148 : index
    %277 = vector.load %arg1[%c0_376, %c0_377, %c148] : memref<1x8x640xf32, #tpu.memory_space<vmem>>, vector<1x8x384xf32>
    %278 = vector.shape_cast %277 : vector<1x8x384xf32> to vector<8x384xf32>
    %c368 = arith.constant 368 : index
    %c0_378 = arith.constant 0 : index
    %279 = vector.load %arg11[%c368, %c0_378] : memref<392x768xf32, #tpu.memory_space<vmem>>, vector<8x384xf32>
    tpu.vector_store %arg11[%c368, %c0_378], %278 {strides = array<i32>} : memref<392x768xf32, #tpu.memory_space<vmem>>, vector<8x384xf32>,
    %c0_379 = arith.constant 0 : index
    %c0_380 = arith.constant 0 : index
    %c148_381 = arith.constant 148 : index
    %280 = vector.load %arg2[%c0_379, %c0_380, %c148_381] : memref<1x8x640xf32, #tpu.memory_space<vmem>>, vector<1x8x384xf32>
    %281 = vector.shape_cast %280 : vector<1x8x384xf32> to vector<8x384xf32>
    %c368_382 = arith.constant 368 : index
    %c384_383 = arith.constant 384 : index
    %282 = vector.load %arg11[%c368_382, %c384_383] : memref<392x768xf32, #tpu.memory_space<vmem>>, vector<8x384xf32>
    tpu.vector_store %arg11[%c368_382, %c384_383], %281 {strides = array<i32>} : memref<392x768xf32, #tpu.memory_space<vmem>>, vector<8x384xf32>,
    %c0_384 = arith.constant 0 : index
    %c0_385 = arith.constant 0 : index
    %c149 = arith.constant 149 : index
    %283 = vector.load %arg1[%c0_384, %c0_385, %c149] : memref<1x8x640xf32, #tpu.memory_space<vmem>>, vector<1x8x384xf32>
    %284 = vector.shape_cast %283 : vector<1x8x384xf32> to vector<8x384xf32>
    %c376 = arith.constant 376 : index
    %c0_386 = arith.constant 0 : index
    %285 = vector.load %arg11[%c376, %c0_386] : memref<392x768xf32, #tpu.memory_space<vmem>>, vector<8x384xf32>
    tpu.vector_store %arg11[%c376, %c0_386], %284 {strides = array<i32>} : memref<392x768xf32, #tpu.memory_space<vmem>>, vector<8x384xf32>,
    %c0_387 = arith.constant 0 : index
    %c0_388 = arith.constant 0 : index
    %c149_389 = arith.constant 149 : index
    %286 = vector.load %arg2[%c0_387, %c0_388, %c149_389] : memref<1x8x640xf32, #tpu.memory_space<vmem>>, vector<1x8x384xf32>
    %287 = vector.shape_cast %286 : vector<1x8x384xf32> to vector<8x384xf32>
    %c376_390 = arith.constant 376 : index
    %c384_391 = arith.constant 384 : index
    %288 = vector.load %arg11[%c376_390, %c384_391] : memref<392x768xf32, #tpu.memory_space<vmem>>, vector<8x384xf32>
    tpu.vector_store %arg11[%c376_390, %c384_391], %287 {strides = array<i32>} : memref<392x768xf32, #tpu.memory_space<vmem>>, vector<8x384xf32>,
    %c0_392 = arith.constant 0 : index
    %c0_393 = arith.constant 0 : index
    %c150 = arith.constant 150 : index
    %289 = vector.load %arg1[%c0_392, %c0_393, %c150] : memref<1x8x640xf32, #tpu.memory_space<vmem>>, vector<1x8x384xf32>
    %290 = vector.shape_cast %289 : vector<1x8x384xf32> to vector<8x384xf32>
    %c384_394 = arith.constant 384 : index
    %c0_395 = arith.constant 0 : index
    %291 = vector.load %arg11[%c384_394, %c0_395] : memref<392x768xf32, #tpu.memory_space<vmem>>, vector<8x384xf32>
    tpu.vector_store %arg11[%c384_394, %c0_395], %290 {strides = array<i32>} : memref<392x768xf32, #tpu.memory_space<vmem>>, vector<8x384xf32>,
    %c0_396 = arith.constant 0 : index
    %c0_397 = arith.constant 0 : index
    %c150_398 = arith.constant 150 : index
    %292 = vector.load %arg2[%c0_396, %c0_397, %c150_398] : memref<1x8x640xf32, #tpu.memory_space<vmem>>, vector<1x8x384xf32>
    %293 = vector.shape_cast %292 : vector<1x8x384xf32> to vector<8x384xf32>
    %c384_399 = arith.constant 384 : index
    %c384_400 = arith.constant 384 : index
    %294 = vector.load %arg11[%c384_399, %c384_400] : memref<392x768xf32, #tpu.memory_space<vmem>>, vector<8x384xf32>
    tpu.vector_store %arg11[%c384_399, %c384_400], %293 {strides = array<i32>} : memref<392x768xf32, #tpu.memory_space<vmem>>, vector<8x384xf32>,
    %c0_401 = arith.constant 0 : index
    %c0_402 = arith.constant 0 : index
    %295 = vector.load %arg3[%c0_401, %c0_402] : memref<24x392xf32, #tpu.memory_space<vmem>>, vector<24x392xf32>
    %c0_403 = arith.constant 0 : index
    %c0_404 = arith.constant 0 : index
    %296 = vector.load %arg11[%c0_403, %c0_404] : memref<392x768xf32, #tpu.memory_space<vmem>>, vector<392x768xf32>
    %cst = arith.constant dense<0.000000e+00> : vector<24x768xf32>
    %297 = tpu.matmul %295, %296, %cst {dimension_numbers = #tpu.dot_dimension_numbers<[1], [0], [0], [1], [0, 0, 1, 1], [], []>} : vector<24x392xf32>, vector<392x768xf32>, vector<24x768xf32> -> vector<24x768xf32>
    %c0_405 = arith.constant 0 : index
    %c0_406 = arith.constant 0 : index
    %298 = vector.load %arg4[%c0_405, %c0_406] : memref<24x1xf32, #tpu.memory_space<vmem>>, vector<24x1xf32>
    %299 = vector.broadcast %298 : vector<24x1xf32> to vector<24x768xf32>
    %300 = arith.addf %297, %299 : vector<24x768xf32>
    %301 = vector.extract_strided_slice %300 {offsets = [0, 0], sizes = [8, 768], strides = [1, 1]} : vector<24x768xf32> to vector<8x768xf32>
    %cst_407 = arith.constant 0.000000e+00 : f32
    %302 = vector.broadcast %cst_407 : f32 to vector<8x768xf32>
    %303 = arith.maximumf %301, %302 : vector<8x768xf32>
    %304 = vector.extract_strided_slice %300 {offsets = [8, 0], sizes = [8, 768], strides = [1, 1]} : vector<24x768xf32> to vector<8x768xf32>
    %cst_408 = arith.constant 0.000000e+00 : f32
    %305 = vector.broadcast %cst_408 : f32 to vector<8x768xf32>
    %306 = arith.maximumf %304, %305 : vector<8x768xf32>
    %307 = arith.addf %303, %306 : vector<8x768xf32>
    %308 = vector.extract_strided_slice %300 {offsets = [16, 0], sizes = [8, 768], strides = [1, 1]} : vector<24x768xf32> to vector<8x768xf32>
    %cst_409 = arith.constant 0.000000e+00 : f32
    %309 = vector.broadcast %cst_409 : f32 to vector<8x768xf32>
    %310 = arith.maximumf %308, %309 : vector<8x768xf32>
    %311 = arith.addf %307, %310 : vector<8x768xf32>
    %312 = vector.broadcast %0 : vector<1x768xf32> to vector<8x768xf32>
    %313 = arith.mulf %311, %312 : vector<8x768xf32>
    %314 = vector.extract_strided_slice %313 {offsets = [0, 0], sizes = [8, 384], strides = [1, 1]} : vector<8x768xf32> to vector<8x384xf32>
    %315 = vector.extract_strided_slice %313 {offsets = [0, 384], sizes = [8, 384], strides = [1, 1]} : vector<8x768xf32> to vector<8x384xf32>
    %cst_410 = arith.constant dense<0.000000e+00> : vector<8xf32>
    %316 = vector.multi_reduction <add>, %314, %cst_410 [1] : vector<8x384xf32> to vector<8xf32>
    %317 = vector.shape_cast %316 : vector<8xf32> to vector<8x1xf32>
    %cst_411 = arith.constant 3.906250e-03 : f32
    %318 = vector.broadcast %cst_411 : f32 to vector<8x1xf32>
    %319 = arith.mulf %317, %318 : vector<8x1xf32>
    %cst_412 = arith.constant dense<0xFF800000> : vector<8xf32>
    %320 = vector.multi_reduction <maximumf>, %314, %cst_412 [1] : vector<8x384xf32> to vector<8xf32>
    %321 = vector.shape_cast %320 : vector<8xf32> to vector<8x1xf32>
    %cst_413 = arith.constant dense<0.000000e+00> : vector<8xf32>
    %322 = vector.multi_reduction <add>, %315, %cst_413 [1] : vector<8x384xf32> to vector<8xf32>
    %323 = vector.shape_cast %322 : vector<8xf32> to vector<8x1xf32>
    %cst_414 = arith.constant 3.906250e-03 : f32
    %324 = vector.broadcast %cst_414 : f32 to vector<8x1xf32>
    %325 = arith.mulf %323, %324 : vector<8x1xf32>
    %cst_415 = arith.constant dense<0xFF800000> : vector<8xf32>
    %326 = vector.multi_reduction <maximumf>, %315, %cst_415 [1] : vector<8x384xf32> to vector<8xf32>
    %327 = vector.shape_cast %326 : vector<8xf32> to vector<8x1xf32>
    %328 = tpu.concatenate %319, %321, %325, %327 in 0 : vector<8x1xf32>, vector<8x1xf32>, vector<8x1xf32>, vector<8x1xf32> -> vector<32x1xf32>
    %c0_416 = arith.constant 0 : index
    %c0_417 = arith.constant 0 : index
    %329 = vector.load %arg7[%c0_416, %c0_417] : memref<16x32xf32, #tpu.memory_space<vmem>>, vector<16x32xf32>
    %cst_418 = arith.constant dense<0.000000e+00> : vector<16x1xf32>
    %330 = tpu.matmul %329, %328, %cst_418 {dimension_numbers = #tpu.dot_dimension_numbers<[1], [0], [0], [1], [0, 0, 1, 1], [], []>} : vector<16x32xf32>, vector<32x1xf32>, vector<16x1xf32> -> vector<16x1xf32>
    %c0_419 = arith.constant 0 : index
    %c0_420 = arith.constant 0 : index
    %331 = vector.load %arg8[%c0_419, %c0_420] : memref<16x1xf32, #tpu.memory_space<vmem>>, vector<16x1xf32>
    %332 = arith.addf %330, %331 : vector<16x1xf32>
    %333 = vector.extract_strided_slice %332 {offsets = [0, 0], sizes = [8, 1], strides = [1, 1]} : vector<16x1xf32> to vector<8x1xf32>
    %334 = vector.extract_strided_slice %332 {offsets = [8, 0], sizes = [8, 1], strides = [1, 1]} : vector<16x1xf32> to vector<8x1xf32>
    %335 = arith.maximumf %333, %334 : vector<8x1xf32>
    %336 = arith.subf %333, %335 : vector<8x1xf32>
    %337 = math.exp %336 : vector<8x1xf32>
    %338 = arith.subf %334, %335 : vector<8x1xf32>
    %339 = math.exp %338 : vector<8x1xf32>
    %340 = arith.addf %337, %339 : vector<8x1xf32>
    %341 = tpu.reciprocal %340 {approx = true} : vector<8x1xf32> -> vector<8x1xf32>
    %342 = arith.mulf %337, %341 : vector<8x1xf32>
    %343 = arith.mulf %339, %341 : vector<8x1xf32>
    %cst_421 = arith.constant dense<0.000000e+00> : vector<768xf32>
    %344 = vector.multi_reduction <add>, %313, %cst_421 [0] : vector<8x768xf32> to vector<768xf32>
    %345 = vector.shape_cast %344 : vector<768xf32> to vector<1x768xf32>
    %cst_422 = arith.constant 8.000000e+00 : f32
    %346 = vector.broadcast %cst_422 : f32 to vector<1x768xf32>
    %347 = arith.divf %345, %346 : vector<1x768xf32>
    %cst_423 = arith.constant dense<0xFF800000> : vector<768xf32>
    %348 = vector.multi_reduction <maximumf>, %313, %cst_423 [0] : vector<8x768xf32> to vector<768xf32>
    %349 = vector.shape_cast %348 : vector<768xf32> to vector<1x768xf32>
    %350 = vector.extract_strided_slice %347 {offsets = [0, 0], sizes = [1, 384], strides = [1, 1]} : vector<1x768xf32> to vector<1x384xf32>
    %351 = vector.extract_strided_slice %349 {offsets = [0, 0], sizes = [1, 384], strides = [1, 1]} : vector<1x768xf32> to vector<1x384xf32>
    %352 = vector.extract_strided_slice %347 {offsets = [0, 384], sizes = [1, 384], strides = [1, 1]} : vector<1x768xf32> to vector<1x384xf32>
    %353 = vector.extract_strided_slice %349 {offsets = [0, 384], sizes = [1, 384], strides = [1, 1]} : vector<1x768xf32> to vector<1x384xf32>
    %354 = tpu.concatenate %350, %351, %352, %353 in 0 : vector<1x384xf32>, vector<1x384xf32>, vector<1x384xf32>, vector<1x384xf32> -> vector<4x384xf32>
    %cst_424 = arith.constant 0.000000e+00 : f32
    %355 = vector.broadcast %cst_424 : f32 to vector<4x75xf32>
    %cst_425 = arith.constant 0.000000e+00 : f32
    %356 = vector.broadcast %cst_425 : f32 to vector<4x181xf32>
    %357 = tpu.concatenate %355, %354, %356 in 1 : vector<4x75xf32>, vector<4x384xf32>, vector<4x181xf32> -> vector<4x640xf32>
    %358 = vector.extract_strided_slice %357 {offsets = [0, 0], sizes = [4, 384], strides = [1, 1]} : vector<4x640xf32> to vector<4x384xf32>
    %c0_426 = arith.constant 0 : index
    %c0_427 = arith.constant 0 : index
    %359 = vector.load %arg12[%c0_426, %c0_427] : memref<200x384xf32, #tpu.memory_space<vmem>>, vector<4x384xf32>
    tpu.vector_store %arg12[%c0_426, %c0_427], %358 {strides = array<i32>} : memref<200x384xf32, #tpu.memory_space<vmem>>, vector<4x384xf32>,
    %360 = vector.extract_strided_slice %357 {offsets = [0, 1], sizes = [4, 384], strides = [1, 1]} : vector<4x640xf32> to vector<4x384xf32>
    %c4_428 = arith.constant 4 : index
    %c0_429 = arith.constant 0 : index
    %361 = vector.load %arg12[%c4_428, %c0_429] : memref<200x384xf32, #tpu.memory_space<vmem>>, vector<4x384xf32>
    tpu.vector_store %arg12[%c4_428, %c0_429], %360 {strides = array<i32>} : memref<200x384xf32, #tpu.memory_space<vmem>>, vector<4x384xf32>,
    %362 = vector.extract_strided_slice %357 {offsets = [0, 2], sizes = [4, 384], strides = [1, 1]} : vector<4x640xf32> to vector<4x384xf32>
    %c8_430 = arith.constant 8 : index
    %c0_431 = arith.constant 0 : index
    %363 = vector.load %arg12[%c8_430, %c0_431] : memref<200x384xf32, #tpu.memory_space<vmem>>, vector<4x384xf32>
    tpu.vector_store %arg12[%c8_430, %c0_431], %362 {strides = array<i32>} : memref<200x384xf32, #tpu.memory_space<vmem>>, vector<4x384xf32>,
    %364 = vector.extract_strided_slice %357 {offsets = [0, 3], sizes = [4, 384], strides = [1, 1]} : vector<4x640xf32> to vector<4x384xf32>
    %c12 = arith.constant 12 : index
    %c0_432 = arith.constant 0 : index
    %365 = vector.load %arg12[%c12, %c0_432] : memref<200x384xf32, #tpu.memory_space<vmem>>, vector<4x384xf32>
    tpu.vector_store %arg12[%c12, %c0_432], %364 {strides = array<i32>} : memref<200x384xf32, #tpu.memory_space<vmem>>, vector<4x384xf32>,
    %366 = vector.extract_strided_slice %357 {offsets = [0, 4], sizes = [4, 384], strides = [1, 1]} : vector<4x640xf32> to vector<4x384xf32>
    %c16_433 = arith.constant 16 : index
    %c0_434 = arith.constant 0 : index
    %367 = vector.load %arg12[%c16_433, %c0_434] : memref<200x384xf32, #tpu.memory_space<vmem>>, vector<4x384xf32>
    tpu.vector_store %arg12[%c16_433, %c0_434], %366 {strides = array<i32>} : memref<200x384xf32, #tpu.memory_space<vmem>>, vector<4x384xf32>,
    %368 = vector.extract_strided_slice %357 {offsets = [0, 5], sizes = [4, 384], strides = [1, 1]} : vector<4x640xf32> to vector<4x384xf32>
    %c20 = arith.constant 20 : index
    %c0_435 = arith.constant 0 : index
    %369 = vector.load %arg12[%c20, %c0_435] : memref<200x384xf32, #tpu.memory_space<vmem>>, vector<4x384xf32>
    tpu.vector_store %arg12[%c20, %c0_435], %368 {strides = array<i32>} : memref<200x384xf32, #tpu.memory_space<vmem>>, vector<4x384xf32>,
    %370 = vector.extract_strided_slice %357 {offsets = [0, 6], sizes = [4, 384], strides = [1, 1]} : vector<4x640xf32> to vector<4x384xf32>
    %c24_436 = arith.constant 24 : index
    %c0_437 = arith.constant 0 : index
    %371 = vector.load %arg12[%c24_436, %c0_437] : memref<200x384xf32, #tpu.memory_space<vmem>>, vector<4x384xf32>
    tpu.vector_store %arg12[%c24_436, %c0_437], %370 {strides = array<i32>} : memref<200x384xf32, #tpu.memory_space<vmem>>, vector<4x384xf32>,
    %372 = vector.extract_strided_slice %357 {offsets = [0, 24], sizes = [4, 384], strides = [1, 1]} : vector<4x640xf32> to vector<4x384xf32>
    %c28_438 = arith.constant 28 : index
    %c0_439 = arith.constant 0 : index
    %373 = vector.load %arg12[%c28_438, %c0_439] : memref<200x384xf32, #tpu.memory_space<vmem>>, vector<4x384xf32>
    tpu.vector_store %arg12[%c28_438, %c0_439], %372 {strides = array<i32>} : memref<200x384xf32, #tpu.memory_space<vmem>>, vector<4x384xf32>,
    %374 = vector.extract_strided_slice %357 {offsets = [0, 25], sizes = [4, 384], strides = [1, 1]} : vector<4x640xf32> to vector<4x384xf32>
    %c32_440 = arith.constant 32 : index
    %c0_441 = arith.constant 0 : index
    %375 = vector.load %arg12[%c32_440, %c0_441] : memref<200x384xf32, #tpu.memory_space<vmem>>, vector<4x384xf32>
    tpu.vector_store %arg12[%c32_440, %c0_441], %374 {strides = array<i32>} : memref<200x384xf32, #tpu.memory_space<vmem>>, vector<4x384xf32>,
    %376 = vector.extract_strided_slice %357 {offsets = [0, 26], sizes = [4, 384], strides = [1, 1]} : vector<4x640xf32> to vector<4x384xf32>
    %c36 = arith.constant 36 : index
    %c0_442 = arith.constant 0 : index
    %377 = vector.load %arg12[%c36, %c0_442] : memref<200x384xf32, #tpu.memory_space<vmem>>, vector<4x384xf32>
    tpu.vector_store %arg12[%c36, %c0_442], %376 {strides = array<i32>} : memref<200x384xf32, #tpu.memory_space<vmem>>, vector<4x384xf32>,
    %378 = vector.extract_strided_slice %357 {offsets = [0, 27], sizes = [4, 384], strides = [1, 1]} : vector<4x640xf32> to vector<4x384xf32>
    %c40_443 = arith.constant 40 : index
    %c0_444 = arith.constant 0 : index
    %379 = vector.load %arg12[%c40_443, %c0_444] : memref<200x384xf32, #tpu.memory_space<vmem>>, vector<4x384xf32>
    tpu.vector_store %arg12[%c40_443, %c0_444], %378 {strides = array<i32>} : memref<200x384xf32, #tpu.memory_space<vmem>>, vector<4x384xf32>,
    %380 = vector.extract_strided_slice %357 {offsets = [0, 28], sizes = [4, 384], strides = [1, 1]} : vector<4x640xf32> to vector<4x384xf32>
    %c44 = arith.constant 44 : index
    %c0_445 = arith.constant 0 : index
    %381 = vector.load %arg12[%c44, %c0_445] : memref<200x384xf32, #tpu.memory_space<vmem>>, vector<4x384xf32>
    tpu.vector_store %arg12[%c44, %c0_445], %380 {strides = array<i32>} : memref<200x384xf32, #tpu.memory_space<vmem>>, vector<4x384xf32>,
    %382 = vector.extract_strided_slice %357 {offsets = [0, 29], sizes = [4, 384], strides = [1, 1]} : vector<4x640xf32> to vector<4x384xf32>
    %c48_446 = arith.constant 48 : index
    %c0_447 = arith.constant 0 : index
    %383 = vector.load %arg12[%c48_446, %c0_447] : memref<200x384xf32, #tpu.memory_space<vmem>>, vector<4x384xf32>
    tpu.vector_store %arg12[%c48_446, %c0_447], %382 {strides = array<i32>} : memref<200x384xf32, #tpu.memory_space<vmem>>, vector<4x384xf32>,
    %384 = vector.extract_strided_slice %357 {offsets = [0, 30], sizes = [4, 384], strides = [1, 1]} : vector<4x640xf32> to vector<4x384xf32>
    %c52_448 = arith.constant 52 : index
    %c0_449 = arith.constant 0 : index
    %385 = vector.load %arg12[%c52_448, %c0_449] : memref<200x384xf32, #tpu.memory_space<vmem>>, vector<4x384xf32>
    tpu.vector_store %arg12[%c52_448, %c0_449], %384 {strides = array<i32>} : memref<200x384xf32, #tpu.memory_space<vmem>>, vector<4x384xf32>,
    %386 = vector.extract_strided_slice %357 {offsets = [0, 48], sizes = [4, 384], strides = [1, 1]} : vector<4x640xf32> to vector<4x384xf32>
    %c56_450 = arith.constant 56 : index
    %c0_451 = arith.constant 0 : index
    %387 = vector.load %arg12[%c56_450, %c0_451] : memref<200x384xf32, #tpu.memory_space<vmem>>, vector<4x384xf32>
    tpu.vector_store %arg12[%c56_450, %c0_451], %386 {strides = array<i32>} : memref<200x384xf32, #tpu.memory_space<vmem>>, vector<4x384xf32>,
    %388 = vector.extract_strided_slice %357 {offsets = [0, 49], sizes = [4, 384], strides = [1, 1]} : vector<4x640xf32> to vector<4x384xf32>
    %c60 = arith.constant 60 : index
    %c0_452 = arith.constant 0 : index
    %389 = vector.load %arg12[%c60, %c0_452] : memref<200x384xf32, #tpu.memory_space<vmem>>, vector<4x384xf32>
    tpu.vector_store %arg12[%c60, %c0_452], %388 {strides = array<i32>} : memref<200x384xf32, #tpu.memory_space<vmem>>, vector<4x384xf32>,
    %390 = vector.extract_strided_slice %357 {offsets = [0, 50], sizes = [4, 384], strides = [1, 1]} : vector<4x640xf32> to vector<4x384xf32>
    %c64_453 = arith.constant 64 : index
    %c0_454 = arith.constant 0 : index
    %391 = vector.load %arg12[%c64_453, %c0_454] : memref<200x384xf32, #tpu.memory_space<vmem>>, vector<4x384xf32>
    tpu.vector_store %arg12[%c64_453, %c0_454], %390 {strides = array<i32>} : memref<200x384xf32, #tpu.memory_space<vmem>>, vector<4x384xf32>,
    %392 = vector.extract_strided_slice %357 {offsets = [0, 51], sizes = [4, 384], strides = [1, 1]} : vector<4x640xf32> to vector<4x384xf32>
    %c68 = arith.constant 68 : index
    %c0_455 = arith.constant 0 : index
    %393 = vector.load %arg12[%c68, %c0_455] : memref<200x384xf32, #tpu.memory_space<vmem>>, vector<4x384xf32>
    tpu.vector_store %arg12[%c68, %c0_455], %392 {strides = array<i32>} : memref<200x384xf32, #tpu.memory_space<vmem>>, vector<4x384xf32>,
    %394 = vector.extract_strided_slice %357 {offsets = [0, 52], sizes = [4, 384], strides = [1, 1]} : vector<4x640xf32> to vector<4x384xf32>
    %c72_456 = arith.constant 72 : index
    %c0_457 = arith.constant 0 : index
    %395 = vector.load %arg12[%c72_456, %c0_457] : memref<200x384xf32, #tpu.memory_space<vmem>>, vector<4x384xf32>
    tpu.vector_store %arg12[%c72_456, %c0_457], %394 {strides = array<i32>} : memref<200x384xf32, #tpu.memory_space<vmem>>, vector<4x384xf32>,
    %396 = vector.extract_strided_slice %357 {offsets = [0, 53], sizes = [4, 384], strides = [1, 1]} : vector<4x640xf32> to vector<4x384xf32>
    %c76_458 = arith.constant 76 : index
    %c0_459 = arith.constant 0 : index
    %397 = vector.load %arg12[%c76_458, %c0_459] : memref<200x384xf32, #tpu.memory_space<vmem>>, vector<4x384xf32>
    tpu.vector_store %arg12[%c76_458, %c0_459], %396 {strides = array<i32>} : memref<200x384xf32, #tpu.memory_space<vmem>>, vector<4x384xf32>,
    %398 = vector.extract_strided_slice %357 {offsets = [0, 54], sizes = [4, 384], strides = [1, 1]} : vector<4x640xf32> to vector<4x384xf32>
    %c80_460 = arith.constant 80 : index
    %c0_461 = arith.constant 0 : index
    %399 = vector.load %arg12[%c80_460, %c0_461] : memref<200x384xf32, #tpu.memory_space<vmem>>, vector<4x384xf32>
    tpu.vector_store %arg12[%c80_460, %c0_461], %398 {strides = array<i32>} : memref<200x384xf32, #tpu.memory_space<vmem>>, vector<4x384xf32>,
    %400 = vector.extract_strided_slice %357 {offsets = [0, 72], sizes = [4, 384], strides = [1, 1]} : vector<4x640xf32> to vector<4x384xf32>
    %c84 = arith.constant 84 : index
    %c0_462 = arith.constant 0 : index
    %401 = vector.load %arg12[%c84, %c0_462] : memref<200x384xf32, #tpu.memory_space<vmem>>, vector<4x384xf32>
    tpu.vector_store %arg12[%c84, %c0_462], %400 {strides = array<i32>} : memref<200x384xf32, #tpu.memory_space<vmem>>, vector<4x384xf32>,
    %402 = vector.extract_strided_slice %357 {offsets = [0, 73], sizes = [4, 384], strides = [1, 1]} : vector<4x640xf32> to vector<4x384xf32>
    %c88_463 = arith.constant 88 : index
    %c0_464 = arith.constant 0 : index
    %403 = vector.load %arg12[%c88_463, %c0_464] : memref<200x384xf32, #tpu.memory_space<vmem>>, vector<4x384xf32>
    tpu.vector_store %arg12[%c88_463, %c0_464], %402 {strides = array<i32>} : memref<200x384xf32, #tpu.memory_space<vmem>>, vector<4x384xf32>,
    %404 = vector.extract_strided_slice %357 {offsets = [0, 74], sizes = [4, 384], strides = [1, 1]} : vector<4x640xf32> to vector<4x384xf32>
    %c92 = arith.constant 92 : index
    %c0_465 = arith.constant 0 : index
    %405 = vector.load %arg12[%c92, %c0_465] : memref<200x384xf32, #tpu.memory_space<vmem>>, vector<4x384xf32>
    tpu.vector_store %arg12[%c92, %c0_465], %404 {strides = array<i32>} : memref<200x384xf32, #tpu.memory_space<vmem>>, vector<4x384xf32>,
    %406 = vector.extract_strided_slice %357 {offsets = [0, 75], sizes = [4, 384], strides = [1, 1]} : vector<4x640xf32> to vector<4x384xf32>
    %c96_466 = arith.constant 96 : index
    %c0_467 = arith.constant 0 : index
    %407 = vector.load %arg12[%c96_466, %c0_467] : memref<200x384xf32, #tpu.memory_space<vmem>>, vector<4x384xf32>
    tpu.vector_store %arg12[%c96_466, %c0_467], %406 {strides = array<i32>} : memref<200x384xf32, #tpu.memory_space<vmem>>, vector<4x384xf32>,
    %408 = vector.extract_strided_slice %357 {offsets = [0, 76], sizes = [4, 384], strides = [1, 1]} : vector<4x640xf32> to vector<4x384xf32>
    %c100_468 = arith.constant 100 : index
    %c0_469 = arith.constant 0 : index
    %409 = vector.load %arg12[%c100_468, %c0_469] : memref<200x384xf32, #tpu.memory_space<vmem>>, vector<4x384xf32>
    tpu.vector_store %arg12[%c100_468, %c0_469], %408 {strides = array<i32>} : memref<200x384xf32, #tpu.memory_space<vmem>>, vector<4x384xf32>,
    %410 = vector.extract_strided_slice %357 {offsets = [0, 77], sizes = [4, 384], strides = [1, 1]} : vector<4x640xf32> to vector<4x384xf32>
    %c104_470 = arith.constant 104 : index
    %c0_471 = arith.constant 0 : index
    %411 = vector.load %arg12[%c104_470, %c0_471] : memref<200x384xf32, #tpu.memory_space<vmem>>, vector<4x384xf32>
    tpu.vector_store %arg12[%c104_470, %c0_471], %410 {strides = array<i32>} : memref<200x384xf32, #tpu.memory_space<vmem>>, vector<4x384xf32>,
    %412 = vector.extract_strided_slice %357 {offsets = [0, 78], sizes = [4, 384], strides = [1, 1]} : vector<4x640xf32> to vector<4x384xf32>
    %c108 = arith.constant 108 : index
    %c0_472 = arith.constant 0 : index
    %413 = vector.load %arg12[%c108, %c0_472] : memref<200x384xf32, #tpu.memory_space<vmem>>, vector<4x384xf32>
    tpu.vector_store %arg12[%c108, %c0_472], %412 {strides = array<i32>} : memref<200x384xf32, #tpu.memory_space<vmem>>, vector<4x384xf32>,
    %414 = vector.extract_strided_slice %357 {offsets = [0, 96], sizes = [4, 384], strides = [1, 1]} : vector<4x640xf32> to vector<4x384xf32>
    %c112_473 = arith.constant 112 : index
    %c0_474 = arith.constant 0 : index
    %415 = vector.load %arg12[%c112_473, %c0_474] : memref<200x384xf32, #tpu.memory_space<vmem>>, vector<4x384xf32>
    tpu.vector_store %arg12[%c112_473, %c0_474], %414 {strides = array<i32>} : memref<200x384xf32, #tpu.memory_space<vmem>>, vector<4x384xf32>,
    %416 = vector.extract_strided_slice %357 {offsets = [0, 97], sizes = [4, 384], strides = [1, 1]} : vector<4x640xf32> to vector<4x384xf32>
    %c116 = arith.constant 116 : index
    %c0_475 = arith.constant 0 : index
    %417 = vector.load %arg12[%c116, %c0_475] : memref<200x384xf32, #tpu.memory_space<vmem>>, vector<4x384xf32>
    tpu.vector_store %arg12[%c116, %c0_475], %416 {strides = array<i32>} : memref<200x384xf32, #tpu.memory_space<vmem>>, vector<4x384xf32>,
    %418 = vector.extract_strided_slice %357 {offsets = [0, 98], sizes = [4, 384], strides = [1, 1]} : vector<4x640xf32> to vector<4x384xf32>
    %c120_476 = arith.constant 120 : index
    %c0_477 = arith.constant 0 : index
    %419 = vector.load %arg12[%c120_476, %c0_477] : memref<200x384xf32, #tpu.memory_space<vmem>>, vector<4x384xf32>
    tpu.vector_store %arg12[%c120_476, %c0_477], %418 {strides = array<i32>} : memref<200x384xf32, #tpu.memory_space<vmem>>, vector<4x384xf32>,
    %420 = vector.extract_strided_slice %357 {offsets = [0, 99], sizes = [4, 384], strides = [1, 1]} : vector<4x640xf32> to vector<4x384xf32>
    %c124_478 = arith.constant 124 : index
    %c0_479 = arith.constant 0 : index
    %421 = vector.load %arg12[%c124_478, %c0_479] : memref<200x384xf32, #tpu.memory_space<vmem>>, vector<4x384xf32>
    tpu.vector_store %arg12[%c124_478, %c0_479], %420 {strides = array<i32>} : memref<200x384xf32, #tpu.memory_space<vmem>>, vector<4x384xf32>,
    %422 = vector.extract_strided_slice %357 {offsets = [0, 100], sizes = [4, 384], strides = [1, 1]} : vector<4x640xf32> to vector<4x384xf32>
    %c128_480 = arith.constant 128 : index
    %c0_481 = arith.constant 0 : index
    %423 = vector.load %arg12[%c128_480, %c0_481] : memref<200x384xf32, #tpu.memory_space<vmem>>, vector<4x384xf32>
    tpu.vector_store %arg12[%c128_480, %c0_481], %422 {strides = array<i32>} : memref<200x384xf32, #tpu.memory_space<vmem>>, vector<4x384xf32>,
    %424 = vector.extract_strided_slice %357 {offsets = [0, 101], sizes = [4, 384], strides = [1, 1]} : vector<4x640xf32> to vector<4x384xf32>
    %c132 = arith.constant 132 : index
    %c0_482 = arith.constant 0 : index
    %425 = vector.load %arg12[%c132, %c0_482] : memref<200x384xf32, #tpu.memory_space<vmem>>, vector<4x384xf32>
    tpu.vector_store %arg12[%c132, %c0_482], %424 {strides = array<i32>} : memref<200x384xf32, #tpu.memory_space<vmem>>, vector<4x384xf32>,
    %426 = vector.extract_strided_slice %357 {offsets = [0, 102], sizes = [4, 384], strides = [1, 1]} : vector<4x640xf32> to vector<4x384xf32>
    %c136_483 = arith.constant 136 : index
    %c0_484 = arith.constant 0 : index
    %427 = vector.load %arg12[%c136_483, %c0_484] : memref<200x384xf32, #tpu.memory_space<vmem>>, vector<4x384xf32>
    tpu.vector_store %arg12[%c136_483, %c0_484], %426 {strides = array<i32>} : memref<200x384xf32, #tpu.memory_space<vmem>>, vector<4x384xf32>,
    %428 = vector.extract_strided_slice %357 {offsets = [0, 120], sizes = [4, 384], strides = [1, 1]} : vector<4x640xf32> to vector<4x384xf32>
    %c140 = arith.constant 140 : index
    %c0_485 = arith.constant 0 : index
    %429 = vector.load %arg12[%c140, %c0_485] : memref<200x384xf32, #tpu.memory_space<vmem>>, vector<4x384xf32>
    tpu.vector_store %arg12[%c140, %c0_485], %428 {strides = array<i32>} : memref<200x384xf32, #tpu.memory_space<vmem>>, vector<4x384xf32>,
    %430 = vector.extract_strided_slice %357 {offsets = [0, 121], sizes = [4, 384], strides = [1, 1]} : vector<4x640xf32> to vector<4x384xf32>
    %c144_486 = arith.constant 144 : index
    %c0_487 = arith.constant 0 : index
    %431 = vector.load %arg12[%c144_486, %c0_487] : memref<200x384xf32, #tpu.memory_space<vmem>>, vector<4x384xf32>
    tpu.vector_store %arg12[%c144_486, %c0_487], %430 {strides = array<i32>} : memref<200x384xf32, #tpu.memory_space<vmem>>, vector<4x384xf32>,
    %432 = vector.extract_strided_slice %357 {offsets = [0, 122], sizes = [4, 384], strides = [1, 1]} : vector<4x640xf32> to vector<4x384xf32>
    %c148_488 = arith.constant 148 : index
    %c0_489 = arith.constant 0 : index
    %433 = vector.load %arg12[%c148_488, %c0_489] : memref<200x384xf32, #tpu.memory_space<vmem>>, vector<4x384xf32>
    tpu.vector_store %arg12[%c148_488, %c0_489], %432 {strides = array<i32>} : memref<200x384xf32, #tpu.memory_space<vmem>>, vector<4x384xf32>,
    %434 = vector.extract_strided_slice %357 {offsets = [0, 123], sizes = [4, 384], strides = [1, 1]} : vector<4x640xf32> to vector<4x384xf32>
    %c152_490 = arith.constant 152 : index
    %c0_491 = arith.constant 0 : index
    %435 = vector.load %arg12[%c152_490, %c0_491] : memref<200x384xf32, #tpu.memory_space<vmem>>, vector<4x384xf32>
    tpu.vector_store %arg12[%c152_490, %c0_491], %434 {strides = array<i32>} : memref<200x384xf32, #tpu.memory_space<vmem>>, vector<4x384xf32>,
    %436 = vector.extract_strided_slice %357 {offsets = [0, 124], sizes = [4, 384], strides = [1, 1]} : vector<4x640xf32> to vector<4x384xf32>
    %c156 = arith.constant 156 : index
    %c0_492 = arith.constant 0 : index
    %437 = vector.load %arg12[%c156, %c0_492] : memref<200x384xf32, #tpu.memory_space<vmem>>, vector<4x384xf32>
    tpu.vector_store %arg12[%c156, %c0_492], %436 {strides = array<i32>} : memref<200x384xf32, #tpu.memory_space<vmem>>, vector<4x384xf32>,
    %438 = vector.extract_strided_slice %357 {offsets = [0, 125], sizes = [4, 384], strides = [1, 1]} : vector<4x640xf32> to vector<4x384xf32>
    %c160_493 = arith.constant 160 : index
    %c0_494 = arith.constant 0 : index
    %439 = vector.load %arg12[%c160_493, %c0_494] : memref<200x384xf32, #tpu.memory_space<vmem>>, vector<4x384xf32>
    tpu.vector_store %arg12[%c160_493, %c0_494], %438 {strides = array<i32>} : memref<200x384xf32, #tpu.memory_space<vmem>>, vector<4x384xf32>,
    %440 = vector.extract_strided_slice %357 {offsets = [0, 126], sizes = [4, 384], strides = [1, 1]} : vector<4x640xf32> to vector<4x384xf32>
    %c164 = arith.constant 164 : index
    %c0_495 = arith.constant 0 : index
    %441 = vector.load %arg12[%c164, %c0_495] : memref<200x384xf32, #tpu.memory_space<vmem>>, vector<4x384xf32>
    tpu.vector_store %arg12[%c164, %c0_495], %440 {strides = array<i32>} : memref<200x384xf32, #tpu.memory_space<vmem>>, vector<4x384xf32>,
    %442 = vector.extract_strided_slice %357 {offsets = [0, 144], sizes = [4, 384], strides = [1, 1]} : vector<4x640xf32> to vector<4x384xf32>
    %c168_496 = arith.constant 168 : index
    %c0_497 = arith.constant 0 : index
    %443 = vector.load %arg12[%c168_496, %c0_497] : memref<200x384xf32, #tpu.memory_space<vmem>>, vector<4x384xf32>
    tpu.vector_store %arg12[%c168_496, %c0_497], %442 {strides = array<i32>} : memref<200x384xf32, #tpu.memory_space<vmem>>, vector<4x384xf32>,
    %444 = vector.extract_strided_slice %357 {offsets = [0, 145], sizes = [4, 384], strides = [1, 1]} : vector<4x640xf32> to vector<4x384xf32>
    %c172 = arith.constant 172 : index
    %c0_498 = arith.constant 0 : index
    %445 = vector.load %arg12[%c172, %c0_498] : memref<200x384xf32, #tpu.memory_space<vmem>>, vector<4x384xf32>
    tpu.vector_store %arg12[%c172, %c0_498], %444 {strides = array<i32>} : memref<200x384xf32, #tpu.memory_space<vmem>>, vector<4x384xf32>,
    %446 = vector.extract_strided_slice %357 {offsets = [0, 146], sizes = [4, 384], strides = [1, 1]} : vector<4x640xf32> to vector<4x384xf32>
    %c176_499 = arith.constant 176 : index
    %c0_500 = arith.constant 0 : index
    %447 = vector.load %arg12[%c176_499, %c0_500] : memref<200x384xf32, #tpu.memory_space<vmem>>, vector<4x384xf32>
    tpu.vector_store %arg12[%c176_499, %c0_500], %446 {strides = array<i32>} : memref<200x384xf32, #tpu.memory_space<vmem>>, vector<4x384xf32>,
    %448 = vector.extract_strided_slice %357 {offsets = [0, 147], sizes = [4, 384], strides = [1, 1]} : vector<4x640xf32> to vector<4x384xf32>
    %c180 = arith.constant 180 : index
    %c0_501 = arith.constant 0 : index
    %449 = vector.load %arg12[%c180, %c0_501] : memref<200x384xf32, #tpu.memory_space<vmem>>, vector<4x384xf32>
    tpu.vector_store %arg12[%c180, %c0_501], %448 {strides = array<i32>} : memref<200x384xf32, #tpu.memory_space<vmem>>, vector<4x384xf32>,
    %450 = vector.extract_strided_slice %357 {offsets = [0, 148], sizes = [4, 384], strides = [1, 1]} : vector<4x640xf32> to vector<4x384xf32>
    %c184_502 = arith.constant 184 : index
    %c0_503 = arith.constant 0 : index
    %451 = vector.load %arg12[%c184_502, %c0_503] : memref<200x384xf32, #tpu.memory_space<vmem>>, vector<4x384xf32>
    tpu.vector_store %arg12[%c184_502, %c0_503], %450 {strides = array<i32>} : memref<200x384xf32, #tpu.memory_space<vmem>>, vector<4x384xf32>,
    %452 = vector.extract_strided_slice %357 {offsets = [0, 149], sizes = [4, 384], strides = [1, 1]} : vector<4x640xf32> to vector<4x384xf32>
    %c188 = arith.constant 188 : index
    %c0_504 = arith.constant 0 : index
    %453 = vector.load %arg12[%c188, %c0_504] : memref<200x384xf32, #tpu.memory_space<vmem>>, vector<4x384xf32>
    tpu.vector_store %arg12[%c188, %c0_504], %452 {strides = array<i32>} : memref<200x384xf32, #tpu.memory_space<vmem>>, vector<4x384xf32>,
    %454 = vector.extract_strided_slice %357 {offsets = [0, 150], sizes = [4, 384], strides = [1, 1]} : vector<4x640xf32> to vector<4x384xf32>
    %c192_505 = arith.constant 192 : index
    %c0_506 = arith.constant 0 : index
    %455 = vector.load %arg12[%c192_505, %c0_506] : memref<200x384xf32, #tpu.memory_space<vmem>>, vector<4x384xf32>
    tpu.vector_store %arg12[%c192_505, %c0_506], %454 {strides = array<i32>} : memref<200x384xf32, #tpu.memory_space<vmem>>, vector<4x384xf32>,
    %cst_507 = arith.constant 0.000000e+00 : f32
    %456 = vector.broadcast %cst_507 : f32 to vector<4x384xf32>
    %c196 = arith.constant 196 : index
    %c0_508 = arith.constant 0 : index
    %457 = vector.load %arg12[%c196, %c0_508] : memref<200x384xf32, #tpu.memory_space<vmem>>, vector<4x384xf32>
    tpu.vector_store %arg12[%c196, %c0_508], %456 {strides = array<i32>} : memref<200x384xf32, #tpu.memory_space<vmem>>, vector<4x384xf32>,
    %c0_509 = arith.constant 0 : index
    %c0_510 = arith.constant 0 : index
    %458 = vector.load %arg5[%c0_509, %c0_510] : memref<2x200xf32, #tpu.memory_space<vmem>>, vector<2x200xf32>
    %c0_511 = arith.constant 0 : index
    %c0_512 = arith.constant 0 : index
    %459 = vector.load %arg12[%c0_511, %c0_512] : memref<200x384xf32, #tpu.memory_space<vmem>>, vector<200x384xf32>
    %cst_513 = arith.constant dense<0.000000e+00> : vector<2x384xf32>
    %460 = tpu.matmul %458, %459, %cst_513 {dimension_numbers = #tpu.dot_dimension_numbers<[1], [0], [0], [1], [0, 0, 1, 1], [], []>} : vector<2x200xf32>, vector<200x384xf32>, vector<2x384xf32> -> vector<2x384xf32>
    %c0_514 = arith.constant 0 : index
    %c0_515 = arith.constant 0 : index
    %461 = vector.load %arg6[%c0_514, %c0_515] : memref<2x1xf32, #tpu.memory_space<vmem>>, vector<2x1xf32>
    %462 = vector.broadcast %461 : vector<2x1xf32> to vector<2x384xf32>
    %463 = arith.addf %460, %462 : vector<2x384xf32>
    %464 = vector.extract_strided_slice %463 {offsets = [0, 0], sizes = [1, 384], strides = [1, 1]} : vector<2x384xf32> to vector<1x384xf32>
    %465 = vector.extract_strided_slice %463 {offsets = [1, 0], sizes = [1, 384], strides = [1, 1]} : vector<2x384xf32> to vector<1x384xf32>
    %466 = arith.maximumf %464, %465 : vector<1x384xf32>
    %467 = arith.subf %464, %466 : vector<1x384xf32>
    %468 = math.exp %467 : vector<1x384xf32>
    %469 = arith.subf %465, %466 : vector<1x384xf32>
    %470 = math.exp %469 : vector<1x384xf32>
    %471 = arith.addf %468, %470 : vector<1x384xf32>
    %472 = tpu.reciprocal %471 {approx = true} : vector<1x384xf32> -> vector<1x384xf32>
    %473 = arith.mulf %468, %472 : vector<1x384xf32>
    %474 = arith.mulf %470, %472 : vector<1x384xf32>
    %475 = vector.broadcast %342 : vector<8x1xf32> to vector<8x384xf32>
    %476 = vector.broadcast %473 : vector<1x384xf32> to vector<8x384xf32>
    %477 = arith.addf %475, %476 : vector<8x384xf32>
    %cst_516 = arith.constant 1.000000e+00 : f32
    %478 = vector.broadcast %cst_516 : f32 to vector<8x384xf32>
    %479 = arith.addf %477, %478 : vector<8x384xf32>
    %480 = vector.broadcast %343 : vector<8x1xf32> to vector<8x384xf32>
    %481 = vector.broadcast %474 : vector<1x384xf32> to vector<8x384xf32>
    %482 = arith.addf %480, %481 : vector<8x384xf32>
    %cst_517 = arith.constant 1.000000e+00 : f32
    %483 = vector.broadcast %cst_517 : f32 to vector<8x384xf32>
    %484 = arith.addf %482, %483 : vector<8x384xf32>
    %485 = arith.mulf %479, %314 : vector<8x384xf32>
    %486 = arith.mulf %484, %315 : vector<8x384xf32>
    %487 = arith.addf %485, %486 : vector<8x384xf32>
    %c0_518 = arith.constant 0 : index
    %c0_519 = arith.constant 0 : index
    %c0_520 = arith.constant 0 : index
    %488 = vector.load %arg10[%c0_518, %c0_519, %c0_520] : memref<1x8x384xf32, #tpu.memory_space<vmem>>, vector<1x8x384xf32>
    %489 = vector.shape_cast %488 : vector<1x8x384xf32> to vector<8x384xf32>
    %490 = vector.shape_cast %487 : vector<8x384xf32> to vector<1x8x384xf32>
    tpu.vector_store %arg10[%c0_518, %c0_519, %c0_520], %490 {strides = array<i32>} : memref<1x8x384xf32, #tpu.memory_space<vmem>>, vector<1x8x384xf32>,
    return
  }
  func.func @transform_0(%arg0: i32) -> (i32, i32, i32) {
    %c0_i32 = arith.constant 0 : i32
    %c0_i32_0 = arith.constant 0 : i32
    %c0_i32_1 = arith.constant 0 : i32
    return %arg0, %c0_i32, %c0_i32_0 : i32, i32, i32
  }
  func.func @transform_1(%arg0: i32) -> (i32, i32, i32) {
    %c0_i32 = arith.constant 0 : i32
    %c0_i32_0 = arith.constant 0 : i32
    %c0_i32_1 = arith.constant 0 : i32
    return %arg0, %c0_i32, %c0_i32_0 : i32, i32, i32
  }
  func.func @transform_2(%arg0: i32) -> (i32, i32) {
    %c0_i32 = arith.constant 0 : i32
    %c0_i32_0 = arith.constant 0 : i32
    %c0_i32_1 = arith.constant 0 : i32
    return %c0_i32, %c0_i32_0 : i32, i32
  }
  func.func @transform_3(%arg0: i32) -> (i32, i32) {
    %c0_i32 = arith.constant 0 : i32
    %c0_i32_0 = arith.constant 0 : i32
    %c0_i32_1 = arith.constant 0 : i32
    return %c0_i32, %c0_i32_0 : i32, i32
  }
  func.func @transform_4(%arg0: i32) -> (i32, i32) {
    %c0_i32 = arith.constant 0 : i32
    %c0_i32_0 = arith.constant 0 : i32
    %c0_i32_1 = arith.constant 0 : i32
    return %c0_i32, %c0_i32_0 : i32, i32
  }
  func.func @transform_5(%arg0: i32) -> (i32, i32) {
    %c0_i32 = arith.constant 0 : i32
    %c0_i32_0 = arith.constant 0 : i32
    %c0_i32_1 = arith.constant 0 : i32
    return %c0_i32, %c0_i32_0 : i32, i32
  }
  func.func @transform_6(%arg0: i32) -> (i32, i32) {
    %c0_i32 = arith.constant 0 : i32
    %c0_i32_0 = arith.constant 0 : i32
    %c0_i32_1 = arith.constant 0 : i32
    return %c0_i32, %c0_i32_0 : i32, i32
  }
  func.func @transform_7(%arg0: i32) -> (i32, i32) {
    %c0_i32 = arith.constant 0 : i32
    %c0_i32_0 = arith.constant 0 : i32
    %c0_i32_1 = arith.constant 0 : i32
    return %c0_i32, %c0_i32_0 : i32, i32
  }
  func.func @transform_8(%arg0: i32) -> (i32, i32) {
    %c0_i32 = arith.constant 0 : i32
    %c0_i32_0 = arith.constant 0 : i32
    %c0_i32_1 = arith.constant 0 : i32
    return %c0_i32, %c0_i32_0 : i32, i32
  }
  func.func @transform_9(%arg0: i32) -> (i32, i32, i32) {
    %c0_i32 = arith.constant 0 : i32
    %c0_i32_0 = arith.constant 0 : i32
    %c0_i32_1 = arith.constant 0 : i32
    return %arg0, %c0_i32, %c0_i32_0 : i32, i32, i32
  }
}

</mosaic_0001>

<llo_original>
// kernel: tpu_custom_call.1
$region0: #{tpu_custom_call.1}
  #allocation0 [shape = 'u32[]', space=smem, size = 0x4, offset = 0x4, fixed_abs, tag = 'smem constant byte address 0x4 - core index']
  #allocation1 [shape = 'u32[72,128]{1,0:T(1,128)}', space=vmem, size = 0x9000, scoped, tag = 'internal scratch']
  #allocation2 [shape = 'f32[392,768]{1,0:T(8,128)}', space=vmem, size = 0x126000, scoped, tag = 'scratch operand']
  #allocation3 [shape = 'f32[200,384]{1,0:T(8,128)}', space=vmem, size = 0x4b000, scoped, tag = 'scratch operand']
  %s0 = inlined_call_operand.hbm [shape: f32[2,8,640], index: 0, kind: input, shape index: {}]
  %s1 = inlined_call_operand.hbm [shape: f32[2,8,640], index: 1, kind: input, shape index: {}]
  %s2 = inlined_call_operand.hbm [shape: f32[24,392], index: 2, kind: input, shape index: {}]
  %s3 = inlined_call_operand.vmem [shape: f32[24,1], index: 3, kind: input, shape index: {}]
  %s4 = inlined_call_operand.vmem [shape: f32[2,200], index: 4, kind: input, shape index: {}]
  %s5 = inlined_call_operand.vmem [shape: f32[2,1], index: 5, kind: input, shape index: {}]
  %s6 = inlined_call_operand.vmem [shape: f32[16,32], index: 6, kind: input, shape index: {}]
  %s7 = inlined_call_operand.vmem [shape: f32[16,1], index: 7, kind: input, shape index: {}]
  %s8 = inlined_call_operand.vmem [shape: f32[1,768], index: 8, kind: input, shape index: {}]
  %s9 = inlined_call_operand.hbm [shape: f32[2,8,384], index: 9, kind: output, shape index: {}]
  %s10 = sld [smem:[#allocation0]]
  $region81: #{tpu_custom_call.1} parent=0
    _
  %s12 = ssub.s32 1, %s10
  %s13 = scalar_select 0, %s12, %s10
  $region1: #{tpu_custom_call.1} parent=0
    #allocation4 [shape = 'u8[40960]{0}', space=vmem, size = 0xa000, scoped, tag = 'input window, operand 0']
    #allocation5 [shape = 's32[2]{0}', space=sflag, size = 0x8, scoped, tag = 'scoped memory for tpu_custom_call.1']
    #allocation6 [shape = 's32[2]{0}', space=sflag, size = 0x8, scoped, tag = 'scoped memory for tpu_custom_call.1']
    #allocation7 [shape = 'u8[40960]{0}', space=vmem, size = 0xa000, scoped, tag = 'input window, operand 1']
    #allocation8 [shape = 's32[2]{0}', space=sflag, size = 0x8, scoped, tag = 'scoped memory for tpu_custom_call.1']
    #allocation9 [shape = 'u8[49152]{0}', space=vmem, size = 0xc000, scoped, tag = 'input window, operand 2, single buffered']
    #allocation10 [shape = 'u8[24576]{0}', space=vmem, size = 0x6000, scoped, tag = 'output window, operand 0']
    %14 = vsyncpa [#allocation5], 0
    %s15 = scalar_lea.sflag [#allocation5], 1
    %16 = vsyncpa %s15, 0
    %17 = vsyncpa [#allocation8], 0
    %s18 = scalar_lea.sflag [#allocation8], 1
    %19 = vsyncpa %s18, 0
    %20 = vsyncpa [#allocation6], 0
    %s21 = scalar_lea.sflag [#allocation6], 1
    %22 = vsyncpa %s21, 0
    loop: start=0, step=1, limit=4
    $region2: #{tpu_custom_call.1} parent=1 // loop_pre_header
      _
    $region3: #{tpu_custom_call.1} parent=1 // loop_header
      %s24 = sphi 0, %s28
      %p25 = scmp.ge.s32.totalorder %s24, 4
      %s34 = sphi 0, %s36
      %s37 = sphi 0, %s34
      %s38 = sphi 0, %s37
      %s54 = sphi 0, %s38
      %s60 = sphi 0, %s62
      %s63 = sphi 0, %s60
      %s64 = sphi 0, %s63
      %s80 = sphi 0, %s64
      %s84 = sphi 0, %s84
      %s86 = sphi 0, %s84
      %s87 = sphi 0, %s86
      %s101 = sphi 0, %s87
      %s105 = sphi 0, %s105
      %s107 = sphi 0, %s105
      %s108 = sphi 0, %s107
      %s122 = sphi 0, %s108
      %s126 = sphi 0, %s126
      %s128 = sphi 0, %s126
      %s129 = sphi 0, %s128
      %s143 = sphi 0, %s129
      %s147 = sphi 0, %s147
      %s149 = sphi 0, %s147
      %s150 = sphi 0, %s149
      %s164 = sphi 0, %s150
      %s168 = sphi 0, %s168
      %s170 = sphi 0, %s168
      %s171 = sphi 0, %s170
      %s185 = sphi 0, %s171
      %s189 = sphi 0, %s189
      %s191 = sphi 0, %s189
      %s192 = sphi 0, %s191
      %s206 = sphi 0, %s192
      %s210 = sphi 0, %s210
      %s212 = sphi 0, %s210
      %s213 = sphi 0, %s212
      %s227 = sphi 0, %s213
      %s233 = sphi 0, %s235
      %s236 = sphi 0, %s233
      %s237 = sphi 0, %s236
      %s253 = sphi 0, %s237
    $region4: #{tpu_custom_call.1} parent=1 // loop_header_branch
      %27 = sbr.rel (%p25) target = $region8
    $region5: #{tpu_custom_call.1} parent=1 // loop_body
      %s29 = ssub.s32 %s24, 1
      %s30 = ssub.s32 %s24, 2
      %s31 = sadd.s32 %s24, 1
      %s32 = ssub.s32 %s24, %s31
      %p33 = scmp.eq.s32.totalorder %s32, 0
      %s35 = sadd.s32 %s34, 1
      %s36 = scalar_select %p33, %s34, %s35
      %p39 = pneg %p33
      %p40 = scmp.eq.s32.totalorder %s24, 1
      %p41 = por %p39, %p40
      %p42 = scmp.ne.s32.totalorder %s34, %s37
      %p43 = scmp.eq.s32.totalorder %s24, 0
      %p44 = por %p42, %p43
      %p45 = scmp.ne.s32.totalorder %s34, %s37
      %p46 = scmp.eq.s32.totalorder %s29, 1
      %p47 = por %p45, %p46
      %p48 = scmp.ne.s32.totalorder %s37, %s38
      %p49 = scmp.eq.s32.totalorder %s29, 0
      %p50 = por %p48, %p49
      %p51 = scmp.ne.s32.totalorder %s37, %s38
      %p52 = scmp.eq.s32.totalorder %s30, 1
      %p53 = por %p51, %p52
      %p55 = scmp.ne.s32.totalorder %s38, %s54
      %p56 = scmp.eq.s32.totalorder %s30, 0
      %p57 = por %p55, %p56
      %s58 = ssub.s32 %s24, %s31
      %p59 = scmp.eq.s32.totalorder %s58, 0
      %s61 = sadd.s32 %s60, 1
      %s62 = scalar_select %p59, %s60, %s61
      %p65 = pneg %p59
      %p66 = scmp.eq.s32.totalorder %s24, 1
      %p67 = por %p65, %p66
      %p68 = scmp.ne.s32.totalorder %s60, %s63
      %p69 = scmp.eq.s32.totalorder %s24, 0
      %p70 = por %p68, %p69
      %p71 = scmp.ne.s32.totalorder %s60, %s63
      %p72 = scmp.eq.s32.totalorder %s29, 1
      %p73 = por %p71, %p72
      %p74 = scmp.ne.s32.totalorder %s63, %s64
      %p75 = scmp.eq.s32.totalorder %s29, 0
      %p76 = por %p74, %p75
      %p77 = scmp.ne.s32.totalorder %s63, %s64
      %p78 = scmp.eq.s32.totalorder %s30, 1
      %p79 = por %p77, %p78
      %p81 = scmp.ne.s32.totalorder %s64, %s80
      %p82 = scmp.eq.s32.totalorder %s30, 0
      %p83 = por %p81, %p82
      %s85 = sadd.s32 %s84, 1
      %p88 = scmp.eq.s32.totalorder %s24, 1
      %p89 = scmp.ne.s32.totalorder %s84, %s86
      %p90 = scmp.eq.s32.totalorder %s24, 0
      %p91 = por %p89, %p90
      %p92 = scmp.ne.s32.totalorder %s84, %s86
      %p93 = scmp.eq.s32.totalorder %s29, 1
      %p94 = por %p92, %p93
      %p95 = scmp.ne.s32.totalorder %s86, %s87
      %p96 = scmp.eq.s32.totalorder %s29, 0
      %p97 = por %p95, %p96
      %p98 = scmp.ne.s32.totalorder %s86, %s87
      %p99 = scmp.eq.s32.totalorder %s30, 1
      %p100 = por %p98, %p99
      %p102 = scmp.ne.s32.totalorder %s87, %s101
      %p103 = scmp.eq.s32.totalorder %s30, 0
      %p104 = por %p102, %p103
      %s106 = sadd.s32 %s105, 1
      %p109 = scmp.eq.s32.totalorder %s24, 1
      %p110 = scmp.ne.s32.totalorder %s105, %s107
      %p111 = scmp.eq.s32.totalorder %s24, 0
      %p112 = por %p110, %p111
      %p113 = scmp.ne.s32.totalorder %s105, %s107
      %p114 = scmp.eq.s32.totalorder %s29, 1
      %p115 = por %p113, %p114
      %p116 = scmp.ne.s32.totalorder %s107, %s108
      %p117 = scmp.eq.s32.totalorder %s29, 0
      %p118 = por %p116, %p117
      %p119 = scmp.ne.s32.totalorder %s107, %s108
      %p120 = scmp.eq.s32.totalorder %s30, 1
      %p121 = por %p119, %p120
      %p123 = scmp.ne.s32.totalorder %s108, %s122
      %p124 = scmp.eq.s32.totalorder %s30, 0
      %p125 = por %p123, %p124
      %s127 = sadd.s32 %s126, 1
      %p130 = scmp.eq.s32.totalorder %s24, 1
      %p131 = scmp.ne.s32.totalorder %s126, %s128
      %p132 = scmp.eq.s32.totalorder %s24, 0
      %p133 = por %p131, %p132
      %p134 = scmp.ne.s32.totalorder %s126, %s128
      %p135 = scmp.eq.s32.totalorder %s29, 1
      %p136 = por %p134, %p135
      %p137 = scmp.ne.s32.totalorder %s128, %s129
      %p138 = scmp.eq.s32.totalorder %s29, 0
      %p139 = por %p137, %p138
      %p140 = scmp.ne.s32.totalorder %s128, %s129
      %p141 = scmp.eq.s32.totalorder %s30, 1
      %p142 = por %p140, %p141
      %p144 = scmp.ne.s32.totalorder %s129, %s143
      %p145 = scmp.eq.s32.totalorder %s30, 0
      %p146 = por %p144, %p145
      %s148 = sadd.s32 %s147, 1
      %p151 = scmp.eq.s32.totalorder %s24, 1
      %p152 = scmp.ne.s32.totalorder %s147, %s149
      %p153 = scmp.eq.s32.totalorder %s24, 0
      %p154 = por %p152, %p153
      %p155 = scmp.ne.s32.totalorder %s147, %s149
      %p156 = scmp.eq.s32.totalorder %s29, 1
      %p157 = por %p155, %p156
      %p158 = scmp.ne.s32.totalorder %s149, %s150
      %p159 = scmp.eq.s32.totalorder %s29, 0
      %p160 = por %p158, %p159
      %p161 = scmp.ne.s32.totalorder %s149, %s150
      %p162 = scmp.eq.s32.totalorder %s30, 1
      %p163 = por %p161, %p162
      %p165 = scmp.ne.s32.totalorder %s150, %s164
      %p166 = scmp.eq.s32.totalorder %s30, 0
      %p167 = por %p165, %p166
      %s169 = sadd.s32 %s168, 1
      %p172 = scmp.eq.s32.totalorder %s24, 1
      %p173 = scmp.ne.s32.totalorder %s168, %s170
      %p174 = scmp.eq.s32.totalorder %s24, 0
      %p175 = por %p173, %p174
      %p176 = scmp.ne.s32.totalorder %s168, %s170
      %p177 = scmp.eq.s32.totalorder %s29, 1
      %p178 = por %p176, %p177
      %p179 = scmp.ne.s32.totalorder %s170, %s171
      %p180 = scmp.eq.s32.totalorder %s29, 0
      %p181 = por %p179, %p180
      %p182 = scmp.ne.s32.totalorder %s170, %s171
      %p183 = scmp.eq.s32.totalorder %s30, 1
      %p184 = por %p182, %p183
      %p186 = scmp.ne.s32.totalorder %s171, %s185
      %p187 = scmp.eq.s32.totalorder %s30, 0
      %p188 = por %p186, %p187
      %s190 = sadd.s32 %s189, 1
      %p193 = scmp.eq.s32.totalorder %s24, 1
      %p194 = scmp.ne.s32.totalorder %s189, %s191
      %p195 = scmp.eq.s32.totalorder %s24, 0
      %p196 = por %p194, %p195
      %p197 = scmp.ne.s32.totalorder %s189, %s191
      %p198 = scmp.eq.s32.totalorder %s29, 1
      %p199 = por %p197, %p198
      %p200 = scmp.ne.s32.totalorder %s191, %s192
      %p201 = scmp.eq.s32.totalorder %s29, 0
      %p202 = por %p200, %p201
      %p203 = scmp.ne.s32.totalorder %s191, %s192
      %p204 = scmp.eq.s32.totalorder %s30, 1
      %p205 = por %p203, %p204
      %p207 = scmp.ne.s32.totalorder %s192, %s206
      %p208 = scmp.eq.s32.totalorder %s30, 0
      %p209 = por %p207, %p208
      %s211 = sadd.s32 %s210, 1
      %p214 = scmp.eq.s32.totalorder %s24, 1
      %p215 = scmp.ne.s32.totalorder %s210, %s212
      %p216 = scmp.eq.s32.totalorder %s24, 0
      %p217 = por %p215, %p216
      %p218 = scmp.ne.s32.totalorder %s210, %s212
      %p219 = scmp.eq.s32.totalorder %s29, 1
      %p220 = por %p218, %p219
      %p221 = scmp.ne.s32.totalorder %s212, %s213
      %p222 = scmp.eq.s32.totalorder %s29, 0
      %p223 = por %p221, %p222
      %p224 = scmp.ne.s32.totalorder %s212, %s213
      %p225 = scmp.eq.s32.totalorder %s30, 1
      %p226 = por %p224, %p225
      %p228 = scmp.ne.s32.totalorder %s213, %s227
      %p229 = scmp.eq.s32.totalorder %s30, 0
      %p230 = por %p228, %p229
      %s231 = ssub.s32 %s24, %s31
      %p232 = scmp.eq.s32.totalorder %s231, 0
      %s234 = sadd.s32 %s233, 1
      %s235 = scalar_select %p232, %s233, %s234
      %p238 = pneg %p232
      %p239 = scmp.eq.s32.totalorder %s24, 1
      %p240 = por %p238, %p239
      %p241 = scmp.ne.s32.totalorder %s233, %s236
      %p242 = scmp.eq.s32.totalorder %s24, 0
      %p243 = por %p241, %p242
      %p244 = scmp.ne.s32.totalorder %s233, %s236
      %p245 = scmp.eq.s32.totalorder %s29, 1
      %p246 = por %p244, %p245
      %p247 = scmp.ne.s32.totalorder %s236, %s237
      %p248 = scmp.eq.s32.totalorder %s29, 0
      %p249 = por %p247, %p248
      %p250 = scmp.ne.s32.totalorder %s236, %s237
      %p251 = scmp.eq.s32.totalorder %s30, 1
      %p252 = por %p250, %p251
      %p254 = scmp.ne.s32.totalorder %s237, %s253
      %p255 = scmp.eq.s32.totalorder %s30, 0
      %p256 = por %p254, %p255
      %p257 = scmp.le.s32.totalorder 1, %s24
      %p258 = scmp.lt.s32.totalorder %s24, 3
      %p259 = pnand %p257, %p258
      %p260 = pneg %p259
      // Predicated region
      $region9: #{tpu_custom_call.1} parent=5 // pred_check
        _
      $region10: #{tpu_custom_call.1} parent=5 // pred_check_branch
        %262 = sbr.rel (%p259) target = $region12
      $region11: #{tpu_custom_call.1} parent=5 // pred_region
        %s263 = ssub.s32 %s24, 1
        // Predicated region
        $region13: #{tpu_custom_call.1} parent=11 // pred_check
          %p264 = pneg %p97
        $region14: #{tpu_custom_call.1} parent=11 // pred_check_branch
          %266 = sbr.rel (%p264) target = $region16
        $region15: #{tpu_custom_call.1} parent=11 // pred_region
          %268 = vsyncadd [#allocation8], 0
          %s269 = sshll.u32 %s2, 4
          %s270 = int_to_ptr.hbm [resolvable:$true] %s269
          %s271 = sshll.u32 [#allocation9], 4
          %s272 = int_to_ptr.vmem [resolvable:$true] %s271
          %277 = dma.hbm_to_vmem [thread:$0]  %s270, 1536, %s272, [#allocation8], 512, 512, 32
        $region16: #{tpu_custom_call.1} parent=11 // pred_fallthru
          _
        // Predicated region
        $region17: #{tpu_custom_call.1} parent=11 // pred_check
          %p278 = pneg %p118
        $region18: #{tpu_custom_call.1} parent=11 // pred_check_branch
          %280 = sbr.rel (%p278) target = $region20
        $region19: #{tpu_custom_call.1} parent=11 // pred_region
          _
        $region20: #{tpu_custom_call.1} parent=11 // pred_fallthru
          _
        // Predicated region
        $region21: #{tpu_custom_call.1} parent=11 // pred_check
          %p281 = pneg %p139
        $region22: #{tpu_custom_call.1} parent=11 // pred_check_branch
          %283 = sbr.rel (%p281) target = $region24
        $region23: #{tpu_custom_call.1} parent=11 // pred_region
          _
        $region24: #{tpu_custom_call.1} parent=11 // pred_fallthru
          _
        // Predicated region
        $region25: #{tpu_custom_call.1} parent=11 // pred_check
          %p284 = pneg %p160
        $region26: #{tpu_custom_call.1} parent=11 // pred_check_branch
          %286 = sbr.rel (%p284) target = $region28
        $region27: #{tpu_custom_call.1} parent=11 // pred_region
          _
        $region28: #{tpu_custom_call.1} parent=11 // pred_fallthru
          _
        // Predicated region
        $region29: #{tpu_custom_call.1} parent=11 // pred_check
          %p287 = pneg %p181
        $region30: #{tpu_custom_call.1} parent=11 // pred_check_branch
          %289 = sbr.rel (%p287) target = $region32
        $region31: #{tpu_custom_call.1} parent=11 // pred_region
          _
        $region32: #{tpu_custom_call.1} parent=11 // pred_fallthru
          _
        // Predicated region
        $region33: #{tpu_custom_call.1} parent=11 // pred_check
          %p290 = pneg %p202
        $region34: #{tpu_custom_call.1} parent=11 // pred_check_branch
          %292 = sbr.rel (%p290) target = $region36
        $region35: #{tpu_custom_call.1} parent=11 // pred_region
          _
        $region36: #{tpu_custom_call.1} parent=11 // pred_fallthru
          _
        // Predicated region
        $region37: #{tpu_custom_call.1} parent=11 // pred_check
          %p293 = pneg %p223
        $region38: #{tpu_custom_call.1} parent=11 // pred_check_branch
          %295 = sbr.rel (%p293) target = $region40
        $region39: #{tpu_custom_call.1} parent=11 // pred_region
          _
        $region40: #{tpu_custom_call.1} parent=11 // pred_fallthru
          _
      $region12: #{tpu_custom_call.1} parent=5 // pred_fallthru
        _
      %p296 = scmp.lt.s32.totalorder %s24, 2
      // Predicated region
      $region41: #{tpu_custom_call.1} parent=5 // pred_check
        %p297 = pneg %p296
      $region42: #{tpu_custom_call.1} parent=5 // pred_check_branch
        %299 = sbr.rel (%p297) target = $region44
      $region43: #{tpu_custom_call.1} parent=5 // pred_region
        // Predicated region
        $region45: #{tpu_custom_call.1} parent=43 // pred_check
          %p300 = pneg %p44
        $region46: #{tpu_custom_call.1} parent=43 // pred_check_branch
          %302 = sbr.rel (%p300) target = $region48
        $region47: #{tpu_custom_call.1} parent=43 // pred_region
          %s303 = sand.u32 %s34, 1
          %s304 = scalar_lea.sflag [#allocation5], %s303
          %s305 = sand.u32 %s34, 1
          %s306 = smul.addr %s305, 40
          %s307 = scalar_lea.vmem [#allocation4], %s306
          %309 = vsyncadd %s304, 0
          %s310 = smul.addr %s24, 5
          %s311 = smul.addr %s310, 8
          %s312 = scalar_lea.hbm %s0, %s311
          %s314 = sshll.u32 %s312, 4
          %s315 = int_to_ptr.hbm [resolvable:$true] %s314
          %s316 = sshll.u32 %s307, 4
          %s317 = int_to_ptr.vmem [resolvable:$true] %s316
          %319 = dma.hbm_to_vmem [thread:$0]  %s315, 640, %s317, %s304
        $region48: #{tpu_custom_call.1} parent=43 // pred_fallthru
          _
        // Predicated region
        $region49: #{tpu_custom_call.1} parent=43 // pred_check
          %p320 = pneg %p70
        $region50: #{tpu_custom_call.1} parent=43 // pred_check_branch
          %322 = sbr.rel (%p320) target = $region52
        $region51: #{tpu_custom_call.1} parent=43 // pred_region
          %s323 = sand.u32 %s24, 1
          %s324 = scalar_lea.sflag [#allocation8], %s323
          %s325 = sand.u32 %s60, 1
          %s326 = smul.addr %s325, 40
          %s327 = scalar_lea.vmem [#allocation7], %s326
          %329 = vsyncadd %s324, 0
          %s330 = smul.addr %s24, 5
          %s331 = smul.addr %s330, 8
          %s332 = scalar_lea.hbm %s1, %s331
          %s334 = sshll.u32 %s332, 4
          %s335 = int_to_ptr.hbm [resolvable:$true] %s334
          %s336 = sshll.u32 %s327, 4
          %s337 = int_to_ptr.vmem [resolvable:$true] %s336
          %339 = dma.hbm_to_vmem [thread:$0]  %s335, 640, %s337, %s324
        $region52: #{tpu_custom_call.1} parent=43 // pred_fallthru
          _
      $region44: #{tpu_custom_call.1} parent=5 // pred_fallthru
        _
      %p340 = scmp.le.s32.totalorder 1, %s24
      %p341 = scmp.lt.s32.totalorder %s24, 3
      %p342 = pnand %p340, %p341
      %p343 = pneg %p342
      // Predicated region
      $region53: #{tpu_custom_call.1} parent=5 // pred_check
        _
      $region54: #{tpu_custom_call.1} parent=5 // pred_check_branch
        %345 = sbr.rel (%p342) target = $region56
      $region55: #{tpu_custom_call.1} parent=5 // pred_region
        %s346 = ssub.s32 %s24, 1
        %s347 = sand.u32 %s37, 1
        %s348 = scalar_lea.sflag [#allocation5], %s347
        %s349 = sand.u32 %s37, 1
        %s350 = smul.addr %s349, 40
        %s351 = scalar_lea.vmem [#allocation4], %s350
        // Predicated region
        $region57: #{tpu_custom_call.1} parent=55 // pred_check
          %p352 = pneg %p50
        $region58: #{tpu_custom_call.1} parent=55 // pred_check_branch
          %354 = sbr.rel (%p352) target = $region60
        $region59: #{tpu_custom_call.1} parent=55 // pred_region
          %356 = dma.done %s348, 640
        $region60: #{tpu_custom_call.1} parent=55 // pred_fallthru
          _
        %s357 = sand.u32 %s29, 1
        %s358 = scalar_lea.sflag [#allocation8], %s357
        %s359 = sand.u32 %s63, 1
        %s360 = smul.addr %s359, 40
        %s361 = scalar_lea.vmem [#allocation7], %s360
        // Predicated region
        $region61: #{tpu_custom_call.1} parent=55 // pred_check
          %p362 = pneg %p76
        $region62: #{tpu_custom_call.1} parent=55 // pred_check_branch
          %364 = sbr.rel (%p362) target = $region64
        $region63: #{tpu_custom_call.1} parent=55 // pred_region
          %366 = dma.done %s358, 640
        $region64: #{tpu_custom_call.1} parent=55 // pred_fallthru
          _
        // Predicated region
        $region65: #{tpu_custom_call.1} parent=55 // pred_check
          %p367 = pneg %p97
        $region66: #{tpu_custom_call.1} parent=55 // pred_check_branch
          %369 = sbr.rel (%p367) target = $region68
        $region67: #{tpu_custom_call.1} parent=55 // pred_region
          %371 = dma.done [#allocation8], 1536
        $region68: #{tpu_custom_call.1} parent=55 // pred_fallthru
          _
        %s372 = sand.u32 %s37, 1
        %s373 = scalar_lea.sflag [#allocation5], %s372
        %s374 = sand.u32 %s37, 1
        %s375 = smul.addr %s374, 40
        %s376 = scalar_lea.vmem [#allocation4], %s375
        %p377 = pneg %p50
        %p378 = pneg %p47
        %s379 = sand.u32 %s29, 1
        %s380 = scalar_lea.sflag [#allocation8], %s379
        %s381 = sand.u32 %s63, 1
        %s382 = smul.addr %s381, 40
        %s383 = scalar_lea.vmem [#allocation7], %s382
        %p384 = pneg %p76
        %p385 = pneg %p73
        %p386 = pneg %p97
        %p387 = pneg %p94
        %p388 = pneg %p118
        %p389 = pneg %p115
        %p390 = pneg %p139
        %p391 = pneg %p136
        %p392 = pneg %p160
        %p393 = pneg %p157
        %p394 = pneg %p181
        %p395 = pneg %p178
        %p396 = pneg %p202
        %p397 = pneg %p199
        %p398 = pneg %p223
        %p399 = pneg %p220
        %p400 = pneg %p249
        %p401 = pneg %p246
        %s402 = sand.u32 %s236, 1
        %s403 = scalar_lea.sflag [#allocation6], %s402
        %s404 = sand.u32 %s236, 1
        %s405 = smul.addr %s404, 24
        %s406 = scalar_lea.vmem [#allocation10], %s405
        %v407 = vld [vmem:[%s8] sm:$0x3f]
        %v408 = vld [vmem:[%s351] sm:$0xff]
        %v409 = vld [vmem:[%s351 + $0x8] sm:$0xff]
        %v410 = vld [vmem:[%s351 + $0x10] sm:$0xff]
        %411 = vst [vmem:[#allocation2] sm:$0xff] %v408
        %412 = vst [vmem:[#allocation2 + $0x8] sm:$0xff] %v409
        %413 = vst [vmem:[#allocation2 + $0x10] sm:$0xff] %v410
        %v414 = vld [vmem:[%s361] sm:$0xff]
        %v415 = vld [vmem:[%s361 + $0x8] sm:$0xff]
        %v416 = vld [vmem:[%s361 + $0x10] sm:$0xff]
        %417 = vst [vmem:[#allocation2 + $0x18] sm:$0xff] %v414
        %418 = vst [vmem:[#allocation2 + $0x20] sm:$0xff] %v415
        %419 = vst [vmem:[#allocation2 + $0x28] sm:$0xff] %v416
        %v420 = vld [vmem:[%s351] sm:$0xff]
        %v421 = vld [vmem:[%s351 + $0x8] sm:$0xff]
        %v422 = vld [vmem:[%s351 + $0x10] sm:$0xff]
        %v423 = vld [vmem:[%s351 + $0x18] sm:$0xff]
        %428 = vrot.lane.b32.xlu0 %v420, 127
        %v429 = vpop.permute.xlu0 %428
        %430 = vrot.lane.b32.xlu0 %v421, 127
        %v431 = vpop.permute.xlu0 %430
        %432 = vrot.lane.b32.xlu0 %v422, 127
        %v433 = vpop.permute.xlu0 %432
        %434 = vrot.lane.b32.xlu0 %v423, 127
        %v435 = vpop.permute.xlu0 %434
        %vm436 = vcmask 1039360
        %v437 = vsel %vm436, %v429, %v431
        %v438 = vsel %vm436, %v431, %v433
        %v439 = vsel %vm436, %v433, %v435
        %443 = vst [vmem:[#allocation2 + $0x30] sm:$0xff] %v437
        %444 = vst [vmem:[#allocation2 + $0x38] sm:$0xff] %v438
        %445 = vst [vmem:[#allocation2 + $0x40] sm:$0xff] %v439
        %v446 = vld [vmem:[%s361] sm:$0xff]
        %v447 = vld [vmem:[%s361 + $0x8] sm:$0xff]
        %v448 = vld [vmem:[%s361 + $0x10] sm:$0xff]
        %v449 = vld [vmem:[%s361 + $0x18] sm:$0xff]
        %454 = vrot.lane.b32.xlu0 %v446, 127
        %v455 = vpop.permute.xlu0 %454
        %456 = vrot.lane.b32.xlu0 %v447, 127
        %v457 = vpop.permute.xlu0 %456
        %458 = vrot.lane.b32.xlu0 %v448, 127
        %v459 = vpop.permute.xlu0 %458
        %460 = vrot.lane.b32.xlu0 %v449, 127
        %v461 = vpop.permute.xlu0 %460
        %v462 = vsel %vm436, %v455, %v457
        %v463 = vsel %vm436, %v457, %v459
        %v464 = vsel %vm436, %v459, %v461
        %468 = vst [vmem:[#allocation2 + $0x48] sm:$0xff] %v462
        %469 = vst [vmem:[#allocation2 + $0x50] sm:$0xff] %v463
        %470 = vst [vmem:[#allocation2 + $0x58] sm:$0xff] %v464
        %v471 = vld [vmem:[%s351] sm:$0xff]
        %v472 = vld [vmem:[%s351 + $0x8] sm:$0xff]
        %v473 = vld [vmem:[%s351 + $0x10] sm:$0xff]
        %v474 = vld [vmem:[%s351 + $0x18] sm:$0xff]
        %479 = vrot.lane.b32.xlu0 %v471, 126
        %v480 = vpop.permute.xlu0 %479
        %481 = vrot.lane.b32.xlu0 %v472, 126
        %v482 = vpop.permute.xlu0 %481
        %483 = vrot.lane.b32.xlu0 %v473, 126
        %v484 = vpop.permute.xlu0 %483
        %485 = vrot.lane.b32.xlu0 %v474, 126
        %v486 = vpop.permute.xlu0 %485
        %vm487 = vcmask 1031168
        %v488 = vsel %vm487, %v480, %v482
        %v489 = vsel %vm487, %v482, %v484
        %v490 = vsel %vm487, %v484, %v486
        %494 = vst [vmem:[#allocation2 + $0x60] sm:$0xff] %v488
        %495 = vst [vmem:[#allocation2 + $0x68] sm:$0xff] %v489
        %496 = vst [vmem:[#allocation2 + $0x70] sm:$0xff] %v490
        %v497 = vld [vmem:[%s361] sm:$0xff]
        %v498 = vld [vmem:[%s361 + $0x8] sm:$0xff]
        %v499 = vld [vmem:[%s361 + $0x10] sm:$0xff]
        %v500 = vld [vmem:[%s361 + $0x18] sm:$0xff]
        %505 = vrot.lane.b32.xlu0 %v497, 126
        %v506 = vpop.permute.xlu0 %505
        %507 = vrot.lane.b32.xlu0 %v498, 126
        %v508 = vpop.permute.xlu0 %507
        %509 = vrot.lane.b32.xlu0 %v499, 126
        %v510 = vpop.permute.xlu0 %509
        %511 = vrot.lane.b32.xlu0 %v500, 126
        %v512 = vpop.permute.xlu0 %511
        %v513 = vsel %vm487, %v506, %v508
        %v514 = vsel %vm487, %v508, %v510
        %v515 = vsel %vm487, %v510, %v512
        %519 = vst [vmem:[#allocation2 + $0x78] sm:$0xff] %v513
        %520 = vst [vmem:[#allocation2 + $0x80] sm:$0xff] %v514
        %521 = vst [vmem:[#allocation2 + $0x88] sm:$0xff] %v515
        %v522 = vld [vmem:[%s351] sm:$0xff]
        %v523 = vld [vmem:[%s351 + $0x8] sm:$0xff]
        %v524 = vld [vmem:[%s351 + $0x10] sm:$0xff]
        %v525 = vld [vmem:[%s351 + $0x18] sm:$0xff]
        %530 = vrot.lane.b32.xlu0 %v522, 125
        %v531 = vpop.permute.xlu0 %530
        %532 = vrot.lane.b32.xlu0 %v523, 125
        %v533 = vpop.permute.xlu0 %532
        %534 = vrot.lane.b32.xlu0 %v524, 125
        %v535 = vpop.permute.xlu0 %534
        %536 = vrot.lane.b32.xlu0 %v525, 125
        %v537 = vpop.permute.xlu0 %536
        %vm538 = vcmask 1022976
        %v539 = vsel %vm538, %v531, %v533
        %v540 = vsel %vm538, %v533, %v535
        %v541 = vsel %vm538, %v535, %v537
        %545 = vst [vmem:[#allocation2 + $0x90] sm:$0xff] %v539
        %546 = vst [vmem:[#allocation2 + $0x98] sm:$0xff] %v540
        %547 = vst [vmem:[#allocation2 + $0xa0] sm:$0xff] %v541
        %v548 = vld [vmem:[%s361] sm:$0xff]
        %v549 = vld [vmem:[%s361 + $0x8] sm:$0xff]
        %v550 = vld [vmem:[%s361 + $0x10] sm:$0xff]
        %v551 = vld [vmem:[%s361 + $0x18] sm:$0xff]
        %556 = vrot.lane.b32.xlu0 %v548, 125
        %v557 = vpop.permute.xlu0 %556
        %558 = vrot.lane.b32.xlu0 %v549, 125
        %v559 = vpop.permute.xlu0 %558
        %560 = vrot.lane.b32.xlu0 %v550, 125
        %v561 = vpop.permute.xlu0 %560
        %562 = vrot.lane.b32.xlu0 %v551, 125
        %v563 = vpop.permute.xlu0 %562
        %v564 = vsel %vm538, %v557, %v559
        %v565 = vsel %vm538, %v559, %v561
        %v566 = vsel %vm538, %v561, %v563
        %570 = vst [vmem:[#allocation2 + $0xa8] sm:$0xff] %v564
        %571 = vst [vmem:[#allocation2 + $0xb0] sm:$0xff] %v565
        %572 = vst [vmem:[#allocation2 + $0xb8] sm:$0xff] %v566
        %v573 = vld [vmem:[%s351] sm:$0xff]
        %v574 = vld [vmem:[%s351 + $0x8] sm:$0xff]
        %v575 = vld [vmem:[%s351 + $0x10] sm:$0xff]
        %v576 = vld [vmem:[%s351 + $0x18] sm:$0xff]
        %581 = vrot.lane.b32.xlu0 %v573, 124
        %v582 = vpop.permute.xlu0 %581
        %583 = vrot.lane.b32.xlu0 %v574, 124
        %v584 = vpop.permute.xlu0 %583
        %585 = vrot.lane.b32.xlu0 %v575, 124
        %v586 = vpop.permute.xlu0 %585
        %587 = vrot.lane.b32.xlu0 %v576, 124
        %v588 = vpop.permute.xlu0 %587
        %vm589 = vcmask 1014784
        %v590 = vsel %vm589, %v582, %v584
        %v591 = vsel %vm589, %v584, %v586
        %v592 = vsel %vm589, %v586, %v588
        %596 = vst [vmem:[#allocation2 + $0xc0] sm:$0xff] %v590
        %597 = vst [vmem:[#allocation2 + $0xc8] sm:$0xff] %v591
        %598 = vst [vmem:[#allocation2 + $0xd0] sm:$0xff] %v592
        %v599 = vld [vmem:[%s361] sm:$0xff]
        %v600 = vld [vmem:[%s361 + $0x8] sm:$0xff]
        %v601 = vld [vmem:[%s361 + $0x10] sm:$0xff]
        %v602 = vld [vmem:[%s361 + $0x18] sm:$0xff]
        %607 = vrot.lane.b32.xlu0 %v599, 124
        %v608 = vpop.permute.xlu0 %607
        %609 = vrot.lane.b32.xlu0 %v600, 124
        %v610 = vpop.permute.xlu0 %609
        %611 = vrot.lane.b32.xlu0 %v601, 124
        %v612 = vpop.permute.xlu0 %611
        %613 = vrot.lane.b32.xlu0 %v602, 124
        %v614 = vpop.permute.xlu0 %613
        %v615 = vsel %vm589, %v608, %v610
        %v616 = vsel %vm589, %v610, %v612
        %v617 = vsel %vm589, %v612, %v614
        %621 = vst [vmem:[#allocation2 + $0xd8] sm:$0xff] %v615
        %622 = vst [vmem:[#allocation2 + $0xe0] sm:$0xff] %v616
        %623 = vst [vmem:[#allocation2 + $0xe8] sm:$0xff] %v617
        %v624 = vld [vmem:[%s351] sm:$0xff]
        %v625 = vld [vmem:[%s351 + $0x8] sm:$0xff]
        %v626 = vld [vmem:[%s351 + $0x10] sm:$0xff]
        %v627 = vld [vmem:[%s351 + $0x18] sm:$0xff]
        %632 = vrot.lane.b32.xlu0 %v624, 123
        %v633 = vpop.permute.xlu0 %632
        %634 = vrot.lane.b32.xlu0 %v625, 123
        %v635 = vpop.permute.xlu0 %634
        %636 = vrot.lane.b32.xlu0 %v626, 123
        %v637 = vpop.permute.xlu0 %636
        %638 = vrot.lane.b32.xlu0 %v627, 123
        %v639 = vpop.permute.xlu0 %638
        %vm640 = vcmask 1006592
        %v641 = vsel %vm640, %v633, %v635
        %v642 = vsel %vm640, %v635, %v637
        %v643 = vsel %vm640, %v637, %v639
        %647 = vst [vmem:[#allocation2 + $0xf0] sm:$0xff] %v641
        %648 = vst [vmem:[#allocation2 + $0xf8] sm:$0xff] %v642
        %649 = vst [vmem:[#allocation2 + $0x100] sm:$0xff] %v643
        %v650 = vld [vmem:[%s361] sm:$0xff]
        %v651 = vld [vmem:[%s361 + $0x8] sm:$0xff]
        %v652 = vld [vmem:[%s361 + $0x10] sm:$0xff]
        %v653 = vld [vmem:[%s361 + $0x18] sm:$0xff]
        %658 = vrot.lane.b32.xlu0 %v650, 123
        %v659 = vpop.permute.xlu0 %658
        %660 = vrot.lane.b32.xlu0 %v651, 123
        %v661 = vpop.permute.xlu0 %660
        %662 = vrot.lane.b32.xlu0 %v652, 123
        %v663 = vpop.permute.xlu0 %662
        %664 = vrot.lane.b32.xlu0 %v653, 123
        %v665 = vpop.permute.xlu0 %664
        %v666 = vsel %vm640, %v659, %v661
        %v667 = vsel %vm640, %v661, %v663
        %v668 = vsel %vm640, %v663, %v665
        %672 = vst [vmem:[#allocation2 + $0x108] sm:$0xff] %v666
        %673 = vst [vmem:[#allocation2 + $0x110] sm:$0xff] %v667
        %674 = vst [vmem:[#allocation2 + $0x118] sm:$0xff] %v668
        %v675 = vld [vmem:[%s351] sm:$0xff]
        %v676 = vld [vmem:[%s351 + $0x8] sm:$0xff]
        %v677 = vld [vmem:[%s351 + $0x10] sm:$0xff]
        %v678 = vld [vmem:[%s351 + $0x18] sm:$0xff]
        %683 = vrot.lane.b32.xlu0 %v675, 122
        %v684 = vpop.permute.xlu0 %683
        %685 = vrot.lane.b32.xlu0 %v676, 122
        %v686 = vpop.permute.xlu0 %685
        %687 = vrot.lane.b32.xlu0 %v677, 122
        %v688 = vpop.permute.xlu0 %687
        %689 = vrot.lane.b32.xlu0 %v678, 122
        %v690 = vpop.permute.xlu0 %689
        %vm691 = vcmask 998400
        %v692 = vsel %vm691, %v684, %v686
        %v693 = vsel %vm691, %v686, %v688
        %v694 = vsel %vm691, %v688, %v690
        %698 = vst [vmem:[#allocation2 + $0x120] sm:$0xff] %v692
        %699 = vst [vmem:[#allocation2 + $0x128] sm:$0xff] %v693
        %700 = vst [vmem:[#allocation2 + $0x130] sm:$0xff] %v694
        %v701 = vld [vmem:[%s361] sm:$0xff]
        %v702 = vld [vmem:[%s361 + $0x8] sm:$0xff]
        %v703 = vld [vmem:[%s361 + $0x10] sm:$0xff]
        %v704 = vld [vmem:[%s361 + $0x18] sm:$0xff]
        %709 = vrot.lane.b32.xlu0 %v701, 122
        %v710 = vpop.permute.xlu0 %709
        %711 = vrot.lane.b32.xlu0 %v702, 122
        %v712 = vpop.permute.xlu0 %711
        %713 = vrot.lane.b32.xlu0 %v703, 122
        %v714 = vpop.permute.xlu0 %713
        %715 = vrot.lane.b32.xlu0 %v704, 122
        %v716 = vpop.permute.xlu0 %715
        %v717 = vsel %vm691, %v710, %v712
        %v718 = vsel %vm691, %v712, %v714
        %v719 = vsel %vm691, %v714, %v716
        %723 = vst [vmem:[#allocation2 + $0x138] sm:$0xff] %v717
        %724 = vst [vmem:[#allocation2 + $0x140] sm:$0xff] %v718
        %725 = vst [vmem:[#allocation2 + $0x148] sm:$0xff] %v719
        %v726 = vld [vmem:[%s351] sm:$0xff]
        %v727 = vld [vmem:[%s351 + $0x8] sm:$0xff]
        %v728 = vld [vmem:[%s351 + $0x10] sm:$0xff]
        %v729 = vld [vmem:[%s351 + $0x18] sm:$0xff]
        %734 = vrot.lane.b32.xlu0 %v726, 104
        %v735 = vpop.permute.xlu0 %734
        %736 = vrot.lane.b32.xlu0 %v727, 104
        %v737 = vpop.permute.xlu0 %736
        %738 = vrot.lane.b32.xlu0 %v728, 104
        %v739 = vpop.permute.xlu0 %738
        %740 = vrot.lane.b32.xlu0 %v729, 104
        %v741 = vpop.permute.xlu0 %740
        %vm742 = vcmask 850944
        %v743 = vsel %vm742, %v735, %v737
        %v744 = vsel %vm742, %v737, %v739
        %v745 = vsel %vm742, %v739, %v741
        %749 = vst [vmem:[#allocation2 + $0x150] sm:$0xff] %v743
        %750 = vst [vmem:[#allocation2 + $0x158] sm:$0xff] %v744
        %751 = vst [vmem:[#allocation2 + $0x160] sm:$0xff] %v745
        %v752 = vld [vmem:[%s361] sm:$0xff]
        %v753 = vld [vmem:[%s361 + $0x8] sm:$0xff]
        %v754 = vld [vmem:[%s361 + $0x10] sm:$0xff]
        %v755 = vld [vmem:[%s361 + $0x18] sm:$0xff]
        %760 = vrot.lane.b32.xlu0 %v752, 104
        %v761 = vpop.permute.xlu0 %760
        %762 = vrot.lane.b32.xlu0 %v753, 104
        %v763 = vpop.permute.xlu0 %762
        %764 = vrot.lane.b32.xlu0 %v754, 104
        %v765 = vpop.permute.xlu0 %764
        %766 = vrot.lane.b32.xlu0 %v755, 104
        %v767 = vpop.permute.xlu0 %766
        %v768 = vsel %vm742, %v761, %v763
        %v769 = vsel %vm742, %v763, %v765
        %v770 = vsel %vm742, %v765, %v767
        %774 = vst [vmem:[#allocation2 + $0x168] sm:$0xff] %v768
        %775 = vst [vmem:[#allocation2 + $0x170] sm:$0xff] %v769
        %776 = vst [vmem:[#allocation2 + $0x178] sm:$0xff] %v770
        %v777 = vld [vmem:[%s351] sm:$0xff]
        %v778 = vld [vmem:[%s351 + $0x8] sm:$0xff]
        %v779 = vld [vmem:[%s351 + $0x10] sm:$0xff]
        %v780 = vld [vmem:[%s351 + $0x18] sm:$0xff]
        %785 = vrot.lane.b32.xlu0 %v777, 103
        %v786 = vpop.permute.xlu0 %785
        %787 = vrot.lane.b32.xlu0 %v778, 103
        %v788 = vpop.permute.xlu0 %787
        %789 = vrot.lane.b32.xlu0 %v779, 103
        %v790 = vpop.permute.xlu0 %789
        %791 = vrot.lane.b32.xlu0 %v780, 103
        %v792 = vpop.permute.xlu0 %791
        %vm793 = vcmask 842752
        %v794 = vsel %vm793, %v786, %v788
        %v795 = vsel %vm793, %v788, %v790
        %v796 = vsel %vm793, %v790, %v792
        %800 = vst [vmem:[#allocation2 + $0x180] sm:$0xff] %v794
        %801 = vst [vmem:[#allocation2 + $0x188] sm:$0xff] %v795
        %802 = vst [vmem:[#allocation2 + $0x190] sm:$0xff] %v796
        %v803 = vld [vmem:[%s361] sm:$0xff]
        %v804 = vld [vmem:[%s361 + $0x8] sm:$0xff]
        %v805 = vld [vmem:[%s361 + $0x10] sm:$0xff]
        %v806 = vld [vmem:[%s361 + $0x18] sm:$0xff]
        %811 = vrot.lane.b32.xlu0 %v803, 103
        %v812 = vpop.permute.xlu0 %811
        %813 = vrot.lane.b32.xlu0 %v804, 103
        %v814 = vpop.permute.xlu0 %813
        %815 = vrot.lane.b32.xlu0 %v805, 103
        %v816 = vpop.permute.xlu0 %815
        %817 = vrot.lane.b32.xlu0 %v806, 103
        %v818 = vpop.permute.xlu0 %817
        %v819 = vsel %vm793, %v812, %v814
        %v820 = vsel %vm793, %v814, %v816
        %v821 = vsel %vm793, %v816, %v818
        %825 = vst [vmem:[#allocation2 + $0x198] sm:$0xff] %v819
        %826 = vst [vmem:[#allocation2 + $0x1a0] sm:$0xff] %v820
        %827 = vst [vmem:[#allocation2 + $0x1a8] sm:$0xff] %v821
        %v828 = vld [vmem:[%s351] sm:$0xff]
        %v829 = vld [vmem:[%s351 + $0x8] sm:$0xff]
        %v830 = vld [vmem:[%s351 + $0x10] sm:$0xff]
        %v831 = vld [vmem:[%s351 + $0x18] sm:$0xff]
        %836 = vrot.lane.b32.xlu0 %v828, 102
        %v837 = vpop.permute.xlu0 %836
        %838 = vrot.lane.b32.xlu0 %v829, 102
        %v839 = vpop.permute.xlu0 %838
        %840 = vrot.lane.b32.xlu0 %v830, 102
        %v841 = vpop.permute.xlu0 %840
        %842 = vrot.lane.b32.xlu0 %v831, 102
        %v843 = vpop.permute.xlu0 %842
        %vm844 = vcmask 834560
        %v845 = vsel %vm844, %v837, %v839
        %v846 = vsel %vm844, %v839, %v841
        %v847 = vsel %vm844, %v841, %v843
        %851 = vst [vmem:[#allocation2 + $0x1b0] sm:$0xff] %v845
        %852 = vst [vmem:[#allocation2 + $0x1b8] sm:$0xff] %v846
        %853 = vst [vmem:[#allocation2 + $0x1c0] sm:$0xff] %v847
        %v854 = vld [vmem:[%s361] sm:$0xff]
        %v855 = vld [vmem:[%s361 + $0x8] sm:$0xff]
        %v856 = vld [vmem:[%s361 + $0x10] sm:$0xff]
        %v857 = vld [vmem:[%s361 + $0x18] sm:$0xff]
        %862 = vrot.lane.b32.xlu0 %v854, 102
        %v863 = vpop.permute.xlu0 %862
        %864 = vrot.lane.b32.xlu0 %v855, 102
        %v865 = vpop.permute.xlu0 %864
        %866 = vrot.lane.b32.xlu0 %v856, 102
        %v867 = vpop.permute.xlu0 %866
        %868 = vrot.lane.b32.xlu0 %v857, 102
        %v869 = vpop.permute.xlu0 %868
        %v870 = vsel %vm844, %v863, %v865
        %v871 = vsel %vm844, %v865, %v867
        %v872 = vsel %vm844, %v867, %v869
        %876 = vst [vmem:[#allocation2 + $0x1c8] sm:$0xff] %v870
        %877 = vst [vmem:[#allocation2 + $0x1d0] sm:$0xff] %v871
        %878 = vst [vmem:[#allocation2 + $0x1d8] sm:$0xff] %v872
        %v879 = vld [vmem:[%s351] sm:$0xff]
        %v880 = vld [vmem:[%s351 + $0x8] sm:$0xff]
        %v881 = vld [vmem:[%s351 + $0x10] sm:$0xff]
        %v882 = vld [vmem:[%s351 + $0x18] sm:$0xff]
        %887 = vrot.lane.b32.xlu0 %v879, 101
        %v888 = vpop.permute.xlu0 %887
        %889 = vrot.lane.b32.xlu0 %v880, 101
        %v890 = vpop.permute.xlu0 %889
        %891 = vrot.lane.b32.xlu0 %v881, 101
        %v892 = vpop.permute.xlu0 %891
        %893 = vrot.lane.b32.xlu0 %v882, 101
        %v894 = vpop.permute.xlu0 %893
        %vm895 = vcmask 826368
        %v896 = vsel %vm895, %v888, %v890
        %v897 = vsel %vm895, %v890, %v892
        %v898 = vsel %vm895, %v892, %v894
        %902 = vst [vmem:[#allocation2 + $0x1e0] sm:$0xff] %v896
        %903 = vst [vmem:[#allocation2 + $0x1e8] sm:$0xff] %v897
        %904 = vst [vmem:[#allocation2 + $0x1f0] sm:$0xff] %v898
        %v905 = vld [vmem:[%s361] sm:$0xff]
        %v906 = vld [vmem:[%s361 + $0x8] sm:$0xff]
        %v907 = vld [vmem:[%s361 + $0x10] sm:$0xff]
        %v908 = vld [vmem:[%s361 + $0x18] sm:$0xff]
        %913 = vrot.lane.b32.xlu0 %v905, 101
        %v914 = vpop.permute.xlu0 %913
        %915 = vrot.lane.b32.xlu0 %v906, 101
        %v916 = vpop.permute.xlu0 %915
        %917 = vrot.lane.b32.xlu0 %v907, 101
        %v918 = vpop.permute.xlu0 %917
        %919 = vrot.lane.b32.xlu0 %v908, 101
        %v920 = vpop.permute.xlu0 %919
        %v921 = vsel %vm895, %v914, %v916
        %v922 = vsel %vm895, %v916, %v918
        %v923 = vsel %vm895, %v918, %v920
        %927 = vst [vmem:[#allocation2 + $0x1f8] sm:$0xff] %v921
        %928 = vst [vmem:[#allocation2 + $0x200] sm:$0xff] %v922
        %929 = vst [vmem:[#allocation2 + $0x208] sm:$0xff] %v923
        %v930 = vld [vmem:[%s351] sm:$0xff]
        %v931 = vld [vmem:[%s351 + $0x8] sm:$0xff]
        %v932 = vld [vmem:[%s351 + $0x10] sm:$0xff]
        %v933 = vld [vmem:[%s351 + $0x18] sm:$0xff]
        %938 = vrot.lane.b32.xlu0 %v930, 100
        %v939 = vpop.permute.xlu0 %938
        %940 = vrot.lane.b32.xlu0 %v931, 100
        %v941 = vpop.permute.xlu0 %940
        %942 = vrot.lane.b32.xlu0 %v932, 100
        %v943 = vpop.permute.xlu0 %942
        %944 = vrot.lane.b32.xlu0 %v933, 100
        %v945 = vpop.permute.xlu0 %944
        %vm946 = vcmask 818176
        %v947 = vsel %vm946, %v939, %v941
        %v948 = vsel %vm946, %v941, %v943
        %v949 = vsel %vm946, %v943, %v945
        %953 = vst [vmem:[#allocation2 + $0x210] sm:$0xff] %v947
        %954 = vst [vmem:[#allocation2 + $0x218] sm:$0xff] %v948
        %955 = vst [vmem:[#allocation2 + $0x220] sm:$0xff] %v949
        %v956 = vld [vmem:[%s361] sm:$0xff]
        %v957 = vld [vmem:[%s361 + $0x8] sm:$0xff]
        %v958 = vld [vmem:[%s361 + $0x10] sm:$0xff]
        %v959 = vld [vmem:[%s361 + $0x18] sm:$0xff]
        %964 = vrot.lane.b32.xlu0 %v956, 100
        %v965 = vpop.permute.xlu0 %964
        %966 = vrot.lane.b32.xlu0 %v957, 100
        %v967 = vpop.permute.xlu0 %966
        %968 = vrot.lane.b32.xlu0 %v958, 100
        %v969 = vpop.permute.xlu0 %968
        %970 = vrot.lane.b32.xlu0 %v959, 100
        %v971 = vpop.permute.xlu0 %970
        %v972 = vsel %vm946, %v965, %v967
        %v973 = vsel %vm946, %v967, %v969
        %v974 = vsel %vm946, %v969, %v971
        %978 = vst [vmem:[#allocation2 + $0x228] sm:$0xff] %v972
        %979 = vst [vmem:[#allocation2 + $0x230] sm:$0xff] %v973
        %980 = vst [vmem:[#allocation2 + $0x238] sm:$0xff] %v974
        %v981 = vld [vmem:[%s351] sm:$0xff]
        %v982 = vld [vmem:[%s351 + $0x8] sm:$0xff]
        %v983 = vld [vmem:[%s351 + $0x10] sm:$0xff]
        %v984 = vld [vmem:[%s351 + $0x18] sm:$0xff]
        %989 = vrot.lane.b32.xlu0 %v981, 99
        %v990 = vpop.permute.xlu0 %989
        %991 = vrot.lane.b32.xlu0 %v982, 99
        %v992 = vpop.permute.xlu0 %991
        %993 = vrot.lane.b32.xlu0 %v983, 99
        %v994 = vpop.permute.xlu0 %993
        %995 = vrot.lane.b32.xlu0 %v984, 99
        %v996 = vpop.permute.xlu0 %995
        %vm997 = vcmask 809984
        %v998 = vsel %vm997, %v990, %v992
        %v999 = vsel %vm997, %v992, %v994
        %v1000 = vsel %vm997, %v994, %v996
        %1004 = vst [vmem:[#allocation2 + $0x240] sm:$0xff] %v998
        %1005 = vst [vmem:[#allocation2 + $0x248] sm:$0xff] %v999
        %1006 = vst [vmem:[#allocation2 + $0x250] sm:$0xff] %v1000
        %v1007 = vld [vmem:[%s361] sm:$0xff]
        %v1008 = vld [vmem:[%s361 + $0x8] sm:$0xff]
        %v1009 = vld [vmem:[%s361 + $0x10] sm:$0xff]
        %v1010 = vld [vmem:[%s361 + $0x18] sm:$0xff]
        %1015 = vrot.lane.b32.xlu0 %v1007, 99
        %v1016 = vpop.permute.xlu0 %1015
        %1017 = vrot.lane.b32.xlu0 %v1008, 99
        %v1018 = vpop.permute.xlu0 %1017
        %1019 = vrot.lane.b32.xlu0 %v1009, 99
        %v1020 = vpop.permute.xlu0 %1019
        %1021 = vrot.lane.b32.xlu0 %v1010, 99
        %v1022 = vpop.permute.xlu0 %1021
        %v1023 = vsel %vm997, %v1016, %v1018
        %v1024 = vsel %vm997, %v1018, %v1020
        %v1025 = vsel %vm997, %v1020, %v1022
        %1029 = vst [vmem:[#allocation2 + $0x258] sm:$0xff] %v1023
        %1030 = vst [vmem:[#allocation2 + $0x260] sm:$0xff] %v1024
        %1031 = vst [vmem:[#allocation2 + $0x268] sm:$0xff] %v1025
        %v1032 = vld [vmem:[%s351] sm:$0xff]
        %v1033 = vld [vmem:[%s351 + $0x8] sm:$0xff]
        %v1034 = vld [vmem:[%s351 + $0x10] sm:$0xff]
        %v1035 = vld [vmem:[%s351 + $0x18] sm:$0xff]
        %1040 = vrot.lane.b32.xlu0 %v1032, 98
        %v1041 = vpop.permute.xlu0 %1040
        %1042 = vrot.lane.b32.xlu0 %v1033, 98
        %v1043 = vpop.permute.xlu0 %1042
        %1044 = vrot.lane.b32.xlu0 %v1034, 98
        %v1045 = vpop.permute.xlu0 %1044
        %1046 = vrot.lane.b32.xlu0 %v1035, 98
        %v1047 = vpop.permute.xlu0 %1046
        %vm1048 = vcmask 801792
        %v1049 = vsel %vm1048, %v1041, %v1043
        %v1050 = vsel %vm1048, %v1043, %v1045
        %v1051 = vsel %vm1048, %v1045, %v1047
        %1055 = vst [vmem:[#allocation2 + $0x270] sm:$0xff] %v1049
        %1056 = vst [vmem:[#allocation2 + $0x278] sm:$0xff] %v1050
        %1057 = vst [vmem:[#allocation2 + $0x280] sm:$0xff] %v1051
        %v1058 = vld [vmem:[%s361] sm:$0xff]
        %v1059 = vld [vmem:[%s361 + $0x8] sm:$0xff]
        %v1060 = vld [vmem:[%s361 + $0x10] sm:$0xff]
        %v1061 = vld [vmem:[%s361 + $0x18] sm:$0xff]
        %1066 = vrot.lane.b32.xlu0 %v1058, 98
        %v1067 = vpop.permute.xlu0 %1066
        %1068 = vrot.lane.b32.xlu0 %v1059, 98
        %v1069 = vpop.permute.xlu0 %1068
        %1070 = vrot.lane.b32.xlu0 %v1060, 98
        %v1071 = vpop.permute.xlu0 %1070
        %1072 = vrot.lane.b32.xlu0 %v1061, 98
        %v1073 = vpop.permute.xlu0 %1072
        %v1074 = vsel %vm1048, %v1067, %v1069
        %v1075 = vsel %vm1048, %v1069, %v1071
        %v1076 = vsel %vm1048, %v1071, %v1073
        %1080 = vst [vmem:[#allocation2 + $0x288] sm:$0xff] %v1074
        %1081 = vst [vmem:[#allocation2 + $0x290] sm:$0xff] %v1075
        %1082 = vst [vmem:[#allocation2 + $0x298] sm:$0xff] %v1076
        %v1083 = vld [vmem:[%s351] sm:$0xff]
        %v1084 = vld [vmem:[%s351 + $0x8] sm:$0xff]
        %v1085 = vld [vmem:[%s351 + $0x10] sm:$0xff]
        %v1086 = vld [vmem:[%s351 + $0x18] sm:$0xff]
        %1091 = vrot.lane.b32.xlu0 %v1083, 80
        %v1092 = vpop.permute.xlu0 %1091
        %1093 = vrot.lane.b32.xlu0 %v1084, 80
        %v1094 = vpop.permute.xlu0 %1093
        %1095 = vrot.lane.b32.xlu0 %v1085, 80
        %v1096 = vpop.permute.xlu0 %1095
        %1097 = vrot.lane.b32.xlu0 %v1086, 80
        %v1098 = vpop.permute.xlu0 %1097
        %vm1099 = vcmask 654336
        %v1100 = vsel %vm1099, %v1092, %v1094
        %v1101 = vsel %vm1099, %v1094, %v1096
        %v1102 = vsel %vm1099, %v1096, %v1098
        %1106 = vst [vmem:[#allocation2 + $0x2a0] sm:$0xff] %v1100
        %1107 = vst [vmem:[#allocation2 + $0x2a8] sm:$0xff] %v1101
        %1108 = vst [vmem:[#allocation2 + $0x2b0] sm:$0xff] %v1102
        %v1109 = vld [vmem:[%s361] sm:$0xff]
        %v1110 = vld [vmem:[%s361 + $0x8] sm:$0xff]
        %v1111 = vld [vmem:[%s361 + $0x10] sm:$0xff]
        %v1112 = vld [vmem:[%s361 + $0x18] sm:$0xff]
        %1117 = vrot.lane.b32.xlu0 %v1109, 80
        %v1118 = vpop.permute.xlu0 %1117
        %1119 = vrot.lane.b32.xlu0 %v1110, 80
        %v1120 = vpop.permute.xlu0 %1119
        %1121 = vrot.lane.b32.xlu0 %v1111, 80
        %v1122 = vpop.permute.xlu0 %1121
        %1123 = vrot.lane.b32.xlu0 %v1112, 80
        %v1124 = vpop.permute.xlu0 %1123
        %v1125 = vsel %vm1099, %v1118, %v1120
        %v1126 = vsel %vm1099, %v1120, %v1122
        %v1127 = vsel %vm1099, %v1122, %v1124
        %1131 = vst [vmem:[#allocation2 + $0x2b8] sm:$0xff] %v1125
        %1132 = vst [vmem:[#allocation2 + $0x2c0] sm:$0xff] %v1126
        %1133 = vst [vmem:[#allocation2 + $0x2c8] sm:$0xff] %v1127
        %v1134 = vld [vmem:[%s351] sm:$0xff]
        %v1135 = vld [vmem:[%s351 + $0x8] sm:$0xff]
        %v1136 = vld [vmem:[%s351 + $0x10] sm:$0xff]
        %v1137 = vld [vmem:[%s351 + $0x18] sm:$0xff]
        %1142 = vrot.lane.b32.xlu0 %v1134, 79
        %v1143 = vpop.permute.xlu0 %1142
        %1144 = vrot.lane.b32.xlu0 %v1135, 79
        %v1145 = vpop.permute.xlu0 %1144
        %1146 = vrot.lane.b32.xlu0 %v1136, 79
        %v1147 = vpop.permute.xlu0 %1146
        %1148 = vrot.lane.b32.xlu0 %v1137, 79
        %v1149 = vpop.permute.xlu0 %1148
        %vm1150 = vcmask 646144
        %v1151 = vsel %vm1150, %v1143, %v1145
        %v1152 = vsel %vm1150, %v1145, %v1147
        %v1153 = vsel %vm1150, %v1147, %v1149
        %1157 = vst [vmem:[#allocation2 + $0x2d0] sm:$0xff] %v1151
        %1158 = vst [vmem:[#allocation2 + $0x2d8] sm:$0xff] %v1152
        %1159 = vst [vmem:[#allocation2 + $0x2e0] sm:$0xff] %v1153
        %v1160 = vld [vmem:[%s361] sm:$0xff]
        %v1161 = vld [vmem:[%s361 + $0x8] sm:$0xff]
        %v1162 = vld [vmem:[%s361 + $0x10] sm:$0xff]
        %v1163 = vld [vmem:[%s361 + $0x18] sm:$0xff]
        %1168 = vrot.lane.b32.xlu0 %v1160, 79
        %v1169 = vpop.permute.xlu0 %1168
        %1170 = vrot.lane.b32.xlu0 %v1161, 79
        %v1171 = vpop.permute.xlu0 %1170
        %1172 = vrot.lane.b32.xlu0 %v1162, 79
        %v1173 = vpop.permute.xlu0 %1172
        %1174 = vrot.lane.b32.xlu0 %v1163, 79
        %v1175 = vpop.permute.xlu0 %1174
        %v1176 = vsel %vm1150, %v1169, %v1171
        %v1177 = vsel %vm1150, %v1171, %v1173
        %v1178 = vsel %vm1150, %v1173, %v1175
        %1182 = vst [vmem:[#allocation2 + $0x2e8] sm:$0xff] %v1176
        %1183 = vst [vmem:[#allocation2 + $0x2f0] sm:$0xff] %v1177
        %1184 = vst [vmem:[#allocation2 + $0x2f8] sm:$0xff] %v1178
        %v1185 = vld [vmem:[%s351] sm:$0xff]
        %v1186 = vld [vmem:[%s351 + $0x8] sm:$0xff]
        %v1187 = vld [vmem:[%s351 + $0x10] sm:$0xff]
        %v1188 = vld [vmem:[%s351 + $0x18] sm:$0xff]
        %1193 = vrot.lane.b32.xlu0 %v1185, 78
        %v1194 = vpop.permute.xlu0 %1193
        %1195 = vrot.lane.b32.xlu0 %v1186, 78
        %v1196 = vpop.permute.xlu0 %1195
        %1197 = vrot.lane.b32.xlu0 %v1187, 78
        %v1198 = vpop.permute.xlu0 %1197
        %1199 = vrot.lane.b32.xlu0 %v1188, 78
        %v1200 = vpop.permute.xlu0 %1199
        %vm1201 = vcmask 637952
        %v1202 = vsel %vm1201, %v1194, %v1196
        %v1203 = vsel %vm1201, %v1196, %v1198
        %v1204 = vsel %vm1201, %v1198, %v1200
        %1208 = vst [vmem:[#allocation2 + $0x300] sm:$0xff] %v1202
        %1209 = vst [vmem:[#allocation2 + $0x308] sm:$0xff] %v1203
        %1210 = vst [vmem:[#allocation2 + $0x310] sm:$0xff] %v1204
        %v1211 = vld [vmem:[%s361] sm:$0xff]
        %v1212 = vld [vmem:[%s361 + $0x8] sm:$0xff]
        %v1213 = vld [vmem:[%s361 + $0x10] sm:$0xff]
        %v1214 = vld [vmem:[%s361 + $0x18] sm:$0xff]
        %1219 = vrot.lane.b32.xlu0 %v1211, 78
        %v1220 = vpop.permute.xlu0 %1219
        %1221 = vrot.lane.b32.xlu0 %v1212, 78
        %v1222 = vpop.permute.xlu0 %1221
        %1223 = vrot.lane.b32.xlu0 %v1213, 78
        %v1224 = vpop.permute.xlu0 %1223
        %1225 = vrot.lane.b32.xlu0 %v1214, 78
        %v1226 = vpop.permute.xlu0 %1225
        %v1227 = vsel %vm1201, %v1220, %v1222
        %v1228 = vsel %vm1201, %v1222, %v1224
        %v1229 = vsel %vm1201, %v1224, %v1226
        %1233 = vst [vmem:[#allocation2 + $0x318] sm:$0xff] %v1227
        %1234 = vst [vmem:[#allocation2 + $0x320] sm:$0xff] %v1228
        %1235 = vst [vmem:[#allocation2 + $0x328] sm:$0xff] %v1229
        %v1236 = vld [vmem:[%s351] sm:$0xff]
        %v1237 = vld [vmem:[%s351 + $0x8] sm:$0xff]
        %v1238 = vld [vmem:[%s351 + $0x10] sm:$0xff]
        %v1239 = vld [vmem:[%s351 + $0x18] sm:$0xff]
        %1244 = vrot.lane.b32.xlu0 %v1236, 77
        %v1245 = vpop.permute.xlu0 %1244
        %1246 = vrot.lane.b32.xlu0 %v1237, 77
        %v1247 = vpop.permute.xlu0 %1246
        %1248 = vrot.lane.b32.xlu0 %v1238, 77
        %v1249 = vpop.permute.xlu0 %1248
        %1250 = vrot.lane.b32.xlu0 %v1239, 77
        %v1251 = vpop.permute.xlu0 %1250
        %vm1252 = vcmask 629760
        %v1253 = vsel %vm1252, %v1245, %v1247
        %v1254 = vsel %vm1252, %v1247, %v1249
        %v1255 = vsel %vm1252, %v1249, %v1251
        %1259 = vst [vmem:[#allocation2 + $0x330] sm:$0xff] %v1253
        %1260 = vst [vmem:[#allocation2 + $0x338] sm:$0xff] %v1254
        %1261 = vst [vmem:[#allocation2 + $0x340] sm:$0xff] %v1255
        %v1262 = vld [vmem:[%s361] sm:$0xff]
        %v1263 = vld [vmem:[%s361 + $0x8] sm:$0xff]
        %v1264 = vld [vmem:[%s361 + $0x10] sm:$0xff]
        %v1265 = vld [vmem:[%s361 + $0x18] sm:$0xff]
        %1270 = vrot.lane.b32.xlu0 %v1262, 77
        %v1271 = vpop.permute.xlu0 %1270
        %1272 = vrot.lane.b32.xlu0 %v1263, 77
        %v1273 = vpop.permute.xlu0 %1272
        %1274 = vrot.lane.b32.xlu0 %v1264, 77
        %v1275 = vpop.permute.xlu0 %1274
        %1276 = vrot.lane.b32.xlu0 %v1265, 77
        %v1277 = vpop.permute.xlu0 %1276
        %v1278 = vsel %vm1252, %v1271, %v1273
        %v1279 = vsel %vm1252, %v1273, %v1275
        %v1280 = vsel %vm1252, %v1275, %v1277
        %1284 = vst [vmem:[#allocation2 + $0x348] sm:$0xff] %v1278
        %1285 = vst [vmem:[#allocation2 + $0x350] sm:$0xff] %v1279
        %1286 = vst [vmem:[#allocation2 + $0x358] sm:$0xff] %v1280
        %v1287 = vld [vmem:[%s351] sm:$0xff]
        %v1288 = vld [vmem:[%s351 + $0x8] sm:$0xff]
        %v1289 = vld [vmem:[%s351 + $0x10] sm:$0xff]
        %v1290 = vld [vmem:[%s351 + $0x18] sm:$0xff]
        %1295 = vrot.lane.b32.xlu0 %v1287, 76
        %v1296 = vpop.permute.xlu0 %1295
        %1297 = vrot.lane.b32.xlu0 %v1288, 76
        %v1298 = vpop.permute.xlu0 %1297
        %1299 = vrot.lane.b32.xlu0 %v1289, 76
        %v1300 = vpop.permute.xlu0 %1299
        %1301 = vrot.lane.b32.xlu0 %v1290, 76
        %v1302 = vpop.permute.xlu0 %1301
        %vm1303 = vcmask 621568
        %v1304 = vsel %vm1303, %v1296, %v1298
        %v1305 = vsel %vm1303, %v1298, %v1300
        %v1306 = vsel %vm1303, %v1300, %v1302
        %1310 = vst [vmem:[#allocation2 + $0x360] sm:$0xff] %v1304
        %1311 = vst [vmem:[#allocation2 + $0x368] sm:$0xff] %v1305
        %1312 = vst [vmem:[#allocation2 + $0x370] sm:$0xff] %v1306
        %v1313 = vld [vmem:[%s361] sm:$0xff]
        %v1314 = vld [vmem:[%s361 + $0x8] sm:$0xff]
        %v1315 = vld [vmem:[%s361 + $0x10] sm:$0xff]
        %v1316 = vld [vmem:[%s361 + $0x18] sm:$0xff]
        %1321 = vrot.lane.b32.xlu0 %v1313, 76
        %v1322 = vpop.permute.xlu0 %1321
        %1323 = vrot.lane.b32.xlu0 %v1314, 76
        %v1324 = vpop.permute.xlu0 %1323
        %1325 = vrot.lane.b32.xlu0 %v1315, 76
        %v1326 = vpop.permute.xlu0 %1325
        %1327 = vrot.lane.b32.xlu0 %v1316, 76
        %v1328 = vpop.permute.xlu0 %1327
        %v1329 = vsel %vm1303, %v1322, %v1324
        %v1330 = vsel %vm1303, %v1324, %v1326
        %v1331 = vsel %vm1303, %v1326, %v1328
        %1335 = vst [vmem:[#allocation2 + $0x378] sm:$0xff] %v1329
        %1336 = vst [vmem:[#allocation2 + $0x380] sm:$0xff] %v1330
        %1337 = vst [vmem:[#allocation2 + $0x388] sm:$0xff] %v1331
        %v1338 = vld [vmem:[%s351] sm:$0xff]
        %v1339 = vld [vmem:[%s351 + $0x8] sm:$0xff]
        %v1340 = vld [vmem:[%s351 + $0x10] sm:$0xff]
        %v1341 = vld [vmem:[%s351 + $0x18] sm:$0xff]
        %1346 = vrot.lane.b32.xlu0 %v1338, 75
        %v1347 = vpop.permute.xlu0 %1346
        %1348 = vrot.lane.b32.xlu0 %v1339, 75
        %v1349 = vpop.permute.xlu0 %1348
        %1350 = vrot.lane.b32.xlu0 %v1340, 75
        %v1351 = vpop.permute.xlu0 %1350
        %1352 = vrot.lane.b32.xlu0 %v1341, 75
        %v1353 = vpop.permute.xlu0 %1352
        %vm1354 = vcmask 613376
        %v1355 = vsel %vm1354, %v1347, %v1349
        %v1356 = vsel %vm1354, %v1349, %v1351
        %v1357 = vsel %vm1354, %v1351, %v1353
        %1361 = vst [vmem:[#allocation2 + $0x390] sm:$0xff] %v1355
        %1362 = vst [vmem:[#allocation2 + $0x398] sm:$0xff] %v1356
        %1363 = vst [vmem:[#allocation2 + $0x3a0] sm:$0xff] %v1357
        %v1364 = vld [vmem:[%s361] sm:$0xff]
        %v1365 = vld [vmem:[%s361 + $0x8] sm:$0xff]
        %v1366 = vld [vmem:[%s361 + $0x10] sm:$0xff]
        %v1367 = vld [vmem:[%s361 + $0x18] sm:$0xff]
        %1372 = vrot.lane.b32.xlu0 %v1364, 75
        %v1373 = vpop.permute.xlu0 %1372
        %1374 = vrot.lane.b32.xlu0 %v1365, 75
        %v1375 = vpop.permute.xlu0 %1374
        %1376 = vrot.lane.b32.xlu0 %v1366, 75
        %v1377 = vpop.permute.xlu0 %1376
        %1378 = vrot.lane.b32.xlu0 %v1367, 75
        %v1379 = vpop.permute.xlu0 %1378
        %v1380 = vsel %vm1354, %v1373, %v1375
        %v1381 = vsel %vm1354, %v1375, %v1377
        %v1382 = vsel %vm1354, %v1377, %v1379
        %1386 = vst [vmem:[#allocation2 + $0x3a8] sm:$0xff] %v1380
        %1387 = vst [vmem:[#allocation2 + $0x3b0] sm:$0xff] %v1381
        %1388 = vst [vmem:[#allocation2 + $0x3b8] sm:$0xff] %v1382
        %v1389 = vld [vmem:[%s351] sm:$0xff]
        %v1390 = vld [vmem:[%s351 + $0x8] sm:$0xff]
        %v1391 = vld [vmem:[%s351 + $0x10] sm:$0xff]
        %v1392 = vld [vmem:[%s351 + $0x18] sm:$0xff]
        %1397 = vrot.lane.b32.xlu0 %v1389, 74
        %v1398 = vpop.permute.xlu0 %1397
        %1399 = vrot.lane.b32.xlu0 %v1390, 74
        %v1400 = vpop.permute.xlu0 %1399
        %1401 = vrot.lane.b32.xlu0 %v1391, 74
        %v1402 = vpop.permute.xlu0 %1401
        %1403 = vrot.lane.b32.xlu0 %v1392, 74
        %v1404 = vpop.permute.xlu0 %1403
        %vm1405 = vcmask 605184
        %v1406 = vsel %vm1405, %v1398, %v1400
        %v1407 = vsel %vm1405, %v1400, %v1402
        %v1408 = vsel %vm1405, %v1402, %v1404
        %1412 = vst [vmem:[#allocation2 + $0x3c0] sm:$0xff] %v1406
        %1413 = vst [vmem:[#allocation2 + $0x3c8] sm:$0xff] %v1407
        %1414 = vst [vmem:[#allocation2 + $0x3d0] sm:$0xff] %v1408
        %v1415 = vld [vmem:[%s361] sm:$0xff]
        %v1416 = vld [vmem:[%s361 + $0x8] sm:$0xff]
        %v1417 = vld [vmem:[%s361 + $0x10] sm:$0xff]
        %v1418 = vld [vmem:[%s361 + $0x18] sm:$0xff]
        %1423 = vrot.lane.b32.xlu0 %v1415, 74
        %v1424 = vpop.permute.xlu0 %1423
        %1425 = vrot.lane.b32.xlu0 %v1416, 74
        %v1426 = vpop.permute.xlu0 %1425
        %1427 = vrot.lane.b32.xlu0 %v1417, 74
        %v1428 = vpop.permute.xlu0 %1427
        %1429 = vrot.lane.b32.xlu0 %v1418, 74
        %v1430 = vpop.permute.xlu0 %1429
        %v1431 = vsel %vm1405, %v1424, %v1426
        %v1432 = vsel %vm1405, %v1426, %v1428
        %v1433 = vsel %vm1405, %v1428, %v1430
        %1437 = vst [vmem:[#allocation2 + $0x3d8] sm:$0xff] %v1431
        %1438 = vst [vmem:[#allocation2 + $0x3e0] sm:$0xff] %v1432
        %1439 = vst [vmem:[#allocation2 + $0x3e8] sm:$0xff] %v1433
        %v1440 = vld [vmem:[%s351] sm:$0xff]
        %v1441 = vld [vmem:[%s351 + $0x8] sm:$0xff]
        %v1442 = vld [vmem:[%s351 + $0x10] sm:$0xff]
        %v1443 = vld [vmem:[%s351 + $0x18] sm:$0xff]
        %1448 = vrot.lane.b32.xlu0 %v1440, 56
        %v1449 = vpop.permute.xlu0 %1448
        %1450 = vrot.lane.b32.xlu0 %v1441, 56
        %v1451 = vpop.permute.xlu0 %1450
        %1452 = vrot.lane.b32.xlu0 %v1442, 56
        %v1453 = vpop.permute.xlu0 %1452
        %1454 = vrot.lane.b32.xlu0 %v1443, 56
        %v1455 = vpop.permute.xlu0 %1454
        %vm1456 = vcmask 457728
        %v1457 = vsel %vm1456, %v1449, %v1451
        %v1458 = vsel %vm1456, %v1451, %v1453
        %v1459 = vsel %vm1456, %v1453, %v1455
        %1463 = vst [vmem:[#allocation2 + $0x3f0] sm:$0xff] %v1457
        %1464 = vst [vmem:[#allocation2 + $0x3f8] sm:$0xff] %v1458
        %1465 = vst [vmem:[#allocation2 + $0x400] sm:$0xff] %v1459
        %v1466 = vld [vmem:[%s361] sm:$0xff]
        %v1467 = vld [vmem:[%s361 + $0x8] sm:$0xff]
        %v1468 = vld [vmem:[%s361 + $0x10] sm:$0xff]
        %v1469 = vld [vmem:[%s361 + $0x18] sm:$0xff]
        %1474 = vrot.lane.b32.xlu0 %v1466, 56
        %v1475 = vpop.permute.xlu0 %1474
        %1476 = vrot.lane.b32.xlu0 %v1467, 56
        %v1477 = vpop.permute.xlu0 %1476
        %1478 = vrot.lane.b32.xlu0 %v1468, 56
        %v1479 = vpop.permute.xlu0 %1478
        %1480 = vrot.lane.b32.xlu0 %v1469, 56
        %v1481 = vpop.permute.xlu0 %1480
        %v1482 = vsel %vm1456, %v1475, %v1477
        %v1483 = vsel %vm1456, %v1477, %v1479
        %v1484 = vsel %vm1456, %v1479, %v1481
        %1488 = vst [vmem:[#allocation2 + $0x408] sm:$0xff] %v1482
        %1489 = vst [vmem:[#allocation2 + $0x410] sm:$0xff] %v1483
        %1490 = vst [vmem:[#allocation2 + $0x418] sm:$0xff] %v1484
        %v1491 = vld [vmem:[%s351] sm:$0xff]
        %v1492 = vld [vmem:[%s351 + $0x8] sm:$0xff]
        %v1493 = vld [vmem:[%s351 + $0x10] sm:$0xff]
        %v1494 = vld [vmem:[%s351 + $0x18] sm:$0xff]
        %1499 = vrot.lane.b32.xlu0 %v1491, 55
        %v1500 = vpop.permute.xlu0 %1499
        %1501 = vrot.lane.b32.xlu0 %v1492, 55
        %v1502 = vpop.permute.xlu0 %1501
        %1503 = vrot.lane.b32.xlu0 %v1493, 55
        %v1504 = vpop.permute.xlu0 %1503
        %1505 = vrot.lane.b32.xlu0 %v1494, 55
        %v1506 = vpop.permute.xlu0 %1505
        %vm1507 = vcmask 449536
        %v1508 = vsel %vm1507, %v1500, %v1502
        %v1509 = vsel %vm1507, %v1502, %v1504
        %v1510 = vsel %vm1507, %v1504, %v1506
        %1514 = vst [vmem:[#allocation2 + $0x420] sm:$0xff] %v1508
        %1515 = vst [vmem:[#allocation2 + $0x428] sm:$0xff] %v1509
        %1516 = vst [vmem:[#allocation2 + $0x430] sm:$0xff] %v1510
        %v1517 = vld [vmem:[%s361] sm:$0xff]
        %v1518 = vld [vmem:[%s361 + $0x8] sm:$0xff]
        %v1519 = vld [vmem:[%s361 + $0x10] sm:$0xff]
        %v1520 = vld [vmem:[%s361 + $0x18] sm:$0xff]
        %1525 = vrot.lane.b32.xlu0 %v1517, 55
        %v1526 = vpop.permute.xlu0 %1525
        %1527 = vrot.lane.b32.xlu0 %v1518, 55
        %v1528 = vpop.permute.xlu0 %1527
        %1529 = vrot.lane.b32.xlu0 %v1519, 55
        %v1530 = vpop.permute.xlu0 %1529
        %1531 = vrot.lane.b32.xlu0 %v1520, 55
        %v1532 = vpop.permute.xlu0 %1531
        %v1533 = vsel %vm1507, %v1526, %v1528
        %v1534 = vsel %vm1507, %v1528, %v1530
        %v1535 = vsel %vm1507, %v1530, %v1532
        %1539 = vst [vmem:[#allocation2 + $0x438] sm:$0xff] %v1533
        %1540 = vst [vmem:[#allocation2 + $0x440] sm:$0xff] %v1534
        %1541 = vst [vmem:[#allocation2 + $0x448] sm:$0xff] %v1535
        %v1542 = vld [vmem:[%s351] sm:$0xff]
        %v1543 = vld [vmem:[%s351 + $0x8] sm:$0xff]
        %v1544 = vld [vmem:[%s351 + $0x10] sm:$0xff]
        %v1545 = vld [vmem:[%s351 + $0x18] sm:$0xff]
        %1550 = vrot.lane.b32.xlu0 %v1542, 54
        %v1551 = vpop.permute.xlu0 %1550
        %1552 = vrot.lane.b32.xlu0 %v1543, 54
        %v1553 = vpop.permute.xlu0 %1552
        %1554 = vrot.lane.b32.xlu0 %v1544, 54
        %v1555 = vpop.permute.xlu0 %1554
        %1556 = vrot.lane.b32.xlu0 %v1545, 54
        %v1557 = vpop.permute.xlu0 %1556
        %vm1558 = vcmask 441344
        %v1559 = vsel %vm1558, %v1551, %v1553
        %v1560 = vsel %vm1558, %v1553, %v1555
        %v1561 = vsel %vm1558, %v1555, %v1557
        %1565 = vst [vmem:[#allocation2 + $0x450] sm:$0xff] %v1559
        %1566 = vst [vmem:[#allocation2 + $0x458] sm:$0xff] %v1560
        %1567 = vst [vmem:[#allocation2 + $0x460] sm:$0xff] %v1561
        %v1568 = vld [vmem:[%s361] sm:$0xff]
        %v1569 = vld [vmem:[%s361 + $0x8] sm:$0xff]
        %v1570 = vld [vmem:[%s361 + $0x10] sm:$0xff]
        %v1571 = vld [vmem:[%s361 + $0x18] sm:$0xff]
        %1576 = vrot.lane.b32.xlu0 %v1568, 54
        %v1577 = vpop.permute.xlu0 %1576
        %1578 = vrot.lane.b32.xlu0 %v1569, 54
        %v1579 = vpop.permute.xlu0 %1578
        %1580 = vrot.lane.b32.xlu0 %v1570, 54
        %v1581 = vpop.permute.xlu0 %1580
        %1582 = vrot.lane.b32.xlu0 %v1571, 54
        %v1583 = vpop.permute.xlu0 %1582
        %v1584 = vsel %vm1558, %v1577, %v1579
        %v1585 = vsel %vm1558, %v1579, %v1581
        %v1586 = vsel %vm1558, %v1581, %v1583
        %1590 = vst [vmem:[#allocation2 + $0x468] sm:$0xff] %v1584
        %1591 = vst [vmem:[#allocation2 + $0x470] sm:$0xff] %v1585
        %1592 = vst [vmem:[#allocation2 + $0x478] sm:$0xff] %v1586
        %v1593 = vld [vmem:[%s351] sm:$0xff]
        %v1594 = vld [vmem:[%s351 + $0x8] sm:$0xff]
        %v1595 = vld [vmem:[%s351 + $0x10] sm:$0xff]
        %v1596 = vld [vmem:[%s351 + $0x18] sm:$0xff]
        %1601 = vrot.lane.b32.xlu0 %v1593, 53
        %v1602 = vpop.permute.xlu0 %1601
        %1603 = vrot.lane.b32.xlu0 %v1594, 53
        %v1604 = vpop.permute.xlu0 %1603
        %1605 = vrot.lane.b32.xlu0 %v1595, 53
        %v1606 = vpop.permute.xlu0 %1605
        %1607 = vrot.lane.b32.xlu0 %v1596, 53
        %v1608 = vpop.permute.xlu0 %1607
        %vm1609 = vcmask 433152
        %v1610 = vsel %vm1609, %v1602, %v1604
        %v1611 = vsel %vm1609, %v1604, %v1606
        %v1612 = vsel %vm1609, %v1606, %v1608
        %1616 = vst [vmem:[#allocation2 + $0x480] sm:$0xff] %v1610
        %1617 = vst [vmem:[#allocation2 + $0x488] sm:$0xff] %v1611
        %1618 = vst [vmem:[#allocation2 + $0x490] sm:$0xff] %v1612
        %v1619 = vld [vmem:[%s361] sm:$0xff]
        %v1620 = vld [vmem:[%s361 + $0x8] sm:$0xff]
        %v1621 = vld [vmem:[%s361 + $0x10] sm:$0xff]
        %v1622 = vld [vmem:[%s361 + $0x18] sm:$0xff]
        %1627 = vrot.lane.b32.xlu0 %v1619, 53
        %v1628 = vpop.permute.xlu0 %1627
        %1629 = vrot.lane.b32.xlu0 %v1620, 53
        %v1630 = vpop.permute.xlu0 %1629
        %1631 = vrot.lane.b32.xlu0 %v1621, 53
        %v1632 = vpop.permute.xlu0 %1631
        %1633 = vrot.lane.b32.xlu0 %v1622, 53
        %v1634 = vpop.permute.xlu0 %1633
        %v1635 = vsel %vm1609, %v1628, %v1630
        %v1636 = vsel %vm1609, %v1630, %v1632
        %v1637 = vsel %vm1609, %v1632, %v1634
        %1641 = vst [vmem:[#allocation2 + $0x498] sm:$0xff] %v1635
        %1642 = vst [vmem:[#allocation2 + $0x4a0] sm:$0xff] %v1636
        %1643 = vst [vmem:[#allocation2 + $0x4a8] sm:$0xff] %v1637
        %v1644 = vld [vmem:[%s351] sm:$0xff]
        %v1645 = vld [vmem:[%s351 + $0x8] sm:$0xff]
        %v1646 = vld [vmem:[%s351 + $0x10] sm:$0xff]
        %v1647 = vld [vmem:[%s351 + $0x18] sm:$0xff]
        %1652 = vrot.lane.b32.xlu0 %v1644, 52
        %v1653 = vpop.permute.xlu0 %1652
        %1654 = vrot.lane.b32.xlu0 %v1645, 52
        %v1655 = vpop.permute.xlu0 %1654
        %1656 = vrot.lane.b32.xlu0 %v1646, 52
        %v1657 = vpop.permute.xlu0 %1656
        %1658 = vrot.lane.b32.xlu0 %v1647, 52
        %v1659 = vpop.permute.xlu0 %1658
        %vm1660 = vcmask 424960
        %v1661 = vsel %vm1660, %v1653, %v1655
        %v1662 = vsel %vm1660, %v1655, %v1657
        %v1663 = vsel %vm1660, %v1657, %v1659
        %1667 = vst [vmem:[#allocation2 + $0x4b0] sm:$0xff] %v1661
        %1668 = vst [vmem:[#allocation2 + $0x4b8] sm:$0xff] %v1662
        %1669 = vst [vmem:[#allocation2 + $0x4c0] sm:$0xff] %v1663
        %v1670 = vld [vmem:[%s361] sm:$0xff]
        %v1671 = vld [vmem:[%s361 + $0x8] sm:$0xff]
        %v1672 = vld [vmem:[%s361 + $0x10] sm:$0xff]
        %v1673 = vld [vmem:[%s361 + $0x18] sm:$0xff]
        %1678 = vrot.lane.b32.xlu0 %v1670, 52
        %v1679 = vpop.permute.xlu0 %1678
        %1680 = vrot.lane.b32.xlu0 %v1671, 52
        %v1681 = vpop.permute.xlu0 %1680
        %1682 = vrot.lane.b32.xlu0 %v1672, 52
        %v1683 = vpop.permute.xlu0 %1682
        %1684 = vrot.lane.b32.xlu0 %v1673, 52
        %v1685 = vpop.permute.xlu0 %1684
        %v1686 = vsel %vm1660, %v1679, %v1681
        %v1687 = vsel %vm1660, %v1681, %v1683
        %v1688 = vsel %vm1660, %v1683, %v1685
        %1692 = vst [vmem:[#allocation2 + $0x4c8] sm:$0xff] %v1686
        %1693 = vst [vmem:[#allocation2 + $0x4d0] sm:$0xff] %v1687
        %1694 = vst [vmem:[#allocation2 + $0x4d8] sm:$0xff] %v1688
        %v1695 = vld [vmem:[%s351] sm:$0xff]
        %v1696 = vld [vmem:[%s351 + $0x8] sm:$0xff]
        %v1697 = vld [vmem:[%s351 + $0x10] sm:$0xff]
        %v1698 = vld [vmem:[%s351 + $0x18] sm:$0xff]
        %1703 = vrot.lane.b32.xlu0 %v1695, 51
        %v1704 = vpop.permute.xlu0 %1703
        %1705 = vrot.lane.b32.xlu0 %v1696, 51
        %v1706 = vpop.permute.xlu0 %1705
        %1707 = vrot.lane.b32.xlu0 %v1697, 51
        %v1708 = vpop.permute.xlu0 %1707
        %1709 = vrot.lane.b32.xlu0 %v1698, 51
        %v1710 = vpop.permute.xlu0 %1709
        %vm1711 = vcmask 416768
        %v1712 = vsel %vm1711, %v1704, %v1706
        %v1713 = vsel %vm1711, %v1706, %v1708
        %v1714 = vsel %vm1711, %v1708, %v1710
        %1718 = vst [vmem:[#allocation2 + $0x4e0] sm:$0xff] %v1712
        %1719 = vst [vmem:[#allocation2 + $0x4e8] sm:$0xff] %v1713
        %1720 = vst [vmem:[#allocation2 + $0x4f0] sm:$0xff] %v1714
        %v1721 = vld [vmem:[%s361] sm:$0xff]
        %v1722 = vld [vmem:[%s361 + $0x8] sm:$0xff]
        %v1723 = vld [vmem:[%s361 + $0x10] sm:$0xff]
        %v1724 = vld [vmem:[%s361 + $0x18] sm:$0xff]
        %1729 = vrot.lane.b32.xlu0 %v1721, 51
        %v1730 = vpop.permute.xlu0 %1729
        %1731 = vrot.lane.b32.xlu0 %v1722, 51
        %v1732 = vpop.permute.xlu0 %1731
        %1733 = vrot.lane.b32.xlu0 %v1723, 51
        %v1734 = vpop.permute.xlu0 %1733
        %1735 = vrot.lane.b32.xlu0 %v1724, 51
        %v1736 = vpop.permute.xlu0 %1735
        %v1737 = vsel %vm1711, %v1730, %v1732
        %v1738 = vsel %vm1711, %v1732, %v1734
        %v1739 = vsel %vm1711, %v1734, %v1736
        %1743 = vst [vmem:[#allocation2 + $0x4f8] sm:$0xff] %v1737
        %1744 = vst [vmem:[#allocation2 + $0x500] sm:$0xff] %v1738
        %1745 = vst [vmem:[#allocation2 + $0x508] sm:$0xff] %v1739
        %v1746 = vld [vmem:[%s351] sm:$0xff]
        %v1747 = vld [vmem:[%s351 + $0x8] sm:$0xff]
        %v1748 = vld [vmem:[%s351 + $0x10] sm:$0xff]
        %v1749 = vld [vmem:[%s351 + $0x18] sm:$0xff]
        %1754 = vrot.lane.b32.xlu0 %v1746, 50
        %v1755 = vpop.permute.xlu0 %1754
        %1756 = vrot.lane.b32.xlu0 %v1747, 50
        %v1757 = vpop.permute.xlu0 %1756
        %1758 = vrot.lane.b32.xlu0 %v1748, 50
        %v1759 = vpop.permute.xlu0 %1758
        %1760 = vrot.lane.b32.xlu0 %v1749, 50
        %v1761 = vpop.permute.xlu0 %1760
        %vm1762 = vcmask 408576
        %v1763 = vsel %vm1762, %v1755, %v1757
        %v1764 = vsel %vm1762, %v1757, %v1759
        %v1765 = vsel %vm1762, %v1759, %v1761
        %1769 = vst [vmem:[#allocation2 + $0x510] sm:$0xff] %v1763
        %1770 = vst [vmem:[#allocation2 + $0x518] sm:$0xff] %v1764
        %1771 = vst [vmem:[#allocation2 + $0x520] sm:$0xff] %v1765
        %v1772 = vld [vmem:[%s361] sm:$0xff]
        %v1773 = vld [vmem:[%s361 + $0x8] sm:$0xff]
        %v1774 = vld [vmem:[%s361 + $0x10] sm:$0xff]
        %v1775 = vld [vmem:[%s361 + $0x18] sm:$0xff]
        %1780 = vrot.lane.b32.xlu0 %v1772, 50
        %v1781 = vpop.permute.xlu0 %1780
        %1782 = vrot.lane.b32.xlu0 %v1773, 50
        %v1783 = vpop.permute.xlu0 %1782
        %1784 = vrot.lane.b32.xlu0 %v1774, 50
        %v1785 = vpop.permute.xlu0 %1784
        %1786 = vrot.lane.b32.xlu0 %v1775, 50
        %v1787 = vpop.permute.xlu0 %1786
        %v1788 = vsel %vm1762, %v1781, %v1783
        %v1789 = vsel %vm1762, %v1783, %v1785
        %v1790 = vsel %vm1762, %v1785, %v1787
        %1794 = vst [vmem:[#allocation2 + $0x528] sm:$0xff] %v1788
        %1795 = vst [vmem:[#allocation2 + $0x530] sm:$0xff] %v1789
        %1796 = vst [vmem:[#allocation2 + $0x538] sm:$0xff] %v1790
        %v1797 = vld [vmem:[%s351] sm:$0xff]
        %v1798 = vld [vmem:[%s351 + $0x8] sm:$0xff]
        %v1799 = vld [vmem:[%s351 + $0x10] sm:$0xff]
        %v1800 = vld [vmem:[%s351 + $0x18] sm:$0xff]
        %1805 = vrot.lane.b32.xlu0 %v1797, 32
        %v1806 = vpop.permute.xlu0 %1805
        %1807 = vrot.lane.b32.xlu0 %v1798, 32
        %v1808 = vpop.permute.xlu0 %1807
        %1809 = vrot.lane.b32.xlu0 %v1799, 32
        %v1810 = vpop.permute.xlu0 %1809
        %1811 = vrot.lane.b32.xlu0 %v1800, 32
        %v1812 = vpop.permute.xlu0 %1811
        %vm1813 = vcmask 261120
        %v1814 = vsel %vm1813, %v1806, %v1808
        %v1815 = vsel %vm1813, %v1808, %v1810
        %v1816 = vsel %vm1813, %v1810, %v1812
        %1820 = vst [vmem:[#allocation2 + $0x540] sm:$0xff] %v1814
        %1821 = vst [vmem:[#allocation2 + $0x548] sm:$0xff] %v1815
        %1822 = vst [vmem:[#allocation2 + $0x550] sm:$0xff] %v1816
        %v1823 = vld [vmem:[%s361] sm:$0xff]
        %v1824 = vld [vmem:[%s361 + $0x8] sm:$0xff]
        %v1825 = vld [vmem:[%s361 + $0x10] sm:$0xff]
        %v1826 = vld [vmem:[%s361 + $0x18] sm:$0xff]
        %1831 = vrot.lane.b32.xlu0 %v1823, 32
        %v1832 = vpop.permute.xlu0 %1831
        %1833 = vrot.lane.b32.xlu0 %v1824, 32
        %v1834 = vpop.permute.xlu0 %1833
        %1835 = vrot.lane.b32.xlu0 %v1825, 32
        %v1836 = vpop.permute.xlu0 %1835
        %1837 = vrot.lane.b32.xlu0 %v1826, 32
        %v1838 = vpop.permute.xlu0 %1837
        %v1839 = vsel %vm1813, %v1832, %v1834
        %v1840 = vsel %vm1813, %v1834, %v1836
        %v1841 = vsel %vm1813, %v1836, %v1838
        %1845 = vst [vmem:[#allocation2 + $0x558] sm:$0xff] %v1839
        %1846 = vst [vmem:[#allocation2 + $0x560] sm:$0xff] %v1840
        %1847 = vst [vmem:[#allocation2 + $0x568] sm:$0xff] %v1841
        %v1848 = vld [vmem:[%s351] sm:$0xff]
        %v1849 = vld [vmem:[%s351 + $0x8] sm:$0xff]
        %v1850 = vld [vmem:[%s351 + $0x10] sm:$0xff]
        %v1851 = vld [vmem:[%s351 + $0x18] sm:$0xff]
        %1856 = vrot.lane.b32.xlu0 %v1848, 31
        %v1857 = vpop.permute.xlu0 %1856
        %1858 = vrot.lane.b32.xlu0 %v1849, 31
        %v1859 = vpop.permute.xlu0 %1858
        %1860 = vrot.lane.b32.xlu0 %v1850, 31
        %v1861 = vpop.permute.xlu0 %1860
        %1862 = vrot.lane.b32.xlu0 %v1851, 31
        %v1863 = vpop.permute.xlu0 %1862
        %vm1864 = vcmask 252928
        %v1865 = vsel %vm1864, %v1857, %v1859
        %v1866 = vsel %vm1864, %v1859, %v1861
        %v1867 = vsel %vm1864, %v1861, %v1863
        %1871 = vst [vmem:[#allocation2 + $0x570] sm:$0xff] %v1865
        %1872 = vst [vmem:[#allocation2 + $0x578] sm:$0xff] %v1866
        %1873 = vst [vmem:[#allocation2 + $0x580] sm:$0xff] %v1867
        %v1874 = vld [vmem:[%s361] sm:$0xff]
        %v1875 = vld [vmem:[%s361 + $0x8] sm:$0xff]
        %v1876 = vld [vmem:[%s361 + $0x10] sm:$0xff]
        %v1877 = vld [vmem:[%s361 + $0x18] sm:$0xff]
        %1882 = vrot.lane.b32.xlu0 %v1874, 31
        %v1883 = vpop.permute.xlu0 %1882
        %1884 = vrot.lane.b32.xlu0 %v1875, 31
        %v1885 = vpop.permute.xlu0 %1884
        %1886 = vrot.lane.b32.xlu0 %v1876, 31
        %v1887 = vpop.permute.xlu0 %1886
        %1888 = vrot.lane.b32.xlu0 %v1877, 31
        %v1889 = vpop.permute.xlu0 %1888
        %v1890 = vsel %vm1864, %v1883, %v1885
        %v1891 = vsel %vm1864, %v1885, %v1887
        %v1892 = vsel %vm1864, %v1887, %v1889
        %1896 = vst [vmem:[#allocation2 + $0x588] sm:$0xff] %v1890
        %1897 = vst [vmem:[#allocation2 + $0x590] sm:$0xff] %v1891
        %1898 = vst [vmem:[#allocation2 + $0x598] sm:$0xff] %v1892
        %v1899 = vld [vmem:[%s351] sm:$0xff]
        %v1900 = vld [vmem:[%s351 + $0x8] sm:$0xff]
        %v1901 = vld [vmem:[%s351 + $0x10] sm:$0xff]
        %v1902 = vld [vmem:[%s351 + $0x18] sm:$0xff]
        %1907 = vrot.lane.b32.xlu0 %v1899, 30
        %v1908 = vpop.permute.xlu0 %1907
        %1909 = vrot.lane.b32.xlu0 %v1900, 30
        %v1910 = vpop.permute.xlu0 %1909
        %1911 = vrot.lane.b32.xlu0 %v1901, 30
        %v1912 = vpop.permute.xlu0 %1911
        %1913 = vrot.lane.b32.xlu0 %v1902, 30
        %v1914 = vpop.permute.xlu0 %1913
        %vm1915 = vcmask 244736
        %v1916 = vsel %vm1915, %v1908, %v1910
        %v1917 = vsel %vm1915, %v1910, %v1912
        %v1918 = vsel %vm1915, %v1912, %v1914
        %1922 = vst [vmem:[#allocation2 + $0x5a0] sm:$0xff] %v1916
        %1923 = vst [vmem:[#allocation2 + $0x5a8] sm:$0xff] %v1917
        %1924 = vst [vmem:[#allocation2 + $0x5b0] sm:$0xff] %v1918
        %v1925 = vld [vmem:[%s361] sm:$0xff]
        %v1926 = vld [vmem:[%s361 + $0x8] sm:$0xff]
        %v1927 = vld [vmem:[%s361 + $0x10] sm:$0xff]
        %v1928 = vld [vmem:[%s361 + $0x18] sm:$0xff]
        %1933 = vrot.lane.b32.xlu0 %v1925, 30
        %v1934 = vpop.permute.xlu0 %1933
        %1935 = vrot.lane.b32.xlu0 %v1926, 30
        %v1936 = vpop.permute.xlu0 %1935
        %1937 = vrot.lane.b32.xlu0 %v1927, 30
        %v1938 = vpop.permute.xlu0 %1937
        %1939 = vrot.lane.b32.xlu0 %v1928, 30
        %v1940 = vpop.permute.xlu0 %1939
        %v1941 = vsel %vm1915, %v1934, %v1936
        %v1942 = vsel %vm1915, %v1936, %v1938
        %v1943 = vsel %vm1915, %v1938, %v1940
        %1947 = vst [vmem:[#allocation2 + $0x5b8] sm:$0xff] %v1941
        %1948 = vst [vmem:[#allocation2 + $0x5c0] sm:$0xff] %v1942
        %1949 = vst [vmem:[#allocation2 + $0x5c8] sm:$0xff] %v1943
        %v1950 = vld [vmem:[%s351] sm:$0xff]
        %v1951 = vld [vmem:[%s351 + $0x8] sm:$0xff]
        %v1952 = vld [vmem:[%s351 + $0x10] sm:$0xff]
        %v1953 = vld [vmem:[%s351 + $0x18] sm:$0xff]
        %1958 = vrot.lane.b32.xlu0 %v1950, 29
        %v1959 = vpop.permute.xlu0 %1958
        %1960 = vrot.lane.b32.xlu0 %v1951, 29
        %v1961 = vpop.permute.xlu0 %1960
        %1962 = vrot.lane.b32.xlu0 %v1952, 29
        %v1963 = vpop.permute.xlu0 %1962
        %1964 = vrot.lane.b32.xlu0 %v1953, 29
        %v1965 = vpop.permute.xlu0 %1964
        %vm1966 = vcmask 236544
        %v1967 = vsel %vm1966, %v1959, %v1961
        %v1968 = vsel %vm1966, %v1961, %v1963
        %v1969 = vsel %vm1966, %v1963, %v1965
        %1973 = vst [vmem:[#allocation2 + $0x5d0] sm:$0xff] %v1967
        %1974 = vst [vmem:[#allocation2 + $0x5d8] sm:$0xff] %v1968
        %1975 = vst [vmem:[#allocation2 + $0x5e0] sm:$0xff] %v1969
        %v1976 = vld [vmem:[%s361] sm:$0xff]
        %v1977 = vld [vmem:[%s361 + $0x8] sm:$0xff]
        %v1978 = vld [vmem:[%s361 + $0x10] sm:$0xff]
        %v1979 = vld [vmem:[%s361 + $0x18] sm:$0xff]
        %1984 = vrot.lane.b32.xlu0 %v1976, 29
        %v1985 = vpop.permute.xlu0 %1984
        %1986 = vrot.lane.b32.xlu0 %v1977, 29
        %v1987 = vpop.permute.xlu0 %1986
        %1988 = vrot.lane.b32.xlu0 %v1978, 29
        %v1989 = vpop.permute.xlu0 %1988
        %1990 = vrot.lane.b32.xlu0 %v1979, 29
        %v1991 = vpop.permute.xlu0 %1990
        %v1992 = vsel %vm1966, %v1985, %v1987
        %v1993 = vsel %vm1966, %v1987, %v1989
        %v1994 = vsel %vm1966, %v1989, %v1991
        %1998 = vst [vmem:[#allocation2 + $0x5e8] sm:$0xff] %v1992
        %1999 = vst [vmem:[#allocation2 + $0x5f0] sm:$0xff] %v1993
        %2000 = vst [vmem:[#allocation2 + $0x5f8] sm:$0xff] %v1994
        %v2001 = vld [vmem:[%s351] sm:$0xff]
        %v2002 = vld [vmem:[%s351 + $0x8] sm:$0xff]
        %v2003 = vld [vmem:[%s351 + $0x10] sm:$0xff]
        %v2004 = vld [vmem:[%s351 + $0x18] sm:$0xff]
        %2009 = vrot.lane.b32.xlu0 %v2001, 28
        %v2010 = vpop.permute.xlu0 %2009
        %2011 = vrot.lane.b32.xlu0 %v2002, 28
        %v2012 = vpop.permute.xlu0 %2011
        %2013 = vrot.lane.b32.xlu0 %v2003, 28
        %v2014 = vpop.permute.xlu0 %2013
        %2015 = vrot.lane.b32.xlu0 %v2004, 28
        %v2016 = vpop.permute.xlu0 %2015
        %vm2017 = vcmask 228352
        %v2018 = vsel %vm2017, %v2010, %v2012
        %v2019 = vsel %vm2017, %v2012, %v2014
        %v2020 = vsel %vm2017, %v2014, %v2016
        %2024 = vst [vmem:[#allocation2 + $0x600] sm:$0xff] %v2018
        %2025 = vst [vmem:[#allocation2 + $0x608] sm:$0xff] %v2019
        %2026 = vst [vmem:[#allocation2 + $0x610] sm:$0xff] %v2020
        %v2027 = vld [vmem:[%s361] sm:$0xff]
        %v2028 = vld [vmem:[%s361 + $0x8] sm:$0xff]
        %v2029 = vld [vmem:[%s361 + $0x10] sm:$0xff]
        %v2030 = vld [vmem:[%s361 + $0x18] sm:$0xff]
        %2035 = vrot.lane.b32.xlu0 %v2027, 28
        %v2036 = vpop.permute.xlu0 %2035
        %2037 = vrot.lane.b32.xlu0 %v2028, 28
        %v2038 = vpop.permute.xlu0 %2037
        %2039 = vrot.lane.b32.xlu0 %v2029, 28
        %v2040 = vpop.permute.xlu0 %2039
        %2041 = vrot.lane.b32.xlu0 %v2030, 28
        %v2042 = vpop.permute.xlu0 %2041
        %v2043 = vsel %vm2017, %v2036, %v2038
        %v2044 = vsel %vm2017, %v2038, %v2040
        %v2045 = vsel %vm2017, %v2040, %v2042
        %2049 = vst [vmem:[#allocation2 + $0x618] sm:$0xff] %v2043
        %2050 = vst [vmem:[#allocation2 + $0x620] sm:$0xff] %v2044
        %2051 = vst [vmem:[#allocation2 + $0x628] sm:$0xff] %v2045
        %v2052 = vld [vmem:[%s351] sm:$0xff]
        %v2053 = vld [vmem:[%s351 + $0x8] sm:$0xff]
        %v2054 = vld [vmem:[%s351 + $0x10] sm:$0xff]
        %v2055 = vld [vmem:[%s351 + $0x18] sm:$0xff]
        %2060 = vrot.lane.b32.xlu0 %v2052, 27
        %v2061 = vpop.permute.xlu0 %2060
        %2062 = vrot.lane.b32.xlu0 %v2053, 27
        %v2063 = vpop.permute.xlu0 %2062
        %2064 = vrot.lane.b32.xlu0 %v2054, 27
        %v2065 = vpop.permute.xlu0 %2064
        %2066 = vrot.lane.b32.xlu0 %v2055, 27
        %v2067 = vpop.permute.xlu0 %2066
        %vm2068 = vcmask 220160
        %v2069 = vsel %vm2068, %v2061, %v2063
        %v2070 = vsel %vm2068, %v2063, %v2065
        %v2071 = vsel %vm2068, %v2065, %v2067
        %2075 = vst [vmem:[#allocation2 + $0x630] sm:$0xff] %v2069
        %2076 = vst [vmem:[#allocation2 + $0x638] sm:$0xff] %v2070
        %2077 = vst [vmem:[#allocation2 + $0x640] sm:$0xff] %v2071
        %v2078 = vld [vmem:[%s361] sm:$0xff]
        %v2079 = vld [vmem:[%s361 + $0x8] sm:$0xff]
        %v2080 = vld [vmem:[%s361 + $0x10] sm:$0xff]
        %v2081 = vld [vmem:[%s361 + $0x18] sm:$0xff]
        %2086 = vrot.lane.b32.xlu0 %v2078, 27
        %v2087 = vpop.permute.xlu0 %2086
        %2088 = vrot.lane.b32.xlu0 %v2079, 27
        %v2089 = vpop.permute.xlu0 %2088
        %2090 = vrot.lane.b32.xlu0 %v2080, 27
        %v2091 = vpop.permute.xlu0 %2090
        %2092 = vrot.lane.b32.xlu0 %v2081, 27
        %v2093 = vpop.permute.xlu0 %2092
        %v2094 = vsel %vm2068, %v2087, %v2089
        %v2095 = vsel %vm2068, %v2089, %v2091
        %v2096 = vsel %vm2068, %v2091, %v2093
        %2100 = vst [vmem:[#allocation2 + $0x648] sm:$0xff] %v2094
        %2101 = vst [vmem:[#allocation2 + $0x650] sm:$0xff] %v2095
        %2102 = vst [vmem:[#allocation2 + $0x658] sm:$0xff] %v2096
        %v2103 = vld [vmem:[%s351] sm:$0xff]
        %v2104 = vld [vmem:[%s351 + $0x8] sm:$0xff]
        %v2105 = vld [vmem:[%s351 + $0x10] sm:$0xff]
        %v2106 = vld [vmem:[%s351 + $0x18] sm:$0xff]
        %2111 = vrot.lane.b32.xlu0 %v2103, 26
        %v2112 = vpop.permute.xlu0 %2111
        %2113 = vrot.lane.b32.xlu0 %v2104, 26
        %v2114 = vpop.permute.xlu0 %2113
        %2115 = vrot.lane.b32.xlu0 %v2105, 26
        %v2116 = vpop.permute.xlu0 %2115
        %2117 = vrot.lane.b32.xlu0 %v2106, 26
        %v2118 = vpop.permute.xlu0 %2117
        %vm2119 = vcmask 211968
        %v2120 = vsel %vm2119, %v2112, %v2114
        %v2121 = vsel %vm2119, %v2114, %v2116
        %v2122 = vsel %vm2119, %v2116, %v2118
        %2126 = vst [vmem:[#allocation2 + $0x660] sm:$0xff] %v2120
        %2127 = vst [vmem:[#allocation2 + $0x668] sm:$0xff] %v2121
        %2128 = vst [vmem:[#allocation2 + $0x670] sm:$0xff] %v2122
        %v2129 = vld [vmem:[%s361] sm:$0xff]
        %v2130 = vld [vmem:[%s361 + $0x8] sm:$0xff]
        %v2131 = vld [vmem:[%s361 + $0x10] sm:$0xff]
        %v2132 = vld [vmem:[%s361 + $0x18] sm:$0xff]
        %2137 = vrot.lane.b32.xlu0 %v2129, 26
        %v2138 = vpop.permute.xlu0 %2137
        %2139 = vrot.lane.b32.xlu0 %v2130, 26
        %v2140 = vpop.permute.xlu0 %2139
        %2141 = vrot.lane.b32.xlu0 %v2131, 26
        %v2142 = vpop.permute.xlu0 %2141
        %2143 = vrot.lane.b32.xlu0 %v2132, 26
        %v2144 = vpop.permute.xlu0 %2143
        %v2145 = vsel %vm2119, %v2138, %v2140
        %v2146 = vsel %vm2119, %v2140, %v2142
        %v2147 = vsel %vm2119, %v2142, %v2144
        %2151 = vst [vmem:[#allocation2 + $0x678] sm:$0xff] %v2145
        %2152 = vst [vmem:[#allocation2 + $0x680] sm:$0xff] %v2146
        %2153 = vst [vmem:[#allocation2 + $0x688] sm:$0xff] %v2147
        %v2154 = vld [vmem:[%s351] sm:$0xff]
        %v2155 = vld [vmem:[%s351 + $0x8] sm:$0xff]
        %v2156 = vld [vmem:[%s351 + $0x10] sm:$0xff]
        %v2157 = vld [vmem:[%s351 + $0x18] sm:$0xff]
        %2162 = vrot.lane.b32.xlu0 %v2154, 8
        %v2163 = vpop.permute.xlu0 %2162
        %2164 = vrot.lane.b32.xlu0 %v2155, 8
        %v2165 = vpop.permute.xlu0 %2164
        %2166 = vrot.lane.b32.xlu0 %v2156, 8
        %v2167 = vpop.permute.xlu0 %2166
        %2168 = vrot.lane.b32.xlu0 %v2157, 8
        %v2169 = vpop.permute.xlu0 %2168
        %vm2170 = vcmask 64512
        %v2171 = vsel %vm2170, %v2163, %v2165
        %v2172 = vsel %vm2170, %v2165, %v2167
        %v2173 = vsel %vm2170, %v2167, %v2169
        %2177 = vst [vmem:[#allocation2 + $0x690] sm:$0xff] %v2171
        %2178 = vst [vmem:[#allocation2 + $0x698] sm:$0xff] %v2172
        %2179 = vst [vmem:[#allocation2 + $0x6a0] sm:$0xff] %v2173
        %v2180 = vld [vmem:[%s361] sm:$0xff]
        %v2181 = vld [vmem:[%s361 + $0x8] sm:$0xff]
        %v2182 = vld [vmem:[%s361 + $0x10] sm:$0xff]
        %v2183 = vld [vmem:[%s361 + $0x18] sm:$0xff]
        %2188 = vrot.lane.b32.xlu0 %v2180, 8
        %v2189 = vpop.permute.xlu0 %2188
        %2190 = vrot.lane.b32.xlu0 %v2181, 8
        %v2191 = vpop.permute.xlu0 %2190
        %2192 = vrot.lane.b32.xlu0 %v2182, 8
        %v2193 = vpop.permute.xlu0 %2192
        %2194 = vrot.lane.b32.xlu0 %v2183, 8
        %v2195 = vpop.permute.xlu0 %2194
        %v2196 = vsel %vm2170, %v2189, %v2191
        %v2197 = vsel %vm2170, %v2191, %v2193
        %v2198 = vsel %vm2170, %v2193, %v2195
        %2202 = vst [vmem:[#allocation2 + $0x6a8] sm:$0xff] %v2196
        %2203 = vst [vmem:[#allocation2 + $0x6b0] sm:$0xff] %v2197
        %2204 = vst [vmem:[#allocation2 + $0x6b8] sm:$0xff] %v2198
        %v2205 = vld [vmem:[%s351] sm:$0xff]
        %v2206 = vld [vmem:[%s351 + $0x8] sm:$0xff]
        %v2207 = vld [vmem:[%s351 + $0x10] sm:$0xff]
        %v2208 = vld [vmem:[%s351 + $0x18] sm:$0xff]
        %2213 = vrot.lane.b32.xlu0 %v2205, 7
        %v2214 = vpop.permute.xlu0 %2213
        %2215 = vrot.lane.b32.xlu0 %v2206, 7
        %v2216 = vpop.permute.xlu0 %2215
        %2217 = vrot.lane.b32.xlu0 %v2207, 7
        %v2218 = vpop.permute.xlu0 %2217
        %2219 = vrot.lane.b32.xlu0 %v2208, 7
        %v2220 = vpop.permute.xlu0 %2219
        %vm2221 = vcmask 56320
        %v2222 = vsel %vm2221, %v2214, %v2216
        %v2223 = vsel %vm2221, %v2216, %v2218
        %v2224 = vsel %vm2221, %v2218, %v2220
        %2228 = vst [vmem:[#allocation2 + $0x6c0] sm:$0xff] %v2222
        %2229 = vst [vmem:[#allocation2 + $0x6c8] sm:$0xff] %v2223
        %2230 = vst [vmem:[#allocation2 + $0x6d0] sm:$0xff] %v2224
        %v2231 = vld [vmem:[%s361] sm:$0xff]
        %v2232 = vld [vmem:[%s361 + $0x8] sm:$0xff]
        %v2233 = vld [vmem:[%s361 + $0x10] sm:$0xff]
        %v2234 = vld [vmem:[%s361 + $0x18] sm:$0xff]
        %2239 = vrot.lane.b32.xlu0 %v2231, 7
        %v2240 = vpop.permute.xlu0 %2239
        %2241 = vrot.lane.b32.xlu0 %v2232, 7
        %v2242 = vpop.permute.xlu0 %2241
        %2243 = vrot.lane.b32.xlu0 %v2233, 7
        %v2244 = vpop.permute.xlu0 %2243
        %2245 = vrot.lane.b32.xlu0 %v2234, 7
        %v2246 = vpop.permute.xlu0 %2245
        %v2247 = vsel %vm2221, %v2240, %v2242
        %v2248 = vsel %vm2221, %v2242, %v2244
        %v2249 = vsel %vm2221, %v2244, %v2246
        %2253 = vst [vmem:[#allocation2 + $0x6d8] sm:$0xff] %v2247
        %2254 = vst [vmem:[#allocation2 + $0x6e0] sm:$0xff] %v2248
        %2255 = vst [vmem:[#allocation2 + $0x6e8] sm:$0xff] %v2249
        %v2256 = vld [vmem:[%s351] sm:$0xff]
        %v2257 = vld [vmem:[%s351 + $0x8] sm:$0xff]
        %v2258 = vld [vmem:[%s351 + $0x10] sm:$0xff]
        %v2259 = vld [vmem:[%s351 + $0x18] sm:$0xff]
        %2264 = vrot.lane.b32.xlu0 %v2256, 6
        %v2265 = vpop.permute.xlu0 %2264
        %2266 = vrot.lane.b32.xlu0 %v2257, 6
        %v2267 = vpop.permute.xlu0 %2266
        %2268 = vrot.lane.b32.xlu0 %v2258, 6
        %v2269 = vpop.permute.xlu0 %2268
        %2270 = vrot.lane.b32.xlu0 %v2259, 6
        %v2271 = vpop.permute.xlu0 %2270
        %vm2272 = vcmask 48128
        %v2273 = vsel %vm2272, %v2265, %v2267
        %v2274 = vsel %vm2272, %v2267, %v2269
        %v2275 = vsel %vm2272, %v2269, %v2271
        %2279 = vst [vmem:[#allocation2 + $0x6f0] sm:$0xff] %v2273
        %2280 = vst [vmem:[#allocation2 + $0x6f8] sm:$0xff] %v2274
        %2281 = vst [vmem:[#allocation2 + $0x700] sm:$0xff] %v2275
        %v2282 = vld [vmem:[%s361] sm:$0xff]
        %v2283 = vld [vmem:[%s361 + $0x8] sm:$0xff]
        %v2284 = vld [vmem:[%s361 + $0x10] sm:$0xff]
        %v2285 = vld [vmem:[%s361 + $0x18] sm:$0xff]
        %2290 = vrot.lane.b32.xlu0 %v2282, 6
        %v2291 = vpop.permute.xlu0 %2290
        %2292 = vrot.lane.b32.xlu0 %v2283, 6
        %v2293 = vpop.permute.xlu0 %2292
        %2294 = vrot.lane.b32.xlu0 %v2284, 6
        %v2295 = vpop.permute.xlu0 %2294
        %2296 = vrot.lane.b32.xlu0 %v2285, 6
        %v2297 = vpop.permute.xlu0 %2296
        %v2298 = vsel %vm2272, %v2291, %v2293
        %v2299 = vsel %vm2272, %v2293, %v2295
        %v2300 = vsel %vm2272, %v2295, %v2297
        %2304 = vst [vmem:[#allocation2 + $0x708] sm:$0xff] %v2298
        %2305 = vst [vmem:[#allocation2 + $0x710] sm:$0xff] %v2299
        %2306 = vst [vmem:[#allocation2 + $0x718] sm:$0xff] %v2300
        %v2307 = vld [vmem:[%s351] sm:$0xff]
        %v2308 = vld [vmem:[%s351 + $0x8] sm:$0xff]
        %v2309 = vld [vmem:[%s351 + $0x10] sm:$0xff]
        %v2310 = vld [vmem:[%s351 + $0x18] sm:$0xff]
        %2315 = vrot.lane.b32.xlu0 %v2307, 5
        %v2316 = vpop.permute.xlu0 %2315
        %2317 = vrot.lane.b32.xlu0 %v2308, 5
        %v2318 = vpop.permute.xlu0 %2317
        %2319 = vrot.lane.b32.xlu0 %v2309, 5
        %v2320 = vpop.permute.xlu0 %2319
        %2321 = vrot.lane.b32.xlu0 %v2310, 5
        %v2322 = vpop.permute.xlu0 %2321
        %vm2323 = vcmask 39936
        %v2324 = vsel %vm2323, %v2316, %v2318
        %v2325 = vsel %vm2323, %v2318, %v2320
        %v2326 = vsel %vm2323, %v2320, %v2322
        %2330 = vst [vmem:[#allocation2 + $0x720] sm:$0xff] %v2324
        %2331 = vst [vmem:[#allocation2 + $0x728] sm:$0xff] %v2325
        %2332 = vst [vmem:[#allocation2 + $0x730] sm:$0xff] %v2326
        %v2333 = vld [vmem:[%s361] sm:$0xff]
        %v2334 = vld [vmem:[%s361 + $0x8] sm:$0xff]
        %v2335 = vld [vmem:[%s361 + $0x10] sm:$0xff]
        %v2336 = vld [vmem:[%s361 + $0x18] sm:$0xff]
        %2341 = vrot.lane.b32.xlu0 %v2333, 5
        %v2342 = vpop.permute.xlu0 %2341
        %2343 = vrot.lane.b32.xlu0 %v2334, 5
        %v2344 = vpop.permute.xlu0 %2343
        %2345 = vrot.lane.b32.xlu0 %v2335, 5
        %v2346 = vpop.permute.xlu0 %2345
        %2347 = vrot.lane.b32.xlu0 %v2336, 5
        %v2348 = vpop.permute.xlu0 %2347
        %v2349 = vsel %vm2323, %v2342, %v2344
        %v2350 = vsel %vm2323, %v2344, %v2346
        %v2351 = vsel %vm2323, %v2346, %v2348
        %2355 = vst [vmem:[#allocation2 + $0x738] sm:$0xff] %v2349
        %2356 = vst [vmem:[#allocation2 + $0x740] sm:$0xff] %v2350
        %2357 = vst [vmem:[#allocation2 + $0x748] sm:$0xff] %v2351
        %v2358 = vld [vmem:[%s351] sm:$0xff]
        %v2359 = vld [vmem:[%s351 + $0x8] sm:$0xff]
        %v2360 = vld [vmem:[%s351 + $0x10] sm:$0xff]
        %v2361 = vld [vmem:[%s351 + $0x18] sm:$0xff]
        %2366 = vrot.lane.b32.xlu0 %v2358, 4
        %v2367 = vpop.permute.xlu0 %2366
        %2368 = vrot.lane.b32.xlu0 %v2359, 4
        %v2369 = vpop.permute.xlu0 %2368
        %2370 = vrot.lane.b32.xlu0 %v2360, 4
        %v2371 = vpop.permute.xlu0 %2370
        %2372 = vrot.lane.b32.xlu0 %v2361, 4
        %v2373 = vpop.permute.xlu0 %2372
        %vm2374 = vcmask 31744
        %v2375 = vsel %vm2374, %v2367, %v2369
        %v2376 = vsel %vm2374, %v2369, %v2371
        %v2377 = vsel %vm2374, %v2371, %v2373
        %2381 = vst [vmem:[#allocation2 + $0x750] sm:$0xff] %v2375
        %2382 = vst [vmem:[#allocation2 + $0x758] sm:$0xff] %v2376
        %2383 = vst [vmem:[#allocation2 + $0x760] sm:$0xff] %v2377
        %v2384 = vld [vmem:[%s361] sm:$0xff]
        %v2385 = vld [vmem:[%s361 + $0x8] sm:$0xff]
        %v2386 = vld [vmem:[%s361 + $0x10] sm:$0xff]
        %v2387 = vld [vmem:[%s361 + $0x18] sm:$0xff]
        %2392 = vrot.lane.b32.xlu0 %v2384, 4
        %v2393 = vpop.permute.xlu0 %2392
        %2394 = vrot.lane.b32.xlu0 %v2385, 4
        %v2395 = vpop.permute.xlu0 %2394
        %2396 = vrot.lane.b32.xlu0 %v2386, 4
        %v2397 = vpop.permute.xlu0 %2396
        %2398 = vrot.lane.b32.xlu0 %v2387, 4
        %v2399 = vpop.permute.xlu0 %2398
        %v2400 = vsel %vm2374, %v2393, %v2395
        %v2401 = vsel %vm2374, %v2395, %v2397
        %v2402 = vsel %vm2374, %v2397, %v2399
        %2406 = vst [vmem:[#allocation2 + $0x768] sm:$0xff] %v2400
        %2407 = vst [vmem:[#allocation2 + $0x770] sm:$0xff] %v2401
        %2408 = vst [vmem:[#allocation2 + $0x778] sm:$0xff] %v2402
        %v2409 = vld [vmem:[%s351] sm:$0xff]
        %v2410 = vld [vmem:[%s351 + $0x8] sm:$0xff]
        %v2411 = vld [vmem:[%s351 + $0x10] sm:$0xff]
        %v2412 = vld [vmem:[%s351 + $0x18] sm:$0xff]
        %2417 = vrot.lane.b32.xlu0 %v2409, 3
        %v2418 = vpop.permute.xlu0 %2417
        %2419 = vrot.lane.b32.xlu0 %v2410, 3
        %v2420 = vpop.permute.xlu0 %2419
        %2421 = vrot.lane.b32.xlu0 %v2411, 3
        %v2422 = vpop.permute.xlu0 %2421
        %2423 = vrot.lane.b32.xlu0 %v2412, 3
        %v2424 = vpop.permute.xlu0 %2423
        %vm2425 = vcmask 23552
        %v2426 = vsel %vm2425, %v2418, %v2420
        %v2427 = vsel %vm2425, %v2420, %v2422
        %v2428 = vsel %vm2425, %v2422, %v2424
        %2432 = vst [vmem:[#allocation2 + $0x780] sm:$0xff] %v2426
        %2433 = vst [vmem:[#allocation2 + $0x788] sm:$0xff] %v2427
        %2434 = vst [vmem:[#allocation2 + $0x790] sm:$0xff] %v2428
        %v2435 = vld [vmem:[%s361] sm:$0xff]
        %v2436 = vld [vmem:[%s361 + $0x8] sm:$0xff]
        %v2437 = vld [vmem:[%s361 + $0x10] sm:$0xff]
        %v2438 = vld [vmem:[%s361 + $0x18] sm:$0xff]
        %2443 = vrot.lane.b32.xlu0 %v2435, 3
        %v2444 = vpop.permute.xlu0 %2443
        %2445 = vrot.lane.b32.xlu0 %v2436, 3
        %v2446 = vpop.permute.xlu0 %2445
        %2447 = vrot.lane.b32.xlu0 %v2437, 3
        %v2448 = vpop.permute.xlu0 %2447
        %2449 = vrot.lane.b32.xlu0 %v2438, 3
        %v2450 = vpop.permute.xlu0 %2449
        %v2451 = vsel %vm2425, %v2444, %v2446
        %v2452 = vsel %vm2425, %v2446, %v2448
        %v2453 = vsel %vm2425, %v2448, %v2450
        %2457 = vst [vmem:[#allocation2 + $0x798] sm:$0xff] %v2451
        %2458 = vst [vmem:[#allocation2 + $0x7a0] sm:$0xff] %v2452
        %2459 = vst [vmem:[#allocation2 + $0x7a8] sm:$0xff] %v2453
        %v2460 = vld [vmem:[%s351] sm:$0xff]
        %v2461 = vld [vmem:[%s351 + $0x8] sm:$0xff]
        %v2462 = vld [vmem:[%s351 + $0x10] sm:$0xff]
        %v2463 = vld [vmem:[%s351 + $0x18] sm:$0xff]
        %2468 = vrot.lane.b32.xlu0 %v2460, 2
        %v2469 = vpop.permute.xlu0 %2468
        %2470 = vrot.lane.b32.xlu0 %v2461, 2
        %v2471 = vpop.permute.xlu0 %2470
        %2472 = vrot.lane.b32.xlu0 %v2462, 2
        %v2473 = vpop.permute.xlu0 %2472
        %2474 = vrot.lane.b32.xlu0 %v2463, 2
        %v2475 = vpop.permute.xlu0 %2474
        %vm2476 = vcmask 15360
        %v2477 = vsel %vm2476, %v2469, %v2471
        %v2478 = vsel %vm2476, %v2471, %v2473
        %v2479 = vsel %vm2476, %v2473, %v2475
        %2483 = vst [vmem:[#allocation2 + $0x7b0] sm:$0xff] %v2477
        %2484 = vst [vmem:[#allocation2 + $0x7b8] sm:$0xff] %v2478
        %2485 = vst [vmem:[#allocation2 + $0x7c0] sm:$0xff] %v2479
        %v2486 = vld [vmem:[%s361] sm:$0xff]
        %v2487 = vld [vmem:[%s361 + $0x8] sm:$0xff]
        %v2488 = vld [vmem:[%s361 + $0x10] sm:$0xff]
        %v2489 = vld [vmem:[%s361 + $0x18] sm:$0xff]
        %2494 = vrot.lane.b32.xlu0 %v2486, 2
        %v2495 = vpop.permute.xlu0 %2494
        %2496 = vrot.lane.b32.xlu0 %v2487, 2
        %v2497 = vpop.permute.xlu0 %2496
        %2498 = vrot.lane.b32.xlu0 %v2488, 2
        %v2499 = vpop.permute.xlu0 %2498
        %2500 = vrot.lane.b32.xlu0 %v2489, 2
        %v2501 = vpop.permute.xlu0 %2500
        %v2502 = vsel %vm2476, %v2495, %v2497
        %v2503 = vsel %vm2476, %v2497, %v2499
        %v2504 = vsel %vm2476, %v2499, %v2501
        %2508 = vst [vmem:[#allocation2 + $0x7c8] sm:$0xff] %v2502
        %2509 = vst [vmem:[#allocation2 + $0x7d0] sm:$0xff] %v2503
        %2510 = vst [vmem:[#allocation2 + $0x7d8] sm:$0xff] %v2504
        %v2511 = vld [vmem:[%s351 + $0x8] sm:$0xff]
        %v2512 = vld [vmem:[%s351 + $0x10] sm:$0xff]
        %v2513 = vld [vmem:[%s351 + $0x18] sm:$0xff]
        %v2514 = vld [vmem:[%s351 + $0x20] sm:$0xff]
        %2519 = vrot.lane.b32.xlu0 %v2511, 112
        %v2520 = vpop.permute.xlu0 %2519
        %2521 = vrot.lane.b32.xlu0 %v2512, 112
        %v2522 = vpop.permute.xlu0 %2521
        %2523 = vrot.lane.b32.xlu0 %v2513, 112
        %v2524 = vpop.permute.xlu0 %2523
        %2525 = vrot.lane.b32.xlu0 %v2514, 112
        %v2526 = vpop.permute.xlu0 %2525
        %vm2527 = vcmask 916480
        %v2528 = vsel %vm2527, %v2520, %v2522
        %v2529 = vsel %vm2527, %v2522, %v2524
        %v2530 = vsel %vm2527, %v2524, %v2526
        %2534 = vst [vmem:[#allocation2 + $0x7e0] sm:$0xff] %v2528
        %2535 = vst [vmem:[#allocation2 + $0x7e8] sm:$0xff] %v2529
        %2536 = vst [vmem:[#allocation2 + $0x7f0] sm:$0xff] %v2530
        %v2537 = vld [vmem:[%s361 + $0x8] sm:$0xff]
        %v2538 = vld [vmem:[%s361 + $0x10] sm:$0xff]
        %v2539 = vld [vmem:[%s361 + $0x18] sm:$0xff]
        %v2540 = vld [vmem:[%s361 + $0x20] sm:$0xff]
        %2545 = vrot.lane.b32.xlu0 %v2537, 112
        %v2546 = vpop.permute.xlu0 %2545
        %2547 = vrot.lane.b32.xlu0 %v2538, 112
        %v2548 = vpop.permute.xlu0 %2547
        %2549 = vrot.lane.b32.xlu0 %v2539, 112
        %v2550 = vpop.permute.xlu0 %2549
        %2551 = vrot.lane.b32.xlu0 %v2540, 112
        %v2552 = vpop.permute.xlu0 %2551
        %v2553 = vsel %vm2527, %v2546, %v2548
        %v2554 = vsel %vm2527, %v2548, %v2550
        %v2555 = vsel %vm2527, %v2550, %v2552
        %2559 = vst [vmem:[#allocation2 + $0x7f8] sm:$0xff] %v2553
        %2560 = vst [vmem:[#allocation2 + $0x800] sm:$0xff] %v2554
        %2561 = vst [vmem:[#allocation2 + $0x808] sm:$0xff] %v2555
        %v2562 = vld [vmem:[%s351 + $0x8] sm:$0xff]
        %v2563 = vld [vmem:[%s351 + $0x10] sm:$0xff]
        %v2564 = vld [vmem:[%s351 + $0x18] sm:$0xff]
        %v2565 = vld [vmem:[%s351 + $0x20] sm:$0xff]
        %2570 = vrot.lane.b32.xlu0 %v2562, 111
        %v2571 = vpop.permute.xlu0 %2570
        %2572 = vrot.lane.b32.xlu0 %v2563, 111
        %v2573 = vpop.permute.xlu0 %2572
        %2574 = vrot.lane.b32.xlu0 %v2564, 111
        %v2575 = vpop.permute.xlu0 %2574
        %2576 = vrot.lane.b32.xlu0 %v2565, 111
        %v2577 = vpop.permute.xlu0 %2576
        %vm2578 = vcmask 908288
        %v2579 = vsel %vm2578, %v2571, %v2573
        %v2580 = vsel %vm2578, %v2573, %v2575
        %v2581 = vsel %vm2578, %v2575, %v2577
        %2585 = vst [vmem:[#allocation2 + $0x810] sm:$0xff] %v2579
        %2586 = vst [vmem:[#allocation2 + $0x818] sm:$0xff] %v2580
        %2587 = vst [vmem:[#allocation2 + $0x820] sm:$0xff] %v2581
        %v2588 = vld [vmem:[%s361 + $0x8] sm:$0xff]
        %v2589 = vld [vmem:[%s361 + $0x10] sm:$0xff]
        %v2590 = vld [vmem:[%s361 + $0x18] sm:$0xff]
        %v2591 = vld [vmem:[%s361 + $0x20] sm:$0xff]
        %2596 = vrot.lane.b32.xlu0 %v2588, 111
        %v2597 = vpop.permute.xlu0 %2596
        %2598 = vrot.lane.b32.xlu0 %v2589, 111
        %v2599 = vpop.permute.xlu0 %2598
        %2600 = vrot.lane.b32.xlu0 %v2590, 111
        %v2601 = vpop.permute.xlu0 %2600
        %2602 = vrot.lane.b32.xlu0 %v2591, 111
        %v2603 = vpop.permute.xlu0 %2602
        %v2604 = vsel %vm2578, %v2597, %v2599
        %v2605 = vsel %vm2578, %v2599, %v2601
        %v2606 = vsel %vm2578, %v2601, %v2603
        %2610 = vst [vmem:[#allocation2 + $0x828] sm:$0xff] %v2604
        %2611 = vst [vmem:[#allocation2 + $0x830] sm:$0xff] %v2605
        %2612 = vst [vmem:[#allocation2 + $0x838] sm:$0xff] %v2606
        %v2613 = vld [vmem:[%s351 + $0x8] sm:$0xff]
        %v2614 = vld [vmem:[%s351 + $0x10] sm:$0xff]
        %v2615 = vld [vmem:[%s351 + $0x18] sm:$0xff]
        %v2616 = vld [vmem:[%s351 + $0x20] sm:$0xff]
        %2621 = vrot.lane.b32.xlu0 %v2613, 110
        %v2622 = vpop.permute.xlu0 %2621
        %2623 = vrot.lane.b32.xlu0 %v2614, 110
        %v2624 = vpop.permute.xlu0 %2623
        %2625 = vrot.lane.b32.xlu0 %v2615, 110
        %v2626 = vpop.permute.xlu0 %2625
        %2627 = vrot.lane.b32.xlu0 %v2616, 110
        %v2628 = vpop.permute.xlu0 %2627
        %vm2629 = vcmask 900096
        %v2630 = vsel %vm2629, %v2622, %v2624
        %v2631 = vsel %vm2629, %v2624, %v2626
        %v2632 = vsel %vm2629, %v2626, %v2628
        %2636 = vst [vmem:[#allocation2 + $0x840] sm:$0xff] %v2630
        %2637 = vst [vmem:[#allocation2 + $0x848] sm:$0xff] %v2631
        %2638 = vst [vmem:[#allocation2 + $0x850] sm:$0xff] %v2632
        %v2639 = vld [vmem:[%s361 + $0x8] sm:$0xff]
        %v2640 = vld [vmem:[%s361 + $0x10] sm:$0xff]
        %v2641 = vld [vmem:[%s361 + $0x18] sm:$0xff]
        %v2642 = vld [vmem:[%s361 + $0x20] sm:$0xff]
        %2647 = vrot.lane.b32.xlu0 %v2639, 110
        %v2648 = vpop.permute.xlu0 %2647
        %2649 = vrot.lane.b32.xlu0 %v2640, 110
        %v2650 = vpop.permute.xlu0 %2649
        %2651 = vrot.lane.b32.xlu0 %v2641, 110
        %v2652 = vpop.permute.xlu0 %2651
        %2653 = vrot.lane.b32.xlu0 %v2642, 110
        %v2654 = vpop.permute.xlu0 %2653
        %v2655 = vsel %vm2629, %v2648, %v2650
        %v2656 = vsel %vm2629, %v2650, %v2652
        %v2657 = vsel %vm2629, %v2652, %v2654
        %2661 = vst [vmem:[#allocation2 + $0x858] sm:$0xff] %v2655
        %2662 = vst [vmem:[#allocation2 + $0x860] sm:$0xff] %v2656
        %2663 = vst [vmem:[#allocation2 + $0x868] sm:$0xff] %v2657
        %v2664 = vld [vmem:[%s351 + $0x8] sm:$0xff]
        %v2665 = vld [vmem:[%s351 + $0x10] sm:$0xff]
        %v2666 = vld [vmem:[%s351 + $0x18] sm:$0xff]
        %v2667 = vld [vmem:[%s351 + $0x20] sm:$0xff]
        %2672 = vrot.lane.b32.xlu0 %v2664, 109
        %v2673 = vpop.permute.xlu0 %2672
        %2674 = vrot.lane.b32.xlu0 %v2665, 109
        %v2675 = vpop.permute.xlu0 %2674
        %2676 = vrot.lane.b32.xlu0 %v2666, 109
        %v2677 = vpop.permute.xlu0 %2676
        %2678 = vrot.lane.b32.xlu0 %v2667, 109
        %v2679 = vpop.permute.xlu0 %2678
        %vm2680 = vcmask 891904
        %v2681 = vsel %vm2680, %v2673, %v2675
        %v2682 = vsel %vm2680, %v2675, %v2677
        %v2683 = vsel %vm2680, %v2677, %v2679
        %2687 = vst [vmem:[#allocation2 + $0x870] sm:$0xff] %v2681
        %2688 = vst [vmem:[#allocation2 + $0x878] sm:$0xff] %v2682
        %2689 = vst [vmem:[#allocation2 + $0x880] sm:$0xff] %v2683
        %v2690 = vld [vmem:[%s361 + $0x8] sm:$0xff]
        %v2691 = vld [vmem:[%s361 + $0x10] sm:$0xff]
        %v2692 = vld [vmem:[%s361 + $0x18] sm:$0xff]
        %v2693 = vld [vmem:[%s361 + $0x20] sm:$0xff]
        %2698 = vrot.lane.b32.xlu0 %v2690, 109
        %v2699 = vpop.permute.xlu0 %2698
        %2700 = vrot.lane.b32.xlu0 %v2691, 109
        %v2701 = vpop.permute.xlu0 %2700
        %2702 = vrot.lane.b32.xlu0 %v2692, 109
        %v2703 = vpop.permute.xlu0 %2702
        %2704 = vrot.lane.b32.xlu0 %v2693, 109
        %v2705 = vpop.permute.xlu0 %2704
        %v2706 = vsel %vm2680, %v2699, %v2701
        %v2707 = vsel %vm2680, %v2701, %v2703
        %v2708 = vsel %vm2680, %v2703, %v2705
        %2712 = vst [vmem:[#allocation2 + $0x888] sm:$0xff] %v2706
        %2713 = vst [vmem:[#allocation2 + $0x890] sm:$0xff] %v2707
        %2714 = vst [vmem:[#allocation2 + $0x898] sm:$0xff] %v2708
        %v2715 = vld [vmem:[%s351 + $0x8] sm:$0xff]
        %v2716 = vld [vmem:[%s351 + $0x10] sm:$0xff]
        %v2717 = vld [vmem:[%s351 + $0x18] sm:$0xff]
        %v2718 = vld [vmem:[%s351 + $0x20] sm:$0xff]
        %2723 = vrot.lane.b32.xlu0 %v2715, 108
        %v2724 = vpop.permute.xlu0 %2723
        %2725 = vrot.lane.b32.xlu0 %v2716, 108
        %v2726 = vpop.permute.xlu0 %2725
        %2727 = vrot.lane.b32.xlu0 %v2717, 108
        %v2728 = vpop.permute.xlu0 %2727
        %2729 = vrot.lane.b32.xlu0 %v2718, 108
        %v2730 = vpop.permute.xlu0 %2729
        %vm2731 = vcmask 883712
        %v2732 = vsel %vm2731, %v2724, %v2726
        %v2733 = vsel %vm2731, %v2726, %v2728
        %v2734 = vsel %vm2731, %v2728, %v2730
        %2738 = vst [vmem:[#allocation2 + $0x8a0] sm:$0xff] %v2732
        %2739 = vst [vmem:[#allocation2 + $0x8a8] sm:$0xff] %v2733
        %2740 = vst [vmem:[#allocation2 + $0x8b0] sm:$0xff] %v2734
        %v2741 = vld [vmem:[%s361 + $0x8] sm:$0xff]
        %v2742 = vld [vmem:[%s361 + $0x10] sm:$0xff]
        %v2743 = vld [vmem:[%s361 + $0x18] sm:$0xff]
        %v2744 = vld [vmem:[%s361 + $0x20] sm:$0xff]
        %2749 = vrot.lane.b32.xlu0 %v2741, 108
        %v2750 = vpop.permute.xlu0 %2749
        %2751 = vrot.lane.b32.xlu0 %v2742, 108
        %v2752 = vpop.permute.xlu0 %2751
        %2753 = vrot.lane.b32.xlu0 %v2743, 108
        %v2754 = vpop.permute.xlu0 %2753
        %2755 = vrot.lane.b32.xlu0 %v2744, 108
        %v2756 = vpop.permute.xlu0 %2755
        %v2757 = vsel %vm2731, %v2750, %v2752
        %v2758 = vsel %vm2731, %v2752, %v2754
        %v2759 = vsel %vm2731, %v2754, %v2756
        %2763 = vst [vmem:[#allocation2 + $0x8b8] sm:$0xff] %v2757
        %2764 = vst [vmem:[#allocation2 + $0x8c0] sm:$0xff] %v2758
        %2765 = vst [vmem:[#allocation2 + $0x8c8] sm:$0xff] %v2759
        %v2766 = vld [vmem:[%s351 + $0x8] sm:$0xff]
        %v2767 = vld [vmem:[%s351 + $0x10] sm:$0xff]
        %v2768 = vld [vmem:[%s351 + $0x18] sm:$0xff]
        %v2769 = vld [vmem:[%s351 + $0x20] sm:$0xff]
        %2774 = vrot.lane.b32.xlu0 %v2766, 107
        %v2775 = vpop.permute.xlu0 %2774
        %2776 = vrot.lane.b32.xlu0 %v2767, 107
        %v2777 = vpop.permute.xlu0 %2776
        %2778 = vrot.lane.b32.xlu0 %v2768, 107
        %v2779 = vpop.permute.xlu0 %2778
        %2780 = vrot.lane.b32.xlu0 %v2769, 107
        %v2781 = vpop.permute.xlu0 %2780
        %vm2782 = vcmask 875520
        %v2783 = vsel %vm2782, %v2775, %v2777
        %v2784 = vsel %vm2782, %v2777, %v2779
        %v2785 = vsel %vm2782, %v2779, %v2781
        %2789 = vst [vmem:[#allocation2 + $0x8d0] sm:$0xff] %v2783
        %2790 = vst [vmem:[#allocation2 + $0x8d8] sm:$0xff] %v2784
        %2791 = vst [vmem:[#allocation2 + $0x8e0] sm:$0xff] %v2785
        %v2792 = vld [vmem:[%s361 + $0x8] sm:$0xff]
        %v2793 = vld [vmem:[%s361 + $0x10] sm:$0xff]
        %v2794 = vld [vmem:[%s361 + $0x18] sm:$0xff]
        %v2795 = vld [vmem:[%s361 + $0x20] sm:$0xff]
        %2800 = vrot.lane.b32.xlu0 %v2792, 107
        %v2801 = vpop.permute.xlu0 %2800
        %2802 = vrot.lane.b32.xlu0 %v2793, 107
        %v2803 = vpop.permute.xlu0 %2802
        %2804 = vrot.lane.b32.xlu0 %v2794, 107
        %v2805 = vpop.permute.xlu0 %2804
        %2806 = vrot.lane.b32.xlu0 %v2795, 107
        %v2807 = vpop.permute.xlu0 %2806
        %v2808 = vsel %vm2782, %v2801, %v2803
        %v2809 = vsel %vm2782, %v2803, %v2805
        %v2810 = vsel %vm2782, %v2805, %v2807
        %2814 = vst [vmem:[#allocation2 + $0x8e8] sm:$0xff] %v2808
        %2815 = vst [vmem:[#allocation2 + $0x8f0] sm:$0xff] %v2809
        %2816 = vst [vmem:[#allocation2 + $0x8f8] sm:$0xff] %v2810
        %v2817 = vld [vmem:[%s351 + $0x8] sm:$0xff]
        %v2818 = vld [vmem:[%s351 + $0x10] sm:$0xff]
        %v2819 = vld [vmem:[%s351 + $0x18] sm:$0xff]
        %v2820 = vld [vmem:[%s351 + $0x20] sm:$0xff]
        %2825 = vrot.lane.b32.xlu0 %v2817, 106
        %v2826 = vpop.permute.xlu0 %2825
        %2827 = vrot.lane.b32.xlu0 %v2818, 106
        %v2828 = vpop.permute.xlu0 %2827
        %2829 = vrot.lane.b32.xlu0 %v2819, 106
        %v2830 = vpop.permute.xlu0 %2829
        %2831 = vrot.lane.b32.xlu0 %v2820, 106
        %v2832 = vpop.permute.xlu0 %2831
        %vm2833 = vcmask 867328
        %v2834 = vsel %vm2833, %v2826, %v2828
        %v2835 = vsel %vm2833, %v2828, %v2830
        %v2836 = vsel %vm2833, %v2830, %v2832
        %2840 = vst [vmem:[#allocation2 + $0x900] sm:$0xff] %v2834
        %2841 = vst [vmem:[#allocation2 + $0x908] sm:$0xff] %v2835
        %2842 = vst [vmem:[#allocation2 + $0x910] sm:$0xff] %v2836
        %v2843 = vld [vmem:[%s361 + $0x8] sm:$0xff]
        %v2844 = vld [vmem:[%s361 + $0x10] sm:$0xff]
        %v2845 = vld [vmem:[%s361 + $0x18] sm:$0xff]
        %v2846 = vld [vmem:[%s361 + $0x20] sm:$0xff]
        %2851 = vrot.lane.b32.xlu0 %v2843, 106
        %v2852 = vpop.permute.xlu0 %2851
        %2853 = vrot.lane.b32.xlu0 %v2844, 106
        %v2854 = vpop.permute.xlu0 %2853
        %2855 = vrot.lane.b32.xlu0 %v2845, 106
        %v2856 = vpop.permute.xlu0 %2855
        %2857 = vrot.lane.b32.xlu0 %v2846, 106
        %v2858 = vpop.permute.xlu0 %2857
        %v2859 = vsel %vm2833, %v2852, %v2854
        %v2860 = vsel %vm2833, %v2854, %v2856
        %v2861 = vsel %vm2833, %v2856, %v2858
        %2865 = vst [vmem:[#allocation2 + $0x918] sm:$0xff] %v2859
        %2866 = vst [vmem:[#allocation2 + $0x920] sm:$0xff] %v2860
        %2867 = vst [vmem:[#allocation2 + $0x928] sm:$0xff] %v2861
        %v2868 = vld [vmem:[#allocation9] sm:$0xff]
        %v2869 = vld [vmem:[#allocation9 + $0x8] sm:$0xff]
        %v2870 = vld [vmem:[#allocation9 + $0x10] sm:$0xff]
        %v2871 = vld [vmem:[#allocation9 + $0x18] sm:$0xff]
        %v2872 = vld [vmem:[#allocation9 + $0x20] sm:$0xff]
        %v2873 = vld [vmem:[#allocation9 + $0x28] sm:$0xff]
        %v2874 = vld [vmem:[#allocation9 + $0x30] sm:$0xff]
        %v2875 = vld [vmem:[#allocation9 + $0x38] sm:$0xff]
        %v2876 = vld [vmem:[#allocation9 + $0x40] sm:$0xff]
        %v2877 = vld [vmem:[#allocation9 + $0x48] sm:$0xff]
        %v2878 = vld [vmem:[#allocation9 + $0x50] sm:$0xff]
        %v2879 = vld [vmem:[#allocation9 + $0x58] sm:$0xff]
        %v2880 = vld [vmem:[#allocation2] sm:$0xff]
        %v2881 = vld [vmem:[#allocation2 + $0x8] sm:$0xff]
        %v2882 = vld [vmem:[#allocation2 + $0x10] sm:$0xff]
        %v2883 = vld [vmem:[#allocation2 + $0x18] sm:$0xff]
        %v2884 = vld [vmem:[#allocation2 + $0x20] sm:$0xff]
        %v2885 = vld [vmem:[#allocation2 + $0x28] sm:$0xff]
        %v2886 = vld [vmem:[#allocation2 + $0x30] sm:$0xff]
        %v2887 = vld [vmem:[#allocation2 + $0x38] sm:$0xff]
        %v2888 = vld [vmem:[#allocation2 + $0x40] sm:$0xff]
        %v2889 = vld [vmem:[#allocation2 + $0x48] sm:$0xff]
        %v2890 = vld [vmem:[#allocation2 + $0x50] sm:$0xff]
        %v2891 = vld [vmem:[#allocation2 + $0x58] sm:$0xff]
        %v2892 = vld [vmem:[#allocation2 + $0x60] sm:$0xff]
        %v2893 = vld [vmem:[#allocation2 + $0x68] sm:$0xff]
        %v2894 = vld [vmem:[#allocation2 + $0x70] sm:$0xff]
        %v2895 = vld [vmem:[#allocation2 + $0x78] sm:$0xff]
        %v2896 = vld [vmem:[#allocation2 + $0x80] sm:$0xff]
        %v2897 = vld [vmem:[#allocation2 + $0x88] sm:$0xff]
        %v2898 = vld [vmem:[#allocation2 + $0x90] sm:$0xff]
        %v2899 = vld [vmem:[#allocation2 + $0x98] sm:$0xff]
        %v2900 = vld [vmem:[#allocation2 + $0xa0] sm:$0xff]
        %v2901 = vld [vmem:[#allocation2 + $0xa8] sm:$0xff]
        %v2902 = vld [vmem:[#allocation2 + $0xb0] sm:$0xff]
        %v2903 = vld [vmem:[#allocation2 + $0xb8] sm:$0xff]
        %v2904 = vld [vmem:[#allocation2 + $0xc0] sm:$0xff]
        %v2905 = vld [vmem:[#allocation2 + $0xc8] sm:$0xff]
        %v2906 = vld [vmem:[#allocation2 + $0xd0] sm:$0xff]
        %v2907 = vld [vmem:[#allocation2 + $0xd8] sm:$0xff]
        %v2908 = vld [vmem:[#allocation2 + $0xe0] sm:$0xff]
        %v2909 = vld [vmem:[#allocation2 + $0xe8] sm:$0xff]
        %v2910 = vld [vmem:[#allocation2 + $0xf0] sm:$0xff]
        %v2911 = vld [vmem:[#allocation2 + $0xf8] sm:$0xff]
        %v2912 = vld [vmem:[#allocation2 + $0x100] sm:$0xff]
        %v2913 = vld [vmem:[#allocation2 + $0x108] sm:$0xff]
        %v2914 = vld [vmem:[#allocation2 + $0x110] sm:$0xff]
        %v2915 = vld [vmem:[#allocation2 + $0x118] sm:$0xff]
        %v2916 = vld [vmem:[#allocation2 + $0x120] sm:$0xff]
        %v2917 = vld [vmem:[#allocation2 + $0x128] sm:$0xff]
        %v2918 = vld [vmem:[#allocation2 + $0x130] sm:$0xff]
        %v2919 = vld [vmem:[#allocation2 + $0x138] sm:$0xff]
        %v2920 = vld [vmem:[#allocation2 + $0x140] sm:$0xff]
        %v2921 = vld [vmem:[#allocation2 + $0x148] sm:$0xff]
        %v2922 = vld [vmem:[#allocation2 + $0x150] sm:$0xff]
        %v2923 = vld [vmem:[#allocation2 + $0x158] sm:$0xff]
        %v2924 = vld [vmem:[#allocation2 + $0x160] sm:$0xff]
        %v2925 = vld [vmem:[#allocation2 + $0x168] sm:$0xff]
        %v2926 = vld [vmem:[#allocation2 + $0x170] sm:$0xff]
        %v2927 = vld [vmem:[#allocation2 + $0x178] sm:$0xff]
        %v2928 = vld [vmem:[#allocation2 + $0x180] sm:$0xff]
        %v2929 = vld [vmem:[#allocation2 + $0x188] sm:$0xff]
        %v2930 = vld [vmem:[#allocation2 + $0x190] sm:$0xff]
        %v2931 = vld [vmem:[#allocation2 + $0x198] sm:$0xff]
        %v2932 = vld [vmem:[#allocation2 + $0x1a0] sm:$0xff]
        %v2933 = vld [vmem:[#allocation2 + $0x1a8] sm:$0xff]
        %v2934 = vld [vmem:[#allocation2 + $0x1b0] sm:$0xff]
        %v2935 = vld [vmem:[#allocation2 + $0x1b8] sm:$0xff]
        %v2936 = vld [vmem:[#allocation2 + $0x1c0] sm:$0xff]
        %v2937 = vld [vmem:[#allocation2 + $0x1c8] sm:$0xff]
        %v2938 = vld [vmem:[#allocation2 + $0x1d0] sm:$0xff]
        %v2939 = vld [vmem:[#allocation2 + $0x1d8] sm:$0xff]
        %v2940 = vld [vmem:[#allocation2 + $0x1e0] sm:$0xff]
        %v2941 = vld [vmem:[#allocation2 + $0x1e8] sm:$0xff]
        %v2942 = vld [vmem:[#allocation2 + $0x1f0] sm:$0xff]
        %v2943 = vld [vmem:[#allocation2 + $0x1f8] sm:$0xff]
        %v2944 = vld [vmem:[#allocation2 + $0x200] sm:$0xff]
        %v2945 = vld [vmem:[#allocation2 + $0x208] sm:$0xff]
        %v2946 = vld [vmem:[#allocation2 + $0x210] sm:$0xff]
        %v2947 = vld [vmem:[#allocation2 + $0x218] sm:$0xff]
        %v2948 = vld [vmem:[#allocation2 + $0x220] sm:$0xff]
        %v2949 = vld [vmem:[#allocation2 + $0x228] sm:$0xff]
        %v2950 = vld [vmem:[#allocation2 + $0x230] sm:$0xff]
        %v2951 = vld [vmem:[#allocation2 + $0x238] sm:$0xff]
        %v2952 = vld [vmem:[#allocation2 + $0x240] sm:$0xff]
        %v2953 = vld [vmem:[#allocation2 + $0x248] sm:$0xff]
        %v2954 = vld [vmem:[#allocation2 + $0x250] sm:$0xff]
        %v2955 = vld [vmem:[#allocation2 + $0x258] sm:$0xff]
        %v2956 = vld [vmem:[#allocation2 + $0x260] sm:$0xff]
        %v2957 = vld [vmem:[#allocation2 + $0x268] sm:$0xff]
        %v2958 = vld [vmem:[#allocation2 + $0x270] sm:$0xff]
        %v2959 = vld [vmem:[#allocation2 + $0x278] sm:$0xff]
        %v2960 = vld [vmem:[#allocation2 + $0x280] sm:$0xff]
        %v2961 = vld [vmem:[#allocation2 + $0x288] sm:$0xff]
        %v2962 = vld [vmem:[#allocation2 + $0x290] sm:$0xff]
        %v2963 = vld [vmem:[#allocation2 + $0x298] sm:$0xff]
        %v2964 = vld [vmem:[#allocation2 + $0x2a0] sm:$0xff]
        %v2965 = vld [vmem:[#allocation2 + $0x2a8] sm:$0xff]
        %v2966 = vld [vmem:[#allocation2 + $0x2b0] sm:$0xff]
        %v2967 = vld [vmem:[#allocation2 + $0x2b8] sm:$0xff]
        %v2968 = vld [vmem:[#allocation2 + $0x2c0] sm:$0xff]
        %v2969 = vld [vmem:[#allocation2 + $0x2c8] sm:$0xff]
        %v2970 = vld [vmem:[#allocation2 + $0x2d0] sm:$0xff]
        %v2971 = vld [vmem:[#allocation2 + $0x2d8] sm:$0xff]
        %v2972 = vld [vmem:[#allocation2 + $0x2e0] sm:$0xff]
        %v2973 = vld [vmem:[#allocation2 + $0x2e8] sm:$0xff]
        %v2974 = vld [vmem:[#allocation2 + $0x2f0] sm:$0xff]
        %v2975 = vld [vmem:[#allocation2 + $0x2f8] sm:$0xff]
        %v2976 = vld [vmem:[#allocation2 + $0x300] sm:$0xff]
        %v2977 = vld [vmem:[#allocation2 + $0x308] sm:$0xff]
        %v2978 = vld [vmem:[#allocation2 + $0x310] sm:$0xff]
        %v2979 = vld [vmem:[#allocation2 + $0x318] sm:$0xff]
        %v2980 = vld [vmem:[#allocation2 + $0x320] sm:$0xff]
        %v2981 = vld [vmem:[#allocation2 + $0x328] sm:$0xff]
        %v2982 = vld [vmem:[#allocation2 + $0x330] sm:$0xff]
        %v2983 = vld [vmem:[#allocation2 + $0x338] sm:$0xff]
        %v2984 = vld [vmem:[#allocation2 + $0x340] sm:$0xff]
        %v2985 = vld [vmem:[#allocation2 + $0x348] sm:$0xff]
        %v2986 = vld [vmem:[#allocation2 + $0x350] sm:$0xff]
        %v2987 = vld [vmem:[#allocation2 + $0x358] sm:$0xff]
        %v2988 = vld [vmem:[#allocation2 + $0x360] sm:$0xff]
        %v2989 = vld [vmem:[#allocation2 + $0x368] sm:$0xff]
        %v2990 = vld [vmem:[#allocation2 + $0x370] sm:$0xff]
        %v2991 = vld [vmem:[#allocation2 + $0x378] sm:$0xff]
        %v2992 = vld [vmem:[#allocation2 + $0x380] sm:$0xff]
        %v2993 = vld [vmem:[#allocation2 + $0x388] sm:$0xff]
        %v2994 = vld [vmem:[#allocation2 + $0x390] sm:$0xff]
        %v2995 = vld [vmem:[#allocation2 + $0x398] sm:$0xff]
        %v2996 = vld [vmem:[#allocation2 + $0x3a0] sm:$0xff]
        %v2997 = vld [vmem:[#allocation2 + $0x3a8] sm:$0xff]
        %v2998 = vld [vmem:[#allocation2 + $0x3b0] sm:$0xff]
        %v2999 = vld [vmem:[#allocation2 + $0x3b8] sm:$0xff]
        %v3000 = vld [vmem:[#allocation2 + $0x3c0] sm:$0xff]
        %v3001 = vld [vmem:[#allocation2 + $0x3c8] sm:$0xff]
        %v3002 = vld [vmem:[#allocation2 + $0x3d0] sm:$0xff]
        %v3003 = vld [vmem:[#allocation2 + $0x3d8] sm:$0xff]
        %v3004 = vld [vmem:[#allocation2 + $0x3e0] sm:$0xff]
        %v3005 = vld [vmem:[#allocation2 + $0x3e8] sm:$0xff]
        %v3006 = vld [vmem:[#allocation2 + $0x3f0] sm:$0xff]
        %v3007 = vld [vmem:[#allocation2 + $0x3f8] sm:$0xff]
        %v3008 = vld [vmem:[#allocation2 + $0x400] sm:$0xff]
        %v3009 = vld [vmem:[#allocation2 + $0x408] sm:$0xff]
        %v3010 = vld [vmem:[#allocation2 + $0x410] sm:$0xff]
        %v3011 = vld [vmem:[#allocation2 + $0x418] sm:$0xff]
        %v3012 = vld [vmem:[#allocation2 + $0x420] sm:$0xff]
        %v3013 = vld [vmem:[#allocation2 + $0x428] sm:$0xff]
        %v3014 = vld [vmem:[#allocation2 + $0x430] sm:$0xff]
        %v3015 = vld [vmem:[#allocation2 + $0x438] sm:$0xff]
        %v3016 = vld [vmem:[#allocation2 + $0x440] sm:$0xff]
        %v3017 = vld [vmem:[#allocation2 + $0x448] sm:$0xff]
        %v3018 = vld [vmem:[#allocation2 + $0x450] sm:$0xff]
        %v3019 = vld [vmem:[#allocation2 + $0x458] sm:$0xff]
        %v3020 = vld [vmem:[#allocation2 + $0x460] sm:$0xff]
        %v3021 = vld [vmem:[#allocation2 + $0x468] sm:$0xff]
        %v3022 = vld [vmem:[#allocation2 + $0x470] sm:$0xff]
        %v3023 = vld [vmem:[#allocation2 + $0x478] sm:$0xff]
        %v3024 = vld [vmem:[#allocation2 + $0x480] sm:$0xff]
        %v3025 = vld [vmem:[#allocation2 + $0x488] sm:$0xff]
        %v3026 = vld [vmem:[#allocation2 + $0x490] sm:$0xff]
        %v3027 = vld [vmem:[#allocation2 + $0x498] sm:$0xff]
        %v3028 = vld [vmem:[#allocation2 + $0x4a0] sm:$0xff]
        %v3029 = vld [vmem:[#allocation2 + $0x4a8] sm:$0xff]
        %v3030 = vld [vmem:[#allocation2 + $0x4b0] sm:$0xff]
        %v3031 = vld [vmem:[#allocation2 + $0x4b8] sm:$0xff]
        %v3032 = vld [vmem:[#allocation2 + $0x4c0] sm:$0xff]
        %v3033 = vld [vmem:[#allocation2 + $0x4c8] sm:$0xff]
        %v3034 = vld [vmem:[#allocation2 + $0x4d0] sm:$0xff]
        %v3035 = vld [vmem:[#allocation2 + $0x4d8] sm:$0xff]
        %v3036 = vld [vmem:[#allocation2 + $0x4e0] sm:$0xff]
        %v3037 = vld [vmem:[#allocation2 + $0x4e8] sm:$0xff]
        %v3038 = vld [vmem:[#allocation2 + $0x4f0] sm:$0xff]
        %v3039 = vld [vmem:[#allocation2 + $0x4f8] sm:$0xff]
        %v3040 = vld [vmem:[#allocation2 + $0x500] sm:$0xff]
        %v3041 = vld [vmem:[#allocation2 + $0x508] sm:$0xff]
        %v3042 = vld [vmem:[#allocation2 + $0x510] sm:$0xff]
        %v3043 = vld [vmem:[#allocation2 + $0x518] sm:$0xff]
        %v3044 = vld [vmem:[#allocation2 + $0x520] sm:$0xff]
        %v3045 = vld [vmem:[#allocation2 + $0x528] sm:$0xff]
        %v3046 = vld [vmem:[#allocation2 + $0x530] sm:$0xff]
        %v3047 = vld [vmem:[#allocation2 + $0x538] sm:$0xff]
        %v3048 = vld [vmem:[#allocation2 + $0x540] sm:$0xff]
        %v3049 = vld [vmem:[#allocation2 + $0x548] sm:$0xff]
        %v3050 = vld [vmem:[#allocation2 + $0x550] sm:$0xff]
        %v3051 = vld [vmem:[#allocation2 + $0x558] sm:$0xff]
        %v3052 = vld [vmem:[#allocation2 + $0x560] sm:$0xff]
        %v3053 = vld [vmem:[#allocation2 + $0x568] sm:$0xff]
        %v3054 = vld [vmem:[#allocation2 + $0x570] sm:$0xff]
        %v3055 = vld [vmem:[#allocation2 + $0x578] sm:$0xff]
        %v3056 = vld [vmem:[#allocation2 + $0x580] sm:$0xff]
        %v3057 = vld [vmem:[#allocation2 + $0x588] sm:$0xff]
        %v3058 = vld [vmem:[#allocation2 + $0x590] sm:$0xff]
        %v3059 = vld [vmem:[#allocation2 + $0x598] sm:$0xff]
        %v3060 = vld [vmem:[#allocation2 + $0x5a0] sm:$0xff]
        %v3061 = vld [vmem:[#allocation2 + $0x5a8] sm:$0xff]
        %v3062 = vld [vmem:[#allocation2 + $0x5b0] sm:$0xff]
        %v3063 = vld [vmem:[#allocation2 + $0x5b8] sm:$0xff]
        %v3064 = vld [vmem:[#allocation2 + $0x5c0] sm:$0xff]
        %v3065 = vld [vmem:[#allocation2 + $0x5c8] sm:$0xff]
        %v3066 = vld [vmem:[#allocation2 + $0x5d0] sm:$0xff]
        %v3067 = vld [vmem:[#allocation2 + $0x5d8] sm:$0xff]
        %v3068 = vld [vmem:[#allocation2 + $0x5e0] sm:$0xff]
        %v3069 = vld [vmem:[#allocation2 + $0x5e8] sm:$0xff]
        %v3070 = vld [vmem:[#allocation2 + $0x5f0] sm:$0xff]
        %v3071 = vld [vmem:[#allocation2 + $0x5f8] sm:$0xff]
        %v3072 = vld [vmem:[#allocation2 + $0x600] sm:$0xff]
        %v3073 = vld [vmem:[#allocation2 + $0x608] sm:$0xff]
        %v3074 = vld [vmem:[#allocation2 + $0x610] sm:$0xff]
        %v3075 = vld [vmem:[#allocation2 + $0x618] sm:$0xff]
        %v3076 = vld [vmem:[#allocation2 + $0x620] sm:$0xff]
        %v3077 = vld [vmem:[#allocation2 + $0x628] sm:$0xff]
        %v3078 = vld [vmem:[#allocation2 + $0x630] sm:$0xff]
        %v3079 = vld [vmem:[#allocation2 + $0x638] sm:$0xff]
        %v3080 = vld [vmem:[#allocation2 + $0x640] sm:$0xff]
        %v3081 = vld [vmem:[#allocation2 + $0x648] sm:$0xff]
        %v3082 = vld [vmem:[#allocation2 + $0x650] sm:$0xff]
        %v3083 = vld [vmem:[#allocation2 + $0x658] sm:$0xff]
        %v3084 = vld [vmem:[#allocation2 + $0x660] sm:$0xff]
        %v3085 = vld [vmem:[#allocation2 + $0x668] sm:$0xff]
        %v3086 = vld [vmem:[#allocation2 + $0x670] sm:$0xff]
        %v3087 = vld [vmem:[#allocation2 + $0x678] sm:$0xff]
        %v3088 = vld [vmem:[#allocation2 + $0x680] sm:$0xff]
        %v3089 = vld [vmem:[#allocation2 + $0x688] sm:$0xff]
        %v3090 = vld [vmem:[#allocation2 + $0x690] sm:$0xff]
        %v3091 = vld [vmem:[#allocation2 + $0x698] sm:$0xff]
        %v3092 = vld [vmem:[#allocation2 + $0x6a0] sm:$0xff]
        %v3093 = vld [vmem:[#allocation2 + $0x6a8] sm:$0xff]
        %v3094 = vld [vmem:[#allocation2 + $0x6b0] sm:$0xff]
        %v3095 = vld [vmem:[#allocation2 + $0x6b8] sm:$0xff]
        %v3096 = vld [vmem:[#allocation2 + $0x6c0] sm:$0xff]
        %v3097 = vld [vmem:[#allocation2 + $0x6c8] sm:$0xff]
        %v3098 = vld [vmem:[#allocation2 + $0x6d0] sm:$0xff]
        %v3099 = vld [vmem:[#allocation2 + $0x6d8] sm:$0xff]
        %v3100 = vld [vmem:[#allocation2 + $0x6e0] sm:$0xff]
        %v3101 = vld [vmem:[#allocation2 + $0x6e8] sm:$0xff]
        %v3102 = vld [vmem:[#allocation2 + $0x6f0] sm:$0xff]
        %v3103 = vld [vmem:[#allocation2 + $0x6f8] sm:$0xff]
        %v3104 = vld [vmem:[#allocation2 + $0x700] sm:$0xff]
        %v3105 = vld [vmem:[#allocation2 + $0x708] sm:$0xff]
        %v3106 = vld [vmem:[#allocation2 + $0x710] sm:$0xff]
        %v3107 = vld [vmem:[#allocation2 + $0x718] sm:$0xff]
        %v3108 = vld [vmem:[#allocation2 + $0x720] sm:$0xff]
        %v3109 = vld [vmem:[#allocation2 + $0x728] sm:$0xff]
        %v3110 = vld [vmem:[#allocation2 + $0x730] sm:$0xff]
        %v3111 = vld [vmem:[#allocation2 + $0x738] sm:$0xff]
        %v3112 = vld [vmem:[#allocation2 + $0x740] sm:$0xff]
        %v3113 = vld [vmem:[#allocation2 + $0x748] sm:$0xff]
        %v3114 = vld [vmem:[#allocation2 + $0x750] sm:$0xff]
        %v3115 = vld [vmem:[#allocation2 + $0x758] sm:$0xff]
        %v3116 = vld [vmem:[#allocation2 + $0x760] sm:$0xff]
        %v3117 = vld [vmem:[#allocation2 + $0x768] sm:$0xff]
        %v3118 = vld [vmem:[#allocation2 + $0x770] sm:$0xff]
        %v3119 = vld [vmem:[#allocation2 + $0x778] sm:$0xff]
        %v3120 = vld [vmem:[#allocation2 + $0x780] sm:$0xff]
        %v3121 = vld [vmem:[#allocation2 + $0x788] sm:$0xff]
        %v3122 = vld [vmem:[#allocation2 + $0x790] sm:$0xff]
        %v3123 = vld [vmem:[#allocation2 + $0x798] sm:$0xff]
        %v3124 = vld [vmem:[#allocation2 + $0x7a0] sm:$0xff]
        %v3125 = vld [vmem:[#allocation2 + $0x7a8] sm:$0xff]
        %v3126 = vld [vmem:[#allocation2 + $0x7b0] sm:$0xff]
        %v3127 = vld [vmem:[#allocation2 + $0x7b8] sm:$0xff]
        %v3128 = vld [vmem:[#allocation2 + $0x7c0] sm:$0xff]
        %v3129 = vld [vmem:[#allocation2 + $0x7c8] sm:$0xff]
        %v3130 = vld [vmem:[#allocation2 + $0x7d0] sm:$0xff]
        %v3131 = vld [vmem:[#allocation2 + $0x7d8] sm:$0xff]
        %v3132 = vld [vmem:[#allocation2 + $0x7e0] sm:$0xff]
        %v3133 = vld [vmem:[#allocation2 + $0x7e8] sm:$0xff]
        %v3134 = vld [vmem:[#allocation2 + $0x7f0] sm:$0xff]
        %v3135 = vld [vmem:[#allocation2 + $0x7f8] sm:$0xff]
        %v3136 = vld [vmem:[#allocation2 + $0x800] sm:$0xff]
        %v3137 = vld [vmem:[#allocation2 + $0x808] sm:$0xff]
        %v3138 = vld [vmem:[#allocation2 + $0x810] sm:$0xff]
        %v3139 = vld [vmem:[#allocation2 + $0x818] sm:$0xff]
        %v3140 = vld [vmem:[#allocation2 + $0x820] sm:$0xff]
        %v3141 = vld [vmem:[#allocation2 + $0x828] sm:$0xff]
        %v3142 = vld [vmem:[#allocation2 + $0x830] sm:$0xff]
        %v3143 = vld [vmem:[#allocation2 + $0x838] sm:$0xff]
        %v3144 = vld [vmem:[#allocation2 + $0x840] sm:$0xff]
        %v3145 = vld [vmem:[#allocation2 + $0x848] sm:$0xff]
        %v3146 = vld [vmem:[#allocation2 + $0x850] sm:$0xff]
        %v3147 = vld [vmem:[#allocation2 + $0x858] sm:$0xff]
        %v3148 = vld [vmem:[#allocation2 + $0x860] sm:$0xff]
        %v3149 = vld [vmem:[#allocation2 + $0x868] sm:$0xff]
        %v3150 = vld [vmem:[#allocation2 + $0x870] sm:$0xff]
        %v3151 = vld [vmem:[#allocation2 + $0x878] sm:$0xff]
        %v3152 = vld [vmem:[#allocation2 + $0x880] sm:$0xff]
        %v3153 = vld [vmem:[#allocation2 + $0x888] sm:$0xff]
        %v3154 = vld [vmem:[#allocation2 + $0x890] sm:$0xff]
        %v3155 = vld [vmem:[#allocation2 + $0x898] sm:$0xff]
        %v3156 = vld [vmem:[#allocation2 + $0x8a0] sm:$0xff]
        %v3157 = vld [vmem:[#allocation2 + $0x8a8] sm:$0xff]
        %v3158 = vld [vmem:[#allocation2 + $0x8b0] sm:$0xff]
        %v3159 = vld [vmem:[#allocation2 + $0x8b8] sm:$0xff]
        %v3160 = vld [vmem:[#allocation2 + $0x8c0] sm:$0xff]
        %v3161 = vld [vmem:[#allocation2 + $0x8c8] sm:$0xff]
        %v3162 = vld [vmem:[#allocation2 + $0x8d0] sm:$0xff]
        %v3163 = vld [vmem:[#allocation2 + $0x8d8] sm:$0xff]
        %v3164 = vld [vmem:[#allocation2 + $0x8e0] sm:$0xff]
        %v3165 = vld [vmem:[#allocation2 + $0x8e8] sm:$0xff]
        %v3166 = vld [vmem:[#allocation2 + $0x8f0] sm:$0xff]
        %v3167 = vld [vmem:[#allocation2 + $0x8f8] sm:$0xff]
        %v3168 = vld [vmem:[#allocation2 + $0x900] sm:$0xff]
        %v3169 = vld [vmem:[#allocation2 + $0x908] sm:$0xff]
        %v3170 = vld [vmem:[#allocation2 + $0x910] sm:$0xff]
        %v3171 = vld [vmem:[#allocation2 + $0x918] sm:$0xff]
        %v3172 = vld [vmem:[#allocation2 + $0x920] sm:$0xff]
        %v3173 = vld [vmem:[#allocation2 + $0x928] sm:$0xff]
        %v3174 = vld [vmem:[%s3] sm:$0xff]
        %v3175 = vld [vmem:[%s3 + $0x8] sm:$0xff]
        %v3176 = vld [vmem:[%s3 + $0x10] sm:$0xff]
        %3178 = vset.pattern.permute.xlu0 0
        %3179 = vperm.xlu0 %3178, %v3174
        %v3180 = vpop.permute.xlu0 %3179
        %3183 = vset.pattern.permute.xlu0 0
        %3184 = vperm.xlu0 %3183, %v3175
        %v3185 = vpop.permute.xlu0 %3184
        %3188 = vset.pattern.permute.xlu0 0
        %3189 = vperm.xlu0 %3188, %v3176
        %v3190 = vpop.permute.xlu0 %3189
        %v3193 = vsel %vm2170, %v2871, 0
        %v3196 = vsel %vm2170, %v2875, 0
        %v3199 = vsel %vm2170, %v2879, 0
        %3201 = vmatpush.msra.mxu0 %v2970
        %3202 = vmatpush.msra.mxu0 %v2964
        %3203 = vmatpush.msra.mxu0 %v2958
        %3204 = vmatpush.msra.mxu0 %v2952
        %3205 = vmatpush.msra.mxu0 %v2946
        %3206 = vmatpush.msra.mxu0 %v2940
        %3207 = vmatpush.msra.mxu0 %v2934
        %3208 = vmatpush.msra.mxu0 %v2928
        %3209 = vmatpush.msra.mxu0 %v2922
        %3210 = vmatpush.msra.mxu0 %v2916
        %3211 = vmatpush.msra.mxu0 %v2910
        %3212 = vmatpush.msra.mxu0 %v2904
        %3213 = vmatpush.msra.mxu0 %v2898
        %3214 = vmatpush.msra.mxu0 %v2892
        %3215 = vmatpush.msra.mxu0 %v2886
        %3216 = vmatpush.msra.mxu0 %v2880
        %3217 = vmatmul.f32.gmra.mxu0 %v2868
        %v3218 = vpop.f32.mrf.mxu0
        %v3219 = vadd.f32 %v3180, %v3218
        %3220 = vmatmul.f32.gmra.mxu0 %v2872
        %v3221 = vpop.f32.mrf.mxu0
        %v3222 = vadd.f32 %v3185, %v3221
        %3223 = vmatmul.f32.gmra.mxu0 %v2876
        %v3224 = vpop.f32.mrf.mxu0
        %v3225 = vadd.f32 %v3190, %v3224
        %3226 = vdwg.mxu0
        %3227 = vmatpush.msra.mxu0 %v3066
        %3228 = vmatpush.msra.mxu0 %v3060
        %3229 = vmatpush.msra.mxu0 %v3054
        %3230 = vmatpush.msra.mxu0 %v3048
        %3231 = vmatpush.msra.mxu0 %v3042
        %3232 = vmatpush.msra.mxu0 %v3036
        %3233 = vmatpush.msra.mxu0 %v3030
        %3234 = vmatpush.msra.mxu0 %v3024
        %3235 = vmatpush.msra.mxu0 %v3018
        %3236 = vmatpush.msra.mxu0 %v3012
        %3237 = vmatpush.msra.mxu0 %v3006
        %3238 = vmatpush.msra.mxu0 %v3000
        %3239 = vmatpush.msra.mxu0 %v2994
        %3240 = vmatpush.msra.mxu0 %v2988
        %3241 = vmatpush.msra.mxu0 %v2982
        %3242 = vmatpush.msra.mxu0 %v2976
        %3243 = vmatmul.f32.gmra.mxu0 %v2869
        %v3244 = vpop.f32.mrf.mxu0
        %v3245 = vadd.f32 %v3219, %v3244
        %3246 = vmatmul.f32.gmra.mxu0 %v2873
        %v3247 = vpop.f32.mrf.mxu0
        %v3248 = vadd.f32 %v3222, %v3247
        %3249 = vmatmul.f32.gmra.mxu0 %v2877
        %v3250 = vpop.f32.mrf.mxu0
        %v3251 = vadd.f32 %v3225, %v3250
        %3252 = vdwg.mxu0
        %3253 = vmatpush.msra.mxu0 %v3162
        %3254 = vmatpush.msra.mxu0 %v3156
        %3255 = vmatpush.msra.mxu0 %v3150
        %3256 = vmatpush.msra.mxu0 %v3144
        %3257 = vmatpush.msra.mxu0 %v3138
        %3258 = vmatpush.msra.mxu0 %v3132
        %3259 = vmatpush.msra.mxu0 %v3126
        %3260 = vmatpush.msra.mxu0 %v3120
        %3261 = vmatpush.msra.mxu0 %v3114
        %3262 = vmatpush.msra.mxu0 %v3108
        %3263 = vmatpush.msra.mxu0 %v3102
        %3264 = vmatpush.msra.mxu0 %v3096
        %3265 = vmatpush.msra.mxu0 %v3090
        %3266 = vmatpush.msra.mxu0 %v3084
        %3267 = vmatpush.msra.mxu0 %v3078
        %3268 = vmatpush.msra.mxu0 %v3072
        %3269 = vmatmul.f32.gmra.mxu0 %v2870
        %v3270 = vpop.f32.mrf.mxu0
        %v3271 = vadd.f32 %v3245, %v3270
        %3272 = vmatmul.f32.gmra.mxu0 %v2874
        %v3273 = vpop.f32.mrf.mxu0
        %v3274 = vadd.f32 %v3248, %v3273
        %3275 = vmatmul.f32.gmra.mxu0 %v2878
        %v3276 = vpop.f32.mrf.mxu0
        %v3277 = vadd.f32 %v3251, %v3276
        %3278 = vdwg.mxu0
        %3279 = vmatpush.msra.mxu0 0.0
        %3280 = vmatpush.msra.mxu0 0.0
        %3281 = vmatpush.msra.mxu0 0.0
        %3282 = vmatpush.msra.mxu0 0.0
        %3283 = vmatpush.msra.mxu0 0.0
        %3284 = vmatpush.msra.mxu0 0.0
        %3285 = vmatpush.msra.mxu0 0.0
        %3286 = vmatpush.msra.mxu0 0.0
        %3287 = vmatpush.msra.mxu0 0.0
        %3288 = vmatpush.msra.mxu0 0.0
        %3289 = vmatpush.msra.mxu0 0.0
        %3290 = vmatpush.msra.mxu0 0.0
        %3291 = vmatpush.msra.mxu0 0.0
        %3292 = vmatpush.msra.mxu0 0.0
        %3293 = vmatpush.msra.mxu0 0.0
        %3294 = vmatpush.msra.mxu0 %v3168
        %3295 = vmatmul.f32.gmra.mxu0 %v3193
        %v3296 = vpop.f32.mrf.mxu0
        %v3297 = vadd.f32 %v3271, %v3296
        %3298 = vmatmul.f32.gmra.mxu0 %v3196
        %v3299 = vpop.f32.mrf.mxu0
        %v3300 = vadd.f32 %v3274, %v3299
        %3301 = vmatmul.f32.gmra.mxu0 %v3199
        %v3302 = vpop.f32.mrf.mxu0
        %v3303 = vadd.f32 %v3277, %v3302
        %3304 = vdwg.mxu0
        %3305 = vmatpush.msra.mxu0 %v2971
        %3306 = vmatpush.msra.mxu0 %v2965
        %3307 = vmatpush.msra.mxu0 %v2959
        %3308 = vmatpush.msra.mxu0 %v2953
        %3309 = vmatpush.msra.mxu0 %v2947
        %3310 = vmatpush.msra.mxu0 %v2941
        %3311 = vmatpush.msra.mxu0 %v2935
        %3312 = vmatpush.msra.mxu0 %v2929
        %3313 = vmatpush.msra.mxu0 %v2923
        %3314 = vmatpush.msra.mxu0 %v2917
        %3315 = vmatpush.msra.mxu0 %v2911
        %3316 = vmatpush.msra.mxu0 %v2905
        %3317 = vmatpush.msra.mxu0 %v2899
        %3318 = vmatpush.msra.mxu0 %v2893
        %3319 = vmatpush.msra.mxu0 %v2887
        %3320 = vmatpush.msra.mxu0 %v2881
        %3321 = vmatmul.f32.gmra.mxu0 %v2868
        %v3322 = vpop.f32.mrf.mxu0
        %v3323 = vadd.f32 %v3180, %v3322
        %3324 = vmatmul.f32.gmra.mxu0 %v2872
        %v3325 = vpop.f32.mrf.mxu0
        %v3326 = vadd.f32 %v3185, %v3325
        %3327 = vmatmul.f32.gmra.mxu0 %v2876
        %v3328 = vpop.f32.mrf.mxu0
        %v3329 = vadd.f32 %v3190, %v3328
        %3330 = vdwg.mxu0
        %3331 = vmatpush.msra.mxu0 %v3067
        %3332 = vmatpush.msra.mxu0 %v3061
        %3333 = vmatpush.msra.mxu0 %v3055
        %3334 = vmatpush.msra.mxu0 %v3049
        %3335 = vmatpush.msra.mxu0 %v3043
        %3336 = vmatpush.msra.mxu0 %v3037
        %3337 = vmatpush.msra.mxu0 %v3031
        %3338 = vmatpush.msra.mxu0 %v3025
        %3339 = vmatpush.msra.mxu0 %v3019
        %3340 = vmatpush.msra.mxu0 %v3013
        %3341 = vmatpush.msra.mxu0 %v3007
        %3342 = vmatpush.msra.mxu0 %v3001
        %3343 = vmatpush.msra.mxu0 %v2995
        %3344 = vmatpush.msra.mxu0 %v2989
        %3345 = vmatpush.msra.mxu0 %v2983
        %3346 = vmatpush.msra.mxu0 %v2977
        %3347 = vmatmul.f32.gmra.mxu0 %v2869
        %v3348 = vpop.f32.mrf.mxu0
        %v3349 = vadd.f32 %v3323, %v3348
        %3350 = vmatmul.f32.gmra.mxu0 %v2873
        %v3351 = vpop.f32.mrf.mxu0
        %v3352 = vadd.f32 %v3326, %v3351
        %3353 = vmatmul.f32.gmra.mxu0 %v2877
        %v3354 = vpop.f32.mrf.mxu0
        %v3355 = vadd.f32 %v3329, %v3354
        %3356 = vdwg.mxu0
        %3357 = vmatpush.msra.mxu0 %v3163
        %3358 = vmatpush.msra.mxu0 %v3157
        %3359 = vmatpush.msra.mxu0 %v3151
        %3360 = vmatpush.msra.mxu0 %v3145
        %3361 = vmatpush.msra.mxu0 %v3139
        %3362 = vmatpush.msra.mxu0 %v3133
        %3363 = vmatpush.msra.mxu0 %v3127
        %3364 = vmatpush.msra.mxu0 %v3121
        %3365 = vmatpush.msra.mxu0 %v3115
        %3366 = vmatpush.msra.mxu0 %v3109
        %3367 = vmatpush.msra.mxu0 %v3103
        %3368 = vmatpush.msra.mxu0 %v3097
        %3369 = vmatpush.msra.mxu0 %v3091
        %3370 = vmatpush.msra.mxu0 %v3085
        %3371 = vmatpush.msra.mxu0 %v3079
        %3372 = vmatpush.msra.mxu0 %v3073
        %3373 = vmatmul.f32.gmra.mxu0 %v2870
        %v3374 = vpop.f32.mrf.mxu0
        %v3375 = vadd.f32 %v3349, %v3374
        %3376 = vmatmul.f32.gmra.mxu0 %v2874
        %v3377 = vpop.f32.mrf.mxu0
        %v3378 = vadd.f32 %v3352, %v3377
        %3379 = vmatmul.f32.gmra.mxu0 %v2878
        %v3380 = vpop.f32.mrf.mxu0
        %v3381 = vadd.f32 %v3355, %v3380
        %3382 = vdwg.mxu0
        %3383 = vmatpush.msra.mxu0 0.0
        %3384 = vmatpush.msra.mxu0 0.0
        %3385 = vmatpush.msra.mxu0 0.0
        %3386 = vmatpush.msra.mxu0 0.0
        %3387 = vmatpush.msra.mxu0 0.0
        %3388 = vmatpush.msra.mxu0 0.0
        %3389 = vmatpush.msra.mxu0 0.0
        %3390 = vmatpush.msra.mxu0 0.0
        %3391 = vmatpush.msra.mxu0 0.0
        %3392 = vmatpush.msra.mxu0 0.0
        %3393 = vmatpush.msra.mxu0 0.0
        %3394 = vmatpush.msra.mxu0 0.0
        %3395 = vmatpush.msra.mxu0 0.0
        %3396 = vmatpush.msra.mxu0 0.0
        %3397 = vmatpush.msra.mxu0 0.0
        %3398 = vmatpush.msra.mxu0 %v3169
        %3399 = vmatmul.f32.gmra.mxu0 %v3193
        %v3400 = vpop.f32.mrf.mxu0
        %v3401 = vadd.f32 %v3375, %v3400
        %3402 = vmatmul.f32.gmra.mxu0 %v3196
        %v3403 = vpop.f32.mrf.mxu0
        %v3404 = vadd.f32 %v3378, %v3403
        %3405 = vmatmul.f32.gmra.mxu0 %v3199
        %v3406 = vpop.f32.mrf.mxu0
        %v3407 = vadd.f32 %v3381, %v3406
        %3408 = vdwg.mxu0
        %3409 = vmatpush.msra.mxu0 %v2972
        %3410 = vmatpush.msra.mxu0 %v2966
        %3411 = vmatpush.msra.mxu0 %v2960
        %3412 = vmatpush.msra.mxu0 %v2954
        %3413 = vmatpush.msra.mxu0 %v2948
        %3414 = vmatpush.msra.mxu0 %v2942
        %3415 = vmatpush.msra.mxu0 %v2936
        %3416 = vmatpush.msra.mxu0 %v2930
        %3417 = vmatpush.msra.mxu0 %v2924
        %3418 = vmatpush.msra.mxu0 %v2918
        %3419 = vmatpush.msra.mxu0 %v2912
        %3420 = vmatpush.msra.mxu0 %v2906
        %3421 = vmatpush.msra.mxu0 %v2900
        %3422 = vmatpush.msra.mxu0 %v2894
        %3423 = vmatpush.msra.mxu0 %v2888
        %3424 = vmatpush.msra.mxu0 %v2882
        %3425 = vmatmul.f32.gmra.mxu0 %v2868
        %v3426 = vpop.f32.mrf.mxu0
        %v3427 = vadd.f32 %v3180, %v3426
        %3428 = vmatmul.f32.gmra.mxu0 %v2872
        %v3429 = vpop.f32.mrf.mxu0
        %v3430 = vadd.f32 %v3185, %v3429
        %3431 = vmatmul.f32.gmra.mxu0 %v2876
        %v3432 = vpop.f32.mrf.mxu0
        %v3433 = vadd.f32 %v3190, %v3432
        %3434 = vdwg.mxu0
        %3435 = vmatpush.msra.mxu0 %v3068
        %3436 = vmatpush.msra.mxu0 %v3062
        %3437 = vmatpush.msra.mxu0 %v3056
        %3438 = vmatpush.msra.mxu0 %v3050
        %3439 = vmatpush.msra.mxu0 %v3044
        %3440 = vmatpush.msra.mxu0 %v3038
        %3441 = vmatpush.msra.mxu0 %v3032
        %3442 = vmatpush.msra.mxu0 %v3026
        %3443 = vmatpush.msra.mxu0 %v3020
        %3444 = vmatpush.msra.mxu0 %v3014
        %3445 = vmatpush.msra.mxu0 %v3008
        %3446 = vmatpush.msra.mxu0 %v3002
        %3447 = vmatpush.msra.mxu0 %v2996
        %3448 = vmatpush.msra.mxu0 %v2990
        %3449 = vmatpush.msra.mxu0 %v2984
        %3450 = vmatpush.msra.mxu0 %v2978
        %3451 = vmatmul.f32.gmra.mxu0 %v2869
        %v3452 = vpop.f32.mrf.mxu0
        %v3453 = vadd.f32 %v3427, %v3452
        %3454 = vmatmul.f32.gmra.mxu0 %v2873
        %v3455 = vpop.f32.mrf.mxu0
        %v3456 = vadd.f32 %v3430, %v3455
        %3457 = vmatmul.f32.gmra.mxu0 %v2877
        %v3458 = vpop.f32.mrf.mxu0
        %v3459 = vadd.f32 %v3433, %v3458
        %3460 = vdwg.mxu0
        %3461 = vmatpush.msra.mxu0 %v3164
        %3462 = vmatpush.msra.mxu0 %v3158
        %3463 = vmatpush.msra.mxu0 %v3152
        %3464 = vmatpush.msra.mxu0 %v3146
        %3465 = vmatpush.msra.mxu0 %v3140
        %3466 = vmatpush.msra.mxu0 %v3134
        %3467 = vmatpush.msra.mxu0 %v3128
        %3468 = vmatpush.msra.mxu0 %v3122
        %3469 = vmatpush.msra.mxu0 %v3116
        %3470 = vmatpush.msra.mxu0 %v3110
        %3471 = vmatpush.msra.mxu0 %v3104
        %3472 = vmatpush.msra.mxu0 %v3098
        %3473 = vmatpush.msra.mxu0 %v3092
        %3474 = vmatpush.msra.mxu0 %v3086
        %3475 = vmatpush.msra.mxu0 %v3080
        %3476 = vmatpush.msra.mxu0 %v3074
        %3477 = vmatmul.f32.gmra.mxu0 %v2870
        %v3478 = vpop.f32.mrf.mxu0
        %v3479 = vadd.f32 %v3453, %v3478
        %3480 = vmatmul.f32.gmra.mxu0 %v2874
        %v3481 = vpop.f32.mrf.mxu0
        %v3482 = vadd.f32 %v3456, %v3481
        %3483 = vmatmul.f32.gmra.mxu0 %v2878
        %v3484 = vpop.f32.mrf.mxu0
        %v3485 = vadd.f32 %v3459, %v3484
        %3486 = vdwg.mxu0
        %3487 = vmatpush.msra.mxu0 0.0
        %3488 = vmatpush.msra.mxu0 0.0
        %3489 = vmatpush.msra.mxu0 0.0
        %3490 = vmatpush.msra.mxu0 0.0
        %3491 = vmatpush.msra.mxu0 0.0
        %3492 = vmatpush.msra.mxu0 0.0
        %3493 = vmatpush.msra.mxu0 0.0
        %3494 = vmatpush.msra.mxu0 0.0
        %3495 = vmatpush.msra.mxu0 0.0
        %3496 = vmatpush.msra.mxu0 0.0
        %3497 = vmatpush.msra.mxu0 0.0
        %3498 = vmatpush.msra.mxu0 0.0
        %3499 = vmatpush.msra.mxu0 0.0
        %3500 = vmatpush.msra.mxu0 0.0
        %3501 = vmatpush.msra.mxu0 0.0
        %3502 = vmatpush.msra.mxu0 %v3170
        %3503 = vmatmul.f32.gmra.mxu0 %v3193
        %v3504 = vpop.f32.mrf.mxu0
        %v3505 = vadd.f32 %v3479, %v3504
        %3506 = vmatmul.f32.gmra.mxu0 %v3196
        %v3507 = vpop.f32.mrf.mxu0
        %v3508 = vadd.f32 %v3482, %v3507
        %3509 = vmatmul.f32.gmra.mxu0 %v3199
        %v3510 = vpop.f32.mrf.mxu0
        %v3511 = vadd.f32 %v3485, %v3510
        %3512 = vdwg.mxu0
        %3513 = vmatpush.msra.mxu0 %v2973
        %3514 = vmatpush.msra.mxu0 %v2967
        %3515 = vmatpush.msra.mxu0 %v2961
        %3516 = vmatpush.msra.mxu0 %v2955
        %3517 = vmatpush.msra.mxu0 %v2949
        %3518 = vmatpush.msra.mxu0 %v2943
        %3519 = vmatpush.msra.mxu0 %v2937
        %3520 = vmatpush.msra.mxu0 %v2931
        %3521 = vmatpush.msra.mxu0 %v2925
        %3522 = vmatpush.msra.mxu0 %v2919
        %3523 = vmatpush.msra.mxu0 %v2913
        %3524 = vmatpush.msra.mxu0 %v2907
        %3525 = vmatpush.msra.mxu0 %v2901
        %3526 = vmatpush.msra.mxu0 %v2895
        %3527 = vmatpush.msra.mxu0 %v2889
        %3528 = vmatpush.msra.mxu0 %v2883
        %3529 = vmatmul.f32.gmra.mxu0 %v2868
        %v3530 = vpop.f32.mrf.mxu0
        %v3531 = vadd.f32 %v3180, %v3530
        %3532 = vmatmul.f32.gmra.mxu0 %v2872
        %v3533 = vpop.f32.mrf.mxu0
        %v3534 = vadd.f32 %v3185, %v3533
        %3535 = vmatmul.f32.gmra.mxu0 %v2876
        %v3536 = vpop.f32.mrf.mxu0
        %v3537 = vadd.f32 %v3190, %v3536
        %3538 = vdwg.mxu0
        %3539 = vmatpush.msra.mxu0 %v3069
        %3540 = vmatpush.msra.mxu0 %v3063
        %3541 = vmatpush.msra.mxu0 %v3057
        %3542 = vmatpush.msra.mxu0 %v3051
        %3543 = vmatpush.msra.mxu0 %v3045
        %3544 = vmatpush.msra.mxu0 %v3039
        %3545 = vmatpush.msra.mxu0 %v3033
        %3546 = vmatpush.msra.mxu0 %v3027
        %3547 = vmatpush.msra.mxu0 %v3021
        %3548 = vmatpush.msra.mxu0 %v3015
        %3549 = vmatpush.msra.mxu0 %v3009
        %3550 = vmatpush.msra.mxu0 %v3003
        %3551 = vmatpush.msra.mxu0 %v2997
        %3552 = vmatpush.msra.mxu0 %v2991
        %3553 = vmatpush.msra.mxu0 %v2985
        %3554 = vmatpush.msra.mxu0 %v2979
        %3555 = vmatmul.f32.gmra.mxu0 %v2869
        %v3556 = vpop.f32.mrf.mxu0
        %v3557 = vadd.f32 %v3531, %v3556
        %3558 = vmatmul.f32.gmra.mxu0 %v2873
        %v3559 = vpop.f32.mrf.mxu0
        %v3560 = vadd.f32 %v3534, %v3559
        %3561 = vmatmul.f32.gmra.mxu0 %v2877
        %v3562 = vpop.f32.mrf.mxu0
        %v3563 = vadd.f32 %v3537, %v3562
        %3564 = vdwg.mxu0
        %3565 = vmatpush.msra.mxu0 %v3165
        %3566 = vmatpush.msra.mxu0 %v3159
        %3567 = vmatpush.msra.mxu0 %v3153
        %3568 = vmatpush.msra.mxu0 %v3147
        %3569 = vmatpush.msra.mxu0 %v3141
        %3570 = vmatpush.msra.mxu0 %v3135
        %3571 = vmatpush.msra.mxu0 %v3129
        %3572 = vmatpush.msra.mxu0 %v3123
        %3573 = vmatpush.msra.mxu0 %v3117
        %3574 = vmatpush.msra.mxu0 %v3111
        %3575 = vmatpush.msra.mxu0 %v3105
        %3576 = vmatpush.msra.mxu0 %v3099
        %3577 = vmatpush.msra.mxu0 %v3093
        %3578 = vmatpush.msra.mxu0 %v3087
        %3579 = vmatpush.msra.mxu0 %v3081
        %3580 = vmatpush.msra.mxu0 %v3075
        %3581 = vmatmul.f32.gmra.mxu0 %v2870
        %v3582 = vpop.f32.mrf.mxu0
        %v3583 = vadd.f32 %v3557, %v3582
        %3584 = vmatmul.f32.gmra.mxu0 %v2874
        %v3585 = vpop.f32.mrf.mxu0
        %v3586 = vadd.f32 %v3560, %v3585
        %3587 = vmatmul.f32.gmra.mxu0 %v2878
        %v3588 = vpop.f32.mrf.mxu0
        %v3589 = vadd.f32 %v3563, %v3588
        %3590 = vdwg.mxu0
        %3591 = vmatpush.msra.mxu0 0.0
        %3592 = vmatpush.msra.mxu0 0.0
        %3593 = vmatpush.msra.mxu0 0.0
        %3594 = vmatpush.msra.mxu0 0.0
        %3595 = vmatpush.msra.mxu0 0.0
        %3596 = vmatpush.msra.mxu0 0.0
        %3597 = vmatpush.msra.mxu0 0.0
        %3598 = vmatpush.msra.mxu0 0.0
        %3599 = vmatpush.msra.mxu0 0.0
        %3600 = vmatpush.msra.mxu0 0.0
        %3601 = vmatpush.msra.mxu0 0.0
        %3602 = vmatpush.msra.mxu0 0.0
        %3603 = vmatpush.msra.mxu0 0.0
        %3604 = vmatpush.msra.mxu0 0.0
        %3605 = vmatpush.msra.mxu0 0.0
        %3606 = vmatpush.msra.mxu0 %v3171
        %3607 = vmatmul.f32.gmra.mxu0 %v3193
        %v3608 = vpop.f32.mrf.mxu0
        %v3609 = vadd.f32 %v3583, %v3608
        %3610 = vmatmul.f32.gmra.mxu0 %v3196
        %v3611 = vpop.f32.mrf.mxu0
        %v3612 = vadd.f32 %v3586, %v3611
        %3613 = vmatmul.f32.gmra.mxu0 %v3199
        %v3614 = vpop.f32.mrf.mxu0
        %v3615 = vadd.f32 %v3589, %v3614
        %3616 = vdwg.mxu0
        %3617 = vmatpush.msra.mxu0 %v2974
        %3618 = vmatpush.msra.mxu0 %v2968
        %3619 = vmatpush.msra.mxu0 %v2962
        %3620 = vmatpush.msra.mxu0 %v2956
        %3621 = vmatpush.msra.mxu0 %v2950
        %3622 = vmatpush.msra.mxu0 %v2944
        %3623 = vmatpush.msra.mxu0 %v2938
        %3624 = vmatpush.msra.mxu0 %v2932
        %3625 = vmatpush.msra.mxu0 %v2926
        %3626 = vmatpush.msra.mxu0 %v2920
        %3627 = vmatpush.msra.mxu0 %v2914
        %3628 = vmatpush.msra.mxu0 %v2908
        %3629 = vmatpush.msra.mxu0 %v2902
        %3630 = vmatpush.msra.mxu0 %v2896
        %3631 = vmatpush.msra.mxu0 %v2890
        %3632 = vmatpush.msra.mxu0 %v2884
        %3633 = vmatmul.f32.gmra.mxu0 %v2868
        %v3634 = vpop.f32.mrf.mxu0
        %v3635 = vadd.f32 %v3180, %v3634
        %3636 = vmatmul.f32.gmra.mxu0 %v2872
        %v3637 = vpop.f32.mrf.mxu0
        %v3638 = vadd.f32 %v3185, %v3637
        %3639 = vmatmul.f32.gmra.mxu0 %v2876
        %v3640 = vpop.f32.mrf.mxu0
        %v3641 = vadd.f32 %v3190, %v3640
        %3642 = vdwg.mxu0
        %3643 = vmatpush.msra.mxu0 %v3070
        %3644 = vmatpush.msra.mxu0 %v3064
        %3645 = vmatpush.msra.mxu0 %v3058
        %3646 = vmatpush.msra.mxu0 %v3052
        %3647 = vmatpush.msra.mxu0 %v3046
        %3648 = vmatpush.msra.mxu0 %v3040
        %3649 = vmatpush.msra.mxu0 %v3034
        %3650 = vmatpush.msra.mxu0 %v3028
        %3651 = vmatpush.msra.mxu0 %v3022
        %3652 = vmatpush.msra.mxu0 %v3016
        %3653 = vmatpush.msra.mxu0 %v3010
        %3654 = vmatpush.msra.mxu0 %v3004
        %3655 = vmatpush.msra.mxu0 %v2998
        %3656 = vmatpush.msra.mxu0 %v2992
        %3657 = vmatpush.msra.mxu0 %v2986
        %3658 = vmatpush.msra.mxu0 %v2980
        %3659 = vmatmul.f32.gmra.mxu0 %v2869
        %v3660 = vpop.f32.mrf.mxu0
        %v3661 = vadd.f32 %v3635, %v3660
        %3662 = vmatmul.f32.gmra.mxu0 %v2873
        %v3663 = vpop.f32.mrf.mxu0
        %v3664 = vadd.f32 %v3638, %v3663
        %3665 = vmatmul.f32.gmra.mxu0 %v2877
        %v3666 = vpop.f32.mrf.mxu0
        %v3667 = vadd.f32 %v3641, %v3666
        %3668 = vdwg.mxu0
        %3669 = vmatpush.msra.mxu0 %v3166
        %3670 = vmatpush.msra.mxu0 %v3160
        %3671 = vmatpush.msra.mxu0 %v3154
        %3672 = vmatpush.msra.mxu0 %v3148
        %3673 = vmatpush.msra.mxu0 %v3142
        %3674 = vmatpush.msra.mxu0 %v3136
        %3675 = vmatpush.msra.mxu0 %v3130
        %3676 = vmatpush.msra.mxu0 %v3124
        %3677 = vmatpush.msra.mxu0 %v3118
        %3678 = vmatpush.msra.mxu0 %v3112
        %3679 = vmatpush.msra.mxu0 %v3106
        %3680 = vmatpush.msra.mxu0 %v3100
        %3681 = vmatpush.msra.mxu0 %v3094
        %3682 = vmatpush.msra.mxu0 %v3088
        %3683 = vmatpush.msra.mxu0 %v3082
        %3684 = vmatpush.msra.mxu0 %v3076
        %3685 = vmatmul.f32.gmra.mxu0 %v2870
        %v3686 = vpop.f32.mrf.mxu0
        %v3687 = vadd.f32 %v3661, %v3686
        %3688 = vmatmul.f32.gmra.mxu0 %v2874
        %v3689 = vpop.f32.mrf.mxu0
        %v3690 = vadd.f32 %v3664, %v3689
        %3691 = vmatmul.f32.gmra.mxu0 %v2878
        %v3692 = vpop.f32.mrf.mxu0
        %v3693 = vadd.f32 %v3667, %v3692
        %3694 = vdwg.mxu0
        %3695 = vmatpush.msra.mxu0 0.0
        %3696 = vmatpush.msra.mxu0 0.0
        %3697 = vmatpush.msra.mxu0 0.0
        %3698 = vmatpush.msra.mxu0 0.0
        %3699 = vmatpush.msra.mxu0 0.0
        %3700 = vmatpush.msra.mxu0 0.0
        %3701 = vmatpush.msra.mxu0 0.0
        %3702 = vmatpush.msra.mxu0 0.0
        %3703 = vmatpush.msra.mxu0 0.0
        %3704 = vmatpush.msra.mxu0 0.0
        %3705 = vmatpush.msra.mxu0 0.0
        %3706 = vmatpush.msra.mxu0 0.0
        %3707 = vmatpush.msra.mxu0 0.0
        %3708 = vmatpush.msra.mxu0 0.0
        %3709 = vmatpush.msra.mxu0 0.0
        %3710 = vmatpush.msra.mxu0 %v3172
        %3711 = vmatmul.f32.gmra.mxu0 %v3193
        %v3712 = vpop.f32.mrf.mxu0
        %v3713 = vadd.f32 %v3687, %v3712
        %3714 = vmatmul.f32.gmra.mxu0 %v3196
        %v3715 = vpop.f32.mrf.mxu0
        %v3716 = vadd.f32 %v3690, %v3715
        %3717 = vmatmul.f32.gmra.mxu0 %v3199
        %v3718 = vpop.f32.mrf.mxu0
        %v3719 = vadd.f32 %v3693, %v3718
        %3720 = vdwg.mxu0
        %3721 = vmatpush.msra.mxu0 %v2975
        %3722 = vmatpush.msra.mxu0 %v2969
        %3723 = vmatpush.msra.mxu0 %v2963
        %3724 = vmatpush.msra.mxu0 %v2957
        %3725 = vmatpush.msra.mxu0 %v2951
        %3726 = vmatpush.msra.mxu0 %v2945
        %3727 = vmatpush.msra.mxu0 %v2939
        %3728 = vmatpush.msra.mxu0 %v2933
        %3729 = vmatpush.msra.mxu0 %v2927
        %3730 = vmatpush.msra.mxu0 %v2921
        %3731 = vmatpush.msra.mxu0 %v2915
        %3732 = vmatpush.msra.mxu0 %v2909
        %3733 = vmatpush.msra.mxu0 %v2903
        %3734 = vmatpush.msra.mxu0 %v2897
        %3735 = vmatpush.msra.mxu0 %v2891
        %3736 = vmatpush.msra.mxu0 %v2885
        %3737 = vmatmul.f32.gmra.mxu0 %v2868
        %v3738 = vpop.f32.mrf.mxu0
        %v3739 = vadd.f32 %v3180, %v3738
        %3740 = vmatmul.f32.gmra.mxu0 %v2872
        %v3741 = vpop.f32.mrf.mxu0
        %v3742 = vadd.f32 %v3185, %v3741
        %3743 = vmatmul.f32.gmra.mxu0 %v2876
        %v3744 = vpop.f32.mrf.mxu0
        %v3745 = vadd.f32 %v3190, %v3744
        %3746 = vdwg.mxu0
        %3747 = vmatpush.msra.mxu0 %v3071
        %3748 = vmatpush.msra.mxu0 %v3065
        %3749 = vmatpush.msra.mxu0 %v3059
        %3750 = vmatpush.msra.mxu0 %v3053
        %3751 = vmatpush.msra.mxu0 %v3047
        %3752 = vmatpush.msra.mxu0 %v3041
        %3753 = vmatpush.msra.mxu0 %v3035
        %3754 = vmatpush.msra.mxu0 %v3029
        %3755 = vmatpush.msra.mxu0 %v3023
        %3756 = vmatpush.msra.mxu0 %v3017
        %3757 = vmatpush.msra.mxu0 %v3011
        %3758 = vmatpush.msra.mxu0 %v3005
        %3759 = vmatpush.msra.mxu0 %v2999
        %3760 = vmatpush.msra.mxu0 %v2993
        %3761 = vmatpush.msra.mxu0 %v2987
        %3762 = vmatpush.msra.mxu0 %v2981
        %3763 = vmatmul.f32.gmra.mxu0 %v2869
        %v3764 = vpop.f32.mrf.mxu0
        %v3765 = vadd.f32 %v3739, %v3764
        %3766 = vmatmul.f32.gmra.mxu0 %v2873
        %v3767 = vpop.f32.mrf.mxu0
        %v3768 = vadd.f32 %v3742, %v3767
        %3769 = vmatmul.f32.gmra.mxu0 %v2877
        %v3770 = vpop.f32.mrf.mxu0
        %v3771 = vadd.f32 %v3745, %v3770
        %3772 = vdwg.mxu0
        %3773 = vmatpush.msra.mxu0 %v3167
        %3774 = vmatpush.msra.mxu0 %v3161
        %3775 = vmatpush.msra.mxu0 %v3155
        %3776 = vmatpush.msra.mxu0 %v3149
        %3777 = vmatpush.msra.mxu0 %v3143
        %3778 = vmatpush.msra.mxu0 %v3137
        %3779 = vmatpush.msra.mxu0 %v3131
        %3780 = vmatpush.msra.mxu0 %v3125
        %3781 = vmatpush.msra.mxu0 %v3119
        %3782 = vmatpush.msra.mxu0 %v3113
        %3783 = vmatpush.msra.mxu0 %v3107
        %3784 = vmatpush.msra.mxu0 %v3101
        %3785 = vmatpush.msra.mxu0 %v3095
        %3786 = vmatpush.msra.mxu0 %v3089
        %3787 = vmatpush.msra.mxu0 %v3083
        %3788 = vmatpush.msra.mxu0 %v3077
        %3789 = vmatmul.f32.gmra.mxu0 %v2870
        %v3790 = vpop.f32.mrf.mxu0
        %v3791 = vadd.f32 %v3765, %v3790
        %3792 = vmatmul.f32.gmra.mxu0 %v2874
        %v3793 = vpop.f32.mrf.mxu0
        %v3794 = vadd.f32 %v3768, %v3793
        %3795 = vmatmul.f32.gmra.mxu0 %v2878
        %v3796 = vpop.f32.mrf.mxu0
        %v3797 = vadd.f32 %v3771, %v3796
        %3798 = vdwg.mxu0
        %3799 = vmatpush.msra.mxu0 0.0
        %3800 = vmatpush.msra.mxu0 0.0
        %3801 = vmatpush.msra.mxu0 0.0
        %3802 = vmatpush.msra.mxu0 0.0
        %3803 = vmatpush.msra.mxu0 0.0
        %3804 = vmatpush.msra.mxu0 0.0
        %3805 = vmatpush.msra.mxu0 0.0
        %3806 = vmatpush.msra.mxu0 0.0
        %3807 = vmatpush.msra.mxu0 0.0
        %3808 = vmatpush.msra.mxu0 0.0
        %3809 = vmatpush.msra.mxu0 0.0
        %3810 = vmatpush.msra.mxu0 0.0
        %3811 = vmatpush.msra.mxu0 0.0
        %3812 = vmatpush.msra.mxu0 0.0
        %3813 = vmatpush.msra.mxu0 0.0
        %3814 = vmatpush.msra.mxu0 %v3173
        %3815 = vmatmul.f32.gmra.mxu0 %v3193
        %v3816 = vpop.f32.mrf.mxu0
        %v3817 = vadd.f32 %v3791, %v3816
        %3818 = vmatmul.f32.gmra.mxu0 %v3196
        %v3819 = vpop.f32.mrf.mxu0
        %v3820 = vadd.f32 %v3794, %v3819
        %3821 = vmatmul.f32.gmra.mxu0 %v3199
        %v3822 = vpop.f32.mrf.mxu0
        %v3823 = vadd.f32 %v3797, %v3822
        %3824 = vdwg.mxu0
        %v3825 = vmax.f32 %v3297, 0.0
        %v3826 = vmax.f32 %v3401, 0.0
        %v3827 = vmax.f32 %v3505, 0.0
        %v3828 = vmax.f32 %v3609, 0.0
        %v3829 = vmax.f32 %v3713, 0.0
        %v3830 = vmax.f32 %v3817, 0.0
        %v3831 = vmax.f32 %v3300, 0.0
        %v3832 = vmax.f32 %v3404, 0.0
        %v3833 = vmax.f32 %v3508, 0.0
        %v3834 = vmax.f32 %v3612, 0.0
        %v3835 = vmax.f32 %v3716, 0.0
        %v3836 = vmax.f32 %v3820, 0.0
        %v3837 = vadd.f32 %v3825, %v3831
        %v3838 = vadd.f32 %v3826, %v3832
        %v3839 = vadd.f32 %v3827, %v3833
        %v3840 = vadd.f32 %v3828, %v3834
        %v3841 = vadd.f32 %v3829, %v3835
        %v3842 = vadd.f32 %v3830, %v3836
        %v3843 = vmax.f32 %v3303, 0.0
        %v3844 = vmax.f32 %v3407, 0.0
        %v3845 = vmax.f32 %v3511, 0.0
        %v3846 = vmax.f32 %v3615, 0.0
        %v3847 = vmax.f32 %v3719, 0.0
        %v3848 = vmax.f32 %v3823, 0.0
        %v3849 = vadd.f32 %v3837, %v3843
        %v3850 = vadd.f32 %v3838, %v3844
        %v3851 = vadd.f32 %v3839, %v3845
        %v3852 = vadd.f32 %v3840, %v3846
        %v3853 = vadd.f32 %v3841, %v3847
        %v3854 = vadd.f32 %v3842, %v3848
        %v3856 = vperm.slane %v407, 0
        %v3857 = vperm.slane %v407, 1
        %v3858 = vperm.slane %v407, 2
        %v3859 = vperm.slane %v407, 3
        %v3860 = vperm.slane %v407, 4
        %v3861 = vperm.slane %v407, 5
        %v3868 = vmul.f32 %v3849, %v3856
        %v3869 = vmul.f32 %v3850, %v3857
        %v3870 = vmul.f32 %v3851, %v3858
        %v3871 = vmul.f32 %v3852, %v3859
        %v3872 = vmul.f32 %v3853, %v3860
        %v3873 = vmul.f32 %v3854, %v3861
        %v3874 = vadd.f32 %v3868, %v3869
        %v3875 = vadd.f32 %v3874, %v3870
        %3876 = vadd.xlane.f32.xlu0 %v3875
        %v3877 = vpop.xlane.xlu0 %3876
        %v3878 = vmul.f32 %v3877, 0.00390625
        %v3879 = vmax.f32 %v3868, %v3869
        %v3880 = vmax.f32 %v3879, %v3870
        %3881 = vmax.xlane.f32.xlu0 %v3880
        %v3882 = vpop.xlane.xlu0 %3881
        %v3883 = vadd.f32 %v3871, %v3872
        %v3884 = vadd.f32 %v3883, %v3873
        %3885 = vadd.xlane.f32.xlu0 %v3884
        %v3886 = vpop.xlane.xlu0 %3885
        %v3887 = vmul.f32 %v3886, 0.00390625
        %v3888 = vmax.f32 %v3871, %v3872
        %v3889 = vmax.f32 %v3888, %v3873
        %3890 = vmax.xlane.f32.xlu0 %v3889
        %v3891 = vpop.xlane.xlu0 %3890
        %v3892 = vld [vmem:[%s6] sm:$0xff]
        %v3893 = vld [vmem:[%s6 + $0x8] sm:$0xff]
        %v3894 = vld [vmem:[%s7] sm:$0xff]
        %v3895 = vld [vmem:[%s7 + $0x8] sm:$0xff]
        %v3897 = vsel %vm1813, %v3892, 0
        %v3900 = vsel %vm1813, %v3893, 0
        %3902 = vmatpush.msra.mxu0 0.0
        %3903 = vmatpush.msra.mxu0 0.0
        %3904 = vmatpush.msra.mxu0 0.0
        %3905 = vmatpush.msra.mxu0 0.0
        %3906 = vmatpush.msra.mxu0 0.0
        %3907 = vmatpush.msra.mxu0 0.0
        %3908 = vmatpush.msra.mxu0 0.0
        %3909 = vmatpush.msra.mxu0 0.0
        %3910 = vmatpush.msra.mxu0 0.0
        %3911 = vmatpush.msra.mxu0 0.0
        %3912 = vmatpush.msra.mxu0 0.0
        %3913 = vmatpush.msra.mxu0 0.0
        %3914 = vmatpush.msra.mxu0 %v3891
        %3915 = vmatpush.msra.mxu0 %v3887
        %3916 = vmatpush.msra.mxu0 %v3882
        %3917 = vmatpush.msra.mxu0 %v3878
        %3918 = vmatmul.f32.gmra.mxu0 %v3897
        %v3919 = vpop.f32.mrf.mxu0
        %v3920 = vadd.f32 %v3894, %v3919
        %3921 = vmatmul.f32.gmra.mxu0 %v3900
        %v3922 = vpop.f32.mrf.mxu0
        %v3923 = vadd.f32 %v3895, %v3922
        %3924 = vdwg.mxu0
        %v3925 = vmax.f32 %v3920, %v3923
        %v3926 = vsub.f32 %v3920, %v3925
        %v3927 = vmul.f32 %v3926, 1.442695
        %v3928 = vpow.pop %v3927
        %v3929 = vsub.f32 %v3923, %v3925
        %v3930 = vmul.f32 %v3929, 1.442695
        %v3931 = vpow.pop %v3930
        %v3932 = vadd.f32 %v3928, %v3931
        %v3933 = vrcp.pop %v3932
        %v3934 = vmul.f32 %v3928, %v3933
        %v3935 = vmul.f32 %v3931, %v3933
        %v3936 = vrot.slane %v3868, 4
        %v3937 = vadd.f32 %v3868, %v3936
        %v3938 = vrot.slane %v3937, 2
        %v3939 = vadd.f32 %v3937, %v3938
        %v3940 = vrot.slane %v3939, 1
        %v3941 = vadd.f32 %v3939, %v3940
        %v3942 = vrot.slane %v3869, 4
        %v3943 = vadd.f32 %v3869, %v3942
        %v3944 = vrot.slane %v3943, 2
        %v3945 = vadd.f32 %v3943, %v3944
        %v3946 = vrot.slane %v3945, 1
        %v3947 = vadd.f32 %v3945, %v3946
        %v3948 = vrot.slane %v3870, 4
        %v3949 = vadd.f32 %v3870, %v3948
        %v3950 = vrot.slane %v3949, 2
        %v3951 = vadd.f32 %v3949, %v3950
        %v3952 = vrot.slane %v3951, 1
        %v3953 = vadd.f32 %v3951, %v3952
        %v3954 = vrot.slane %v3871, 4
        %v3955 = vadd.f32 %v3871, %v3954
        %v3956 = vrot.slane %v3955, 2
        %v3957 = vadd.f32 %v3955, %v3956
        %v3958 = vrot.slane %v3957, 1
        %v3959 = vadd.f32 %v3957, %v3958
        %v3960 = vrot.slane %v3872, 4
        %v3961 = vadd.f32 %v3872, %v3960
        %v3962 = vrot.slane %v3961, 2
        %v3963 = vadd.f32 %v3961, %v3962
        %v3964 = vrot.slane %v3963, 1
        %v3965 = vadd.f32 %v3963, %v3964
        %v3966 = vrot.slane %v3873, 4
        %v3967 = vadd.f32 %v3873, %v3966
        %v3968 = vrot.slane %v3967, 2
        %v3969 = vadd.f32 %v3967, %v3968
        %v3970 = vrot.slane %v3969, 1
        %v3971 = vadd.f32 %v3969, %v3970
        %v3972 = vrcp.pop 8.0
        %v3973 = vmul.f32 8.0, %v3972
        %v3974 = vsub.f32 1.0, %v3973
        %v3975 = vmul.f32 %v3972, %v3974
        %v3976 = vadd.f32 %v3972, %v3975
        %vm3977 = vweird.f32 %v3972
        %v3978 = vsel %vm3977, %v3972, %v3976
        %v3979 = vmul.f32 %v3941, %v3978
        %v3980 = vmul.f32 %v3947, %v3978
        %v3981 = vmul.f32 %v3953, %v3978
        %v3982 = vmul.f32 %v3959, %v3978
        %v3983 = vmul.f32 %v3965, %v3978
        %v3984 = vmul.f32 %v3971, %v3978
        %v3985 = vrot.slane %v3868, 4
        %v3986 = vmax.f32 %v3868, %v3985
        %v3987 = vrot.slane %v3986, 2
        %v3988 = vmax.f32 %v3986, %v3987
        %v3989 = vrot.slane %v3988, 1
        %v3990 = vmax.f32 %v3988, %v3989
        %v3991 = vrot.slane %v3869, 4
        %v3992 = vmax.f32 %v3869, %v3991
        %v3993 = vrot.slane %v3992, 2
        %v3994 = vmax.f32 %v3992, %v3993
        %v3995 = vrot.slane %v3994, 1
        %v3996 = vmax.f32 %v3994, %v3995
        %v3997 = vrot.slane %v3870, 4
        %v3998 = vmax.f32 %v3870, %v3997
        %v3999 = vrot.slane %v3998, 2
        %v4000 = vmax.f32 %v3998, %v3999
        %v4001 = vrot.slane %v4000, 1
        %v4002 = vmax.f32 %v4000, %v4001
        %v4003 = vrot.slane %v3871, 4
        %v4004 = vmax.f32 %v3871, %v4003
        %v4005 = vrot.slane %v4004, 2
        %v4006 = vmax.f32 %v4004, %v4005
        %v4007 = vrot.slane %v4006, 1
        %v4008 = vmax.f32 %v4006, %v4007
        %v4009 = vrot.slane %v3872, 4
        %v4010 = vmax.f32 %v3872, %v4009
        %v4011 = vrot.slane %v4010, 2
        %v4012 = vmax.f32 %v4010, %v4011
        %v4013 = vrot.slane %v4012, 1
        %v4014 = vmax.f32 %v4012, %v4013
        %v4015 = vrot.slane %v3873, 4
        %v4016 = vmax.f32 %v3873, %v4015
        %v4017 = vrot.slane %v4016, 2
        %v4018 = vmax.f32 %v4016, %v4017
        %v4019 = vrot.slane %v4018, 1
        %v4020 = vmax.f32 %v4018, %v4019
        %vm4021 = vcmask 1040384
        %v4022 = vsel %vm4021, %v3979, %v3990
        %v4023 = vsel %vm4021, %v3980, %v3996
        %v4024 = vsel %vm4021, %v3981, %v4002
        %vm4025 = vcmask 1041408
        %v4026 = vsel %vm4025, %v4022, %v3982
        %v4027 = vsel %vm4025, %v4023, %v3983
        %v4028 = vsel %vm4025, %v4024, %v3984
        %vm4029 = vcmask 1042432
        %v4030 = vsel %vm4029, %v4026, %v4008
        %v4031 = vsel %vm4029, %v4027, %v4014
        %v4032 = vsel %vm4029, %v4028, %v4020
        %4036 = vrot.lane.b32.xlu0 %v4030, 75
        %v4037 = vpop.permute.xlu0 %4036
        %4038 = vrot.lane.b32.xlu0 %v4031, 75
        %v4039 = vpop.permute.xlu0 %4038
        %4040 = vrot.lane.b32.xlu0 %v4032, 75
        %v4041 = vpop.permute.xlu0 %4040
        %v4042 = vsel %vm1354, %v4037, %v4039
        %v4043 = vsel %vm1354, %v4039, %v4041
        %v4048 = vsel %vm1354, 0.0, %v4037
        %v4049 = vsel %vm1354, %v4041, 0.0
        %4050 = vst [vmem:[#allocation3] sm:$0xf] %v4048
        %4051 = vst [vmem:[#allocation3 + $0x8] sm:$0xf] %v4042
        %4052 = vst [vmem:[#allocation3 + $0x10] sm:$0xf] %v4043
        %v4055 = vrot.slane %v4048, 4
        %v4056 = vrot.slane %v4042, 4
        %v4057 = vrot.slane %v4043, 4
        %v4058 = vrot.slane %v4049, 4
        %4059 = vrot.lane.b32.xlu0 %v4055, 127
        %v4060 = vpop.permute.xlu0 %4059
        %4061 = vrot.lane.b32.xlu0 %v4056, 127
        %v4062 = vpop.permute.xlu0 %4061
        %4063 = vrot.lane.b32.xlu0 %v4057, 127
        %v4064 = vpop.permute.xlu0 %4063
        %4065 = vrot.lane.b32.xlu0 %v4058, 127
        %v4066 = vpop.permute.xlu0 %4065
        %v4067 = vsel %vm436, %v4060, %v4062
        %v4068 = vsel %vm436, %v4062, %v4064
        %v4069 = vsel %vm436, %v4064, %v4066
        %4073 = vst [vmem:[#allocation3] sm:$0xf0] %v4067
        %4074 = vst [vmem:[#allocation3 + $0x8] sm:$0xf0] %v4068
        %4075 = vst [vmem:[#allocation3 + $0x10] sm:$0xf0] %v4069
        %4076 = vrot.lane.b32.xlu0 %v4048, 126
        %v4077 = vpop.permute.xlu0 %4076
        %4078 = vrot.lane.b32.xlu0 %v4042, 126
        %v4079 = vpop.permute.xlu0 %4078
        %4080 = vrot.lane.b32.xlu0 %v4043, 126
        %v4081 = vpop.permute.xlu0 %4080
        %4082 = vrot.lane.b32.xlu0 %v4049, 126
        %v4083 = vpop.permute.xlu0 %4082
        %v4084 = vsel %vm487, %v4077, %v4079
        %v4085 = vsel %vm487, %v4079, %v4081
        %v4086 = vsel %vm487, %v4081, %v4083
        %4090 = vst [vmem:[#allocation3 + $0x18] sm:$0xf] %v4084
        %4091 = vst [vmem:[#allocation3 + $0x20] sm:$0xf] %v4085
        %4092 = vst [vmem:[#allocation3 + $0x28] sm:$0xf] %v4086
        %4093 = vrot.lane.b32.xlu0 %v4055, 125
        %v4094 = vpop.permute.xlu0 %4093
        %4095 = vrot.lane.b32.xlu0 %v4056, 125
        %v4096 = vpop.permute.xlu0 %4095
        %4097 = vrot.lane.b32.xlu0 %v4057, 125
        %v4098 = vpop.permute.xlu0 %4097
        %4099 = vrot.lane.b32.xlu0 %v4058, 125
        %v4100 = vpop.permute.xlu0 %4099
        %v4101 = vsel %vm538, %v4094, %v4096
        %v4102 = vsel %vm538, %v4096, %v4098
        %v4103 = vsel %vm538, %v4098, %v4100
        %4107 = vst [vmem:[#allocation3 + $0x18] sm:$0xf0] %v4101
        %4108 = vst [vmem:[#allocation3 + $0x20] sm:$0xf0] %v4102
        %4109 = vst [vmem:[#allocation3 + $0x28] sm:$0xf0] %v4103
        %4110 = vrot.lane.b32.xlu0 %v4048, 124
        %v4111 = vpop.permute.xlu0 %4110
        %4112 = vrot.lane.b32.xlu0 %v4042, 124
        %v4113 = vpop.permute.xlu0 %4112
        %4114 = vrot.lane.b32.xlu0 %v4043, 124
        %v4115 = vpop.permute.xlu0 %4114
        %4116 = vrot.lane.b32.xlu0 %v4049, 124
        %v4117 = vpop.permute.xlu0 %4116
        %v4118 = vsel %vm589, %v4111, %v4113
        %v4119 = vsel %vm589, %v4113, %v4115
        %v4120 = vsel %vm589, %v4115, %v4117
        %4124 = vst [vmem:[#allocation3 + $0x30] sm:$0xf] %v4118
        %4125 = vst [vmem:[#allocation3 + $0x38] sm:$0xf] %v4119
        %4126 = vst [vmem:[#allocation3 + $0x40] sm:$0xf] %v4120
        %4127 = vrot.lane.b32.xlu0 %v4055, 123
        %v4128 = vpop.permute.xlu0 %4127
        %4129 = vrot.lane.b32.xlu0 %v4056, 123
        %v4130 = vpop.permute.xlu0 %4129
        %4131 = vrot.lane.b32.xlu0 %v4057, 123
        %v4132 = vpop.permute.xlu0 %4131
        %4133 = vrot.lane.b32.xlu0 %v4058, 123
        %v4134 = vpop.permute.xlu0 %4133
        %v4135 = vsel %vm640, %v4128, %v4130
        %v4136 = vsel %vm640, %v4130, %v4132
        %v4137 = vsel %vm640, %v4132, %v4134
        %4141 = vst [vmem:[#allocation3 + $0x30] sm:$0xf0] %v4135
        %4142 = vst [vmem:[#allocation3 + $0x38] sm:$0xf0] %v4136
        %4143 = vst [vmem:[#allocation3 + $0x40] sm:$0xf0] %v4137
        %4144 = vrot.lane.b32.xlu0 %v4048, 122
        %v4145 = vpop.permute.xlu0 %4144
        %4146 = vrot.lane.b32.xlu0 %v4042, 122
        %v4147 = vpop.permute.xlu0 %4146
        %4148 = vrot.lane.b32.xlu0 %v4043, 122
        %v4149 = vpop.permute.xlu0 %4148
        %4150 = vrot.lane.b32.xlu0 %v4049, 122
        %v4151 = vpop.permute.xlu0 %4150
        %v4152 = vsel %vm691, %v4145, %v4147
        %v4153 = vsel %vm691, %v4147, %v4149
        %v4154 = vsel %vm691, %v4149, %v4151
        %4158 = vst [vmem:[#allocation3 + $0x48] sm:$0xf] %v4152
        %4159 = vst [vmem:[#allocation3 + $0x50] sm:$0xf] %v4153
        %4160 = vst [vmem:[#allocation3 + $0x58] sm:$0xf] %v4154
        %4161 = vrot.lane.b32.xlu0 %v4055, 104
        %v4162 = vpop.permute.xlu0 %4161
        %4163 = vrot.lane.b32.xlu0 %v4056, 104
        %v4164 = vpop.permute.xlu0 %4163
        %4165 = vrot.lane.b32.xlu0 %v4057, 104
        %v4166 = vpop.permute.xlu0 %4165
        %4167 = vrot.lane.b32.xlu0 %v4058, 104
        %v4168 = vpop.permute.xlu0 %4167
        %v4169 = vsel %vm742, %v4162, %v4164
        %v4170 = vsel %vm742, %v4164, %v4166
        %v4171 = vsel %vm742, %v4166, %v4168
        %4175 = vst [vmem:[#allocation3 + $0x48] sm:$0xf0] %v4169
        %4176 = vst [vmem:[#allocation3 + $0x50] sm:$0xf0] %v4170
        %4177 = vst [vmem:[#allocation3 + $0x58] sm:$0xf0] %v4171
        %4178 = vrot.lane.b32.xlu0 %v4048, 103
        %v4179 = vpop.permute.xlu0 %4178
        %4180 = vrot.lane.b32.xlu0 %v4042, 103
        %v4181 = vpop.permute.xlu0 %4180
        %4182 = vrot.lane.b32.xlu0 %v4043, 103
        %v4183 = vpop.permute.xlu0 %4182
        %4184 = vrot.lane.b32.xlu0 %v4049, 103
        %v4185 = vpop.permute.xlu0 %4184
        %v4186 = vsel %vm793, %v4179, %v4181
        %v4187 = vsel %vm793, %v4181, %v4183
        %v4188 = vsel %vm793, %v4183, %v4185
        %4192 = vst [vmem:[#allocation3 + $0x60] sm:$0xf] %v4186
        %4193 = vst [vmem:[#allocation3 + $0x68] sm:$0xf] %v4187
        %4194 = vst [vmem:[#allocation3 + $0x70] sm:$0xf] %v4188
        %4195 = vrot.lane.b32.xlu0 %v4055, 102
        %v4196 = vpop.permute.xlu0 %4195
        %4197 = vrot.lane.b32.xlu0 %v4056, 102
        %v4198 = vpop.permute.xlu0 %4197
        %4199 = vrot.lane.b32.xlu0 %v4057, 102
        %v4200 = vpop.permute.xlu0 %4199
        %4201 = vrot.lane.b32.xlu0 %v4058, 102
        %v4202 = vpop.permute.xlu0 %4201
        %v4203 = vsel %vm844, %v4196, %v4198
        %v4204 = vsel %vm844, %v4198, %v4200
        %v4205 = vsel %vm844, %v4200, %v4202
        %4209 = vst [vmem:[#allocation3 + $0x60] sm:$0xf0] %v4203
        %4210 = vst [vmem:[#allocation3 + $0x68] sm:$0xf0] %v4204
        %4211 = vst [vmem:[#allocation3 + $0x70] sm:$0xf0] %v4205
        %4212 = vrot.lane.b32.xlu0 %v4048, 101
        %v4213 = vpop.permute.xlu0 %4212
        %4214 = vrot.lane.b32.xlu0 %v4042, 101
        %v4215 = vpop.permute.xlu0 %4214
        %4216 = vrot.lane.b32.xlu0 %v4043, 101
        %v4217 = vpop.permute.xlu0 %4216
        %4218 = vrot.lane.b32.xlu0 %v4049, 101
        %v4219 = vpop.permute.xlu0 %4218
        %v4220 = vsel %vm895, %v4213, %v4215
        %v4221 = vsel %vm895, %v4215, %v4217
        %v4222 = vsel %vm895, %v4217, %v4219
        %4226 = vst [vmem:[#allocation3 + $0x78] sm:$0xf] %v4220
        %4227 = vst [vmem:[#allocation3 + $0x80] sm:$0xf] %v4221
        %4228 = vst [vmem:[#allocation3 + $0x88] sm:$0xf] %v4222
        %4229 = vrot.lane.b32.xlu0 %v4055, 100
        %v4230 = vpop.permute.xlu0 %4229
        %4231 = vrot.lane.b32.xlu0 %v4056, 100
        %v4232 = vpop.permute.xlu0 %4231
        %4233 = vrot.lane.b32.xlu0 %v4057, 100
        %v4234 = vpop.permute.xlu0 %4233
        %4235 = vrot.lane.b32.xlu0 %v4058, 100
        %v4236 = vpop.permute.xlu0 %4235
        %v4237 = vsel %vm946, %v4230, %v4232
        %v4238 = vsel %vm946, %v4232, %v4234
        %v4239 = vsel %vm946, %v4234, %v4236
        %4243 = vst [vmem:[#allocation3 + $0x78] sm:$0xf0] %v4237
        %4244 = vst [vmem:[#allocation3 + $0x80] sm:$0xf0] %v4238
        %4245 = vst [vmem:[#allocation3 + $0x88] sm:$0xf0] %v4239
        %4246 = vrot.lane.b32.xlu0 %v4048, 99
        %v4247 = vpop.permute.xlu0 %4246
        %4248 = vrot.lane.b32.xlu0 %v4042, 99
        %v4249 = vpop.permute.xlu0 %4248
        %4250 = vrot.lane.b32.xlu0 %v4043, 99
        %v4251 = vpop.permute.xlu0 %4250
        %4252 = vrot.lane.b32.xlu0 %v4049, 99
        %v4253 = vpop.permute.xlu0 %4252
        %v4254 = vsel %vm997, %v4247, %v4249
        %v4255 = vsel %vm997, %v4249, %v4251
        %v4256 = vsel %vm997, %v4251, %v4253
        %4260 = vst [vmem:[#allocation3 + $0x90] sm:$0xf] %v4254
        %4261 = vst [vmem:[#allocation3 + $0x98] sm:$0xf] %v4255
        %4262 = vst [vmem:[#allocation3 + $0xa0] sm:$0xf] %v4256
        %4263 = vrot.lane.b32.xlu0 %v4055, 98
        %v4264 = vpop.permute.xlu0 %4263
        %4265 = vrot.lane.b32.xlu0 %v4056, 98
        %v4266 = vpop.permute.xlu0 %4265
        %4267 = vrot.lane.b32.xlu0 %v4057, 98
        %v4268 = vpop.permute.xlu0 %4267
        %4269 = vrot.lane.b32.xlu0 %v4058, 98
        %v4270 = vpop.permute.xlu0 %4269
        %v4271 = vsel %vm1048, %v4264, %v4266
        %v4272 = vsel %vm1048, %v4266, %v4268
        %v4273 = vsel %vm1048, %v4268, %v4270
        %4277 = vst [vmem:[#allocation3 + $0x90] sm:$0xf0] %v4271
        %4278 = vst [vmem:[#allocation3 + $0x98] sm:$0xf0] %v4272
        %4279 = vst [vmem:[#allocation3 + $0xa0] sm:$0xf0] %v4273
        %4280 = vrot.lane.b32.xlu0 %v4048, 80
        %v4281 = vpop.permute.xlu0 %4280
        %4282 = vrot.lane.b32.xlu0 %v4042, 80
        %v4283 = vpop.permute.xlu0 %4282
        %4284 = vrot.lane.b32.xlu0 %v4043, 80
        %v4285 = vpop.permute.xlu0 %4284
        %4286 = vrot.lane.b32.xlu0 %v4049, 80
        %v4287 = vpop.permute.xlu0 %4286
        %v4288 = vsel %vm1099, %v4281, %v4283
        %v4289 = vsel %vm1099, %v4283, %v4285
        %v4290 = vsel %vm1099, %v4285, %v4287
        %4294 = vst [vmem:[#allocation3 + $0xa8] sm:$0xf] %v4288
        %4295 = vst [vmem:[#allocation3 + $0xb0] sm:$0xf] %v4289
        %4296 = vst [vmem:[#allocation3 + $0xb8] sm:$0xf] %v4290
        %4297 = vrot.lane.b32.xlu0 %v4055, 79
        %v4298 = vpop.permute.xlu0 %4297
        %4299 = vrot.lane.b32.xlu0 %v4056, 79
        %v4300 = vpop.permute.xlu0 %4299
        %4301 = vrot.lane.b32.xlu0 %v4057, 79
        %v4302 = vpop.permute.xlu0 %4301
        %4303 = vrot.lane.b32.xlu0 %v4058, 79
        %v4304 = vpop.permute.xlu0 %4303
        %v4305 = vsel %vm1150, %v4298, %v4300
        %v4306 = vsel %vm1150, %v4300, %v4302
        %v4307 = vsel %vm1150, %v4302, %v4304
        %4311 = vst [vmem:[#allocation3 + $0xa8] sm:$0xf0] %v4305
        %4312 = vst [vmem:[#allocation3 + $0xb0] sm:$0xf0] %v4306
        %4313 = vst [vmem:[#allocation3 + $0xb8] sm:$0xf0] %v4307
        %4314 = vrot.lane.b32.xlu0 %v4048, 78
        %v4315 = vpop.permute.xlu0 %4314
        %4316 = vrot.lane.b32.xlu0 %v4042, 78
        %v4317 = vpop.permute.xlu0 %4316
        %4318 = vrot.lane.b32.xlu0 %v4043, 78
        %v4319 = vpop.permute.xlu0 %4318
        %4320 = vrot.lane.b32.xlu0 %v4049, 78
        %v4321 = vpop.permute.xlu0 %4320
        %v4322 = vsel %vm1201, %v4315, %v4317
        %v4323 = vsel %vm1201, %v4317, %v4319
        %v4324 = vsel %vm1201, %v4319, %v4321
        %4328 = vst [vmem:[#allocation3 + $0xc0] sm:$0xf] %v4322
        %4329 = vst [vmem:[#allocation3 + $0xc8] sm:$0xf] %v4323
        %4330 = vst [vmem:[#allocation3 + $0xd0] sm:$0xf] %v4324
        %4331 = vrot.lane.b32.xlu0 %v4055, 77
        %v4332 = vpop.permute.xlu0 %4331
        %4333 = vrot.lane.b32.xlu0 %v4056, 77
        %v4334 = vpop.permute.xlu0 %4333
        %4335 = vrot.lane.b32.xlu0 %v4057, 77
        %v4336 = vpop.permute.xlu0 %4335
        %4337 = vrot.lane.b32.xlu0 %v4058, 77
        %v4338 = vpop.permute.xlu0 %4337
        %v4339 = vsel %vm1252, %v4332, %v4334
        %v4340 = vsel %vm1252, %v4334, %v4336
        %v4341 = vsel %vm1252, %v4336, %v4338
        %4345 = vst [vmem:[#allocation3 + $0xc0] sm:$0xf0] %v4339
        %4346 = vst [vmem:[#allocation3 + $0xc8] sm:$0xf0] %v4340
        %4347 = vst [vmem:[#allocation3 + $0xd0] sm:$0xf0] %v4341
        %4348 = vrot.lane.b32.xlu0 %v4048, 76
        %v4349 = vpop.permute.xlu0 %4348
        %4350 = vrot.lane.b32.xlu0 %v4042, 76
        %v4351 = vpop.permute.xlu0 %4350
        %4352 = vrot.lane.b32.xlu0 %v4043, 76
        %v4353 = vpop.permute.xlu0 %4352
        %4354 = vrot.lane.b32.xlu0 %v4049, 76
        %v4355 = vpop.permute.xlu0 %4354
        %v4356 = vsel %vm1303, %v4349, %v4351
        %v4357 = vsel %vm1303, %v4351, %v4353
        %v4358 = vsel %vm1303, %v4353, %v4355
        %4362 = vst [vmem:[#allocation3 + $0xd8] sm:$0xf] %v4356
        %4363 = vst [vmem:[#allocation3 + $0xe0] sm:$0xf] %v4357
        %4364 = vst [vmem:[#allocation3 + $0xe8] sm:$0xf] %v4358
        %4365 = vrot.lane.b32.xlu0 %v4055, 75
        %v4366 = vpop.permute.xlu0 %4365
        %4367 = vrot.lane.b32.xlu0 %v4056, 75
        %v4368 = vpop.permute.xlu0 %4367
        %4369 = vrot.lane.b32.xlu0 %v4057, 75
        %v4370 = vpop.permute.xlu0 %4369
        %4371 = vrot.lane.b32.xlu0 %v4058, 75
        %v4372 = vpop.permute.xlu0 %4371
        %v4373 = vsel %vm1354, %v4366, %v4368
        %v4374 = vsel %vm1354, %v4368, %v4370
        %v4375 = vsel %vm1354, %v4370, %v4372
        %4379 = vst [vmem:[#allocation3 + $0xd8] sm:$0xf0] %v4373
        %4380 = vst [vmem:[#allocation3 + $0xe0] sm:$0xf0] %v4374
        %4381 = vst [vmem:[#allocation3 + $0xe8] sm:$0xf0] %v4375
        %4382 = vrot.lane.b32.xlu0 %v4048, 74
        %v4383 = vpop.permute.xlu0 %4382
        %4384 = vrot.lane.b32.xlu0 %v4042, 74
        %v4385 = vpop.permute.xlu0 %4384
        %4386 = vrot.lane.b32.xlu0 %v4043, 74
        %v4387 = vpop.permute.xlu0 %4386
        %4388 = vrot.lane.b32.xlu0 %v4049, 74
        %v4389 = vpop.permute.xlu0 %4388
        %v4390 = vsel %vm1405, %v4383, %v4385
        %v4391 = vsel %vm1405, %v4385, %v4387
        %v4392 = vsel %vm1405, %v4387, %v4389
        %4396 = vst [vmem:[#allocation3 + $0xf0] sm:$0xf] %v4390
        %4397 = vst [vmem:[#allocation3 + $0xf8] sm:$0xf] %v4391
        %4398 = vst [vmem:[#allocation3 + $0x100] sm:$0xf] %v4392
        %4399 = vrot.lane.b32.xlu0 %v4055, 56
        %v4400 = vpop.permute.xlu0 %4399
        %4401 = vrot.lane.b32.xlu0 %v4056, 56
        %v4402 = vpop.permute.xlu0 %4401
        %4403 = vrot.lane.b32.xlu0 %v4057, 56
        %v4404 = vpop.permute.xlu0 %4403
        %4405 = vrot.lane.b32.xlu0 %v4058, 56
        %v4406 = vpop.permute.xlu0 %4405
        %v4407 = vsel %vm1456, %v4400, %v4402
        %v4408 = vsel %vm1456, %v4402, %v4404
        %v4409 = vsel %vm1456, %v4404, %v4406
        %4413 = vst [vmem:[#allocation3 + $0xf0] sm:$0xf0] %v4407
        %4414 = vst [vmem:[#allocation3 + $0xf8] sm:$0xf0] %v4408
        %4415 = vst [vmem:[#allocation3 + $0x100] sm:$0xf0] %v4409
        %4416 = vrot.lane.b32.xlu0 %v4048, 55
        %v4417 = vpop.permute.xlu0 %4416
        %4418 = vrot.lane.b32.xlu0 %v4042, 55
        %v4419 = vpop.permute.xlu0 %4418
        %4420 = vrot.lane.b32.xlu0 %v4043, 55
        %v4421 = vpop.permute.xlu0 %4420
        %4422 = vrot.lane.b32.xlu0 %v4049, 55
        %v4423 = vpop.permute.xlu0 %4422
        %v4424 = vsel %vm1507, %v4417, %v4419
        %v4425 = vsel %vm1507, %v4419, %v4421
        %v4426 = vsel %vm1507, %v4421, %v4423
        %4430 = vst [vmem:[#allocation3 + $0x108] sm:$0xf] %v4424
        %4431 = vst [vmem:[#allocation3 + $0x110] sm:$0xf] %v4425
        %4432 = vst [vmem:[#allocation3 + $0x118] sm:$0xf] %v4426
        %4433 = vrot.lane.b32.xlu0 %v4055, 54
        %v4434 = vpop.permute.xlu0 %4433
        %4435 = vrot.lane.b32.xlu0 %v4056, 54
        %v4436 = vpop.permute.xlu0 %4435
        %4437 = vrot.lane.b32.xlu0 %v4057, 54
        %v4438 = vpop.permute.xlu0 %4437
        %4439 = vrot.lane.b32.xlu0 %v4058, 54
        %v4440 = vpop.permute.xlu0 %4439
        %v4441 = vsel %vm1558, %v4434, %v4436
        %v4442 = vsel %vm1558, %v4436, %v4438
        %v4443 = vsel %vm1558, %v4438, %v4440
        %4447 = vst [vmem:[#allocation3 + $0x108] sm:$0xf0] %v4441
        %4448 = vst [vmem:[#allocation3 + $0x110] sm:$0xf0] %v4442
        %4449 = vst [vmem:[#allocation3 + $0x118] sm:$0xf0] %v4443
        %4450 = vrot.lane.b32.xlu0 %v4048, 53
        %v4451 = vpop.permute.xlu0 %4450
        %4452 = vrot.lane.b32.xlu0 %v4042, 53
        %v4453 = vpop.permute.xlu0 %4452
        %4454 = vrot.lane.b32.xlu0 %v4043, 53
        %v4455 = vpop.permute.xlu0 %4454
        %4456 = vrot.lane.b32.xlu0 %v4049, 53
        %v4457 = vpop.permute.xlu0 %4456
        %v4458 = vsel %vm1609, %v4451, %v4453
        %v4459 = vsel %vm1609, %v4453, %v4455
        %v4460 = vsel %vm1609, %v4455, %v4457
        %4464 = vst [vmem:[#allocation3 + $0x120] sm:$0xf] %v4458
        %4465 = vst [vmem:[#allocation3 + $0x128] sm:$0xf] %v4459
        %4466 = vst [vmem:[#allocation3 + $0x130] sm:$0xf] %v4460
        %4467 = vrot.lane.b32.xlu0 %v4055, 52
        %v4468 = vpop.permute.xlu0 %4467
        %4469 = vrot.lane.b32.xlu0 %v4056, 52
        %v4470 = vpop.permute.xlu0 %4469
        %4471 = vrot.lane.b32.xlu0 %v4057, 52
        %v4472 = vpop.permute.xlu0 %4471
        %4473 = vrot.lane.b32.xlu0 %v4058, 52
        %v4474 = vpop.permute.xlu0 %4473
        %v4475 = vsel %vm1660, %v4468, %v4470
        %v4476 = vsel %vm1660, %v4470, %v4472
        %v4477 = vsel %vm1660, %v4472, %v4474
        %4481 = vst [vmem:[#allocation3 + $0x120] sm:$0xf0] %v4475
        %4482 = vst [vmem:[#allocation3 + $0x128] sm:$0xf0] %v4476
        %4483 = vst [vmem:[#allocation3 + $0x130] sm:$0xf0] %v4477
        %4484 = vrot.lane.b32.xlu0 %v4048, 51
        %v4485 = vpop.permute.xlu0 %4484
        %4486 = vrot.lane.b32.xlu0 %v4042, 51
        %v4487 = vpop.permute.xlu0 %4486
        %4488 = vrot.lane.b32.xlu0 %v4043, 51
        %v4489 = vpop.permute.xlu0 %4488
        %4490 = vrot.lane.b32.xlu0 %v4049, 51
        %v4491 = vpop.permute.xlu0 %4490
        %v4492 = vsel %vm1711, %v4485, %v4487
        %v4493 = vsel %vm1711, %v4487, %v4489
        %v4494 = vsel %vm1711, %v4489, %v4491
        %4498 = vst [vmem:[#allocation3 + $0x138] sm:$0xf] %v4492
        %4499 = vst [vmem:[#allocation3 + $0x140] sm:$0xf] %v4493
        %4500 = vst [vmem:[#allocation3 + $0x148] sm:$0xf] %v4494
        %4501 = vrot.lane.b32.xlu0 %v4055, 50
        %v4502 = vpop.permute.xlu0 %4501
        %4503 = vrot.lane.b32.xlu0 %v4056, 50
        %v4504 = vpop.permute.xlu0 %4503
        %4505 = vrot.lane.b32.xlu0 %v4057, 50
        %v4506 = vpop.permute.xlu0 %4505
        %4507 = vrot.lane.b32.xlu0 %v4058, 50
        %v4508 = vpop.permute.xlu0 %4507
        %v4509 = vsel %vm1762, %v4502, %v4504
        %v4510 = vsel %vm1762, %v4504, %v4506
        %v4511 = vsel %vm1762, %v4506, %v4508
        %4515 = vst [vmem:[#allocation3 + $0x138] sm:$0xf0] %v4509
        %4516 = vst [vmem:[#allocation3 + $0x140] sm:$0xf0] %v4510
        %4517 = vst [vmem:[#allocation3 + $0x148] sm:$0xf0] %v4511
        %4518 = vrot.lane.b32.xlu0 %v4048, 32
        %v4519 = vpop.permute.xlu0 %4518
        %4520 = vrot.lane.b32.xlu0 %v4042, 32
        %v4521 = vpop.permute.xlu0 %4520
        %4522 = vrot.lane.b32.xlu0 %v4043, 32
        %v4523 = vpop.permute.xlu0 %4522
        %4524 = vrot.lane.b32.xlu0 %v4049, 32
        %v4525 = vpop.permute.xlu0 %4524
        %v4526 = vsel %vm1813, %v4519, %v4521
        %v4527 = vsel %vm1813, %v4521, %v4523
        %v4528 = vsel %vm1813, %v4523, %v4525
        %4532 = vst [vmem:[#allocation3 + $0x150] sm:$0xf] %v4526
        %4533 = vst [vmem:[#allocation3 + $0x158] sm:$0xf] %v4527
        %4534 = vst [vmem:[#allocation3 + $0x160] sm:$0xf] %v4528
        %4535 = vrot.lane.b32.xlu0 %v4055, 31
        %v4536 = vpop.permute.xlu0 %4535
        %4537 = vrot.lane.b32.xlu0 %v4056, 31
        %v4538 = vpop.permute.xlu0 %4537
        %4539 = vrot.lane.b32.xlu0 %v4057, 31
        %v4540 = vpop.permute.xlu0 %4539
        %4541 = vrot.lane.b32.xlu0 %v4058, 31
        %v4542 = vpop.permute.xlu0 %4541
        %v4543 = vsel %vm1864, %v4536, %v4538
        %v4544 = vsel %vm1864, %v4538, %v4540
        %v4545 = vsel %vm1864, %v4540, %v4542
        %4549 = vst [vmem:[#allocation3 + $0x150] sm:$0xf0] %v4543
        %4550 = vst [vmem:[#allocation3 + $0x158] sm:$0xf0] %v4544
        %4551 = vst [vmem:[#allocation3 + $0x160] sm:$0xf0] %v4545
        %4552 = vrot.lane.b32.xlu0 %v4048, 30
        %v4553 = vpop.permute.xlu0 %4552
        %4554 = vrot.lane.b32.xlu0 %v4042, 30
        %v4555 = vpop.permute.xlu0 %4554
        %4556 = vrot.lane.b32.xlu0 %v4043, 30
        %v4557 = vpop.permute.xlu0 %4556
        %4558 = vrot.lane.b32.xlu0 %v4049, 30
        %v4559 = vpop.permute.xlu0 %4558
        %v4560 = vsel %vm1915, %v4553, %v4555
        %v4561 = vsel %vm1915, %v4555, %v4557
        %v4562 = vsel %vm1915, %v4557, %v4559
        %4566 = vst [vmem:[#allocation3 + $0x168] sm:$0xf] %v4560
        %4567 = vst [vmem:[#allocation3 + $0x170] sm:$0xf] %v4561
        %4568 = vst [vmem:[#allocation3 + $0x178] sm:$0xf] %v4562
        %4569 = vrot.lane.b32.xlu0 %v4055, 29
        %v4570 = vpop.permute.xlu0 %4569
        %4571 = vrot.lane.b32.xlu0 %v4056, 29
        %v4572 = vpop.permute.xlu0 %4571
        %4573 = vrot.lane.b32.xlu0 %v4057, 29
        %v4574 = vpop.permute.xlu0 %4573
        %4575 = vrot.lane.b32.xlu0 %v4058, 29
        %v4576 = vpop.permute.xlu0 %4575
        %v4577 = vsel %vm1966, %v4570, %v4572
        %v4578 = vsel %vm1966, %v4572, %v4574
        %v4579 = vsel %vm1966, %v4574, %v4576
        %4583 = vst [vmem:[#allocation3 + $0x168] sm:$0xf0] %v4577
        %4584 = vst [vmem:[#allocation3 + $0x170] sm:$0xf0] %v4578
        %4585 = vst [vmem:[#allocation3 + $0x178] sm:$0xf0] %v4579
        %4586 = vrot.lane.b32.xlu0 %v4048, 28
        %v4587 = vpop.permute.xlu0 %4586
        %4588 = vrot.lane.b32.xlu0 %v4042, 28
        %v4589 = vpop.permute.xlu0 %4588
        %4590 = vrot.lane.b32.xlu0 %v4043, 28
        %v4591 = vpop.permute.xlu0 %4590
        %4592 = vrot.lane.b32.xlu0 %v4049, 28
        %v4593 = vpop.permute.xlu0 %4592
        %v4594 = vsel %vm2017, %v4587, %v4589
        %v4595 = vsel %vm2017, %v4589, %v4591
        %v4596 = vsel %vm2017, %v4591, %v4593
        %4600 = vst [vmem:[#allocation3 + $0x180] sm:$0xf] %v4594
        %4601 = vst [vmem:[#allocation3 + $0x188] sm:$0xf] %v4595
        %4602 = vst [vmem:[#allocation3 + $0x190] sm:$0xf] %v4596
        %4603 = vrot.lane.b32.xlu0 %v4055, 27
        %v4604 = vpop.permute.xlu0 %4603
        %4605 = vrot.lane.b32.xlu0 %v4056, 27
        %v4606 = vpop.permute.xlu0 %4605
        %4607 = vrot.lane.b32.xlu0 %v4057, 27
        %v4608 = vpop.permute.xlu0 %4607
        %4609 = vrot.lane.b32.xlu0 %v4058, 27
        %v4610 = vpop.permute.xlu0 %4609
        %v4611 = vsel %vm2068, %v4604, %v4606
        %v4612 = vsel %vm2068, %v4606, %v4608
        %v4613 = vsel %vm2068, %v4608, %v4610
        %4617 = vst [vmem:[#allocation3 + $0x180] sm:$0xf0] %v4611
        %4618 = vst [vmem:[#allocation3 + $0x188] sm:$0xf0] %v4612
        %4619 = vst [vmem:[#allocation3 + $0x190] sm:$0xf0] %v4613
        %4620 = vrot.lane.b32.xlu0 %v4048, 26
        %v4621 = vpop.permute.xlu0 %4620
        %4622 = vrot.lane.b32.xlu0 %v4042, 26
        %v4623 = vpop.permute.xlu0 %4622
        %4624 = vrot.lane.b32.xlu0 %v4043, 26
        %v4625 = vpop.permute.xlu0 %4624
        %4626 = vrot.lane.b32.xlu0 %v4049, 26
        %v4627 = vpop.permute.xlu0 %4626
        %v4628 = vsel %vm2119, %v4621, %v4623
        %v4629 = vsel %vm2119, %v4623, %v4625
        %v4630 = vsel %vm2119, %v4625, %v4627
        %4634 = vst [vmem:[#allocation3 + $0x198] sm:$0xf] %v4628
        %4635 = vst [vmem:[#allocation3 + $0x1a0] sm:$0xf] %v4629
        %4636 = vst [vmem:[#allocation3 + $0x1a8] sm:$0xf] %v4630
        %4637 = vrot.lane.b32.xlu0 %v4055, 8
        %v4638 = vpop.permute.xlu0 %4637
        %4639 = vrot.lane.b32.xlu0 %v4056, 8
        %v4640 = vpop.permute.xlu0 %4639
        %4641 = vrot.lane.b32.xlu0 %v4057, 8
        %v4642 = vpop.permute.xlu0 %4641
        %4643 = vrot.lane.b32.xlu0 %v4058, 8
        %v4644 = vpop.permute.xlu0 %4643
        %v4645 = vsel %vm2170, %v4638, %v4640
        %v4646 = vsel %vm2170, %v4640, %v4642
        %v4647 = vsel %vm2170, %v4642, %v4644
        %4651 = vst [vmem:[#allocation3 + $0x198] sm:$0xf0] %v4645
        %4652 = vst [vmem:[#allocation3 + $0x1a0] sm:$0xf0] %v4646
        %4653 = vst [vmem:[#allocation3 + $0x1a8] sm:$0xf0] %v4647
        %4654 = vrot.lane.b32.xlu0 %v4048, 7
        %v4655 = vpop.permute.xlu0 %4654
        %4656 = vrot.lane.b32.xlu0 %v4042, 7
        %v4657 = vpop.permute.xlu0 %4656
        %4658 = vrot.lane.b32.xlu0 %v4043, 7
        %v4659 = vpop.permute.xlu0 %4658
        %4660 = vrot.lane.b32.xlu0 %v4049, 7
        %v4661 = vpop.permute.xlu0 %4660
        %v4662 = vsel %vm2221, %v4655, %v4657
        %v4663 = vsel %vm2221, %v4657, %v4659
        %v4664 = vsel %vm2221, %v4659, %v4661
        %4668 = vst [vmem:[#allocation3 + $0x1b0] sm:$0xf] %v4662
        %4669 = vst [vmem:[#allocation3 + $0x1b8] sm:$0xf] %v4663
        %4670 = vst [vmem:[#allocation3 + $0x1c0] sm:$0xf] %v4664
        %4671 = vrot.lane.b32.xlu0 %v4055, 6
        %v4672 = vpop.permute.xlu0 %4671
        %4673 = vrot.lane.b32.xlu0 %v4056, 6
        %v4674 = vpop.permute.xlu0 %4673
        %4675 = vrot.lane.b32.xlu0 %v4057, 6
        %v4676 = vpop.permute.xlu0 %4675
        %4677 = vrot.lane.b32.xlu0 %v4058, 6
        %v4678 = vpop.permute.xlu0 %4677
        %v4679 = vsel %vm2272, %v4672, %v4674
        %v4680 = vsel %vm2272, %v4674, %v4676
        %v4681 = vsel %vm2272, %v4676, %v4678
        %4685 = vst [vmem:[#allocation3 + $0x1b0] sm:$0xf0] %v4679
        %4686 = vst [vmem:[#allocation3 + $0x1b8] sm:$0xf0] %v4680
        %4687 = vst [vmem:[#allocation3 + $0x1c0] sm:$0xf0] %v4681
        %4688 = vrot.lane.b32.xlu0 %v4048, 5
        %v4689 = vpop.permute.xlu0 %4688
        %4690 = vrot.lane.b32.xlu0 %v4042, 5
        %v4691 = vpop.permute.xlu0 %4690
        %4692 = vrot.lane.b32.xlu0 %v4043, 5
        %v4693 = vpop.permute.xlu0 %4692
        %4694 = vrot.lane.b32.xlu0 %v4049, 5
        %v4695 = vpop.permute.xlu0 %4694
        %v4696 = vsel %vm2323, %v4689, %v4691
        %v4697 = vsel %vm2323, %v4691, %v4693
        %v4698 = vsel %vm2323, %v4693, %v4695
        %4702 = vst [vmem:[#allocation3 + $0x1c8] sm:$0xf] %v4696
        %4703 = vst [vmem:[#allocation3 + $0x1d0] sm:$0xf] %v4697
        %4704 = vst [vmem:[#allocation3 + $0x1d8] sm:$0xf] %v4698
        %4705 = vrot.lane.b32.xlu0 %v4055, 4
        %v4706 = vpop.permute.xlu0 %4705
        %4707 = vrot.lane.b32.xlu0 %v4056, 4
        %v4708 = vpop.permute.xlu0 %4707
        %4709 = vrot.lane.b32.xlu0 %v4057, 4
        %v4710 = vpop.permute.xlu0 %4709
        %4711 = vrot.lane.b32.xlu0 %v4058, 4
        %v4712 = vpop.permute.xlu0 %4711
        %v4713 = vsel %vm2374, %v4706, %v4708
        %v4714 = vsel %vm2374, %v4708, %v4710
        %v4715 = vsel %vm2374, %v4710, %v4712
        %4719 = vst [vmem:[#allocation3 + $0x1c8] sm:$0xf0] %v4713
        %4720 = vst [vmem:[#allocation3 + $0x1d0] sm:$0xf0] %v4714
        %4721 = vst [vmem:[#allocation3 + $0x1d8] sm:$0xf0] %v4715
        %4722 = vrot.lane.b32.xlu0 %v4048, 3
        %v4723 = vpop.permute.xlu0 %4722
        %4724 = vrot.lane.b32.xlu0 %v4042, 3
        %v4725 = vpop.permute.xlu0 %4724
        %4726 = vrot.lane.b32.xlu0 %v4043, 3
        %v4727 = vpop.permute.xlu0 %4726
        %4728 = vrot.lane.b32.xlu0 %v4049, 3
        %v4729 = vpop.permute.xlu0 %4728
        %v4730 = vsel %vm2425, %v4723, %v4725
        %v4731 = vsel %vm2425, %v4725, %v4727
        %v4732 = vsel %vm2425, %v4727, %v4729
        %4736 = vst [vmem:[#allocation3 + $0x1e0] sm:$0xf] %v4730
        %4737 = vst [vmem:[#allocation3 + $0x1e8] sm:$0xf] %v4731
        %4738 = vst [vmem:[#allocation3 + $0x1f0] sm:$0xf] %v4732
        %4739 = vrot.lane.b32.xlu0 %v4055, 2
        %v4740 = vpop.permute.xlu0 %4739
        %4741 = vrot.lane.b32.xlu0 %v4056, 2
        %v4742 = vpop.permute.xlu0 %4741
        %4743 = vrot.lane.b32.xlu0 %v4057, 2
        %v4744 = vpop.permute.xlu0 %4743
        %4745 = vrot.lane.b32.xlu0 %v4058, 2
        %v4746 = vpop.permute.xlu0 %4745
        %v4747 = vsel %vm2476, %v4740, %v4742
        %v4748 = vsel %vm2476, %v4742, %v4744
        %v4749 = vsel %vm2476, %v4744, %v4746
        %4753 = vst [vmem:[#allocation3 + $0x1e0] sm:$0xf0] %v4747
        %4754 = vst [vmem:[#allocation3 + $0x1e8] sm:$0xf0] %v4748
        %4755 = vst [vmem:[#allocation3 + $0x1f0] sm:$0xf0] %v4749
        %4757 = vrot.lane.b32.xlu0 %v4042, 112
        %v4758 = vpop.permute.xlu0 %4757
        %4759 = vrot.lane.b32.xlu0 %v4043, 112
        %v4760 = vpop.permute.xlu0 %4759
        %4761 = vrot.lane.b32.xlu0 %v4049, 112
        %v4762 = vpop.permute.xlu0 %4761
        %4763 = vrot.lane.b32.xlu0 0.0, 112
        %v4764 = vpop.permute.xlu0 %4763
        %v4765 = vsel %vm2527, %v4758, %v4760
        %v4766 = vsel %vm2527, %v4760, %v4762
        %v4767 = vsel %vm2527, %v4762, %v4764
        %4771 = vst [vmem:[#allocation3 + $0x1f8] sm:$0xf] %v4765
        %4772 = vst [vmem:[#allocation3 + $0x200] sm:$0xf] %v4766
        %4773 = vst [vmem:[#allocation3 + $0x208] sm:$0xf] %v4767
        %v4774 = vrot.slane 0.0, 4
        %4775 = vrot.lane.b32.xlu0 %v4056, 111
        %v4776 = vpop.permute.xlu0 %4775
        %4777 = vrot.lane.b32.xlu0 %v4057, 111
        %v4778 = vpop.permute.xlu0 %4777
        %4779 = vrot.lane.b32.xlu0 %v4058, 111
        %v4780 = vpop.permute.xlu0 %4779
        %4781 = vrot.lane.b32.xlu0 %v4774, 111
        %v4782 = vpop.permute.xlu0 %4781
        %v4783 = vsel %vm2578, %v4776, %v4778
        %v4784 = vsel %vm2578, %v4778, %v4780
        %v4785 = vsel %vm2578, %v4780, %v4782
        %4789 = vst [vmem:[#allocation3 + $0x1f8] sm:$0xf0] %v4783
        %4790 = vst [vmem:[#allocation3 + $0x200] sm:$0xf0] %v4784
        %4791 = vst [vmem:[#allocation3 + $0x208] sm:$0xf0] %v4785
        %4792 = vrot.lane.b32.xlu0 %v4042, 110
        %v4793 = vpop.permute.xlu0 %4792
        %4794 = vrot.lane.b32.xlu0 %v4043, 110
        %v4795 = vpop.permute.xlu0 %4794
        %4796 = vrot.lane.b32.xlu0 %v4049, 110
        %v4797 = vpop.permute.xlu0 %4796
        %4798 = vrot.lane.b32.xlu0 0.0, 110
        %v4799 = vpop.permute.xlu0 %4798
        %v4800 = vsel %vm2629, %v4793, %v4795
        %v4801 = vsel %vm2629, %v4795, %v4797
        %v4802 = vsel %vm2629, %v4797, %v4799
        %4806 = vst [vmem:[#allocation3 + $0x210] sm:$0xf] %v4800
        %4807 = vst [vmem:[#allocation3 + $0x218] sm:$0xf] %v4801
        %4808 = vst [vmem:[#allocation3 + $0x220] sm:$0xf] %v4802
        %4809 = vrot.lane.b32.xlu0 %v4056, 109
        %v4810 = vpop.permute.xlu0 %4809
        %4811 = vrot.lane.b32.xlu0 %v4057, 109
        %v4812 = vpop.permute.xlu0 %4811
        %4813 = vrot.lane.b32.xlu0 %v4058, 109
        %v4814 = vpop.permute.xlu0 %4813
        %4815 = vrot.lane.b32.xlu0 %v4774, 109
        %v4816 = vpop.permute.xlu0 %4815
        %v4817 = vsel %vm2680, %v4810, %v4812
        %v4818 = vsel %vm2680, %v4812, %v4814
        %v4819 = vsel %vm2680, %v4814, %v4816
        %4823 = vst [vmem:[#allocation3 + $0x210] sm:$0xf0] %v4817
        %4824 = vst [vmem:[#allocation3 + $0x218] sm:$0xf0] %v4818
        %4825 = vst [vmem:[#allocation3 + $0x220] sm:$0xf0] %v4819
        %4826 = vrot.lane.b32.xlu0 %v4042, 108
        %v4827 = vpop.permute.xlu0 %4826
        %4828 = vrot.lane.b32.xlu0 %v4043, 108
        %v4829 = vpop.permute.xlu0 %4828
        %4830 = vrot.lane.b32.xlu0 %v4049, 108
        %v4831 = vpop.permute.xlu0 %4830
        %4832 = vrot.lane.b32.xlu0 0.0, 108
        %v4833 = vpop.permute.xlu0 %4832
        %v4834 = vsel %vm2731, %v4827, %v4829
        %v4835 = vsel %vm2731, %v4829, %v4831
        %v4836 = vsel %vm2731, %v4831, %v4833
        %4840 = vst [vmem:[#allocation3 + $0x228] sm:$0xf] %v4834
        %4841 = vst [vmem:[#allocation3 + $0x230] sm:$0xf] %v4835
        %4842 = vst [vmem:[#allocation3 + $0x238] sm:$0xf] %v4836
        %4843 = vrot.lane.b32.xlu0 %v4056, 107
        %v4844 = vpop.permute.xlu0 %4843
        %4845 = vrot.lane.b32.xlu0 %v4057, 107
        %v4846 = vpop.permute.xlu0 %4845
        %4847 = vrot.lane.b32.xlu0 %v4058, 107
        %v4848 = vpop.permute.xlu0 %4847
        %4849 = vrot.lane.b32.xlu0 %v4774, 107
        %v4850 = vpop.permute.xlu0 %4849
        %v4851 = vsel %vm2782, %v4844, %v4846
        %v4852 = vsel %vm2782, %v4846, %v4848
        %v4853 = vsel %vm2782, %v4848, %v4850
        %4857 = vst [vmem:[#allocation3 + $0x228] sm:$0xf0] %v4851
        %4858 = vst [vmem:[#allocation3 + $0x230] sm:$0xf0] %v4852
        %4859 = vst [vmem:[#allocation3 + $0x238] sm:$0xf0] %v4853
        %4860 = vrot.lane.b32.xlu0 %v4042, 106
        %v4861 = vpop.permute.xlu0 %4860
        %4862 = vrot.lane.b32.xlu0 %v4043, 106
        %v4863 = vpop.permute.xlu0 %4862
        %4864 = vrot.lane.b32.xlu0 %v4049, 106
        %v4865 = vpop.permute.xlu0 %4864
        %4866 = vrot.lane.b32.xlu0 0.0, 106
        %v4867 = vpop.permute.xlu0 %4866
        %v4868 = vsel %vm2833, %v4861, %v4863
        %v4869 = vsel %vm2833, %v4863, %v4865
        %v4870 = vsel %vm2833, %v4865, %v4867
        %4874 = vst [vmem:[#allocation3 + $0x240] sm:$0xf] %v4868
        %4875 = vst [vmem:[#allocation3 + $0x248] sm:$0xf] %v4869
        %4876 = vst [vmem:[#allocation3 + $0x250] sm:$0xf] %v4870
        %4877 = vst [vmem:[#allocation3 + $0x240] sm:$0xf0] 0.0
        %4878 = vst [vmem:[#allocation3 + $0x248] sm:$0xf0] 0.0
        %4879 = vst [vmem:[#allocation3 + $0x250] sm:$0xf0] 0.0
        %v4880 = vld [vmem:[%s4] sm:$0xf]
        %v4881 = vld [vmem:[#allocation3] sm:$0xff]
        %v4882 = vld [vmem:[#allocation3 + $0x8] sm:$0xff]
        %v4883 = vld [vmem:[#allocation3 + $0x10] sm:$0xff]
        %v4884 = vld [vmem:[#allocation3 + $0x18] sm:$0xff]
        %v4885 = vld [vmem:[#allocation3 + $0x20] sm:$0xff]
        %v4886 = vld [vmem:[#allocation3 + $0x28] sm:$0xff]
        %v4887 = vld [vmem:[#allocation3 + $0x30] sm:$0xff]
        %v4888 = vld [vmem:[#allocation3 + $0x38] sm:$0xff]
        %v4889 = vld [vmem:[#allocation3 + $0x40] sm:$0xff]
        %v4890 = vld [vmem:[#allocation3 + $0x48] sm:$0xff]
        %v4891 = vld [vmem:[#allocation3 + $0x50] sm:$0xff]
        %v4892 = vld [vmem:[#allocation3 + $0x58] sm:$0xff]
        %v4893 = vld [vmem:[#allocation3 + $0x60] sm:$0xff]
        %v4894 = vld [vmem:[#allocation3 + $0x68] sm:$0xff]
        %v4895 = vld [vmem:[#allocation3 + $0x70] sm:$0xff]
        %v4896 = vld [vmem:[#allocation3 + $0x78] sm:$0xff]
        %v4897 = vld [vmem:[#allocation3 + $0x80] sm:$0xff]
        %v4898 = vld [vmem:[#allocation3 + $0x88] sm:$0xff]
        %v4899 = vld [vmem:[#allocation3 + $0x90] sm:$0xff]
        %v4900 = vld [vmem:[#allocation3 + $0x98] sm:$0xff]
        %v4901 = vld [vmem:[#allocation3 + $0xa0] sm:$0xff]
        %v4902 = vld [vmem:[#allocation3 + $0xa8] sm:$0xff]
        %v4903 = vld [vmem:[#allocation3 + $0xb0] sm:$0xff]
        %v4904 = vld [vmem:[#allocation3 + $0xb8] sm:$0xff]
        %v4905 = vld [vmem:[#allocation3 + $0xc0] sm:$0xff]
        %v4906 = vld [vmem:[#allocation3 + $0xc8] sm:$0xff]
        %v4907 = vld [vmem:[#allocation3 + $0xd0] sm:$0xff]
        %v4908 = vld [vmem:[#allocation3 + $0xd8] sm:$0xff]
        %v4909 = vld [vmem:[#allocation3 + $0xe0] sm:$0xff]
        %v4910 = vld [vmem:[#allocation3 + $0xe8] sm:$0xff]
        %v4911 = vld [vmem:[#allocation3 + $0xf0] sm:$0xff]
        %v4912 = vld [vmem:[#allocation3 + $0xf8] sm:$0xff]
        %v4913 = vld [vmem:[#allocation3 + $0x100] sm:$0xff]
        %v4914 = vld [vmem:[#allocation3 + $0x108] sm:$0xff]
        %v4915 = vld [vmem:[#allocation3 + $0x110] sm:$0xff]
        %v4916 = vld [vmem:[#allocation3 + $0x118] sm:$0xff]
        %v4917 = vld [vmem:[#allocation3 + $0x120] sm:$0xff]
        %v4918 = vld [vmem:[#allocation3 + $0x128] sm:$0xff]
        %v4919 = vld [vmem:[#allocation3 + $0x130] sm:$0xff]
        %v4920 = vld [vmem:[#allocation3 + $0x138] sm:$0xff]
        %v4921 = vld [vmem:[#allocation3 + $0x140] sm:$0xff]
        %v4922 = vld [vmem:[#allocation3 + $0x148] sm:$0xff]
        %v4923 = vld [vmem:[#allocation3 + $0x150] sm:$0xff]
        %v4924 = vld [vmem:[#allocation3 + $0x158] sm:$0xff]
        %v4925 = vld [vmem:[#allocation3 + $0x160] sm:$0xff]
        %v4926 = vld [vmem:[#allocation3 + $0x168] sm:$0xff]
        %v4927 = vld [vmem:[#allocation3 + $0x170] sm:$0xff]
        %v4928 = vld [vmem:[#allocation3 + $0x178] sm:$0xff]
        %v4929 = vld [vmem:[#allocation3 + $0x180] sm:$0xff]
        %v4930 = vld [vmem:[#allocation3 + $0x188] sm:$0xff]
        %v4931 = vld [vmem:[#allocation3 + $0x190] sm:$0xff]
        %v4932 = vld [vmem:[#allocation3 + $0x198] sm:$0xff]
        %v4933 = vld [vmem:[#allocation3 + $0x1a0] sm:$0xff]
        %v4934 = vld [vmem:[#allocation3 + $0x1a8] sm:$0xff]
        %v4935 = vld [vmem:[#allocation3 + $0x1b0] sm:$0xff]
        %v4936 = vld [vmem:[#allocation3 + $0x1b8] sm:$0xff]
        %v4937 = vld [vmem:[#allocation3 + $0x1c0] sm:$0xff]
        %v4938 = vld [vmem:[#allocation3 + $0x1c8] sm:$0xff]
        %v4939 = vld [vmem:[#allocation3 + $0x1d0] sm:$0xff]
        %v4940 = vld [vmem:[#allocation3 + $0x1d8] sm:$0xff]
        %v4941 = vld [vmem:[#allocation3 + $0x1e0] sm:$0xff]
        %v4942 = vld [vmem:[#allocation3 + $0x1e8] sm:$0xff]
        %v4943 = vld [vmem:[#allocation3 + $0x1f0] sm:$0xff]
        %v4944 = vld [vmem:[#allocation3 + $0x1f8] sm:$0xff]
        %v4945 = vld [vmem:[#allocation3 + $0x200] sm:$0xff]
        %v4946 = vld [vmem:[#allocation3 + $0x208] sm:$0xff]
        %v4947 = vld [vmem:[#allocation3 + $0x210] sm:$0xff]
        %v4948 = vld [vmem:[#allocation3 + $0x218] sm:$0xff]
        %v4949 = vld [vmem:[#allocation3 + $0x220] sm:$0xff]
        %v4950 = vld [vmem:[#allocation3 + $0x228] sm:$0xff]
        %v4951 = vld [vmem:[#allocation3 + $0x230] sm:$0xff]
        %v4952 = vld [vmem:[#allocation3 + $0x238] sm:$0xff]
        %v4953 = vld [vmem:[#allocation3 + $0x240] sm:$0xff]
        %v4954 = vld [vmem:[#allocation3 + $0x248] sm:$0xff]
        %v4955 = vld [vmem:[#allocation3 + $0x250] sm:$0xff]
        %v4956 = vld [vmem:[%s5] sm:$0x3]
        %4958 = vset.pattern.permute.xlu0 0
        %4959 = vperm.xlu0 %4958, %v4956
        %v4960 = vpop.permute.xlu0 %4959
        %4963 = vst [vmem:[#allocation1] ss:$4 sm:$0xff] %v4880
        %v4964 = vld.sshfl [vmem:[#allocation1] sm:$0xff pattern:$0x73625140]
        %v4965 = vld.sshfl [vmem:[#allocation1 + $0x8] sm:$0xff pattern:$0x73625140]
        %vm4967 = vcmask 588800
        %v4968 = vsel %vm4967, %v4965, 0
        %4970 = vmatpush.msra.mxu0 %v4926
        %4971 = vmatpush.msra.mxu0 %v4923
        %4972 = vmatpush.msra.mxu0 %v4920
        %4973 = vmatpush.msra.mxu0 %v4917
        %4974 = vmatpush.msra.mxu0 %v4914
        %4975 = vmatpush.msra.mxu0 %v4911
        %4976 = vmatpush.msra.mxu0 %v4908
        %4977 = vmatpush.msra.mxu0 %v4905
        %4978 = vmatpush.msra.mxu0 %v4902
        %4979 = vmatpush.msra.mxu0 %v4899
        %4980 = vmatpush.msra.mxu0 %v4896
        %4981 = vmatpush.msra.mxu0 %v4893
        %4982 = vmatpush.msra.mxu0 %v4890
        %4983 = vmatpush.msra.mxu0 %v4887
        %4984 = vmatpush.msra.mxu0 %v4884
        %4985 = vmatpush.msra.mxu0 %v4881
        %4986 = vmatmul.f32.gmra.mxu0 %v4964
        %v4987 = vpop.f32.mrf.mxu0
        %v4988 = vadd.f32 %v4960, %v4987
        %4989 = vdwg.mxu0
        %4990 = vmatpush.msra.mxu0 0.0
        %4991 = vmatpush.msra.mxu0 0.0
        %4992 = vmatpush.msra.mxu0 0.0
        %4993 = vmatpush.msra.mxu0 0.0
        %4994 = vmatpush.msra.mxu0 0.0
        %4995 = vmatpush.msra.mxu0 0.0
        %4996 = vmatpush.msra.mxu0 0.0
        %4997 = vmatpush.msra.mxu0 %v4953
        %4998 = vmatpush.msra.mxu0 %v4950
        %4999 = vmatpush.msra.mxu0 %v4947
        %5000 = vmatpush.msra.mxu0 %v4944
        %5001 = vmatpush.msra.mxu0 %v4941
        %5002 = vmatpush.msra.mxu0 %v4938
        %5003 = vmatpush.msra.mxu0 %v4935
        %5004 = vmatpush.msra.mxu0 %v4932
        %5005 = vmatpush.msra.mxu0 %v4929
        %5006 = vmatmul.f32.gmra.mxu0 %v4968
        %v5007 = vpop.f32.mrf.mxu0
        %v5008 = vadd.f32 %v4988, %v5007
        %5009 = vdwg.mxu0
        %5010 = vmatpush.msra.mxu0 %v4927
        %5011 = vmatpush.msra.mxu0 %v4924
        %5012 = vmatpush.msra.mxu0 %v4921
        %5013 = vmatpush.msra.mxu0 %v4918
        %5014 = vmatpush.msra.mxu0 %v4915
        %5015 = vmatpush.msra.mxu0 %v4912
        %5016 = vmatpush.msra.mxu0 %v4909
        %5017 = vmatpush.msra.mxu0 %v4906
        %5018 = vmatpush.msra.mxu0 %v4903
        %5019 = vmatpush.msra.mxu0 %v4900
        %5020 = vmatpush.msra.mxu0 %v4897
        %5021 = vmatpush.msra.mxu0 %v4894
        %5022 = vmatpush.msra.mxu0 %v4891
        %5023 = vmatpush.msra.mxu0 %v4888
        %5024 = vmatpush.msra.mxu0 %v4885
        %5025 = vmatpush.msra.mxu0 %v4882
        %5026 = vmatmul.f32.gmra.mxu0 %v4964
        %v5027 = vpop.f32.mrf.mxu0
        %v5028 = vadd.f32 %v4960, %v5027
        %5029 = vdwg.mxu0
        %5030 = vmatpush.msra.mxu0 0.0
        %5031 = vmatpush.msra.mxu0 0.0
        %5032 = vmatpush.msra.mxu0 0.0
        %5033 = vmatpush.msra.mxu0 0.0
        %5034 = vmatpush.msra.mxu0 0.0
        %5035 = vmatpush.msra.mxu0 0.0
        %5036 = vmatpush.msra.mxu0 0.0
        %5037 = vmatpush.msra.mxu0 %v4954
        %5038 = vmatpush.msra.mxu0 %v4951
        %5039 = vmatpush.msra.mxu0 %v4948
        %5040 = vmatpush.msra.mxu0 %v4945
        %5041 = vmatpush.msra.mxu0 %v4942
        %5042 = vmatpush.msra.mxu0 %v4939
        %5043 = vmatpush.msra.mxu0 %v4936
        %5044 = vmatpush.msra.mxu0 %v4933
        %5045 = vmatpush.msra.mxu0 %v4930
        %5046 = vmatmul.f32.gmra.mxu0 %v4968
        %v5047 = vpop.f32.mrf.mxu0
        %v5048 = vadd.f32 %v5028, %v5047
        %5049 = vdwg.mxu0
        %5050 = vmatpush.msra.mxu0 %v4928
        %5051 = vmatpush.msra.mxu0 %v4925
        %5052 = vmatpush.msra.mxu0 %v4922
        %5053 = vmatpush.msra.mxu0 %v4919
        %5054 = vmatpush.msra.mxu0 %v4916
        %5055 = vmatpush.msra.mxu0 %v4913
        %5056 = vmatpush.msra.mxu0 %v4910
        %5057 = vmatpush.msra.mxu0 %v4907
        %5058 = vmatpush.msra.mxu0 %v4904
        %5059 = vmatpush.msra.mxu0 %v4901
        %5060 = vmatpush.msra.mxu0 %v4898
        %5061 = vmatpush.msra.mxu0 %v4895
        %5062 = vmatpush.msra.mxu0 %v4892
        %5063 = vmatpush.msra.mxu0 %v4889
        %5064 = vmatpush.msra.mxu0 %v4886
        %5065 = vmatpush.msra.mxu0 %v4883
        %5066 = vmatmul.f32.gmra.mxu0 %v4964
        %v5067 = vpop.f32.mrf.mxu0
        %v5068 = vadd.f32 %v4960, %v5067
        %5069 = vdwg.mxu0
        %5070 = vmatpush.msra.mxu0 0.0
        %5071 = vmatpush.msra.mxu0 0.0
        %5072 = vmatpush.msra.mxu0 0.0
        %5073 = vmatpush.msra.mxu0 0.0
        %5074 = vmatpush.msra.mxu0 0.0
        %5075 = vmatpush.msra.mxu0 0.0
        %5076 = vmatpush.msra.mxu0 0.0
        %5077 = vmatpush.msra.mxu0 %v4955
        %5078 = vmatpush.msra.mxu0 %v4952
        %5079 = vmatpush.msra.mxu0 %v4949
        %5080 = vmatpush.msra.mxu0 %v4946
        %5081 = vmatpush.msra.mxu0 %v4943
        %5082 = vmatpush.msra.mxu0 %v4940
        %5083 = vmatpush.msra.mxu0 %v4937
        %5084 = vmatpush.msra.mxu0 %v4934
        %5085 = vmatpush.msra.mxu0 %v4931
        %5086 = vmatmul.f32.gmra.mxu0 %v4968
        %v5087 = vpop.f32.mrf.mxu0
        %v5088 = vadd.f32 %v5068, %v5087
        %5089 = vdwg.mxu0
        %v5093 = vrot.slane %v5008, 1
        %v5094 = vrot.slane %v5048, 1
        %v5095 = vrot.slane %v5088, 1
        %v5099 = vmax.f32 %v5008, %v5093
        %v5100 = vmax.f32 %v5048, %v5094
        %v5101 = vmax.f32 %v5088, %v5095
        %v5102 = vsub.f32 %v5008, %v5099
        %v5103 = vsub.f32 %v5048, %v5100
        %v5104 = vsub.f32 %v5088, %v5101
        %v5105 = vmul.f32 %v5102, 1.442695
        %v5106 = vpow.pop %v5105
        %v5107 = vmul.f32 %v5103, 1.442695
        %v5108 = vpow.pop %v5107
        %v5109 = vmul.f32 %v5104, 1.442695
        %v5110 = vpow.pop %v5109
        %v5114 = vrot.slane %v5099, 7
        %v5115 = vrot.slane %v5100, 7
        %v5116 = vrot.slane %v5101, 7
        %v5120 = vsub.f32 %v5008, %v5114
        %v5121 = vsub.f32 %v5048, %v5115
        %v5122 = vsub.f32 %v5088, %v5116
        %v5123 = vmul.f32 %v5120, 1.442695
        %v5124 = vpow.pop %v5123
        %v5125 = vmul.f32 %v5121, 1.442695
        %v5126 = vpow.pop %v5125
        %v5127 = vmul.f32 %v5122, 1.442695
        %v5128 = vpow.pop %v5127
        %v5132 = vrot.slane %v5124, 1
        %v5133 = vrot.slane %v5126, 1
        %v5134 = vrot.slane %v5128, 1
        %v5138 = vadd.f32 %v5106, %v5132
        %v5139 = vadd.f32 %v5108, %v5133
        %v5140 = vadd.f32 %v5110, %v5134
        %v5141 = vrcp.pop %v5138
        %v5142 = vrcp.pop %v5139
        %v5143 = vrcp.pop %v5140
        %v5144 = vmul.f32 %v5106, %v5141
        %v5145 = vmul.f32 %v5108, %v5142
        %v5146 = vmul.f32 %v5110, %v5143
        %v5150 = vrot.slane %v5141, 7
        %v5151 = vrot.slane %v5142, 7
        %v5152 = vrot.slane %v5143, 7
        %v5156 = vmul.f32 %v5124, %v5150
        %v5157 = vmul.f32 %v5126, %v5151
        %v5158 = vmul.f32 %v5128, %v5152
        %5160 = vset.pattern.permute.xlu0 0
        %5161 = vperm.xlu0 %5160, %v3934
        %v5162 = vpop.permute.xlu0 %5161
        %v5164 = vperm.slane %v5144, 0
        %v5165 = vperm.slane %v5145, 0
        %v5166 = vperm.slane %v5146, 0
        %v5167 = vadd.f32 %v5162, %v5164
        %v5168 = vadd.f32 %v5162, %v5165
        %v5169 = vadd.f32 %v5162, %v5166
        %v5170 = vadd.f32 %v5167, 1.0
        %v5171 = vadd.f32 %v5168, 1.0
        %v5172 = vadd.f32 %v5169, 1.0
        %5174 = vset.pattern.permute.xlu0 0
        %5175 = vperm.xlu0 %5174, %v3935
        %v5176 = vpop.permute.xlu0 %5175
        %v5178 = vperm.slane %v5156, 1
        %v5179 = vperm.slane %v5157, 1
        %v5180 = vperm.slane %v5158, 1
        %v5181 = vadd.f32 %v5176, %v5178
        %v5182 = vadd.f32 %v5176, %v5179
        %v5183 = vadd.f32 %v5176, %v5180
        %v5184 = vadd.f32 %v5181, 1.0
        %v5185 = vadd.f32 %v5182, 1.0
        %v5186 = vadd.f32 %v5183, 1.0
        %v5187 = vmul.f32 %v5170, %v3868
        %v5188 = vmul.f32 %v5171, %v3869
        %v5189 = vmul.f32 %v5172, %v3870
        %v5190 = vmul.f32 %v5184, %v3871
        %v5191 = vmul.f32 %v5185, %v3872
        %v5192 = vmul.f32 %v5186, %v3873
        %v5193 = vadd.f32 %v5187, %v5190
        %v5194 = vadd.f32 %v5188, %v5191
        %v5195 = vadd.f32 %v5189, %v5192
        %5196 = vst [vmem:[%s406] sm:$0xff] %v5193
        %5197 = vst [vmem:[%s406 + $0x8] sm:$0xff] %v5194
        %5198 = vst [vmem:[%s406 + $0x10] sm:$0xff] %v5195
        %s5199 = sand.u32 %s236, 1
        %s5200 = scalar_lea.sflag [#allocation6], %s5199
        %s5201 = sand.u32 %s236, 1
        %s5202 = smul.addr %s5201, 24
        %s5203 = scalar_lea.vmem [#allocation10], %s5202
        // Predicated region
        $region69: #{tpu_custom_call.1} parent=55 // pred_check
          %p5204 = pneg %p246
        $region70: #{tpu_custom_call.1} parent=55 // pred_check_branch
          %5206 = sbr.rel (%p5204) target = $region72
        $region71: #{tpu_custom_call.1} parent=55 // pred_region
          %5208 = vsyncadd %s5200, 0
          %s5209 = smul.addr %s29, 3
          %s5210 = smul.addr %s5209, 8
          %s5211 = scalar_lea.hbm %s9, %s5210
          %s5213 = sshll.u32 %s5203, 4
          %s5214 = int_to_ptr.vmem [resolvable:$true] %s5213
          %s5215 = sshll.u32 %s5211, 4
          %s5216 = int_to_ptr.hbm [resolvable:$true] %s5215
          %5218 = dma.vmem_to_hbm [thread:$0]  %s5214, 384, %s5216, %s5200
        $region72: #{tpu_custom_call.1} parent=55 // pred_fallthru
          _
      $region56: #{tpu_custom_call.1} parent=5 // pred_fallthru
        _
      %p5219 = scmp.le.s32.totalorder 2, %s24
      // Predicated region
      $region73: #{tpu_custom_call.1} parent=5 // pred_check
        %p5220 = pneg %p5219
      $region74: #{tpu_custom_call.1} parent=5 // pred_check_branch
        %5222 = sbr.rel (%p5220) target = $region76
      $region75: #{tpu_custom_call.1} parent=5 // pred_region
        %s5223 = ssub.s32 %s24, 2
        // Predicated region
        $region77: #{tpu_custom_call.1} parent=75 // pred_check
          %p5224 = pneg %p252
        $region78: #{tpu_custom_call.1} parent=75 // pred_check_branch
          %5226 = sbr.rel (%p5224) target = $region80
        $region79: #{tpu_custom_call.1} parent=75 // pred_region
          %s5227 = sand.u32 %s237, 1
          %s5228 = scalar_lea.sflag [#allocation6], %s5227
          %s5229 = sand.u32 %s237, 1
          %s5230 = smul.addr %s5229, 24
          %s5231 = scalar_lea.vmem [#allocation10], %s5230
          %5233 = dma.done %s5228, 384
        $region80: #{tpu_custom_call.1} parent=75 // pred_fallthru
          _
      $region76: #{tpu_custom_call.1} parent=5 // pred_fallthru
        _
    $region6: #{tpu_custom_call.1} parent=1 // loop_footer
      %s28 = sadd.s32 1, %s24
    $region7: #{tpu_custom_call.1} parent=1 // loop_footer_branch
      %23 = sbr.rel target = $region3
    $region8: #{tpu_custom_call.1} parent=1 // loop_exit
      _
    %5234 = vsyncpa [#allocation5], 1
    %s5235 = scalar_lea.sflag [#allocation5], 1
    %5236 = vsyncpa %s5235, 1
    %5237 = vsyncpa [#allocation8], 1
    %s5238 = scalar_lea.sflag [#allocation8], 1
    %5239 = vsyncpa %s5238, 1
    %5240 = vsyncpa [#allocation6], 1
    %s5241 = scalar_lea.sflag [#allocation6], 1
    %5242 = vsyncpa %s5241, 1

</llo_original>
